<compile_context>
chip_gen: v6e
topology: v6e:2x2x1
jax: 0.10.0
libtpu: 0.0.40
codegen_flags: <defaults>
</compile_context>

<pallas_src>
import jax
import jax.numpy as jnp
from jax import lax
from jax.experimental import pallas as pl
from jax.experimental.pallas import tpu as pltpu


def _round_up(x, m):
    return ((x + m - 1) // m) * m


def _pick_col_tile(np_pad, cap=512):
    for cand in (512, 384, 256, 128):
        if cand <= cap and np_pad % cand == 0:
            return cand
    return 128


def _pick_row_tile(n, np_pad, tj, c, h2, mm_bytes, budget, min_tiles):
    """Largest 8-aligned row tile fitting the VMEM budget with small row padding."""
    base8 = _round_up(max(n, 1), 8)
    per_row = (tj * c * mm_bytes          # |xi - xj| slab (matmul dtype)
               + 2 * tj * h2 * 4          # h and h*w2 (f32)
               + 4 * tj * 4               # s / ed / ed_fix / masks
               + 2 * np_pad * 4           # resident ed output block (dbl-buffered)
               + 2 * tj * 4               # dsim output block (dbl-buffered)
               + 2 * c * mm_bytes)        # x row block (dbl-buffered)
    fixed = 2 * tj * c * mm_bytes + (c * h2 + 3 * h2) * 4
    cap = (budget - fixed) // max(per_row, 1)
    cap = max(8, min(int(cap), 256, base8))
    cap = (cap // 8) * 8
    best_ti, best_rows = 8, base8
    for ti in range(8, cap + 1, 8):
        rows = _round_up(n, ti)
        if rows // ti < min_tiles:
            continue
        if (rows - base8) * 8 <= base8:   # <= ~12.5% extra padded rows
            best_ti, best_rows = ti, rows
    return best_ti, best_rows


def distribution_similarity(x, w1, b1, w2, scalars, *, row_tile=None, col_tile=None,
                            matmul_dtype=jnp.bfloat16):
    """Forward pass of DistributionSimilarity (l1 metric, eval mode).

    x       : (B, N, C) float32 node features
    w1      : (C, 2H)   first linear weight
    b1      : (1, 2H)   first linear bias
    w2      : (1, 2H)   second linear weight, stored as a row
    scalars : (2,)      [prelu_alpha, b2]  (SMEM via scalar prefetch)
    Returns (ed_ij, dis_similarity), each (B, N, N) float32.
    NOTE: matmul_dtype=bf16 deviates slightly from f32/PyTorch parity; pass
    jnp.float32 for strict accuracy (uses Precision.HIGHEST on the MXU).
    """
    B, N, C = x.shape
    H2 = w1.shape[1]
    mm_dtype = jnp.dtype(matmul_dtype)
    use_f32_mm = mm_dtype == jnp.dtype(jnp.float32)
    mm_bytes = 4 if use_f32_mm else 2

    # Column (lane) axis padded to a multiple of 128 -> lane-dense vst.
    np_pad = _round_up(max(N, 1), 128)

    # VMEM budget (v7x: 64 MiB physical -> ~48 MiB usable; v5e/v6e: 128 MiB).
    try:
        vmem_cap = int(pltpu.get_tpu_info().vmem_capacity_bytes)
    except Exception:
        vmem_cap = 64 * 1024 * 1024
    vmem_limit = min(vmem_cap * 3 // 4, 100 * 1024 * 1024)

    tj = col_tile if col_tile is not None else _pick_col_tile(np_pad)
    assert tj % 128 == 0 and np_pad % tj == 0, (tj, np_pad)
    n_col_tiles = np_pad // tj

    # When B == 1, force >= 2 row tiles so both v7x TensorCores get work.
    min_tiles = 2 if (B == 1 and N > 8) else 1
    if row_tile is not None:
        ti = int(row_tile)
        assert ti % 8 == 0, ti
        rows_pad = _round_up(N, ti)
    else:
        ti, rows_pad = _pick_row_tile(N, np_pad, tj, C, H2, mm_bytes,
                                      int(vmem_limit * 0.55), min_tiles)
    n_row_tiles = rows_pad // ti

    # Cast x ONCE to the matmul dtype; two padded copies (row blocks / col blocks).
    xr = jnp.pad(x, ((0, 0), (0, rows_pad - N), (0, 0))).astype(mm_dtype)
    xc = jnp.pad(x, ((0, 0), (0, np_pad - N), (0, 0))).astype(mm_dtype)
    w1c = w1.astype(mm_dtype)
    prec = lax.Precision.HIGHEST if use_f32_mm else lax.Precision.DEFAULT
    pad_cols = np_pad > N

    def kernel(sc_ref, xr_ref, xc_ref, w1_ref, b1_ref, w2_ref,
               ed_ref, dsim_ref, rsum_ref):
        i = pl.program_id(1)
        j = pl.program_id(2)
        alpha = sc_ref[0]                         # PReLU slope (SMEM)
        b2 = sc_ref[1]                            # second-layer bias (SMEM)

        @pl.when(j == 0)
        def _():
            rsum_ref[...] = jnp.zeros_like(rsum_ref)

        x_rows = xr_ref[0]                        # (ti, C)  matmul dtype
        x_cols = xc_ref[0]                        # (tj, C)  matmul dtype

        # Pairwise L1 slab bounded to (ti, tj, C), computed in the matmul dtype.
        diff = jnp.abs(x_rows[:, None, :] - x_cols[None, :, :])
        diff2 = diff.reshape(ti * tj, C)

        # Linear -> PReLU -> (Dropout = identity in eval) -> Linear.
        h = jnp.dot(diff2, w1_ref[...], precision=prec,
                    preferred_element_type=jnp.float32)           # (ti*tj, H2) f32
        h = h + b1_ref[...]

        # PReLU folded into the second-layer weights.
        w2_pos = w2_ref[...]                                      # (1, H2)
        w2_neg = alpha * w2_pos
        t = h * jnp.where(h > 0, w2_pos, w2_neg)

        s = jnp.sum(t.reshape(ti, tj, H2), axis=-1) + b2          # (ti, tj)
        ed = jax.nn.sigmoid(s)

        dsim_ref[0] = ed                                          # lane-dense block

        # Diagonal fix-up; accumulate row sums (exclude padded columns).
        col0 = pl.multiple_of(j * tj, tj)
        row0 = i * ti
        row_idx = lax.broadcasted_iota(jnp.int32, (ti, tj), 0) + row0
        col_idx = lax.broadcasted_iota(jnp.int32, (ti, tj), 1) + col0
        ed_fix = jnp.where(row_idx == col_idx, 1.0, ed) + 1e-6
        ed_ref[0, :, pl.ds(col0, tj)] = ed_fix

        ed_for_sum = jnp.where(col_idx < N, ed_fix, 0.0) if pad_cols else ed_fix
        rsum_ref[...] += jnp.sum(ed_for_sum, axis=-1, keepdims=True)

        # Last column chunk: normalize the resident (ti, np_pad) row block with
        # one reciprocal per row + broadcast multiply (no per-element divide).
        @pl.when(j == pl.num_programs(2) - 1)
        def _():
            inv = 1.0 / rsum_ref[...]              # (ti, 1)
            ed_ref[0] = ed_ref[0] * inv

    grid_spec = pltpu.PrefetchScalarGridSpec(
        num_scalar_prefetch=1,
        grid=(B, n_row_tiles, n_col_tiles),
        in_specs=(
            pl.BlockSpec((1, ti, C), lambda b, i, j, sc: (b, i, 0)),      # x rows
            pl.BlockSpec((1, tj, C), lambda b, i, j, sc: (b, j, 0)),      # x cols
            pl.BlockSpec((C, H2), lambda b, i, j, sc: (0, 0)),            # w1
            pl.BlockSpec((1, H2), lambda b, i, j, sc: (0, 0)),            # b1
            pl.BlockSpec((1, H2), lambda b, i, j, sc: (0, 0)),            # w2
        ),
        out_specs=(
            pl.BlockSpec((1, ti, np_pad), lambda b, i, j, sc: (b, i, 0)),  # ed_ij
            pl.BlockSpec((1, ti, tj), lambda b, i, j, sc: (b, i, j)),      # dsim
        ),
        scratch_shapes=[pltpu.VMEM((ti, 1), jnp.float32)],                 # row sums
    )

    pairs = B * rows_pad * np_pad
    cost = pl.CostEstimate(
        flops=int(pairs * (2 * C + 2 * C * H2 + 5 * H2 + 8)),
        transcendentals=int(pairs),
        bytes_accessed=int(B * (rows_pad + np_pad * n_row_tiles) * C * mm_bytes
                           + (C * H2 + 3 * H2 + 2) * 4
                           + 2 * B * rows_pad * np_pad * 4),
    )

    ed_p, dsim_p = pl.pallas_call(
        kernel,
        out_shape=(
            jax.ShapeDtypeStruct((B, rows_pad, np_pad), jnp.float32),
            jax.ShapeDtypeStruct((B, rows_pad, np_pad), jnp.float32),
        ),
        grid_spec=grid_spec,
        compiler_params=pltpu.CompilerParams(
            dimension_semantics=("parallel", "parallel", "arbitrary"),
            vmem_limit_bytes=int(vmem_limit)),
        cost_estimate=cost,
    )(scalars, xr, xc, w1c, b1, w2)

    return ed_p[:, :N, :N], dsim_p[:, :N, :N]


def init_params(key, in_c, base_c):
    """Deterministic PyTorch-style init (uniform +/- 1/sqrt(fan_in))."""
    h2 = 2 * base_c
    k1, k2, k3, k4 = jax.random.split(key, 4)
    lim1 = 1.0 / jnp.sqrt(in_c)
    lim2 = 1.0 / jnp.sqrt(h2)
    w1 = jax.random.uniform(k1, (in_c, h2), jnp.float32, -lim1, lim1)
    b1 = jax.random.uniform(k2, (1, h2), jnp.float32, -lim1, lim1)
    w2 = jax.random.uniform(k3, (1, h2), jnp.float32, -lim2, lim2)   # row layout
    b2 = jax.random.uniform(k4, (), jnp.float32, -lim2, lim2)
    alpha = jnp.float32(0.25)                                        # PReLU default
    scalars = jnp.stack([alpha, b2]).astype(jnp.float32)             # (2,) SMEM scalars
    return w1, b1, w2, scalars


def reference(x, w1, b1, w2, scalars):
    """Pure-JAX reference mirroring the PyTorch forward (l1 metric, eval mode)."""
    alpha, b2 = scalars[0], scalars[1]
    sim = jnp.abs(x[:, :, None, :] - x[:, None, :, :])               # (B, N, N, C)
    h = jnp.einsum('bijc,ch->bijh', sim, w1,
                   precision=jax.lax.Precision.HIGHEST) + b1[0]
    h = jnp.where(h > 0, h, alpha * h)
    s = jnp.sum(h * w2[0], axis=-1) + b2
    ed = jax.nn.sigmoid(s)                                           # (B, N, N)
    dsim = ed
    n = x.shape[1]
    eye = jnp.eye(n, dtype=ed.dtype)[None]
    ed = ed * (1.0 - eye) + eye + 1e-6
    ed = ed / jnp.sum(ed, axis=2, keepdims=True)
    return ed, dsim


if __name__ == "__main__":
    B, N, in_c, base_c = 2, 8, 32, 16
    key = jax.random.PRNGKey(0)
    kx, kp = jax.random.split(key)
    x = jax.random.normal(kx, (B, N, in_c), dtype=jnp.float32)
    w1, b1, w2, scalars = init_params(kp, in_c, base_c)

    ed_ref_, dsim_ref_ = reference(x, w1, b1, w2, scalars)

    # 1) f32 path (Precision.HIGHEST): strict accuracy check.
    ed, dsim = distribution_similarity(x, w1, b1, w2, scalars,
                                       matmul_dtype=jnp.float32)
    jax.block_until_ready((ed, dsim))
    assert ed.shape == (B, N, N) and dsim.shape == (B, N, N)
    assert jnp.allclose(ed, ed_ref_, atol=2e-3), "ed_ij mismatch (f32)"
    assert jnp.allclose(dsim, dsim_ref_, atol=2e-3), "dis_similarity mismatch (f32)"

    # 2) Default bf16-matmul path (v6e/v7x MXU throughput): relaxed tolerance.
    ed_b, dsim_b = distribution_similarity(x, w1, b1, w2, scalars)
    jax.block_until_ready((ed_b, dsim_b))
    assert jnp.allclose(ed_b, ed_ref_, atol=5e-2), "ed_ij mismatch (bf16)"
    assert jnp.allclose(dsim_b, dsim_ref_, atol=5e-2), "dis_similarity mismatch (bf16)"

    # 3) Multi row-tile + multi column-chunk + padded-column path (N=200).
    B2, N2 = 1, 200
    x2 = jax.random.normal(jax.random.PRNGKey(1), (B2, N2, in_c), dtype=jnp.float32)
    ed2, dsim2 = distribution_similarity(x2, w1, b1, w2, scalars,
                                         row_tile=104, col_tile=128,
                                         matmul_dtype=jnp.float32)
    jax.block_until_ready((ed2, dsim2))
    ed2_ref, dsim2_ref = reference(x2, w1, b1, w2, scalars)
    assert ed2.shape == (B2, N2, N2) and dsim2.shape == (B2, N2, N2)
    assert jnp.allclose(ed2, ed2_ref, atol=2e-3), "ed_ij mismatch (tiled)"
    assert jnp.allclose(dsim2, dsim2_ref, atol=2e-3), "dis_similarity mismatch (tiled)"

    print("KERNEL_OK")
</pallas_src>

<mosaic_0001>
module attributes {stable_mosaic.version = 11 : i64} {
  func.func @kernel(%arg0: i32, %arg1: i32, %arg2: i32, %arg3: memref<2xf32, #tpu.memory_space<smem>>, %arg4: memref<1x8x32xf32, #tpu.memory_space<vmem>>, %arg5: memref<1x128x32xf32, #tpu.memory_space<vmem>>, %arg6: memref<32x32xf32, #tpu.memory_space<vmem>>, %arg7: memref<1x32xf32, #tpu.memory_space<vmem>>, %arg8: memref<1x32xf32, #tpu.memory_space<vmem>>, %arg9: memref<1x8x128xf32, #tpu.memory_space<vmem>>, %arg10: memref<1x8x128xf32, #tpu.memory_space<vmem>>, %arg11: memref<8x1xf32, #tpu.memory_space<vmem>>) attributes {dimension_semantics = [#tpu.dimension_semantics<parallel>, #tpu.dimension_semantics<parallel>, #tpu.dimension_semantics<arbitrary>], iteration_bounds = array<i64: 2, 1, 1>, scalar_prefetch = 1 : i64, scratch_operands = 1 : i64, tpu.core_type = #tpu.core_type<tc>, window_params = [{transform_indices = @transform_0, window_bounds = array<i64: 1, 8, 32>}, {transform_indices = @transform_1, window_bounds = array<i64: 1, 128, 32>}, {pipeline_mode = #tpu.pipeline_mode<synchronous>, transform_indices = @transform_2, window_bounds = array<i64: 32, 32>}, {pipeline_mode = #tpu.pipeline_mode<synchronous>, transform_indices = @transform_3, window_bounds = array<i64: 1, 32>}, {pipeline_mode = #tpu.pipeline_mode<synchronous>, transform_indices = @transform_4, window_bounds = array<i64: 1, 32>}, {transform_indices = @transform_5, window_bounds = array<i64: 1, 8, 128>}, {transform_indices = @transform_6, window_bounds = array<i64: 1, 8, 128>}]} {
    %c0 = arith.constant 0 : index
    %0 = memref.load %arg3[%c0] : memref<2xf32, #tpu.memory_space<smem>>
    %c1 = arith.constant 1 : index
    %1 = memref.load %arg3[%c1] : memref<2xf32, #tpu.memory_space<smem>>
    %c0_i32 = arith.constant 0 : i32
    %2 = arith.cmpi eq, %arg2, %c0_i32 : i32
    %3 = arith.extui %2 : i1 to i32
    %c0_i32_0 = arith.constant 0 : i32
    %4 = arith.cmpi ne, %3, %c0_i32_0 : i32
    scf.if %4 {
      %cst_32 = arith.constant 0.000000e+00 : f32
      %74 = vector.broadcast %cst_32 : f32 to vector<8x1xf32>
      %c0_33 = arith.constant 0 : index
      %c0_34 = arith.constant 0 : index
      %75 = vector.load %arg11[%c0_33, %c0_34] : memref<8x1xf32, #tpu.memory_space<vmem>>, vector<8x1xf32>
      tpu.vector_store %arg11[%c0_33, %c0_34], %74 {strides = array<i32>} : memref<8x1xf32, #tpu.memory_space<vmem>>, vector<8x1xf32>,
    } else {
    }
    %c0_1 = arith.constant 0 : index
    %c0_2 = arith.constant 0 : index
    %c0_3 = arith.constant 0 : index
    %5 = vector.load %arg4[%c0_1, %c0_2, %c0_3] : memref<1x8x32xf32, #tpu.memory_space<vmem>>, vector<1x8x32xf32>
    %6 = vector.shape_cast %5 : vector<1x8x32xf32> to vector<8x32xf32>
    %c0_4 = arith.constant 0 : index
    %c0_5 = arith.constant 0 : index
    %c0_6 = arith.constant 0 : index
    %7 = vector.load %arg5[%c0_4, %c0_5, %c0_6] : memref<1x128x32xf32, #tpu.memory_space<vmem>>, vector<1x128x32xf32>
    %8 = vector.shape_cast %7 : vector<1x128x32xf32> to vector<128x32xf32>
    %9 = vector.shape_cast %6 : vector<8x32xf32> to vector<8x1x32xf32>
    %10 = vector.shape_cast %8 : vector<128x32xf32> to vector<1x128x32xf32>
    %11 = vector.broadcast %9 : vector<8x1x32xf32> to vector<8x128x32xf32>
    %12 = vector.broadcast %10 : vector<1x128x32xf32> to vector<8x128x32xf32>
    %13 = arith.subf %11, %12 : vector<8x128x32xf32>
    %14 = math.absf %13 : vector<8x128x32xf32>
    %15 = vector.shape_cast %14 : vector<8x128x32xf32> to vector<1024x32xf32>
    %c0_7 = arith.constant 0 : index
    %c0_8 = arith.constant 0 : index
    %16 = vector.load %arg6[%c0_7, %c0_8] : memref<32x32xf32, #tpu.memory_space<vmem>>, vector<32x32xf32>
    %cst = arith.constant dense<0.000000e+00> : vector<1024x32xf32>
    %17 = tpu.matmul %15, %16, %cst {dimension_numbers = #tpu.dot_dimension_numbers<[1], [0], [0], [1], [0, 0, 1, 1], [], []>, precision = #tpu.contract_precision<fp32>} : vector<1024x32xf32>, vector<32x32xf32>, vector<1024x32xf32> -> vector<1024x32xf32>
    %c0_9 = arith.constant 0 : index
    %c0_10 = arith.constant 0 : index
    %18 = vector.load %arg7[%c0_9, %c0_10] : memref<1x32xf32, #tpu.memory_space<vmem>>, vector<1x32xf32>
    %19 = vector.broadcast %18 : vector<1x32xf32> to vector<1024x32xf32>
    %20 = arith.addf %17, %19 : vector<1024x32xf32>
    %c0_11 = arith.constant 0 : index
    %c0_12 = arith.constant 0 : index
    %21 = vector.load %arg8[%c0_11, %c0_12] : memref<1x32xf32, #tpu.memory_space<vmem>>, vector<1x32xf32>
    %22 = vector.broadcast %0 : f32 to vector<1x32xf32>
    %23 = arith.mulf %22, %21 : vector<1x32xf32>
    %cst_13 = arith.constant 0.000000e+00 : f32
    %24 = vector.broadcast %cst_13 : f32 to vector<1024x32xf32>
    %25 = arith.cmpf ogt, %20, %24 : vector<1024x32xf32>
    %26 = vector.shape_cast %21 : vector<1x32xf32> to vector<1x32xf32>
    %27 = vector.broadcast %26 : vector<1x32xf32> to vector<1024x32xf32>
    %28 = vector.shape_cast %23 : vector<1x32xf32> to vector<1x32xf32>
    %29 = vector.broadcast %28 : vector<1x32xf32> to vector<1024x32xf32>
    %30 = arith.select %25, %27, %29 : vector<1024x32xi1>, vector<1024x32xf32>
    %31 = arith.mulf %20, %30 : vector<1024x32xf32>
    %32 = vector.shape_cast %31 : vector<1024x32xf32> to vector<8x128x32xf32>
    %cst_14 = arith.constant dense<0.000000e+00> : vector<8x128xf32>
    %33 = vector.multi_reduction <add>, %32, %cst_14 [2] : vector<8x128x32xf32> to vector<8x128xf32>
    %34 = vector.broadcast %1 : f32 to vector<8x128xf32>
    %35 = arith.addf %33, %34 : vector<8x128xf32>
    %36 = arith.negf %35 : vector<8x128xf32>
    %37 = math.exp %36 : vector<8x128xf32>
    %cst_15 = arith.constant 1.000000e+00 : f32
    %38 = vector.broadcast %cst_15 : f32 to vector<8x128xf32>
    %39 = arith.addf %38, %37 : vector<8x128xf32>
    %40 = arith.divf %38, %39 : vector<8x128xf32>
    %c0_16 = arith.constant 0 : index
    %c0_17 = arith.constant 0 : index
    %c0_18 = arith.constant 0 : index
    %41 = vector.load %arg10[%c0_16, %c0_17, %c0_18] : memref<1x8x128xf32, #tpu.memory_space<vmem>>, vector<1x8x128xf32>
    %42 = vector.shape_cast %41 : vector<1x8x128xf32> to vector<8x128xf32>
    %43 = vector.shape_cast %40 : vector<8x128xf32> to vector<1x8x128xf32>
    tpu.vector_store %arg10[%c0_16, %c0_17, %c0_18], %43 {strides = array<i32>} : memref<1x8x128xf32, #tpu.memory_space<vmem>>, vector<1x8x128xf32>,
    %c128_i32 = arith.constant 128 : i32
    %44 = arith.muli %arg2, %c128_i32 : i32
    %45 = tpu.assume_multiple %44, 128 : i32
    %c8_i32 = arith.constant 8 : i32
    %46 = arith.muli %arg1, %c8_i32 : i32
    %47 = tpu.iota {dimensions = array<i32: 0>} : vector<8x128xi32>
    %48 = vector.broadcast %46 : i32 to vector<8x128xi32>
    %49 = arith.addi %47, %48 : vector<8x128xi32>
    %50 = tpu.iota {dimensions = array<i32: 1>} : vector<8x128xi32>
    %51 = vector.broadcast %45 : i32 to vector<8x128xi32>
    %52 = arith.addi %50, %51 : vector<8x128xi32>
    %53 = arith.cmpi eq, %49, %52 : vector<8x128xi32>
    %cst_19 = arith.constant 1.000000e+00 : f32
    %54 = vector.broadcast %cst_19 : f32 to vector<8x128xf32>
    %55 = arith.select %53, %54, %40 : vector<8x128xi1>, vector<8x128xf32>
    %cst_20 = arith.constant 9.99999997E-7 : f32
    %56 = vector.broadcast %cst_20 : f32 to vector<8x128xf32>
    %57 = arith.addf %55, %56 : vector<8x128xf32>
    %c0_21 = arith.constant 0 : index
    %c0_22 = arith.constant 0 : index
    %58 = arith.index_cast %45 : i32 to index
    %59 = vector.load %arg9[%c0_21, %c0_22, %58] : memref<1x8x128xf32, #tpu.memory_space<vmem>>, vector<1x8x128xf32>
    %60 = vector.shape_cast %59 : vector<1x8x128xf32> to vector<8x128xf32>
    %61 = vector.shape_cast %57 : vector<8x128xf32> to vector<1x8x128xf32>
    tpu.vector_store %arg9[%c0_21, %c0_22, %58], %61 {strides = array<i32>} : memref<1x8x128xf32, #tpu.memory_space<vmem>>, vector<1x8x128xf32>,
    %c8_i32_23 = arith.constant 8 : i32
    %62 = vector.broadcast %c8_i32_23 : i32 to vector<8x128xi32>
    %63 = arith.cmpi slt, %52, %62 : vector<8x128xi32>
    %cst_24 = arith.constant 0.000000e+00 : f32
    %64 = vector.broadcast %cst_24 : f32 to vector<8x128xf32>
    %65 = arith.select %63, %57, %64 : vector<8x128xi1>, vector<8x128xf32>
    %c0_25 = arith.constant 0 : index
    %c0_26 = arith.constant 0 : index
    %66 = vector.load %arg11[%c0_25, %c0_26] : memref<8x1xf32, #tpu.memory_space<vmem>>, vector<8x1xf32>
    %cst_27 = arith.constant dense<0.000000e+00> : vector<8xf32>
    %67 = vector.multi_reduction <add>, %65, %cst_27 [1] : vector<8x128xf32> to vector<8xf32>
    %68 = vector.shape_cast %67 : vector<8xf32> to vector<8x1xf32>
    %69 = arith.addf %66, %68 : vector<8x1xf32>
    %c0_28 = arith.constant 0 : index
    %c0_29 = arith.constant 0 : index
    %70 = vector.load %arg11[%c0_28, %c0_29] : memref<8x1xf32, #tpu.memory_space<vmem>>, vector<8x1xf32>
    tpu.vector_store %arg11[%c0_28, %c0_29], %69 {strides = array<i32>} : memref<8x1xf32, #tpu.memory_space<vmem>>, vector<8x1xf32>,
    %c0_i32_30 = arith.constant 0 : i32
    %71 = arith.cmpi eq, %arg2, %c0_i32_30 : i32
    %72 = arith.extui %71 : i1 to i32
    %c0_i32_31 = arith.constant 0 : i32
    %73 = arith.cmpi ne, %72, %c0_i32_31 : i32
    scf.if %73 {
      %c0_32 = arith.constant 0 : index
      %c0_33 = arith.constant 0 : index
      %74 = vector.load %arg11[%c0_32, %c0_33] : memref<8x1xf32, #tpu.memory_space<vmem>>, vector<8x1xf32>
      %cst_34 = arith.constant 1.000000e+00 : f32
      %75 = vector.broadcast %cst_34 : f32 to vector<8x1xf32>
      %76 = arith.divf %75, %74 : vector<8x1xf32>
      %c0_35 = arith.constant 0 : index
      %c0_36 = arith.constant 0 : index
      %c0_37 = arith.constant 0 : index
      %77 = vector.load %arg9[%c0_35, %c0_36, %c0_37] : memref<1x8x128xf32, #tpu.memory_space<vmem>>, vector<1x8x128xf32>
      %78 = vector.shape_cast %77 : vector<1x8x128xf32> to vector<8x128xf32>
      %79 = vector.broadcast %76 : vector<8x1xf32> to vector<8x128xf32>
      %80 = arith.mulf %78, %79 : vector<8x128xf32>
      %c0_38 = arith.constant 0 : index
      %c0_39 = arith.constant 0 : index
      %c0_40 = arith.constant 0 : index
      %81 = vector.load %arg9[%c0_38, %c0_39, %c0_40] : memref<1x8x128xf32, #tpu.memory_space<vmem>>, vector<1x8x128xf32>
      %82 = vector.shape_cast %81 : vector<1x8x128xf32> to vector<8x128xf32>
      %83 = vector.shape_cast %80 : vector<8x128xf32> to vector<1x8x128xf32>
      tpu.vector_store %arg9[%c0_38, %c0_39, %c0_40], %83 {strides = array<i32>} : memref<1x8x128xf32, #tpu.memory_space<vmem>>, vector<1x8x128xf32>,
    } else {
    }
    return
  }
  func.func @transform_0(%arg0: i32, %arg1: i32, %arg2: i32, %arg3: memref<2xf32, #tpu.memory_space<smem>>) -> (i32, i32, i32) {
    %c0_i32 = arith.constant 0 : i32
    %c0_i32_0 = arith.constant 0 : i32
    return %arg0, %arg1, %c0_i32 : i32, i32, i32
  }
  func.func @transform_1(%arg0: i32, %arg1: i32, %arg2: i32, %arg3: memref<2xf32, #tpu.memory_space<smem>>) -> (i32, i32, i32) {
    %c0_i32 = arith.constant 0 : i32
    %c0_i32_0 = arith.constant 0 : i32
    return %arg0, %arg2, %c0_i32 : i32, i32, i32
  }
  func.func @transform_2(%arg0: i32, %arg1: i32, %arg2: i32, %arg3: memref<2xf32, #tpu.memory_space<smem>>) -> (i32, i32) {
    %c0_i32 = arith.constant 0 : i32
    %c0_i32_0 = arith.constant 0 : i32
    %c0_i32_1 = arith.constant 0 : i32
    return %c0_i32, %c0_i32_0 : i32, i32
  }
  func.func @transform_3(%arg0: i32, %arg1: i32, %arg2: i32, %arg3: memref<2xf32, #tpu.memory_space<smem>>) -> (i32, i32) {
    %c0_i32 = arith.constant 0 : i32
    %c0_i32_0 = arith.constant 0 : i32
    %c0_i32_1 = arith.constant 0 : i32
    return %c0_i32, %c0_i32_0 : i32, i32
  }
  func.func @transform_4(%arg0: i32, %arg1: i32, %arg2: i32, %arg3: memref<2xf32, #tpu.memory_space<smem>>) -> (i32, i32) {
    %c0_i32 = arith.constant 0 : i32
    %c0_i32_0 = arith.constant 0 : i32
    %c0_i32_1 = arith.constant 0 : i32
    return %c0_i32, %c0_i32_0 : i32, i32
  }
  func.func @transform_5(%arg0: i32, %arg1: i32, %arg2: i32, %arg3: memref<2xf32, #tpu.memory_space<smem>>) -> (i32, i32, i32) {
    %c0_i32 = arith.constant 0 : i32
    %c0_i32_0 = arith.constant 0 : i32
    return %arg0, %arg1, %c0_i32 : i32, i32, i32
  }
  func.func @transform_6(%arg0: i32, %arg1: i32, %arg2: i32, %arg3: memref<2xf32, #tpu.memory_space<smem>>) -> (i32, i32, i32) {
    %c0_i32 = arith.constant 0 : i32
    return %arg0, %arg1, %arg2 : i32, i32, i32
  }
}

</mosaic_0001>

<llo_original>
// kernel: tpu_custom_call.1
$region0: #{tpu_custom_call.1}
  #allocation0 [shape = 'u32[]', space=smem, size = 0x4, offset = 0x4, fixed_abs, tag = 'smem constant byte address 0x4 - core index']
  #allocation1 [shape = 'u32[144,128]{1,0:T(1,128)}', space=vmem, size = 0x12000, scoped, tag = 'internal scratch']
  #allocation2 [shape = 'f32[8,1]{1,0:T(8,128)}', space=vmem, size = 0x1000, scoped, tag = 'scratch operand']
  #allocation3 [shape = 's32[1]{0}', space=sflag, size = 0x4, scoped, tag = 'scoped memory for tpu_custom_call.1']
  #allocation4 [shape = 'u8[512]{0}', space=smem, size = 0x200, scoped, tag = 'prefetched SMEM operand 0']
  %s0 = inlined_call_operand.vmem [shape: f32[2], index: 0, kind: input, shape index: {}]
  %s1 = inlined_call_operand.vmem [shape: f32[2,8,32], index: 1, kind: input, shape index: {}]
  %s2 = inlined_call_operand.vmem [shape: f32[2,128,32], index: 2, kind: input, shape index: {}]
  %s3 = inlined_call_operand.vmem [shape: f32[32,32], index: 3, kind: input, shape index: {}]
  %s4 = inlined_call_operand.vmem [shape: f32[1,32], index: 4, kind: input, shape index: {}]
  %s5 = inlined_call_operand.vmem [shape: f32[1,32], index: 5, kind: input, shape index: {}]
  %s6 = inlined_call_operand.hbm [shape: f32[2,8,128], index: 6, kind: output, shape index: {0}]
  %s7 = inlined_call_operand.hbm [shape: f32[2,8,128], index: 7, kind: output, shape index: {1}]
  %8 = xla_tuple %s6, %s7
  %s9 = sld [smem:[#allocation0]]
  $region69: #{tpu_custom_call.1} parent=0
    _
  %s11 = ssub.s32 1, %s9
  %s12 = scalar_select 0, %s11, %s9
  %s13 = sshll.u32 %s0, 4
  %s14 = int_to_ptr.vmem [resolvable:$true] %s13
  %16 = dma.vmem_to_smem %s14, 16, [#allocation4], [#allocation3]
  %17 = dma.done [#allocation3], 16
  %18 = sfence
  $region1: #{tpu_custom_call.1} parent=0
    #allocation5 [shape = 'u8[8192]{0}', space=vmem, size = 0x2000, scoped, tag = 'output window, operand 0']
    #allocation6 [shape = 's32[2]{0}', space=sflag, size = 0x8, scoped, tag = 'scoped memory for tpu_custom_call.1']
    #allocation7 [shape = 'u8[8192]{0}', space=vmem, size = 0x2000, scoped, tag = 'output window, operand 1']
    #allocation8 [shape = 's32[2]{0}', space=sflag, size = 0x8, scoped, tag = 'scoped memory for tpu_custom_call.1']
    %19 = vsyncpa [#allocation6], 0
    %s20 = scalar_lea.sflag [#allocation6], 1
    %21 = vsyncpa %s20, 0
    %22 = vsyncpa [#allocation8], 0
    %s23 = scalar_lea.sflag [#allocation8], 1
    %24 = vsyncpa %s23, 0
    loop: start=0, step=1, limit=4
    $region2: #{tpu_custom_call.1} parent=1 // loop_pre_header
      _
    $region3: #{tpu_custom_call.1} parent=1 // loop_header
      %s26 = sphi 0, %s30
      %p27 = scmp.ge.s32.totalorder %s26, 4
      %s33 = sphi 0, %s52
      %s34 = sphi 0, %s48
      %s35 = sphi 0, %s44
      %s36 = sphi 0, %s33
      %s37 = sphi 0, %s34
      %s38 = sphi 0, %s35
      %s39 = sphi 0, %s36
      %s40 = sphi 0, %s37
      %s41 = sphi 0, %s38
      %s57 = sphi 0, %s59
      %s60 = sphi 0, %s57
      %s61 = sphi 0, %s60
      %s77 = sphi 0, %s61
      %s85 = sphi 0, %s87
      %s88 = sphi 0, %s85
      %s89 = sphi 0, %s88
      %s105 = sphi 0, %s89
      %s109 = sphi 0, %s109
      %s111 = sphi 0, %s109
      %s112 = sphi 0, %s111
      %s126 = sphi 0, %s112
      %s130 = sphi 0, %s130
      %s132 = sphi 0, %s130
      %s133 = sphi 0, %s132
      %s147 = sphi 0, %s133
      %s151 = sphi 0, %s151
      %s153 = sphi 0, %s151
      %s154 = sphi 0, %s153
      %s168 = sphi 0, %s154
      %s176 = sphi 0, %s178
      %s179 = sphi 0, %s176
      %s180 = sphi 0, %s179
      %s196 = sphi 0, %s180
      %s206 = sphi 0, %s208
      %s209 = sphi 0, %s206
      %s210 = sphi 0, %s209
      %s226 = sphi 0, %s210
    $region4: #{tpu_custom_call.1} parent=1 // loop_header_branch
      %29 = sbr.rel (%p27) target = $region8
    $region5: #{tpu_custom_call.1} parent=1 // loop_body
      %s31 = ssub.s32 %s26, 1
      %s32 = ssub.s32 %s26, 2
      %s42 = sadd.s32 1, %s35
      %p43 = scmp.ge.s32.totalorder %s42, 1
      %s44 = scalar_select %p43, 0, %s42
      %s45 = sadd.s32 1, %s34
      %s46 = scalar_select %p43, %s45, %s34
      %p47 = scmp.ge.s32.totalorder %s46, 1
      %s48 = scalar_select %p47, 0, %s46
      %s49 = sadd.s32 1, %s33
      %s50 = scalar_select %p47, %s49, %s33
      %p51 = scmp.ge.s32.totalorder %s50, 2
      %s52 = scalar_select %p51, 0, %s50
      %s53 = ssub.s32 %s33, %s52
      %s54 = ssub.s32 %s34, %s48
      %s55 = sor.u32 %s53, %s54
      %p56 = scmp.eq.s32.totalorder %s55, 0
      %s58 = sadd.s32 %s57, 1
      %s59 = scalar_select %p56, %s57, %s58
      %p62 = pneg %p56
      %p63 = scmp.eq.s32.totalorder %s26, 1
      %p64 = por %p62, %p63
      %p65 = scmp.ne.s32.totalorder %s57, %s60
      %p66 = scmp.eq.s32.totalorder %s26, 0
      %p67 = por %p65, %p66
      %p68 = scmp.ne.s32.totalorder %s57, %s60
      %p69 = scmp.eq.s32.totalorder %s31, 1
      %p70 = por %p68, %p69
      %p71 = scmp.ne.s32.totalorder %s60, %s61
      %p72 = scmp.eq.s32.totalorder %s31, 0
      %p73 = por %p71, %p72
      %p74 = scmp.ne.s32.totalorder %s60, %s61
      %p75 = scmp.eq.s32.totalorder %s32, 1
      %p76 = por %p74, %p75
      %p78 = scmp.ne.s32.totalorder %s61, %s77
      %p79 = scmp.eq.s32.totalorder %s32, 0
      %p80 = por %p78, %p79
      %s81 = ssub.s32 %s33, %s52
      %s82 = ssub.s32 %s35, %s44
      %s83 = sor.u32 %s81, %s82
      %p84 = scmp.eq.s32.totalorder %s83, 0
      %s86 = sadd.s32 %s85, 1
      %s87 = scalar_select %p84, %s85, %s86
      %p90 = pneg %p84
      %p91 = scmp.eq.s32.totalorder %s26, 1
      %p92 = por %p90, %p91
      %p93 = scmp.ne.s32.totalorder %s85, %s88
      %p94 = scmp.eq.s32.totalorder %s26, 0
      %p95 = por %p93, %p94
      %p96 = scmp.ne.s32.totalorder %s85, %s88
      %p97 = scmp.eq.s32.totalorder %s31, 1
      %p98 = por %p96, %p97
      %p99 = scmp.ne.s32.totalorder %s88, %s89
      %p100 = scmp.eq.s32.totalorder %s31, 0
      %p101 = por %p99, %p100
      %p102 = scmp.ne.s32.totalorder %s88, %s89
      %p103 = scmp.eq.s32.totalorder %s32, 1
      %p104 = por %p102, %p103
      %p106 = scmp.ne.s32.totalorder %s89, %s105
      %p107 = scmp.eq.s32.totalorder %s32, 0
      %p108 = por %p106, %p107
      %s110 = sadd.s32 %s109, 1
      %p113 = scmp.eq.s32.totalorder %s26, 1
      %p114 = scmp.ne.s32.totalorder %s109, %s111
      %p115 = scmp.eq.s32.totalorder %s26, 0
      %p116 = por %p114, %p115
      %p117 = scmp.ne.s32.totalorder %s109, %s111
      %p118 = scmp.eq.s32.totalorder %s31, 1
      %p119 = por %p117, %p118
      %p120 = scmp.ne.s32.totalorder %s111, %s112
      %p121 = scmp.eq.s32.totalorder %s31, 0
      %p122 = por %p120, %p121
      %p123 = scmp.ne.s32.totalorder %s111, %s112
      %p124 = scmp.eq.s32.totalorder %s32, 1
      %p125 = por %p123, %p124
      %p127 = scmp.ne.s32.totalorder %s112, %s126
      %p128 = scmp.eq.s32.totalorder %s32, 0
      %p129 = por %p127, %p128
      %s131 = sadd.s32 %s130, 1
      %p134 = scmp.eq.s32.totalorder %s26, 1
      %p135 = scmp.ne.s32.totalorder %s130, %s132
      %p136 = scmp.eq.s32.totalorder %s26, 0
      %p137 = por %p135, %p136
      %p138 = scmp.ne.s32.totalorder %s130, %s132
      %p139 = scmp.eq.s32.totalorder %s31, 1
      %p140 = por %p138, %p139
      %p141 = scmp.ne.s32.totalorder %s132, %s133
      %p142 = scmp.eq.s32.totalorder %s31, 0
      %p143 = por %p141, %p142
      %p144 = scmp.ne.s32.totalorder %s132, %s133
      %p145 = scmp.eq.s32.totalorder %s32, 1
      %p146 = por %p144, %p145
      %p148 = scmp.ne.s32.totalorder %s133, %s147
      %p149 = scmp.eq.s32.totalorder %s32, 0
      %p150 = por %p148, %p149
      %s152 = sadd.s32 %s151, 1
      %p155 = scmp.eq.s32.totalorder %s26, 1
      %p156 = scmp.ne.s32.totalorder %s151, %s153
      %p157 = scmp.eq.s32.totalorder %s26, 0
      %p158 = por %p156, %p157
      %p159 = scmp.ne.s32.totalorder %s151, %s153
      %p160 = scmp.eq.s32.totalorder %s31, 1
      %p161 = por %p159, %p160
      %p162 = scmp.ne.s32.totalorder %s153, %s154
      %p163 = scmp.eq.s32.totalorder %s31, 0
      %p164 = por %p162, %p163
      %p165 = scmp.ne.s32.totalorder %s153, %s154
      %p166 = scmp.eq.s32.totalorder %s32, 1
      %p167 = por %p165, %p166
      %p169 = scmp.ne.s32.totalorder %s154, %s168
      %p170 = scmp.eq.s32.totalorder %s32, 0
      %p171 = por %p169, %p170
      %s172 = ssub.s32 %s33, %s52
      %s173 = ssub.s32 %s34, %s48
      %s174 = sor.u32 %s172, %s173
      %p175 = scmp.eq.s32.totalorder %s174, 0
      %s177 = sadd.s32 %s176, 1
      %s178 = scalar_select %p175, %s176, %s177
      %p181 = pneg %p175
      %p182 = scmp.eq.s32.totalorder %s26, 1
      %p183 = por %p181, %p182
      %p184 = scmp.ne.s32.totalorder %s176, %s179
      %p185 = scmp.eq.s32.totalorder %s26, 0
      %p186 = por %p184, %p185
      %p187 = scmp.ne.s32.totalorder %s176, %s179
      %p188 = scmp.eq.s32.totalorder %s31, 1
      %p189 = por %p187, %p188
      %p190 = scmp.ne.s32.totalorder %s179, %s180
      %p191 = scmp.eq.s32.totalorder %s31, 0
      %p192 = por %p190, %p191
      %p193 = scmp.ne.s32.totalorder %s179, %s180
      %p194 = scmp.eq.s32.totalorder %s32, 1
      %p195 = por %p193, %p194
      %p197 = scmp.ne.s32.totalorder %s180, %s196
      %p198 = scmp.eq.s32.totalorder %s32, 0
      %p199 = por %p197, %p198
      %s200 = ssub.s32 %s33, %s52
      %s201 = ssub.s32 %s34, %s48
      %s202 = sor.u32 %s200, %s201
      %s203 = ssub.s32 %s35, %s44
      %s204 = sor.u32 %s202, %s203
      %p205 = scmp.eq.s32.totalorder %s204, 0
      %s207 = sadd.s32 %s206, 1
      %s208 = scalar_select %p205, %s206, %s207
      %p211 = pneg %p205
      %p212 = scmp.eq.s32.totalorder %s26, 1
      %p213 = por %p211, %p212
      %p214 = scmp.ne.s32.totalorder %s206, %s209
      %p215 = scmp.eq.s32.totalorder %s26, 0
      %p216 = por %p214, %p215
      %p217 = scmp.ne.s32.totalorder %s206, %s209
      %p218 = scmp.eq.s32.totalorder %s31, 1
      %p219 = por %p217, %p218
      %p220 = scmp.ne.s32.totalorder %s209, %s210
      %p221 = scmp.eq.s32.totalorder %s31, 0
      %p222 = por %p220, %p221
      %p223 = scmp.ne.s32.totalorder %s209, %s210
      %p224 = scmp.eq.s32.totalorder %s32, 1
      %p225 = por %p223, %p224
      %p227 = scmp.ne.s32.totalorder %s210, %s226
      %p228 = scmp.eq.s32.totalorder %s32, 0
      %p229 = por %p227, %p228
      %p230 = scmp.le.s32.totalorder 1, %s26
      %p231 = scmp.lt.s32.totalorder %s26, 3
      %p232 = pnand %p230, %p231
      %p233 = pneg %p232
      // Predicated region
      $region9: #{tpu_custom_call.1} parent=5 // pred_check
        _
      $region10: #{tpu_custom_call.1} parent=5 // pred_check_branch
        %235 = sbr.rel (%p232) target = $region12
      $region11: #{tpu_custom_call.1} parent=5 // pred_region
        %s236 = ssub.s32 %s26, 1
        // Predicated region
        $region13: #{tpu_custom_call.1} parent=11 // pred_check
          %p237 = pneg %p122
        $region14: #{tpu_custom_call.1} parent=11 // pred_check_branch
          %239 = sbr.rel (%p237) target = $region16
        $region15: #{tpu_custom_call.1} parent=11 // pred_region
          _
        $region16: #{tpu_custom_call.1} parent=11 // pred_fallthru
          _
        // Predicated region
        $region17: #{tpu_custom_call.1} parent=11 // pred_check
          %p240 = pneg %p143
        $region18: #{tpu_custom_call.1} parent=11 // pred_check_branch
          %242 = sbr.rel (%p240) target = $region20
        $region19: #{tpu_custom_call.1} parent=11 // pred_region
          _
        $region20: #{tpu_custom_call.1} parent=11 // pred_fallthru
          _
        // Predicated region
        $region21: #{tpu_custom_call.1} parent=11 // pred_check
          %p243 = pneg %p164
        $region22: #{tpu_custom_call.1} parent=11 // pred_check_branch
          %245 = sbr.rel (%p243) target = $region24
        $region23: #{tpu_custom_call.1} parent=11 // pred_region
          _
        $region24: #{tpu_custom_call.1} parent=11 // pred_fallthru
          _
      $region12: #{tpu_custom_call.1} parent=5 // pred_fallthru
        _
      %p246 = scmp.lt.s32.totalorder %s26, 2
      // Predicated region
      $region25: #{tpu_custom_call.1} parent=5 // pred_check
        %p247 = pneg %p246
      $region26: #{tpu_custom_call.1} parent=5 // pred_check_branch
        %249 = sbr.rel (%p247) target = $region28
      $region27: #{tpu_custom_call.1} parent=5 // pred_region
        // Predicated region
        $region29: #{tpu_custom_call.1} parent=27 // pred_check
          %p250 = pneg %p67
        $region30: #{tpu_custom_call.1} parent=27 // pred_check_branch
          %252 = sbr.rel (%p250) target = $region32
        $region31: #{tpu_custom_call.1} parent=27 // pred_region
          %p253 = scmp.lt.s32.totalorder %s33, 1
          %s254 = scalar_select %p253, %s33, 1
          %p255 = scmp.lt.s32.totalorder %s34, 0
          %s256 = scalar_select %p255, %s34, 0
          %s257 = sadd.s32 %s256, %s254
          %s258 = smul.addr %s257, 8
          %s259 = scalar_lea.vmem %s1, %s258
        $region32: #{tpu_custom_call.1} parent=27 // pred_fallthru
          _
        // Predicated region
        $region33: #{tpu_custom_call.1} parent=27 // pred_check
          %p260 = pneg %p95
        $region34: #{tpu_custom_call.1} parent=27 // pred_check_branch
          %262 = sbr.rel (%p260) target = $region36
        $region35: #{tpu_custom_call.1} parent=27 // pred_region
          %s263 = smul.u32 16, %s35
          %p264 = scmp.lt.s32.totalorder %s33, 1
          %s265 = scalar_select %p264, %s33, 1
          %p266 = scmp.lt.s32.totalorder %s263, 15
          %s267 = scalar_select %p266, %s263, 15
          %s268 = smul.addr %s265, 16
          %s269 = sadd.s32 %s267, %s268
          %s270 = smul.addr %s269, 8
          %s271 = scalar_lea.vmem %s2, %s270
          %s272 = smul.u32 16, %s35
        $region36: #{tpu_custom_call.1} parent=27 // pred_fallthru
          _
      $region28: #{tpu_custom_call.1} parent=5 // pred_fallthru
        _
      %p273 = scmp.le.s32.totalorder 1, %s26
      %p274 = scmp.lt.s32.totalorder %s26, 3
      %p275 = pnand %p273, %p274
      %p276 = pneg %p275
      // Predicated region
      $region37: #{tpu_custom_call.1} parent=5 // pred_check
        _
      $region38: #{tpu_custom_call.1} parent=5 // pred_check_branch
        %278 = sbr.rel (%p275) target = $region40
      $region39: #{tpu_custom_call.1} parent=5 // pred_region
        %s279 = ssub.s32 %s26, 1
        %p280 = scmp.lt.s32.totalorder %s36, 1
        %s281 = scalar_select %p280, %s36, 1
        %p282 = scmp.lt.s32.totalorder %s37, 0
        %s283 = scalar_select %p282, %s37, 0
        %s284 = sadd.s32 %s283, %s281
        %s285 = smul.addr %s284, 8
        %s286 = scalar_lea.vmem %s1, %s285
        %p287 = pneg %p73
        %p288 = pneg %p70
        %s289 = smul.u32 16, %s38
        %p290 = scmp.lt.s32.totalorder %s36, 1
        %s291 = scalar_select %p290, %s36, 1
        %p292 = scmp.lt.s32.totalorder %s289, 15
        %s293 = scalar_select %p292, %s289, 15
        %s294 = smul.addr %s291, 16
        %s295 = sadd.s32 %s293, %s294
        %s296 = smul.addr %s295, 8
        %s297 = scalar_lea.vmem %s2, %s296
        %p298 = pneg %p101
        %p299 = pneg %p98
        %p300 = pneg %p122
        %p301 = pneg %p119
        %p302 = pneg %p143
        %p303 = pneg %p140
        %p304 = pneg %p164
        %p305 = pneg %p161
        %p306 = pneg %p192
        %p307 = pneg %p189
        %s308 = sand.u32 %s179, 1
        %s309 = scalar_lea.sflag [#allocation6], %s308
        %s310 = sand.u32 %s179, 1
        %s311 = smul.addr %s310, 8
        %s312 = scalar_lea.vmem [#allocation5], %s311
        %p313 = pneg %p222
        %p314 = pneg %p219
        %s315 = sand.u32 %s209, 1
        %s316 = scalar_lea.sflag [#allocation8], %s315
        %s317 = sand.u32 %s209, 1
        %s318 = smul.addr %s317, 8
        %s319 = scalar_lea.vmem [#allocation7], %s318
        %p320 = scmp.lt.s32.totalorder %s36, 1
        %s321 = scalar_select %p320, %s36, 1
        %p322 = scmp.lt.s32.totalorder %s37, 0
        %s323 = scalar_select %p322, %s37, 0
        %s324 = sadd.s32 %s323, %s321
        %s325 = smul.addr %s324, 8
        %s326 = scalar_lea.vmem %s1, %s325
        %s327 = smul.u32 16, %s38
        %p328 = scmp.lt.s32.totalorder %s36, 1
        %s329 = scalar_select %p328, %s36, 1
        %p330 = scmp.lt.s32.totalorder %s327, 15
        %s331 = scalar_select %p330, %s327, 15
        %s332 = smul.addr %s329, 16
        %s333 = sadd.s32 %s331, %s332
        %s334 = smul.addr %s333, 8
        %s335 = scalar_lea.vmem %s2, %s334
        %s336 = smul.u32 16, %s38
        %s337 = sld [smem:[#allocation4]]
        %s338 = sld [smem:[#allocation4 + $0x1]]
        %p339 = scmp.eq.s32.totalorder %s38, 0
        // Predicated region
        $region41: #{tpu_custom_call.1} parent=39 // pred_check
          %p340 = pneg %p339
        $region42: #{tpu_custom_call.1} parent=39 // pred_check_branch
          %342 = sbr.rel (%p340) target = $region44
        $region43: #{tpu_custom_call.1} parent=39 // pred_region
          %vm343 = vcmask 7168
          %344 = vst.msk [vmem:[#allocation2] sm:$0xff] %vm343, 0.0
        $region44: #{tpu_custom_call.1} parent=39 // pred_fallthru
          _
        %v345 = vld [vmem:[%s326] sm:$0xff]
        %v346 = vld [vmem:[%s335] sm:$0xff]
        %v347 = vld [vmem:[%s335 + $0x8] sm:$0xff]
        %v348 = vld [vmem:[%s335 + $0x10] sm:$0xff]
        %v349 = vld [vmem:[%s335 + $0x18] sm:$0xff]
        %v350 = vld [vmem:[%s335 + $0x20] sm:$0xff]
        %v351 = vld [vmem:[%s335 + $0x28] sm:$0xff]
        %v352 = vld [vmem:[%s335 + $0x30] sm:$0xff]
        %v353 = vld [vmem:[%s335 + $0x38] sm:$0xff]
        %v354 = vld [vmem:[%s335 + $0x40] sm:$0xff]
        %v355 = vld [vmem:[%s335 + $0x48] sm:$0xff]
        %v356 = vld [vmem:[%s335 + $0x50] sm:$0xff]
        %v357 = vld [vmem:[%s335 + $0x58] sm:$0xff]
        %v358 = vld [vmem:[%s335 + $0x60] sm:$0xff]
        %v359 = vld [vmem:[%s335 + $0x68] sm:$0xff]
        %v360 = vld [vmem:[%s335 + $0x70] sm:$0xff]
        %v361 = vld [vmem:[%s335 + $0x78] sm:$0xff]
        %v363 = vcombine.high %v345, %v345
        %v365 = vunpack.c.l.s4 1966171168
        %v366 = vunpack.c.0.s8 %v365
        %v367 = vlaneseq
        %v368 = vshrl.u32 %v367, 7
        %v369 = vsub.s32 %v366, %v368
        %v370 = vrot.slane %v345, %v369
        %v372 = vunpack.c.l.s4 1966171168
        %v373 = vunpack.c.0.s8 %v372
        %v374 = vlaneseq
        %v375 = vshrl.u32 %v374, 7
        %v376 = vsub.s32 %v373, %v375
        %v377 = vrot.slane %v363, %v376
        %v378 = vcombine.high %v370, %v370
        %v379 = vcombine.high %v377, %v377
        %v381 = vunpack.c.l.s4 1966171168
        %v382 = vunpack.c.0.s8 %v381
        %v383 = vlaneseq
        %v384 = vshrl.u32 %v383, 7
        %v385 = vsub.s32 %v382, %v384
        %v386 = vrot.slane %v370, %v385
        %v388 = vunpack.c.l.s4 1966171168
        %v389 = vunpack.c.0.s8 %v388
        %v390 = vlaneseq
        %v391 = vshrl.u32 %v390, 7
        %v392 = vsub.s32 %v389, %v391
        %v393 = vrot.slane %v377, %v392
        %v395 = vunpack.c.l.s4 1966171168
        %v396 = vunpack.c.0.s8 %v395
        %v397 = vlaneseq
        %v398 = vshrl.u32 %v397, 7
        %v399 = vsub.s32 %v396, %v398
        %v400 = vrot.slane %v378, %v399
        %v402 = vunpack.c.l.s4 1966171168
        %v403 = vunpack.c.0.s8 %v402
        %v404 = vlaneseq
        %v405 = vshrl.u32 %v404, 7
        %v406 = vsub.s32 %v403, %v405
        %v407 = vrot.slane %v379, %v406
        %v408 = vcombine.high %v386, %v386
        %v409 = vcombine.high %v393, %v393
        %v410 = vcombine.high %v400, %v400
        %v411 = vcombine.high %v407, %v407
        %v412 = vlaneseq
        %v413 = vshrl.u32 %v412, 7
        %v414 = vsub.s32 0, %v413
        %v415 = vrot.slane %v386, %v414
        %v416 = vlaneseq
        %v417 = vshrl.u32 %v416, 7
        %v418 = vsub.s32 0, %v417
        %v419 = vrot.slane %v400, %v418
        %v420 = vlaneseq
        %v421 = vshrl.u32 %v420, 7
        %v422 = vsub.s32 0, %v421
        %v423 = vrot.slane %v408, %v422
        %v424 = vlaneseq
        %v425 = vshrl.u32 %v424, 7
        %v426 = vsub.s32 0, %v425
        %v427 = vrot.slane %v410, %v426
        %v428 = vlaneseq
        %v429 = vshrl.u32 %v428, 7
        %v430 = vsub.s32 0, %v429
        %v431 = vrot.slane %v393, %v430
        %v432 = vlaneseq
        %v433 = vshrl.u32 %v432, 7
        %v434 = vsub.s32 0, %v433
        %v435 = vrot.slane %v407, %v434
        %v436 = vlaneseq
        %v437 = vshrl.u32 %v436, 7
        %v438 = vsub.s32 0, %v437
        %v439 = vrot.slane %v409, %v438
        %v440 = vlaneseq
        %v441 = vshrl.u32 %v440, 7
        %v442 = vsub.s32 0, %v441
        %v443 = vrot.slane %v411, %v442
        %v452 = vsub.f32 %v415, %v346
        %v453 = vsub.f32 %v415, %v347
        %v454 = vsub.f32 %v415, %v348
        %v455 = vsub.f32 %v415, %v349
        %v456 = vsub.f32 %v415, %v350
        %v457 = vsub.f32 %v415, %v351
        %v458 = vsub.f32 %v415, %v352
        %v459 = vsub.f32 %v415, %v353
        %v460 = vsub.f32 %v415, %v354
        %v461 = vsub.f32 %v415, %v355
        %v462 = vsub.f32 %v415, %v356
        %v463 = vsub.f32 %v415, %v357
        %v464 = vsub.f32 %v415, %v358
        %v465 = vsub.f32 %v415, %v359
        %v466 = vsub.f32 %v415, %v360
        %v467 = vsub.f32 %v415, %v361
        %v468 = vsub.f32 %v419, %v346
        %v469 = vsub.f32 %v419, %v347
        %v470 = vsub.f32 %v419, %v348
        %v471 = vsub.f32 %v419, %v349
        %v472 = vsub.f32 %v419, %v350
        %v473 = vsub.f32 %v419, %v351
        %v474 = vsub.f32 %v419, %v352
        %v475 = vsub.f32 %v419, %v353
        %v476 = vsub.f32 %v419, %v354
        %v477 = vsub.f32 %v419, %v355
        %v478 = vsub.f32 %v419, %v356
        %v479 = vsub.f32 %v419, %v357
        %v480 = vsub.f32 %v419, %v358
        %v481 = vsub.f32 %v419, %v359
        %v482 = vsub.f32 %v419, %v360
        %v483 = vsub.f32 %v419, %v361
        %v484 = vsub.f32 %v423, %v346
        %v485 = vsub.f32 %v423, %v347
        %v486 = vsub.f32 %v423, %v348
        %v487 = vsub.f32 %v423, %v349
        %v488 = vsub.f32 %v423, %v350
        %v489 = vsub.f32 %v423, %v351
        %v490 = vsub.f32 %v423, %v352
        %v491 = vsub.f32 %v423, %v353
        %v492 = vsub.f32 %v423, %v354
        %v493 = vsub.f32 %v423, %v355
        %v494 = vsub.f32 %v423, %v356
        %v495 = vsub.f32 %v423, %v357
        %v496 = vsub.f32 %v423, %v358
        %v497 = vsub.f32 %v423, %v359
        %v498 = vsub.f32 %v423, %v360
        %v499 = vsub.f32 %v423, %v361
        %v500 = vsub.f32 %v427, %v346
        %v501 = vsub.f32 %v427, %v347
        %v502 = vsub.f32 %v427, %v348
        %v503 = vsub.f32 %v427, %v349
        %v504 = vsub.f32 %v427, %v350
        %v505 = vsub.f32 %v427, %v351
        %v506 = vsub.f32 %v427, %v352
        %v507 = vsub.f32 %v427, %v353
        %v508 = vsub.f32 %v427, %v354
        %v509 = vsub.f32 %v427, %v355
        %v510 = vsub.f32 %v427, %v356
        %v511 = vsub.f32 %v427, %v357
        %v512 = vsub.f32 %v427, %v358
        %v513 = vsub.f32 %v427, %v359
        %v514 = vsub.f32 %v427, %v360
        %v515 = vsub.f32 %v427, %v361
        %v516 = vsub.f32 %v431, %v346
        %v517 = vsub.f32 %v431, %v347
        %v518 = vsub.f32 %v431, %v348
        %v519 = vsub.f32 %v431, %v349
        %v520 = vsub.f32 %v431, %v350
        %v521 = vsub.f32 %v431, %v351
        %v522 = vsub.f32 %v431, %v352
        %v523 = vsub.f32 %v431, %v353
        %v524 = vsub.f32 %v431, %v354
        %v525 = vsub.f32 %v431, %v355
        %v526 = vsub.f32 %v431, %v356
        %v527 = vsub.f32 %v431, %v357
        %v528 = vsub.f32 %v431, %v358
        %v529 = vsub.f32 %v431, %v359
        %v530 = vsub.f32 %v431, %v360
        %v531 = vsub.f32 %v431, %v361
        %v532 = vsub.f32 %v435, %v346
        %v533 = vsub.f32 %v435, %v347
        %v534 = vsub.f32 %v435, %v348
        %v535 = vsub.f32 %v435, %v349
        %v536 = vsub.f32 %v435, %v350
        %v537 = vsub.f32 %v435, %v351
        %v538 = vsub.f32 %v435, %v352
        %v539 = vsub.f32 %v435, %v353
        %v540 = vsub.f32 %v435, %v354
        %v541 = vsub.f32 %v435, %v355
        %v542 = vsub.f32 %v435, %v356
        %v543 = vsub.f32 %v435, %v357
        %v544 = vsub.f32 %v435, %v358
        %v545 = vsub.f32 %v435, %v359
        %v546 = vsub.f32 %v435, %v360
        %v547 = vsub.f32 %v435, %v361
        %v548 = vsub.f32 %v439, %v346
        %v549 = vsub.f32 %v439, %v347
        %v550 = vsub.f32 %v439, %v348
        %v551 = vsub.f32 %v439, %v349
        %v552 = vsub.f32 %v439, %v350
        %v553 = vsub.f32 %v439, %v351
        %v554 = vsub.f32 %v439, %v352
        %v555 = vsub.f32 %v439, %v353
        %v556 = vsub.f32 %v439, %v354
        %v557 = vsub.f32 %v439, %v355
        %v558 = vsub.f32 %v439, %v356
        %v559 = vsub.f32 %v439, %v357
        %v560 = vsub.f32 %v439, %v358
        %v561 = vsub.f32 %v439, %v359
        %v562 = vsub.f32 %v439, %v360
        %v563 = vsub.f32 %v439, %v361
        %v564 = vsub.f32 %v443, %v346
        %v565 = vsub.f32 %v443, %v347
        %v566 = vsub.f32 %v443, %v348
        %v567 = vsub.f32 %v443, %v349
        %v568 = vsub.f32 %v443, %v350
        %v569 = vsub.f32 %v443, %v351
        %v570 = vsub.f32 %v443, %v352
        %v571 = vsub.f32 %v443, %v353
        %v572 = vsub.f32 %v443, %v354
        %v573 = vsub.f32 %v443, %v355
        %v574 = vsub.f32 %v443, %v356
        %v575 = vsub.f32 %v443, %v357
        %v576 = vsub.f32 %v443, %v358
        %v577 = vsub.f32 %v443, %v359
        %v578 = vsub.f32 %v443, %v360
        %v579 = vsub.f32 %v443, %v361
        %v580 = vand.u32 2147483647, %v452
        %v581 = vand.u32 2147483647, %v453
        %v582 = vand.u32 2147483647, %v454
        %v583 = vand.u32 2147483647, %v455
        %v584 = vand.u32 2147483647, %v456
        %v585 = vand.u32 2147483647, %v457
        %v586 = vand.u32 2147483647, %v458
        %v587 = vand.u32 2147483647, %v459
        %v588 = vand.u32 2147483647, %v460
        %v589 = vand.u32 2147483647, %v461
        %v590 = vand.u32 2147483647, %v462
        %v591 = vand.u32 2147483647, %v463
        %v592 = vand.u32 2147483647, %v464
        %v593 = vand.u32 2147483647, %v465
        %v594 = vand.u32 2147483647, %v466
        %v595 = vand.u32 2147483647, %v467
        %v596 = vand.u32 2147483647, %v468
        %v597 = vand.u32 2147483647, %v469
        %v598 = vand.u32 2147483647, %v470
        %v599 = vand.u32 2147483647, %v471
        %v600 = vand.u32 2147483647, %v472
        %v601 = vand.u32 2147483647, %v473
        %v602 = vand.u32 2147483647, %v474
        %v603 = vand.u32 2147483647, %v475
        %v604 = vand.u32 2147483647, %v476
        %v605 = vand.u32 2147483647, %v477
        %v606 = vand.u32 2147483647, %v478
        %v607 = vand.u32 2147483647, %v479
        %v608 = vand.u32 2147483647, %v480
        %v609 = vand.u32 2147483647, %v481
        %v610 = vand.u32 2147483647, %v482
        %v611 = vand.u32 2147483647, %v483
        %v612 = vand.u32 2147483647, %v484
        %v613 = vand.u32 2147483647, %v485
        %v614 = vand.u32 2147483647, %v486
        %v615 = vand.u32 2147483647, %v487
        %v616 = vand.u32 2147483647, %v488
        %v617 = vand.u32 2147483647, %v489
        %v618 = vand.u32 2147483647, %v490
        %v619 = vand.u32 2147483647, %v491
        %v620 = vand.u32 2147483647, %v492
        %v621 = vand.u32 2147483647, %v493
        %v622 = vand.u32 2147483647, %v494
        %v623 = vand.u32 2147483647, %v495
        %v624 = vand.u32 2147483647, %v496
        %v625 = vand.u32 2147483647, %v497
        %v626 = vand.u32 2147483647, %v498
        %v627 = vand.u32 2147483647, %v499
        %v628 = vand.u32 2147483647, %v500
        %v629 = vand.u32 2147483647, %v501
        %v630 = vand.u32 2147483647, %v502
        %v631 = vand.u32 2147483647, %v503
        %v632 = vand.u32 2147483647, %v504
        %v633 = vand.u32 2147483647, %v505
        %v634 = vand.u32 2147483647, %v506
        %v635 = vand.u32 2147483647, %v507
        %v636 = vand.u32 2147483647, %v508
        %v637 = vand.u32 2147483647, %v509
        %v638 = vand.u32 2147483647, %v510
        %v639 = vand.u32 2147483647, %v511
        %v640 = vand.u32 2147483647, %v512
        %v641 = vand.u32 2147483647, %v513
        %v642 = vand.u32 2147483647, %v514
        %v643 = vand.u32 2147483647, %v515
        %v644 = vand.u32 2147483647, %v516
        %v645 = vand.u32 2147483647, %v517
        %v646 = vand.u32 2147483647, %v518
        %v647 = vand.u32 2147483647, %v519
        %v648 = vand.u32 2147483647, %v520
        %v649 = vand.u32 2147483647, %v521
        %v650 = vand.u32 2147483647, %v522
        %v651 = vand.u32 2147483647, %v523
        %v652 = vand.u32 2147483647, %v524
        %v653 = vand.u32 2147483647, %v525
        %v654 = vand.u32 2147483647, %v526
        %v655 = vand.u32 2147483647, %v527
        %v656 = vand.u32 2147483647, %v528
        %v657 = vand.u32 2147483647, %v529
        %v658 = vand.u32 2147483647, %v530
        %v659 = vand.u32 2147483647, %v531
        %v660 = vand.u32 2147483647, %v532
        %v661 = vand.u32 2147483647, %v533
        %v662 = vand.u32 2147483647, %v534
        %v663 = vand.u32 2147483647, %v535
        %v664 = vand.u32 2147483647, %v536
        %v665 = vand.u32 2147483647, %v537
        %v666 = vand.u32 2147483647, %v538
        %v667 = vand.u32 2147483647, %v539
        %v668 = vand.u32 2147483647, %v540
        %v669 = vand.u32 2147483647, %v541
        %v670 = vand.u32 2147483647, %v542
        %v671 = vand.u32 2147483647, %v543
        %v672 = vand.u32 2147483647, %v544
        %v673 = vand.u32 2147483647, %v545
        %v674 = vand.u32 2147483647, %v546
        %v675 = vand.u32 2147483647, %v547
        %v676 = vand.u32 2147483647, %v548
        %v677 = vand.u32 2147483647, %v549
        %v678 = vand.u32 2147483647, %v550
        %v679 = vand.u32 2147483647, %v551
        %v680 = vand.u32 2147483647, %v552
        %v681 = vand.u32 2147483647, %v553
        %v682 = vand.u32 2147483647, %v554
        %v683 = vand.u32 2147483647, %v555
        %v684 = vand.u32 2147483647, %v556
        %v685 = vand.u32 2147483647, %v557
        %v686 = vand.u32 2147483647, %v558
        %v687 = vand.u32 2147483647, %v559
        %v688 = vand.u32 2147483647, %v560
        %v689 = vand.u32 2147483647, %v561
        %v690 = vand.u32 2147483647, %v562
        %v691 = vand.u32 2147483647, %v563
        %v692 = vand.u32 2147483647, %v564
        %v693 = vand.u32 2147483647, %v565
        %v694 = vand.u32 2147483647, %v566
        %v695 = vand.u32 2147483647, %v567
        %v696 = vand.u32 2147483647, %v568
        %v697 = vand.u32 2147483647, %v569
        %v698 = vand.u32 2147483647, %v570
        %v699 = vand.u32 2147483647, %v571
        %v700 = vand.u32 2147483647, %v572
        %v701 = vand.u32 2147483647, %v573
        %v702 = vand.u32 2147483647, %v574
        %v703 = vand.u32 2147483647, %v575
        %v704 = vand.u32 2147483647, %v576
        %v705 = vand.u32 2147483647, %v577
        %v706 = vand.u32 2147483647, %v578
        %v707 = vand.u32 2147483647, %v579
        %v708 = vld [vmem:[%s3] sm:$0xff]
        %v709 = vld [vmem:[%s3 + $0x8] sm:$0xff]
        %v710 = vld [vmem:[%s3 + $0x10] sm:$0xff]
        %v711 = vld [vmem:[%s3 + $0x18] sm:$0xff]
        %v712 = vld [vmem:[%s4] sm:$0x1]
        %v714 = vlaneseq
        %v715 = vshrl.u32 %v714, 7
        %v716 = vsub.s32 0, %v715
        %v717 = vrot.slane %v712, %v716
        %vm719 = vcmask 261120
        %v721 = vsel %vm719, %v580, 0
        %v724 = vsel %vm719, %v581, 0
        %v727 = vsel %vm719, %v582, 0
        %v730 = vsel %vm719, %v583, 0
        %v733 = vsel %vm719, %v584, 0
        %v736 = vsel %vm719, %v585, 0
        %v739 = vsel %vm719, %v586, 0
        %v742 = vsel %vm719, %v587, 0
        %v745 = vsel %vm719, %v588, 0
        %v748 = vsel %vm719, %v589, 0
        %v751 = vsel %vm719, %v590, 0
        %v754 = vsel %vm719, %v591, 0
        %v757 = vsel %vm719, %v592, 0
        %v760 = vsel %vm719, %v593, 0
        %v763 = vsel %vm719, %v594, 0
        %v766 = vsel %vm719, %v595, 0
        %v769 = vsel %vm719, %v596, 0
        %v772 = vsel %vm719, %v597, 0
        %v775 = vsel %vm719, %v598, 0
        %v778 = vsel %vm719, %v599, 0
        %v781 = vsel %vm719, %v600, 0
        %v784 = vsel %vm719, %v601, 0
        %v787 = vsel %vm719, %v602, 0
        %v790 = vsel %vm719, %v603, 0
        %v793 = vsel %vm719, %v604, 0
        %v796 = vsel %vm719, %v605, 0
        %v799 = vsel %vm719, %v606, 0
        %v802 = vsel %vm719, %v607, 0
        %v805 = vsel %vm719, %v608, 0
        %v808 = vsel %vm719, %v609, 0
        %v811 = vsel %vm719, %v610, 0
        %v814 = vsel %vm719, %v611, 0
        %v817 = vsel %vm719, %v612, 0
        %v820 = vsel %vm719, %v613, 0
        %v823 = vsel %vm719, %v614, 0
        %v826 = vsel %vm719, %v615, 0
        %v829 = vsel %vm719, %v616, 0
        %v832 = vsel %vm719, %v617, 0
        %v835 = vsel %vm719, %v618, 0
        %v838 = vsel %vm719, %v619, 0
        %v841 = vsel %vm719, %v620, 0
        %v844 = vsel %vm719, %v621, 0
        %v847 = vsel %vm719, %v622, 0
        %v850 = vsel %vm719, %v623, 0
        %v853 = vsel %vm719, %v624, 0
        %v856 = vsel %vm719, %v625, 0
        %v859 = vsel %vm719, %v626, 0
        %v862 = vsel %vm719, %v627, 0
        %v865 = vsel %vm719, %v628, 0
        %v868 = vsel %vm719, %v629, 0
        %v871 = vsel %vm719, %v630, 0
        %v874 = vsel %vm719, %v631, 0
        %v877 = vsel %vm719, %v632, 0
        %v880 = vsel %vm719, %v633, 0
        %v883 = vsel %vm719, %v634, 0
        %v886 = vsel %vm719, %v635, 0
        %v889 = vsel %vm719, %v636, 0
        %v892 = vsel %vm719, %v637, 0
        %v895 = vsel %vm719, %v638, 0
        %v898 = vsel %vm719, %v639, 0
        %v901 = vsel %vm719, %v640, 0
        %v904 = vsel %vm719, %v641, 0
        %v907 = vsel %vm719, %v642, 0
        %v910 = vsel %vm719, %v643, 0
        %v913 = vsel %vm719, %v644, 0
        %v916 = vsel %vm719, %v645, 0
        %v919 = vsel %vm719, %v646, 0
        %v922 = vsel %vm719, %v647, 0
        %v925 = vsel %vm719, %v648, 0
        %v928 = vsel %vm719, %v649, 0
        %v931 = vsel %vm719, %v650, 0
        %v934 = vsel %vm719, %v651, 0
        %v937 = vsel %vm719, %v652, 0
        %v940 = vsel %vm719, %v653, 0
        %v943 = vsel %vm719, %v654, 0
        %v946 = vsel %vm719, %v655, 0
        %v949 = vsel %vm719, %v656, 0
        %v952 = vsel %vm719, %v657, 0
        %v955 = vsel %vm719, %v658, 0
        %v958 = vsel %vm719, %v659, 0
        %v961 = vsel %vm719, %v660, 0
        %v964 = vsel %vm719, %v661, 0
        %v967 = vsel %vm719, %v662, 0
        %v970 = vsel %vm719, %v663, 0
        %v973 = vsel %vm719, %v664, 0
        %v976 = vsel %vm719, %v665, 0
        %v979 = vsel %vm719, %v666, 0
        %v982 = vsel %vm719, %v667, 0
        %v985 = vsel %vm719, %v668, 0
        %v988 = vsel %vm719, %v669, 0
        %v991 = vsel %vm719, %v670, 0
        %v994 = vsel %vm719, %v671, 0
        %v997 = vsel %vm719, %v672, 0
        %v1000 = vsel %vm719, %v673, 0
        %v1003 = vsel %vm719, %v674, 0
        %v1006 = vsel %vm719, %v675, 0
        %v1009 = vsel %vm719, %v676, 0
        %v1012 = vsel %vm719, %v677, 0
        %v1015 = vsel %vm719, %v678, 0
        %v1018 = vsel %vm719, %v679, 0
        %v1021 = vsel %vm719, %v680, 0
        %v1024 = vsel %vm719, %v681, 0
        %v1027 = vsel %vm719, %v682, 0
        %v1030 = vsel %vm719, %v683, 0
        %v1033 = vsel %vm719, %v684, 0
        %v1036 = vsel %vm719, %v685, 0
        %v1039 = vsel %vm719, %v686, 0
        %v1042 = vsel %vm719, %v687, 0
        %v1045 = vsel %vm719, %v688, 0
        %v1048 = vsel %vm719, %v689, 0
        %v1051 = vsel %vm719, %v690, 0
        %v1054 = vsel %vm719, %v691, 0
        %v1057 = vsel %vm719, %v692, 0
        %v1060 = vsel %vm719, %v693, 0
        %v1063 = vsel %vm719, %v694, 0
        %v1066 = vsel %vm719, %v695, 0
        %v1069 = vsel %vm719, %v696, 0
        %v1072 = vsel %vm719, %v697, 0
        %v1075 = vsel %vm719, %v698, 0
        %v1078 = vsel %vm719, %v699, 0
        %v1081 = vsel %vm719, %v700, 0
        %v1084 = vsel %vm719, %v701, 0
        %v1087 = vsel %vm719, %v702, 0
        %v1090 = vsel %vm719, %v703, 0
        %v1093 = vsel %vm719, %v704, 0
        %v1096 = vsel %vm719, %v705, 0
        %v1099 = vsel %vm719, %v706, 0
        %v1102 = vsel %vm719, %v707, 0
        %1104 = vmatprep.subr.mxu0 0.0
        %1105 = vmatpush1.msra.mxu0 0.0
        %1106 = vmatprep.subr.mxu0 0.0
        %1107 = vmatpush1.msra.mxu0 0.0
        %1108 = vmatprep.subr.mxu0 0.0
        %1109 = vmatpush1.msra.mxu0 0.0
        %1110 = vmatprep.subr.mxu0 0.0
        %1111 = vmatpush1.msra.mxu0 0.0
        %1112 = vmatprep.subr.mxu0 0.0
        %1113 = vmatpush1.msra.mxu0 0.0
        %1114 = vmatprep.subr.mxu0 0.0
        %1115 = vmatpush1.msra.mxu0 0.0
        %1116 = vmatprep.subr.mxu0 0.0
        %1117 = vmatpush1.msra.mxu0 0.0
        %1118 = vmatprep.subr.mxu0 0.0
        %1119 = vmatpush1.msra.mxu0 0.0
        %1120 = vmatprep.subr.mxu0 0.0
        %1121 = vmatpush1.msra.mxu0 0.0
        %1122 = vmatprep.subr.mxu0 0.0
        %1123 = vmatpush1.msra.mxu0 0.0
        %1124 = vmatprep.subr.mxu0 0.0
        %1125 = vmatpush1.msra.mxu0 0.0
        %1126 = vmatprep.subr.mxu0 0.0
        %1127 = vmatpush1.msra.mxu0 0.0
        %1128 = vmatprep.subr.mxu0 0.0
        %v1129 = vand.u32 %v711, 4294901760
        %1130 = vmatpush1.msra.mxu0 %v1129
        %1131 = vmatprep.subr.mxu0 0.0
        %v1132 = vand.u32 %v710, 4294901760
        %1133 = vmatpush1.msra.mxu0 %v1132
        %1134 = vmatprep.subr.mxu0 0.0
        %v1135 = vand.u32 %v709, 4294901760
        %1136 = vmatpush1.msra.mxu0 %v1135
        %1137 = vmatprep.subr.mxu0 0.0
        %v1138 = vand.u32 %v708, 4294901760
        %1139 = vmatpush1.msra.mxu0 %v1138
        %1140 = vmatprep.subr.mxu0 0.0
        %1141 = vmatpush2.msra.mxu0 0.0
        %1142 = vmatprep.subr.mxu0 0.0
        %1143 = vmatpush2.msra.mxu0 0.0
        %1144 = vmatprep.subr.mxu0 0.0
        %1145 = vmatpush2.msra.mxu0 0.0
        %1146 = vmatprep.subr.mxu0 0.0
        %1147 = vmatpush2.msra.mxu0 0.0
        %1148 = vmatprep.subr.mxu0 0.0
        %1149 = vmatpush2.msra.mxu0 0.0
        %1150 = vmatprep.subr.mxu0 0.0
        %1151 = vmatpush2.msra.mxu0 0.0
        %1152 = vmatprep.subr.mxu0 0.0
        %1153 = vmatpush2.msra.mxu0 0.0
        %1154 = vmatprep.subr.mxu0 0.0
        %1155 = vmatpush2.msra.mxu0 0.0
        %1156 = vmatprep.subr.mxu0 0.0
        %1157 = vmatpush2.msra.mxu0 0.0
        %1158 = vmatprep.subr.mxu0 0.0
        %1159 = vmatpush2.msra.mxu0 0.0
        %1160 = vmatprep.subr.mxu0 0.0
        %1161 = vmatpush2.msra.mxu0 0.0
        %1162 = vmatprep.subr.mxu0 0.0
        %1163 = vmatpush2.msra.mxu0 0.0
        %1164 = vmatprep.subr.mxu0 0.0
        %1165 = vmatpush2.msra.mxu0 0.0
        %1166 = vmatprep.subr.mxu0 0.0
        %1167 = vmatpush2.msra.mxu0 0.0
        %1168 = vmatprep.subr.mxu0 0.0
        %1169 = vmatpush2.msra.mxu0 0.0
        %1170 = vmatprep.subr.mxu0 0.0
        %1171 = vmatpush2.msra.mxu0 0.0
        %1172 = vmatprep.mubr.f32.mxu0 0.0
        %v1173 = vand.u32 %v721, 4294901760
        %v1174 = vsub.f32 %v721, %v1173
        %v1175 = vand.u32 %v1174, 4294901760
        %v1176 = vsub.f32 %v1174, %v1175
        %v1177 = vand.u32 %v1176, 4294901760
        %1178 = vmatmul.mubr.f32.gmra.mxu0 %v1177
        %v1179 = vpop.f32.mrf.mxu0
        %v1180 = vadd.f32 %v717, %v1179
        %v1181 = vpop.f32.mrf.mxu0
        %1182 = vmatprep.mubr.f32.mxu0 0.0
        %v1183 = vand.u32 %v724, 4294901760
        %v1184 = vsub.f32 %v724, %v1183
        %v1185 = vand.u32 %v1184, 4294901760
        %v1186 = vsub.f32 %v1184, %v1185
        %v1187 = vand.u32 %v1186, 4294901760
        %1188 = vmatmul.mubr.f32.gmra.mxu0 %v1187
        %v1189 = vpop.f32.mrf.mxu0
        %v1190 = vadd.f32 %v717, %v1189
        %v1191 = vpop.f32.mrf.mxu0
        %1192 = vmatprep.mubr.f32.mxu0 0.0
        %v1193 = vand.u32 %v727, 4294901760
        %v1194 = vsub.f32 %v727, %v1193
        %v1195 = vand.u32 %v1194, 4294901760
        %v1196 = vsub.f32 %v1194, %v1195
        %v1197 = vand.u32 %v1196, 4294901760
        %1198 = vmatmul.mubr.f32.gmra.mxu0 %v1197
        %v1199 = vpop.f32.mrf.mxu0
        %v1200 = vadd.f32 %v717, %v1199
        %v1201 = vpop.f32.mrf.mxu0
        %1202 = vmatprep.mubr.f32.mxu0 0.0
        %v1203 = vand.u32 %v730, 4294901760
        %v1204 = vsub.f32 %v730, %v1203
        %v1205 = vand.u32 %v1204, 4294901760
        %v1206 = vsub.f32 %v1204, %v1205
        %v1207 = vand.u32 %v1206, 4294901760
        %1208 = vmatmul.mubr.f32.gmra.mxu0 %v1207
        %v1209 = vpop.f32.mrf.mxu0
        %v1210 = vadd.f32 %v717, %v1209
        %v1211 = vpop.f32.mrf.mxu0
        %1212 = vmatprep.mubr.f32.mxu0 0.0
        %v1213 = vand.u32 %v733, 4294901760
        %v1214 = vsub.f32 %v733, %v1213
        %v1215 = vand.u32 %v1214, 4294901760
        %v1216 = vsub.f32 %v1214, %v1215
        %v1217 = vand.u32 %v1216, 4294901760
        %1218 = vmatmul.mubr.f32.gmra.mxu0 %v1217
        %v1219 = vpop.f32.mrf.mxu0
        %v1220 = vadd.f32 %v717, %v1219
        %v1221 = vpop.f32.mrf.mxu0
        %1222 = vmatprep.mubr.f32.mxu0 0.0
        %v1223 = vand.u32 %v736, 4294901760
        %v1224 = vsub.f32 %v736, %v1223
        %v1225 = vand.u32 %v1224, 4294901760
        %v1226 = vsub.f32 %v1224, %v1225
        %v1227 = vand.u32 %v1226, 4294901760
        %1228 = vmatmul.mubr.f32.gmra.mxu0 %v1227
        %v1229 = vpop.f32.mrf.mxu0
        %v1230 = vadd.f32 %v717, %v1229
        %v1231 = vpop.f32.mrf.mxu0
        %1232 = vmatprep.mubr.f32.mxu0 0.0
        %v1233 = vand.u32 %v739, 4294901760
        %v1234 = vsub.f32 %v739, %v1233
        %v1235 = vand.u32 %v1234, 4294901760
        %v1236 = vsub.f32 %v1234, %v1235
        %v1237 = vand.u32 %v1236, 4294901760
        %1238 = vmatmul.mubr.f32.gmra.mxu0 %v1237
        %v1239 = vpop.f32.mrf.mxu0
        %v1240 = vadd.f32 %v717, %v1239
        %v1241 = vpop.f32.mrf.mxu0
        %1242 = vmatprep.mubr.f32.mxu0 0.0
        %v1243 = vand.u32 %v742, 4294901760
        %v1244 = vsub.f32 %v742, %v1243
        %v1245 = vand.u32 %v1244, 4294901760
        %v1246 = vsub.f32 %v1244, %v1245
        %v1247 = vand.u32 %v1246, 4294901760
        %1248 = vmatmul.mubr.f32.gmra.mxu0 %v1247
        %v1249 = vpop.f32.mrf.mxu0
        %v1250 = vadd.f32 %v717, %v1249
        %v1251 = vpop.f32.mrf.mxu0
        %1252 = vmatprep.mubr.f32.mxu0 0.0
        %v1253 = vand.u32 %v745, 4294901760
        %v1254 = vsub.f32 %v745, %v1253
        %v1255 = vand.u32 %v1254, 4294901760
        %v1256 = vsub.f32 %v1254, %v1255
        %v1257 = vand.u32 %v1256, 4294901760
        %1258 = vmatmul.mubr.f32.gmra.mxu0 %v1257
        %v1259 = vpop.f32.mrf.mxu0
        %v1260 = vadd.f32 %v717, %v1259
        %v1261 = vpop.f32.mrf.mxu0
        %1262 = vmatprep.mubr.f32.mxu0 0.0
        %v1263 = vand.u32 %v748, 4294901760
        %v1264 = vsub.f32 %v748, %v1263
        %v1265 = vand.u32 %v1264, 4294901760
        %v1266 = vsub.f32 %v1264, %v1265
        %v1267 = vand.u32 %v1266, 4294901760
        %1268 = vmatmul.mubr.f32.gmra.mxu0 %v1267
        %v1269 = vpop.f32.mrf.mxu0
        %v1270 = vadd.f32 %v717, %v1269
        %v1271 = vpop.f32.mrf.mxu0
        %1272 = vmatprep.mubr.f32.mxu0 0.0
        %v1273 = vand.u32 %v751, 4294901760
        %v1274 = vsub.f32 %v751, %v1273
        %v1275 = vand.u32 %v1274, 4294901760
        %v1276 = vsub.f32 %v1274, %v1275
        %v1277 = vand.u32 %v1276, 4294901760
        %1278 = vmatmul.mubr.f32.gmra.mxu0 %v1277
        %v1279 = vpop.f32.mrf.mxu0
        %v1280 = vadd.f32 %v717, %v1279
        %v1281 = vpop.f32.mrf.mxu0
        %1282 = vmatprep.mubr.f32.mxu0 0.0
        %v1283 = vand.u32 %v754, 4294901760
        %v1284 = vsub.f32 %v754, %v1283
        %v1285 = vand.u32 %v1284, 4294901760
        %v1286 = vsub.f32 %v1284, %v1285
        %v1287 = vand.u32 %v1286, 4294901760
        %1288 = vmatmul.mubr.f32.gmra.mxu0 %v1287
        %v1289 = vpop.f32.mrf.mxu0
        %v1290 = vadd.f32 %v717, %v1289
        %v1291 = vpop.f32.mrf.mxu0
        %1292 = vmatprep.mubr.f32.mxu0 0.0
        %v1293 = vand.u32 %v757, 4294901760
        %v1294 = vsub.f32 %v757, %v1293
        %v1295 = vand.u32 %v1294, 4294901760
        %v1296 = vsub.f32 %v1294, %v1295
        %v1297 = vand.u32 %v1296, 4294901760
        %1298 = vmatmul.mubr.f32.gmra.mxu0 %v1297
        %v1299 = vpop.f32.mrf.mxu0
        %v1300 = vadd.f32 %v717, %v1299
        %v1301 = vpop.f32.mrf.mxu0
        %1302 = vmatprep.mubr.f32.mxu0 0.0
        %v1303 = vand.u32 %v760, 4294901760
        %v1304 = vsub.f32 %v760, %v1303
        %v1305 = vand.u32 %v1304, 4294901760
        %v1306 = vsub.f32 %v1304, %v1305
        %v1307 = vand.u32 %v1306, 4294901760
        %1308 = vmatmul.mubr.f32.gmra.mxu0 %v1307
        %v1309 = vpop.f32.mrf.mxu0
        %v1310 = vadd.f32 %v717, %v1309
        %v1311 = vpop.f32.mrf.mxu0
        %1312 = vmatprep.mubr.f32.mxu0 0.0
        %v1313 = vand.u32 %v763, 4294901760
        %v1314 = vsub.f32 %v763, %v1313
        %v1315 = vand.u32 %v1314, 4294901760
        %v1316 = vsub.f32 %v1314, %v1315
        %v1317 = vand.u32 %v1316, 4294901760
        %1318 = vmatmul.mubr.f32.gmra.mxu0 %v1317
        %v1319 = vpop.f32.mrf.mxu0
        %v1320 = vadd.f32 %v717, %v1319
        %v1321 = vpop.f32.mrf.mxu0
        %1322 = vmatprep.mubr.f32.mxu0 0.0
        %v1323 = vand.u32 %v766, 4294901760
        %v1324 = vsub.f32 %v766, %v1323
        %v1325 = vand.u32 %v1324, 4294901760
        %v1326 = vsub.f32 %v1324, %v1325
        %v1327 = vand.u32 %v1326, 4294901760
        %1328 = vmatmul.mubr.f32.gmra.mxu0 %v1327
        %v1329 = vpop.f32.mrf.mxu0
        %v1330 = vadd.f32 %v717, %v1329
        %v1331 = vpop.f32.mrf.mxu0
        %1332 = vmatprep.mubr.f32.mxu0 0.0
        %v1333 = vand.u32 %v769, 4294901760
        %v1334 = vsub.f32 %v769, %v1333
        %v1335 = vand.u32 %v1334, 4294901760
        %v1336 = vsub.f32 %v1334, %v1335
        %v1337 = vand.u32 %v1336, 4294901760
        %1338 = vmatmul.mubr.f32.gmra.mxu0 %v1337
        %v1339 = vpop.f32.mrf.mxu0
        %v1340 = vadd.f32 %v717, %v1339
        %v1341 = vpop.f32.mrf.mxu0
        %1342 = vmatprep.mubr.f32.mxu0 0.0
        %v1343 = vand.u32 %v772, 4294901760
        %v1344 = vsub.f32 %v772, %v1343
        %v1345 = vand.u32 %v1344, 4294901760
        %v1346 = vsub.f32 %v1344, %v1345
        %v1347 = vand.u32 %v1346, 4294901760
        %1348 = vmatmul.mubr.f32.gmra.mxu0 %v1347
        %v1349 = vpop.f32.mrf.mxu0
        %v1350 = vadd.f32 %v717, %v1349
        %v1351 = vpop.f32.mrf.mxu0
        %1352 = vmatprep.mubr.f32.mxu0 0.0
        %v1353 = vand.u32 %v775, 4294901760
        %v1354 = vsub.f32 %v775, %v1353
        %v1355 = vand.u32 %v1354, 4294901760
        %v1356 = vsub.f32 %v1354, %v1355
        %v1357 = vand.u32 %v1356, 4294901760
        %1358 = vmatmul.mubr.f32.gmra.mxu0 %v1357
        %v1359 = vpop.f32.mrf.mxu0
        %v1360 = vadd.f32 %v717, %v1359
        %v1361 = vpop.f32.mrf.mxu0
        %1362 = vmatprep.mubr.f32.mxu0 0.0
        %v1363 = vand.u32 %v778, 4294901760
        %v1364 = vsub.f32 %v778, %v1363
        %v1365 = vand.u32 %v1364, 4294901760
        %v1366 = vsub.f32 %v1364, %v1365
        %v1367 = vand.u32 %v1366, 4294901760
        %1368 = vmatmul.mubr.f32.gmra.mxu0 %v1367
        %v1369 = vpop.f32.mrf.mxu0
        %v1370 = vadd.f32 %v717, %v1369
        %v1371 = vpop.f32.mrf.mxu0
        %1372 = vmatprep.mubr.f32.mxu0 0.0
        %v1373 = vand.u32 %v781, 4294901760
        %v1374 = vsub.f32 %v781, %v1373
        %v1375 = vand.u32 %v1374, 4294901760
        %v1376 = vsub.f32 %v1374, %v1375
        %v1377 = vand.u32 %v1376, 4294901760
        %1378 = vmatmul.mubr.f32.gmra.mxu0 %v1377
        %v1379 = vpop.f32.mrf.mxu0
        %v1380 = vadd.f32 %v717, %v1379
        %v1381 = vpop.f32.mrf.mxu0
        %1382 = vmatprep.mubr.f32.mxu0 0.0
        %v1383 = vand.u32 %v784, 4294901760
        %v1384 = vsub.f32 %v784, %v1383
        %v1385 = vand.u32 %v1384, 4294901760
        %v1386 = vsub.f32 %v1384, %v1385
        %v1387 = vand.u32 %v1386, 4294901760
        %1388 = vmatmul.mubr.f32.gmra.mxu0 %v1387
        %v1389 = vpop.f32.mrf.mxu0
        %v1390 = vadd.f32 %v717, %v1389
        %v1391 = vpop.f32.mrf.mxu0
        %1392 = vmatprep.mubr.f32.mxu0 0.0
        %v1393 = vand.u32 %v787, 4294901760
        %v1394 = vsub.f32 %v787, %v1393
        %v1395 = vand.u32 %v1394, 4294901760
        %v1396 = vsub.f32 %v1394, %v1395
        %v1397 = vand.u32 %v1396, 4294901760
        %1398 = vmatmul.mubr.f32.gmra.mxu0 %v1397
        %v1399 = vpop.f32.mrf.mxu0
        %v1400 = vadd.f32 %v717, %v1399
        %v1401 = vpop.f32.mrf.mxu0
        %1402 = vmatprep.mubr.f32.mxu0 0.0
        %v1403 = vand.u32 %v790, 4294901760
        %v1404 = vsub.f32 %v790, %v1403
        %v1405 = vand.u32 %v1404, 4294901760
        %v1406 = vsub.f32 %v1404, %v1405
        %v1407 = vand.u32 %v1406, 4294901760
        %1408 = vmatmul.mubr.f32.gmra.mxu0 %v1407
        %v1409 = vpop.f32.mrf.mxu0
        %v1410 = vadd.f32 %v717, %v1409
        %v1411 = vpop.f32.mrf.mxu0
        %1412 = vmatprep.mubr.f32.mxu0 0.0
        %v1413 = vand.u32 %v793, 4294901760
        %v1414 = vsub.f32 %v793, %v1413
        %v1415 = vand.u32 %v1414, 4294901760
        %v1416 = vsub.f32 %v1414, %v1415
        %v1417 = vand.u32 %v1416, 4294901760
        %1418 = vmatmul.mubr.f32.gmra.mxu0 %v1417
        %v1419 = vpop.f32.mrf.mxu0
        %v1420 = vadd.f32 %v717, %v1419
        %v1421 = vpop.f32.mrf.mxu0
        %1422 = vmatprep.mubr.f32.mxu0 0.0
        %v1423 = vand.u32 %v796, 4294901760
        %v1424 = vsub.f32 %v796, %v1423
        %v1425 = vand.u32 %v1424, 4294901760
        %v1426 = vsub.f32 %v1424, %v1425
        %v1427 = vand.u32 %v1426, 4294901760
        %1428 = vmatmul.mubr.f32.gmra.mxu0 %v1427
        %v1429 = vpop.f32.mrf.mxu0
        %v1430 = vadd.f32 %v717, %v1429
        %v1431 = vpop.f32.mrf.mxu0
        %1432 = vmatprep.mubr.f32.mxu0 0.0
        %v1433 = vand.u32 %v799, 4294901760
        %v1434 = vsub.f32 %v799, %v1433
        %v1435 = vand.u32 %v1434, 4294901760
        %v1436 = vsub.f32 %v1434, %v1435
        %v1437 = vand.u32 %v1436, 4294901760
        %1438 = vmatmul.mubr.f32.gmra.mxu0 %v1437
        %v1439 = vpop.f32.mrf.mxu0
        %v1440 = vadd.f32 %v717, %v1439
        %v1441 = vpop.f32.mrf.mxu0
        %1442 = vmatprep.mubr.f32.mxu0 0.0
        %v1443 = vand.u32 %v802, 4294901760
        %v1444 = vsub.f32 %v802, %v1443
        %v1445 = vand.u32 %v1444, 4294901760
        %v1446 = vsub.f32 %v1444, %v1445
        %v1447 = vand.u32 %v1446, 4294901760
        %1448 = vmatmul.mubr.f32.gmra.mxu0 %v1447
        %v1449 = vpop.f32.mrf.mxu0
        %v1450 = vadd.f32 %v717, %v1449
        %v1451 = vpop.f32.mrf.mxu0
        %1452 = vmatprep.mubr.f32.mxu0 0.0
        %v1453 = vand.u32 %v805, 4294901760
        %v1454 = vsub.f32 %v805, %v1453
        %v1455 = vand.u32 %v1454, 4294901760
        %v1456 = vsub.f32 %v1454, %v1455
        %v1457 = vand.u32 %v1456, 4294901760
        %1458 = vmatmul.mubr.f32.gmra.mxu0 %v1457
        %v1459 = vpop.f32.mrf.mxu0
        %v1460 = vadd.f32 %v717, %v1459
        %v1461 = vpop.f32.mrf.mxu0
        %1462 = vmatprep.mubr.f32.mxu0 0.0
        %v1463 = vand.u32 %v808, 4294901760
        %v1464 = vsub.f32 %v808, %v1463
        %v1465 = vand.u32 %v1464, 4294901760
        %v1466 = vsub.f32 %v1464, %v1465
        %v1467 = vand.u32 %v1466, 4294901760
        %1468 = vmatmul.mubr.f32.gmra.mxu0 %v1467
        %v1469 = vpop.f32.mrf.mxu0
        %v1470 = vadd.f32 %v717, %v1469
        %v1471 = vpop.f32.mrf.mxu0
        %1472 = vmatprep.mubr.f32.mxu0 0.0
        %v1473 = vand.u32 %v811, 4294901760
        %v1474 = vsub.f32 %v811, %v1473
        %v1475 = vand.u32 %v1474, 4294901760
        %v1476 = vsub.f32 %v1474, %v1475
        %v1477 = vand.u32 %v1476, 4294901760
        %1478 = vmatmul.mubr.f32.gmra.mxu0 %v1477
        %v1479 = vpop.f32.mrf.mxu0
        %v1480 = vadd.f32 %v717, %v1479
        %v1481 = vpop.f32.mrf.mxu0
        %1482 = vmatprep.mubr.f32.mxu0 0.0
        %v1483 = vand.u32 %v814, 4294901760
        %v1484 = vsub.f32 %v814, %v1483
        %v1485 = vand.u32 %v1484, 4294901760
        %v1486 = vsub.f32 %v1484, %v1485
        %v1487 = vand.u32 %v1486, 4294901760
        %1488 = vmatmul.mubr.f32.gmra.mxu0 %v1487
        %v1489 = vpop.f32.mrf.mxu0
        %v1490 = vadd.f32 %v717, %v1489
        %v1491 = vpop.f32.mrf.mxu0
        %1492 = vmatprep.mubr.f32.mxu0 0.0
        %v1493 = vand.u32 %v817, 4294901760
        %v1494 = vsub.f32 %v817, %v1493
        %v1495 = vand.u32 %v1494, 4294901760
        %v1496 = vsub.f32 %v1494, %v1495
        %v1497 = vand.u32 %v1496, 4294901760
        %1498 = vmatmul.mubr.f32.gmra.mxu0 %v1497
        %v1499 = vpop.f32.mrf.mxu0
        %v1500 = vadd.f32 %v717, %v1499
        %v1501 = vpop.f32.mrf.mxu0
        %1502 = vmatprep.mubr.f32.mxu0 0.0
        %v1503 = vand.u32 %v820, 4294901760
        %v1504 = vsub.f32 %v820, %v1503
        %v1505 = vand.u32 %v1504, 4294901760
        %v1506 = vsub.f32 %v1504, %v1505
        %v1507 = vand.u32 %v1506, 4294901760
        %1508 = vmatmul.mubr.f32.gmra.mxu0 %v1507
        %v1509 = vpop.f32.mrf.mxu0
        %v1510 = vadd.f32 %v717, %v1509
        %v1511 = vpop.f32.mrf.mxu0
        %1512 = vmatprep.mubr.f32.mxu0 0.0
        %v1513 = vand.u32 %v823, 4294901760
        %v1514 = vsub.f32 %v823, %v1513
        %v1515 = vand.u32 %v1514, 4294901760
        %v1516 = vsub.f32 %v1514, %v1515
        %v1517 = vand.u32 %v1516, 4294901760
        %1518 = vmatmul.mubr.f32.gmra.mxu0 %v1517
        %v1519 = vpop.f32.mrf.mxu0
        %v1520 = vadd.f32 %v717, %v1519
        %v1521 = vpop.f32.mrf.mxu0
        %1522 = vmatprep.mubr.f32.mxu0 0.0
        %v1523 = vand.u32 %v826, 4294901760
        %v1524 = vsub.f32 %v826, %v1523
        %v1525 = vand.u32 %v1524, 4294901760
        %v1526 = vsub.f32 %v1524, %v1525
        %v1527 = vand.u32 %v1526, 4294901760
        %1528 = vmatmul.mubr.f32.gmra.mxu0 %v1527
        %v1529 = vpop.f32.mrf.mxu0
        %v1530 = vadd.f32 %v717, %v1529
        %v1531 = vpop.f32.mrf.mxu0
        %1532 = vmatprep.mubr.f32.mxu0 0.0
        %v1533 = vand.u32 %v829, 4294901760
        %v1534 = vsub.f32 %v829, %v1533
        %v1535 = vand.u32 %v1534, 4294901760
        %v1536 = vsub.f32 %v1534, %v1535
        %v1537 = vand.u32 %v1536, 4294901760
        %1538 = vmatmul.mubr.f32.gmra.mxu0 %v1537
        %v1539 = vpop.f32.mrf.mxu0
        %v1540 = vadd.f32 %v717, %v1539
        %v1541 = vpop.f32.mrf.mxu0
        %1542 = vmatprep.mubr.f32.mxu0 0.0
        %v1543 = vand.u32 %v832, 4294901760
        %v1544 = vsub.f32 %v832, %v1543
        %v1545 = vand.u32 %v1544, 4294901760
        %v1546 = vsub.f32 %v1544, %v1545
        %v1547 = vand.u32 %v1546, 4294901760
        %1548 = vmatmul.mubr.f32.gmra.mxu0 %v1547
        %v1549 = vpop.f32.mrf.mxu0
        %v1550 = vadd.f32 %v717, %v1549
        %v1551 = vpop.f32.mrf.mxu0
        %1552 = vmatprep.mubr.f32.mxu0 0.0
        %v1553 = vand.u32 %v835, 4294901760
        %v1554 = vsub.f32 %v835, %v1553
        %v1555 = vand.u32 %v1554, 4294901760
        %v1556 = vsub.f32 %v1554, %v1555
        %v1557 = vand.u32 %v1556, 4294901760
        %1558 = vmatmul.mubr.f32.gmra.mxu0 %v1557
        %v1559 = vpop.f32.mrf.mxu0
        %v1560 = vadd.f32 %v717, %v1559
        %v1561 = vpop.f32.mrf.mxu0
        %1562 = vmatprep.mubr.f32.mxu0 0.0
        %v1563 = vand.u32 %v838, 4294901760
        %v1564 = vsub.f32 %v838, %v1563
        %v1565 = vand.u32 %v1564, 4294901760
        %v1566 = vsub.f32 %v1564, %v1565
        %v1567 = vand.u32 %v1566, 4294901760
        %1568 = vmatmul.mubr.f32.gmra.mxu0 %v1567
        %v1569 = vpop.f32.mrf.mxu0
        %v1570 = vadd.f32 %v717, %v1569
        %v1571 = vpop.f32.mrf.mxu0
        %1572 = vmatprep.mubr.f32.mxu0 0.0
        %v1573 = vand.u32 %v841, 4294901760
        %v1574 = vsub.f32 %v841, %v1573
        %v1575 = vand.u32 %v1574, 4294901760
        %v1576 = vsub.f32 %v1574, %v1575
        %v1577 = vand.u32 %v1576, 4294901760
        %1578 = vmatmul.mubr.f32.gmra.mxu0 %v1577
        %v1579 = vpop.f32.mrf.mxu0
        %v1580 = vadd.f32 %v717, %v1579
        %v1581 = vpop.f32.mrf.mxu0
        %1582 = vmatprep.mubr.f32.mxu0 0.0
        %v1583 = vand.u32 %v844, 4294901760
        %v1584 = vsub.f32 %v844, %v1583
        %v1585 = vand.u32 %v1584, 4294901760
        %v1586 = vsub.f32 %v1584, %v1585
        %v1587 = vand.u32 %v1586, 4294901760
        %1588 = vmatmul.mubr.f32.gmra.mxu0 %v1587
        %v1589 = vpop.f32.mrf.mxu0
        %v1590 = vadd.f32 %v717, %v1589
        %v1591 = vpop.f32.mrf.mxu0
        %1592 = vmatprep.mubr.f32.mxu0 0.0
        %v1593 = vand.u32 %v847, 4294901760
        %v1594 = vsub.f32 %v847, %v1593
        %v1595 = vand.u32 %v1594, 4294901760
        %v1596 = vsub.f32 %v1594, %v1595
        %v1597 = vand.u32 %v1596, 4294901760
        %1598 = vmatmul.mubr.f32.gmra.mxu0 %v1597
        %v1599 = vpop.f32.mrf.mxu0
        %v1600 = vadd.f32 %v717, %v1599
        %v1601 = vpop.f32.mrf.mxu0
        %1602 = vmatprep.mubr.f32.mxu0 0.0
        %v1603 = vand.u32 %v850, 4294901760
        %v1604 = vsub.f32 %v850, %v1603
        %v1605 = vand.u32 %v1604, 4294901760
        %v1606 = vsub.f32 %v1604, %v1605
        %v1607 = vand.u32 %v1606, 4294901760
        %1608 = vmatmul.mubr.f32.gmra.mxu0 %v1607
        %v1609 = vpop.f32.mrf.mxu0
        %v1610 = vadd.f32 %v717, %v1609
        %v1611 = vpop.f32.mrf.mxu0
        %1612 = vmatprep.mubr.f32.mxu0 0.0
        %v1613 = vand.u32 %v853, 4294901760
        %v1614 = vsub.f32 %v853, %v1613
        %v1615 = vand.u32 %v1614, 4294901760
        %v1616 = vsub.f32 %v1614, %v1615
        %v1617 = vand.u32 %v1616, 4294901760
        %1618 = vmatmul.mubr.f32.gmra.mxu0 %v1617
        %v1619 = vpop.f32.mrf.mxu0
        %v1620 = vadd.f32 %v717, %v1619
        %v1621 = vpop.f32.mrf.mxu0
        %1622 = vmatprep.mubr.f32.mxu0 0.0
        %v1623 = vand.u32 %v856, 4294901760
        %v1624 = vsub.f32 %v856, %v1623
        %v1625 = vand.u32 %v1624, 4294901760
        %v1626 = vsub.f32 %v1624, %v1625
        %v1627 = vand.u32 %v1626, 4294901760
        %1628 = vmatmul.mubr.f32.gmra.mxu0 %v1627
        %v1629 = vpop.f32.mrf.mxu0
        %v1630 = vadd.f32 %v717, %v1629
        %v1631 = vpop.f32.mrf.mxu0
        %1632 = vmatprep.mubr.f32.mxu0 0.0
        %v1633 = vand.u32 %v859, 4294901760
        %v1634 = vsub.f32 %v859, %v1633
        %v1635 = vand.u32 %v1634, 4294901760
        %v1636 = vsub.f32 %v1634, %v1635
        %v1637 = vand.u32 %v1636, 4294901760
        %1638 = vmatmul.mubr.f32.gmra.mxu0 %v1637
        %v1639 = vpop.f32.mrf.mxu0
        %v1640 = vadd.f32 %v717, %v1639
        %v1641 = vpop.f32.mrf.mxu0
        %1642 = vmatprep.mubr.f32.mxu0 0.0
        %v1643 = vand.u32 %v862, 4294901760
        %v1644 = vsub.f32 %v862, %v1643
        %v1645 = vand.u32 %v1644, 4294901760
        %v1646 = vsub.f32 %v1644, %v1645
        %v1647 = vand.u32 %v1646, 4294901760
        %1648 = vmatmul.mubr.f32.gmra.mxu0 %v1647
        %v1649 = vpop.f32.mrf.mxu0
        %v1650 = vadd.f32 %v717, %v1649
        %v1651 = vpop.f32.mrf.mxu0
        %1652 = vmatprep.mubr.f32.mxu0 0.0
        %v1653 = vand.u32 %v865, 4294901760
        %v1654 = vsub.f32 %v865, %v1653
        %v1655 = vand.u32 %v1654, 4294901760
        %v1656 = vsub.f32 %v1654, %v1655
        %v1657 = vand.u32 %v1656, 4294901760
        %1658 = vmatmul.mubr.f32.gmra.mxu0 %v1657
        %v1659 = vpop.f32.mrf.mxu0
        %v1660 = vadd.f32 %v717, %v1659
        %v1661 = vpop.f32.mrf.mxu0
        %1662 = vmatprep.mubr.f32.mxu0 0.0
        %v1663 = vand.u32 %v868, 4294901760
        %v1664 = vsub.f32 %v868, %v1663
        %v1665 = vand.u32 %v1664, 4294901760
        %v1666 = vsub.f32 %v1664, %v1665
        %v1667 = vand.u32 %v1666, 4294901760
        %1668 = vmatmul.mubr.f32.gmra.mxu0 %v1667
        %v1669 = vpop.f32.mrf.mxu0
        %v1670 = vadd.f32 %v717, %v1669
        %v1671 = vpop.f32.mrf.mxu0
        %1672 = vmatprep.mubr.f32.mxu0 0.0
        %v1673 = vand.u32 %v871, 4294901760
        %v1674 = vsub.f32 %v871, %v1673
        %v1675 = vand.u32 %v1674, 4294901760
        %v1676 = vsub.f32 %v1674, %v1675
        %v1677 = vand.u32 %v1676, 4294901760
        %1678 = vmatmul.mubr.f32.gmra.mxu0 %v1677
        %v1679 = vpop.f32.mrf.mxu0
        %v1680 = vadd.f32 %v717, %v1679
        %v1681 = vpop.f32.mrf.mxu0
        %1682 = vmatprep.mubr.f32.mxu0 0.0
        %v1683 = vand.u32 %v874, 4294901760
        %v1684 = vsub.f32 %v874, %v1683
        %v1685 = vand.u32 %v1684, 4294901760
        %v1686 = vsub.f32 %v1684, %v1685
        %v1687 = vand.u32 %v1686, 4294901760
        %1688 = vmatmul.mubr.f32.gmra.mxu0 %v1687
        %v1689 = vpop.f32.mrf.mxu0
        %v1690 = vadd.f32 %v717, %v1689
        %v1691 = vpop.f32.mrf.mxu0
        %1692 = vmatprep.mubr.f32.mxu0 0.0
        %v1693 = vand.u32 %v877, 4294901760
        %v1694 = vsub.f32 %v877, %v1693
        %v1695 = vand.u32 %v1694, 4294901760
        %v1696 = vsub.f32 %v1694, %v1695
        %v1697 = vand.u32 %v1696, 4294901760
        %1698 = vmatmul.mubr.f32.gmra.mxu0 %v1697
        %v1699 = vpop.f32.mrf.mxu0
        %v1700 = vadd.f32 %v717, %v1699
        %v1701 = vpop.f32.mrf.mxu0
        %1702 = vmatprep.mubr.f32.mxu0 0.0
        %v1703 = vand.u32 %v880, 4294901760
        %v1704 = vsub.f32 %v880, %v1703
        %v1705 = vand.u32 %v1704, 4294901760
        %v1706 = vsub.f32 %v1704, %v1705
        %v1707 = vand.u32 %v1706, 4294901760
        %1708 = vmatmul.mubr.f32.gmra.mxu0 %v1707
        %v1709 = vpop.f32.mrf.mxu0
        %v1710 = vadd.f32 %v717, %v1709
        %v1711 = vpop.f32.mrf.mxu0
        %1712 = vmatprep.mubr.f32.mxu0 0.0
        %v1713 = vand.u32 %v883, 4294901760
        %v1714 = vsub.f32 %v883, %v1713
        %v1715 = vand.u32 %v1714, 4294901760
        %v1716 = vsub.f32 %v1714, %v1715
        %v1717 = vand.u32 %v1716, 4294901760
        %1718 = vmatmul.mubr.f32.gmra.mxu0 %v1717
        %v1719 = vpop.f32.mrf.mxu0
        %v1720 = vadd.f32 %v717, %v1719
        %v1721 = vpop.f32.mrf.mxu0
        %1722 = vmatprep.mubr.f32.mxu0 0.0
        %v1723 = vand.u32 %v886, 4294901760
        %v1724 = vsub.f32 %v886, %v1723
        %v1725 = vand.u32 %v1724, 4294901760
        %v1726 = vsub.f32 %v1724, %v1725
        %v1727 = vand.u32 %v1726, 4294901760
        %1728 = vmatmul.mubr.f32.gmra.mxu0 %v1727
        %v1729 = vpop.f32.mrf.mxu0
        %v1730 = vadd.f32 %v717, %v1729
        %v1731 = vpop.f32.mrf.mxu0
        %1732 = vmatprep.mubr.f32.mxu0 0.0
        %v1733 = vand.u32 %v889, 4294901760
        %v1734 = vsub.f32 %v889, %v1733
        %v1735 = vand.u32 %v1734, 4294901760
        %v1736 = vsub.f32 %v1734, %v1735
        %v1737 = vand.u32 %v1736, 4294901760
        %1738 = vmatmul.mubr.f32.gmra.mxu0 %v1737
        %v1739 = vpop.f32.mrf.mxu0
        %v1740 = vadd.f32 %v717, %v1739
        %v1741 = vpop.f32.mrf.mxu0
        %1742 = vmatprep.mubr.f32.mxu0 0.0
        %v1743 = vand.u32 %v892, 4294901760
        %v1744 = vsub.f32 %v892, %v1743
        %v1745 = vand.u32 %v1744, 4294901760
        %v1746 = vsub.f32 %v1744, %v1745
        %v1747 = vand.u32 %v1746, 4294901760
        %1748 = vmatmul.mubr.f32.gmra.mxu0 %v1747
        %v1749 = vpop.f32.mrf.mxu0
        %v1750 = vadd.f32 %v717, %v1749
        %v1751 = vpop.f32.mrf.mxu0
        %1752 = vmatprep.mubr.f32.mxu0 0.0
        %v1753 = vand.u32 %v895, 4294901760
        %v1754 = vsub.f32 %v895, %v1753
        %v1755 = vand.u32 %v1754, 4294901760
        %v1756 = vsub.f32 %v1754, %v1755
        %v1757 = vand.u32 %v1756, 4294901760
        %1758 = vmatmul.mubr.f32.gmra.mxu0 %v1757
        %v1759 = vpop.f32.mrf.mxu0
        %v1760 = vadd.f32 %v717, %v1759
        %v1761 = vpop.f32.mrf.mxu0
        %1762 = vmatprep.mubr.f32.mxu0 0.0
        %v1763 = vand.u32 %v898, 4294901760
        %v1764 = vsub.f32 %v898, %v1763
        %v1765 = vand.u32 %v1764, 4294901760
        %v1766 = vsub.f32 %v1764, %v1765
        %v1767 = vand.u32 %v1766, 4294901760
        %1768 = vmatmul.mubr.f32.gmra.mxu0 %v1767
        %v1769 = vpop.f32.mrf.mxu0
        %v1770 = vadd.f32 %v717, %v1769
        %v1771 = vpop.f32.mrf.mxu0
        %1772 = vmatprep.mubr.f32.mxu0 0.0
        %v1773 = vand.u32 %v901, 4294901760
        %v1774 = vsub.f32 %v901, %v1773
        %v1775 = vand.u32 %v1774, 4294901760
        %v1776 = vsub.f32 %v1774, %v1775
        %v1777 = vand.u32 %v1776, 4294901760
        %1778 = vmatmul.mubr.f32.gmra.mxu0 %v1777
        %v1779 = vpop.f32.mrf.mxu0
        %v1780 = vadd.f32 %v717, %v1779
        %v1781 = vpop.f32.mrf.mxu0
        %1782 = vmatprep.mubr.f32.mxu0 0.0
        %v1783 = vand.u32 %v904, 4294901760
        %v1784 = vsub.f32 %v904, %v1783
        %v1785 = vand.u32 %v1784, 4294901760
        %v1786 = vsub.f32 %v1784, %v1785
        %v1787 = vand.u32 %v1786, 4294901760
        %1788 = vmatmul.mubr.f32.gmra.mxu0 %v1787
        %v1789 = vpop.f32.mrf.mxu0
        %v1790 = vadd.f32 %v717, %v1789
        %v1791 = vpop.f32.mrf.mxu0
        %1792 = vmatprep.mubr.f32.mxu0 0.0
        %v1793 = vand.u32 %v907, 4294901760
        %v1794 = vsub.f32 %v907, %v1793
        %v1795 = vand.u32 %v1794, 4294901760
        %v1796 = vsub.f32 %v1794, %v1795
        %v1797 = vand.u32 %v1796, 4294901760
        %1798 = vmatmul.mubr.f32.gmra.mxu0 %v1797
        %v1799 = vpop.f32.mrf.mxu0
        %v1800 = vadd.f32 %v717, %v1799
        %v1801 = vpop.f32.mrf.mxu0
        %1802 = vmatprep.mubr.f32.mxu0 0.0
        %v1803 = vand.u32 %v910, 4294901760
        %v1804 = vsub.f32 %v910, %v1803
        %v1805 = vand.u32 %v1804, 4294901760
        %v1806 = vsub.f32 %v1804, %v1805
        %v1807 = vand.u32 %v1806, 4294901760
        %1808 = vmatmul.mubr.f32.gmra.mxu0 %v1807
        %v1809 = vpop.f32.mrf.mxu0
        %v1810 = vadd.f32 %v717, %v1809
        %v1811 = vpop.f32.mrf.mxu0
        %1812 = vmatprep.mubr.f32.mxu0 0.0
        %v1813 = vand.u32 %v913, 4294901760
        %v1814 = vsub.f32 %v913, %v1813
        %v1815 = vand.u32 %v1814, 4294901760
        %v1816 = vsub.f32 %v1814, %v1815
        %v1817 = vand.u32 %v1816, 4294901760
        %1818 = vmatmul.mubr.f32.gmra.mxu0 %v1817
        %v1819 = vpop.f32.mrf.mxu0
        %v1820 = vadd.f32 %v717, %v1819
        %v1821 = vpop.f32.mrf.mxu0
        %1822 = vmatprep.mubr.f32.mxu0 0.0
        %v1823 = vand.u32 %v916, 4294901760
        %v1824 = vsub.f32 %v916, %v1823
        %v1825 = vand.u32 %v1824, 4294901760
        %v1826 = vsub.f32 %v1824, %v1825
        %v1827 = vand.u32 %v1826, 4294901760
        %1828 = vmatmul.mubr.f32.gmra.mxu0 %v1827
        %v1829 = vpop.f32.mrf.mxu0
        %v1830 = vadd.f32 %v717, %v1829
        %v1831 = vpop.f32.mrf.mxu0
        %1832 = vmatprep.mubr.f32.mxu0 0.0
        %v1833 = vand.u32 %v919, 4294901760
        %v1834 = vsub.f32 %v919, %v1833
        %v1835 = vand.u32 %v1834, 4294901760
        %v1836 = vsub.f32 %v1834, %v1835
        %v1837 = vand.u32 %v1836, 4294901760
        %1838 = vmatmul.mubr.f32.gmra.mxu0 %v1837
        %v1839 = vpop.f32.mrf.mxu0
        %v1840 = vadd.f32 %v717, %v1839
        %v1841 = vpop.f32.mrf.mxu0
        %1842 = vmatprep.mubr.f32.mxu0 0.0
        %v1843 = vand.u32 %v922, 4294901760
        %v1844 = vsub.f32 %v922, %v1843
        %v1845 = vand.u32 %v1844, 4294901760
        %v1846 = vsub.f32 %v1844, %v1845
        %v1847 = vand.u32 %v1846, 4294901760
        %1848 = vmatmul.mubr.f32.gmra.mxu0 %v1847
        %v1849 = vpop.f32.mrf.mxu0
        %v1850 = vadd.f32 %v717, %v1849
        %v1851 = vpop.f32.mrf.mxu0
        %1852 = vmatprep.mubr.f32.mxu0 0.0
        %v1853 = vand.u32 %v925, 4294901760
        %v1854 = vsub.f32 %v925, %v1853
        %v1855 = vand.u32 %v1854, 4294901760
        %v1856 = vsub.f32 %v1854, %v1855
        %v1857 = vand.u32 %v1856, 4294901760
        %1858 = vmatmul.mubr.f32.gmra.mxu0 %v1857
        %v1859 = vpop.f32.mrf.mxu0
        %v1860 = vadd.f32 %v717, %v1859
        %v1861 = vpop.f32.mrf.mxu0
        %1862 = vmatprep.mubr.f32.mxu0 0.0
        %v1863 = vand.u32 %v928, 4294901760
        %v1864 = vsub.f32 %v928, %v1863
        %v1865 = vand.u32 %v1864, 4294901760
        %v1866 = vsub.f32 %v1864, %v1865
        %v1867 = vand.u32 %v1866, 4294901760
        %1868 = vmatmul.mubr.f32.gmra.mxu0 %v1867
        %v1869 = vpop.f32.mrf.mxu0
        %v1870 = vadd.f32 %v717, %v1869
        %v1871 = vpop.f32.mrf.mxu0
        %1872 = vmatprep.mubr.f32.mxu0 0.0
        %v1873 = vand.u32 %v931, 4294901760
        %v1874 = vsub.f32 %v931, %v1873
        %v1875 = vand.u32 %v1874, 4294901760
        %v1876 = vsub.f32 %v1874, %v1875
        %v1877 = vand.u32 %v1876, 4294901760
        %1878 = vmatmul.mubr.f32.gmra.mxu0 %v1877
        %v1879 = vpop.f32.mrf.mxu0
        %v1880 = vadd.f32 %v717, %v1879
        %v1881 = vpop.f32.mrf.mxu0
        %1882 = vmatprep.mubr.f32.mxu0 0.0
        %v1883 = vand.u32 %v934, 4294901760
        %v1884 = vsub.f32 %v934, %v1883
        %v1885 = vand.u32 %v1884, 4294901760
        %v1886 = vsub.f32 %v1884, %v1885
        %v1887 = vand.u32 %v1886, 4294901760
        %1888 = vmatmul.mubr.f32.gmra.mxu0 %v1887
        %v1889 = vpop.f32.mrf.mxu0
        %v1890 = vadd.f32 %v717, %v1889
        %v1891 = vpop.f32.mrf.mxu0
        %1892 = vmatprep.mubr.f32.mxu0 0.0
        %v1893 = vand.u32 %v937, 4294901760
        %v1894 = vsub.f32 %v937, %v1893
        %v1895 = vand.u32 %v1894, 4294901760
        %v1896 = vsub.f32 %v1894, %v1895
        %v1897 = vand.u32 %v1896, 4294901760
        %1898 = vmatmul.mubr.f32.gmra.mxu0 %v1897
        %v1899 = vpop.f32.mrf.mxu0
        %v1900 = vadd.f32 %v717, %v1899
        %v1901 = vpop.f32.mrf.mxu0
        %1902 = vmatprep.mubr.f32.mxu0 0.0
        %v1903 = vand.u32 %v940, 4294901760
        %v1904 = vsub.f32 %v940, %v1903
        %v1905 = vand.u32 %v1904, 4294901760
        %v1906 = vsub.f32 %v1904, %v1905
        %v1907 = vand.u32 %v1906, 4294901760
        %1908 = vmatmul.mubr.f32.gmra.mxu0 %v1907
        %v1909 = vpop.f32.mrf.mxu0
        %v1910 = vadd.f32 %v717, %v1909
        %v1911 = vpop.f32.mrf.mxu0
        %1912 = vmatprep.mubr.f32.mxu0 0.0
        %v1913 = vand.u32 %v943, 4294901760
        %v1914 = vsub.f32 %v943, %v1913
        %v1915 = vand.u32 %v1914, 4294901760
        %v1916 = vsub.f32 %v1914, %v1915
        %v1917 = vand.u32 %v1916, 4294901760
        %1918 = vmatmul.mubr.f32.gmra.mxu0 %v1917
        %v1919 = vpop.f32.mrf.mxu0
        %v1920 = vadd.f32 %v717, %v1919
        %v1921 = vpop.f32.mrf.mxu0
        %1922 = vmatprep.mubr.f32.mxu0 0.0
        %v1923 = vand.u32 %v946, 4294901760
        %v1924 = vsub.f32 %v946, %v1923
        %v1925 = vand.u32 %v1924, 4294901760
        %v1926 = vsub.f32 %v1924, %v1925
        %v1927 = vand.u32 %v1926, 4294901760
        %1928 = vmatmul.mubr.f32.gmra.mxu0 %v1927
        %v1929 = vpop.f32.mrf.mxu0
        %v1930 = vadd.f32 %v717, %v1929
        %v1931 = vpop.f32.mrf.mxu0
        %1932 = vmatprep.mubr.f32.mxu0 0.0
        %v1933 = vand.u32 %v949, 4294901760
        %v1934 = vsub.f32 %v949, %v1933
        %v1935 = vand.u32 %v1934, 4294901760
        %v1936 = vsub.f32 %v1934, %v1935
        %v1937 = vand.u32 %v1936, 4294901760
        %1938 = vmatmul.mubr.f32.gmra.mxu0 %v1937
        %v1939 = vpop.f32.mrf.mxu0
        %v1940 = vadd.f32 %v717, %v1939
        %v1941 = vpop.f32.mrf.mxu0
        %1942 = vmatprep.mubr.f32.mxu0 0.0
        %v1943 = vand.u32 %v952, 4294901760
        %v1944 = vsub.f32 %v952, %v1943
        %v1945 = vand.u32 %v1944, 4294901760
        %v1946 = vsub.f32 %v1944, %v1945
        %v1947 = vand.u32 %v1946, 4294901760
        %1948 = vmatmul.mubr.f32.gmra.mxu0 %v1947
        %v1949 = vpop.f32.mrf.mxu0
        %v1950 = vadd.f32 %v717, %v1949
        %v1951 = vpop.f32.mrf.mxu0
        %1952 = vmatprep.mubr.f32.mxu0 0.0
        %v1953 = vand.u32 %v955, 4294901760
        %v1954 = vsub.f32 %v955, %v1953
        %v1955 = vand.u32 %v1954, 4294901760
        %v1956 = vsub.f32 %v1954, %v1955
        %v1957 = vand.u32 %v1956, 4294901760
        %1958 = vmatmul.mubr.f32.gmra.mxu0 %v1957
        %v1959 = vpop.f32.mrf.mxu0
        %v1960 = vadd.f32 %v717, %v1959
        %v1961 = vpop.f32.mrf.mxu0
        %1962 = vmatprep.mubr.f32.mxu0 0.0
        %v1963 = vand.u32 %v958, 4294901760
        %v1964 = vsub.f32 %v958, %v1963
        %v1965 = vand.u32 %v1964, 4294901760
        %v1966 = vsub.f32 %v1964, %v1965
        %v1967 = vand.u32 %v1966, 4294901760
        %1968 = vmatmul.mubr.f32.gmra.mxu0 %v1967
        %v1969 = vpop.f32.mrf.mxu0
        %v1970 = vadd.f32 %v717, %v1969
        %v1971 = vpop.f32.mrf.mxu0
        %1972 = vmatprep.mubr.f32.mxu0 0.0
        %v1973 = vand.u32 %v961, 4294901760
        %v1974 = vsub.f32 %v961, %v1973
        %v1975 = vand.u32 %v1974, 4294901760
        %v1976 = vsub.f32 %v1974, %v1975
        %v1977 = vand.u32 %v1976, 4294901760
        %1978 = vmatmul.mubr.f32.gmra.mxu0 %v1977
        %v1979 = vpop.f32.mrf.mxu0
        %v1980 = vadd.f32 %v717, %v1979
        %v1981 = vpop.f32.mrf.mxu0
        %1982 = vmatprep.mubr.f32.mxu0 0.0
        %v1983 = vand.u32 %v964, 4294901760
        %v1984 = vsub.f32 %v964, %v1983
        %v1985 = vand.u32 %v1984, 4294901760
        %v1986 = vsub.f32 %v1984, %v1985
        %v1987 = vand.u32 %v1986, 4294901760
        %1988 = vmatmul.mubr.f32.gmra.mxu0 %v1987
        %v1989 = vpop.f32.mrf.mxu0
        %v1990 = vadd.f32 %v717, %v1989
        %v1991 = vpop.f32.mrf.mxu0
        %1992 = vmatprep.mubr.f32.mxu0 0.0
        %v1993 = vand.u32 %v967, 4294901760
        %v1994 = vsub.f32 %v967, %v1993
        %v1995 = vand.u32 %v1994, 4294901760
        %v1996 = vsub.f32 %v1994, %v1995
        %v1997 = vand.u32 %v1996, 4294901760
        %1998 = vmatmul.mubr.f32.gmra.mxu0 %v1997
        %v1999 = vpop.f32.mrf.mxu0
        %v2000 = vadd.f32 %v717, %v1999
        %v2001 = vpop.f32.mrf.mxu0
        %2002 = vmatprep.mubr.f32.mxu0 0.0
        %v2003 = vand.u32 %v970, 4294901760
        %v2004 = vsub.f32 %v970, %v2003
        %v2005 = vand.u32 %v2004, 4294901760
        %v2006 = vsub.f32 %v2004, %v2005
        %v2007 = vand.u32 %v2006, 4294901760
        %2008 = vmatmul.mubr.f32.gmra.mxu0 %v2007
        %v2009 = vpop.f32.mrf.mxu0
        %v2010 = vadd.f32 %v717, %v2009
        %v2011 = vpop.f32.mrf.mxu0
        %2012 = vmatprep.mubr.f32.mxu0 0.0
        %v2013 = vand.u32 %v973, 4294901760
        %v2014 = vsub.f32 %v973, %v2013
        %v2015 = vand.u32 %v2014, 4294901760
        %v2016 = vsub.f32 %v2014, %v2015
        %v2017 = vand.u32 %v2016, 4294901760
        %2018 = vmatmul.mubr.f32.gmra.mxu0 %v2017
        %v2019 = vpop.f32.mrf.mxu0
        %v2020 = vadd.f32 %v717, %v2019
        %v2021 = vpop.f32.mrf.mxu0
        %2022 = vmatprep.mubr.f32.mxu0 0.0
        %v2023 = vand.u32 %v976, 4294901760
        %v2024 = vsub.f32 %v976, %v2023
        %v2025 = vand.u32 %v2024, 4294901760
        %v2026 = vsub.f32 %v2024, %v2025
        %v2027 = vand.u32 %v2026, 4294901760
        %2028 = vmatmul.mubr.f32.gmra.mxu0 %v2027
        %v2029 = vpop.f32.mrf.mxu0
        %v2030 = vadd.f32 %v717, %v2029
        %v2031 = vpop.f32.mrf.mxu0
        %2032 = vmatprep.mubr.f32.mxu0 0.0
        %v2033 = vand.u32 %v979, 4294901760
        %v2034 = vsub.f32 %v979, %v2033
        %v2035 = vand.u32 %v2034, 4294901760
        %v2036 = vsub.f32 %v2034, %v2035
        %v2037 = vand.u32 %v2036, 4294901760
        %2038 = vmatmul.mubr.f32.gmra.mxu0 %v2037
        %v2039 = vpop.f32.mrf.mxu0
        %v2040 = vadd.f32 %v717, %v2039
        %v2041 = vpop.f32.mrf.mxu0
        %2042 = vmatprep.mubr.f32.mxu0 0.0
        %v2043 = vand.u32 %v982, 4294901760
        %v2044 = vsub.f32 %v982, %v2043
        %v2045 = vand.u32 %v2044, 4294901760
        %v2046 = vsub.f32 %v2044, %v2045
        %v2047 = vand.u32 %v2046, 4294901760
        %2048 = vmatmul.mubr.f32.gmra.mxu0 %v2047
        %v2049 = vpop.f32.mrf.mxu0
        %v2050 = vadd.f32 %v717, %v2049
        %v2051 = vpop.f32.mrf.mxu0
        %2052 = vmatprep.mubr.f32.mxu0 0.0
        %v2053 = vand.u32 %v985, 4294901760
        %v2054 = vsub.f32 %v985, %v2053
        %v2055 = vand.u32 %v2054, 4294901760
        %v2056 = vsub.f32 %v2054, %v2055
        %v2057 = vand.u32 %v2056, 4294901760
        %2058 = vmatmul.mubr.f32.gmra.mxu0 %v2057
        %v2059 = vpop.f32.mrf.mxu0
        %v2060 = vadd.f32 %v717, %v2059
        %v2061 = vpop.f32.mrf.mxu0
        %2062 = vmatprep.mubr.f32.mxu0 0.0
        %v2063 = vand.u32 %v988, 4294901760
        %v2064 = vsub.f32 %v988, %v2063
        %v2065 = vand.u32 %v2064, 4294901760
        %v2066 = vsub.f32 %v2064, %v2065
        %v2067 = vand.u32 %v2066, 4294901760
        %2068 = vmatmul.mubr.f32.gmra.mxu0 %v2067
        %v2069 = vpop.f32.mrf.mxu0
        %v2070 = vadd.f32 %v717, %v2069
        %v2071 = vpop.f32.mrf.mxu0
        %2072 = vmatprep.mubr.f32.mxu0 0.0
        %v2073 = vand.u32 %v991, 4294901760
        %v2074 = vsub.f32 %v991, %v2073
        %v2075 = vand.u32 %v2074, 4294901760
        %v2076 = vsub.f32 %v2074, %v2075
        %v2077 = vand.u32 %v2076, 4294901760
        %2078 = vmatmul.mubr.f32.gmra.mxu0 %v2077
        %v2079 = vpop.f32.mrf.mxu0
        %v2080 = vadd.f32 %v717, %v2079
        %v2081 = vpop.f32.mrf.mxu0
        %2082 = vmatprep.mubr.f32.mxu0 0.0
        %v2083 = vand.u32 %v994, 4294901760
        %v2084 = vsub.f32 %v994, %v2083
        %v2085 = vand.u32 %v2084, 4294901760
        %v2086 = vsub.f32 %v2084, %v2085
        %v2087 = vand.u32 %v2086, 4294901760
        %2088 = vmatmul.mubr.f32.gmra.mxu0 %v2087
        %v2089 = vpop.f32.mrf.mxu0
        %v2090 = vadd.f32 %v717, %v2089
        %v2091 = vpop.f32.mrf.mxu0
        %2092 = vmatprep.mubr.f32.mxu0 0.0
        %v2093 = vand.u32 %v997, 4294901760
        %v2094 = vsub.f32 %v997, %v2093
        %v2095 = vand.u32 %v2094, 4294901760
        %v2096 = vsub.f32 %v2094, %v2095
        %v2097 = vand.u32 %v2096, 4294901760
        %2098 = vmatmul.mubr.f32.gmra.mxu0 %v2097
        %v2099 = vpop.f32.mrf.mxu0
        %v2100 = vadd.f32 %v717, %v2099
        %v2101 = vpop.f32.mrf.mxu0
        %2102 = vmatprep.mubr.f32.mxu0 0.0
        %v2103 = vand.u32 %v1000, 4294901760
        %v2104 = vsub.f32 %v1000, %v2103
        %v2105 = vand.u32 %v2104, 4294901760
        %v2106 = vsub.f32 %v2104, %v2105
        %v2107 = vand.u32 %v2106, 4294901760
        %2108 = vmatmul.mubr.f32.gmra.mxu0 %v2107
        %v2109 = vpop.f32.mrf.mxu0
        %v2110 = vadd.f32 %v717, %v2109
        %v2111 = vpop.f32.mrf.mxu0
        %2112 = vmatprep.mubr.f32.mxu0 0.0
        %v2113 = vand.u32 %v1003, 4294901760
        %v2114 = vsub.f32 %v1003, %v2113
        %v2115 = vand.u32 %v2114, 4294901760
        %v2116 = vsub.f32 %v2114, %v2115
        %v2117 = vand.u32 %v2116, 4294901760
        %2118 = vmatmul.mubr.f32.gmra.mxu0 %v2117
        %v2119 = vpop.f32.mrf.mxu0
        %v2120 = vadd.f32 %v717, %v2119
        %v2121 = vpop.f32.mrf.mxu0
        %2122 = vmatprep.mubr.f32.mxu0 0.0
        %v2123 = vand.u32 %v1006, 4294901760
        %v2124 = vsub.f32 %v1006, %v2123
        %v2125 = vand.u32 %v2124, 4294901760
        %v2126 = vsub.f32 %v2124, %v2125
        %v2127 = vand.u32 %v2126, 4294901760
        %2128 = vmatmul.mubr.f32.gmra.mxu0 %v2127
        %v2129 = vpop.f32.mrf.mxu0
        %v2130 = vadd.f32 %v717, %v2129
        %v2131 = vpop.f32.mrf.mxu0
        %2132 = vmatprep.mubr.f32.mxu0 0.0
        %v2133 = vand.u32 %v1009, 4294901760
        %v2134 = vsub.f32 %v1009, %v2133
        %v2135 = vand.u32 %v2134, 4294901760
        %v2136 = vsub.f32 %v2134, %v2135
        %v2137 = vand.u32 %v2136, 4294901760
        %2138 = vmatmul.mubr.f32.gmra.mxu0 %v2137
        %v2139 = vpop.f32.mrf.mxu0
        %v2140 = vadd.f32 %v717, %v2139
        %v2141 = vpop.f32.mrf.mxu0
        %2142 = vmatprep.mubr.f32.mxu0 0.0
        %v2143 = vand.u32 %v1012, 4294901760
        %v2144 = vsub.f32 %v1012, %v2143
        %v2145 = vand.u32 %v2144, 4294901760
        %v2146 = vsub.f32 %v2144, %v2145
        %v2147 = vand.u32 %v2146, 4294901760
        %2148 = vmatmul.mubr.f32.gmra.mxu0 %v2147
        %v2149 = vpop.f32.mrf.mxu0
        %v2150 = vadd.f32 %v717, %v2149
        %v2151 = vpop.f32.mrf.mxu0
        %2152 = vmatprep.mubr.f32.mxu0 0.0
        %v2153 = vand.u32 %v1015, 4294901760
        %v2154 = vsub.f32 %v1015, %v2153
        %v2155 = vand.u32 %v2154, 4294901760
        %v2156 = vsub.f32 %v2154, %v2155
        %v2157 = vand.u32 %v2156, 4294901760
        %2158 = vmatmul.mubr.f32.gmra.mxu0 %v2157
        %v2159 = vpop.f32.mrf.mxu0
        %v2160 = vadd.f32 %v717, %v2159
        %v2161 = vpop.f32.mrf.mxu0
        %2162 = vmatprep.mubr.f32.mxu0 0.0
        %v2163 = vand.u32 %v1018, 4294901760
        %v2164 = vsub.f32 %v1018, %v2163
        %v2165 = vand.u32 %v2164, 4294901760
        %v2166 = vsub.f32 %v2164, %v2165
        %v2167 = vand.u32 %v2166, 4294901760
        %2168 = vmatmul.mubr.f32.gmra.mxu0 %v2167
        %v2169 = vpop.f32.mrf.mxu0
        %v2170 = vadd.f32 %v717, %v2169
        %v2171 = vpop.f32.mrf.mxu0
        %2172 = vmatprep.mubr.f32.mxu0 0.0
        %v2173 = vand.u32 %v1021, 4294901760
        %v2174 = vsub.f32 %v1021, %v2173
        %v2175 = vand.u32 %v2174, 4294901760
        %v2176 = vsub.f32 %v2174, %v2175
        %v2177 = vand.u32 %v2176, 4294901760
        %2178 = vmatmul.mubr.f32.gmra.mxu0 %v2177
        %v2179 = vpop.f32.mrf.mxu0
        %v2180 = vadd.f32 %v717, %v2179
        %v2181 = vpop.f32.mrf.mxu0
        %2182 = vmatprep.mubr.f32.mxu0 0.0
        %v2183 = vand.u32 %v1024, 4294901760
        %v2184 = vsub.f32 %v1024, %v2183
        %v2185 = vand.u32 %v2184, 4294901760
        %v2186 = vsub.f32 %v2184, %v2185
        %v2187 = vand.u32 %v2186, 4294901760
        %2188 = vmatmul.mubr.f32.gmra.mxu0 %v2187
        %v2189 = vpop.f32.mrf.mxu0
        %v2190 = vadd.f32 %v717, %v2189
        %v2191 = vpop.f32.mrf.mxu0
        %2192 = vmatprep.mubr.f32.mxu0 0.0
        %v2193 = vand.u32 %v1027, 4294901760
        %v2194 = vsub.f32 %v1027, %v2193
        %v2195 = vand.u32 %v2194, 4294901760
        %v2196 = vsub.f32 %v2194, %v2195
        %v2197 = vand.u32 %v2196, 4294901760
        %2198 = vmatmul.mubr.f32.gmra.mxu0 %v2197
        %v2199 = vpop.f32.mrf.mxu0
        %v2200 = vadd.f32 %v717, %v2199
        %v2201 = vpop.f32.mrf.mxu0
        %2202 = vmatprep.mubr.f32.mxu0 0.0
        %v2203 = vand.u32 %v1030, 4294901760
        %v2204 = vsub.f32 %v1030, %v2203
        %v2205 = vand.u32 %v2204, 4294901760
        %v2206 = vsub.f32 %v2204, %v2205
        %v2207 = vand.u32 %v2206, 4294901760
        %2208 = vmatmul.mubr.f32.gmra.mxu0 %v2207
        %v2209 = vpop.f32.mrf.mxu0
        %v2210 = vadd.f32 %v717, %v2209
        %v2211 = vpop.f32.mrf.mxu0
        %2212 = vmatprep.mubr.f32.mxu0 0.0
        %v2213 = vand.u32 %v1033, 4294901760
        %v2214 = vsub.f32 %v1033, %v2213
        %v2215 = vand.u32 %v2214, 4294901760
        %v2216 = vsub.f32 %v2214, %v2215
        %v2217 = vand.u32 %v2216, 4294901760
        %2218 = vmatmul.mubr.f32.gmra.mxu0 %v2217
        %v2219 = vpop.f32.mrf.mxu0
        %v2220 = vadd.f32 %v717, %v2219
        %v2221 = vpop.f32.mrf.mxu0
        %2222 = vmatprep.mubr.f32.mxu0 0.0
        %v2223 = vand.u32 %v1036, 4294901760
        %v2224 = vsub.f32 %v1036, %v2223
        %v2225 = vand.u32 %v2224, 4294901760
        %v2226 = vsub.f32 %v2224, %v2225
        %v2227 = vand.u32 %v2226, 4294901760
        %2228 = vmatmul.mubr.f32.gmra.mxu0 %v2227
        %v2229 = vpop.f32.mrf.mxu0
        %v2230 = vadd.f32 %v717, %v2229
        %v2231 = vpop.f32.mrf.mxu0
        %2232 = vmatprep.mubr.f32.mxu0 0.0
        %v2233 = vand.u32 %v1039, 4294901760
        %v2234 = vsub.f32 %v1039, %v2233
        %v2235 = vand.u32 %v2234, 4294901760
        %v2236 = vsub.f32 %v2234, %v2235
        %v2237 = vand.u32 %v2236, 4294901760
        %2238 = vmatmul.mubr.f32.gmra.mxu0 %v2237
        %v2239 = vpop.f32.mrf.mxu0
        %v2240 = vadd.f32 %v717, %v2239
        %v2241 = vpop.f32.mrf.mxu0
        %2242 = vmatprep.mubr.f32.mxu0 0.0
        %v2243 = vand.u32 %v1042, 4294901760
        %v2244 = vsub.f32 %v1042, %v2243
        %v2245 = vand.u32 %v2244, 4294901760
        %v2246 = vsub.f32 %v2244, %v2245
        %v2247 = vand.u32 %v2246, 4294901760
        %2248 = vmatmul.mubr.f32.gmra.mxu0 %v2247
        %v2249 = vpop.f32.mrf.mxu0
        %v2250 = vadd.f32 %v717, %v2249
        %v2251 = vpop.f32.mrf.mxu0
        %2252 = vmatprep.mubr.f32.mxu0 0.0
        %v2253 = vand.u32 %v1045, 4294901760
        %v2254 = vsub.f32 %v1045, %v2253
        %v2255 = vand.u32 %v2254, 4294901760
        %v2256 = vsub.f32 %v2254, %v2255
        %v2257 = vand.u32 %v2256, 4294901760
        %2258 = vmatmul.mubr.f32.gmra.mxu0 %v2257
        %v2259 = vpop.f32.mrf.mxu0
        %v2260 = vadd.f32 %v717, %v2259
        %v2261 = vpop.f32.mrf.mxu0
        %2262 = vmatprep.mubr.f32.mxu0 0.0
        %v2263 = vand.u32 %v1048, 4294901760
        %v2264 = vsub.f32 %v1048, %v2263
        %v2265 = vand.u32 %v2264, 4294901760
        %v2266 = vsub.f32 %v2264, %v2265
        %v2267 = vand.u32 %v2266, 4294901760
        %2268 = vmatmul.mubr.f32.gmra.mxu0 %v2267
        %v2269 = vpop.f32.mrf.mxu0
        %v2270 = vadd.f32 %v717, %v2269
        %v2271 = vpop.f32.mrf.mxu0
        %2272 = vmatprep.mubr.f32.mxu0 0.0
        %v2273 = vand.u32 %v1051, 4294901760
        %v2274 = vsub.f32 %v1051, %v2273
        %v2275 = vand.u32 %v2274, 4294901760
        %v2276 = vsub.f32 %v2274, %v2275
        %v2277 = vand.u32 %v2276, 4294901760
        %2278 = vmatmul.mubr.f32.gmra.mxu0 %v2277
        %v2279 = vpop.f32.mrf.mxu0
        %v2280 = vadd.f32 %v717, %v2279
        %v2281 = vpop.f32.mrf.mxu0
        %2282 = vmatprep.mubr.f32.mxu0 0.0
        %v2283 = vand.u32 %v1054, 4294901760
        %v2284 = vsub.f32 %v1054, %v2283
        %v2285 = vand.u32 %v2284, 4294901760
        %v2286 = vsub.f32 %v2284, %v2285
        %v2287 = vand.u32 %v2286, 4294901760
        %2288 = vmatmul.mubr.f32.gmra.mxu0 %v2287
        %v2289 = vpop.f32.mrf.mxu0
        %v2290 = vadd.f32 %v717, %v2289
        %v2291 = vpop.f32.mrf.mxu0
        %2292 = vmatprep.mubr.f32.mxu0 0.0
        %v2293 = vand.u32 %v1057, 4294901760
        %v2294 = vsub.f32 %v1057, %v2293
        %v2295 = vand.u32 %v2294, 4294901760
        %v2296 = vsub.f32 %v2294, %v2295
        %v2297 = vand.u32 %v2296, 4294901760
        %2298 = vmatmul.mubr.f32.gmra.mxu0 %v2297
        %v2299 = vpop.f32.mrf.mxu0
        %v2300 = vadd.f32 %v717, %v2299
        %v2301 = vpop.f32.mrf.mxu0
        %2302 = vmatprep.mubr.f32.mxu0 0.0
        %v2303 = vand.u32 %v1060, 4294901760
        %v2304 = vsub.f32 %v1060, %v2303
        %v2305 = vand.u32 %v2304, 4294901760
        %v2306 = vsub.f32 %v2304, %v2305
        %v2307 = vand.u32 %v2306, 4294901760
        %2308 = vmatmul.mubr.f32.gmra.mxu0 %v2307
        %v2309 = vpop.f32.mrf.mxu0
        %v2310 = vadd.f32 %v717, %v2309
        %v2311 = vpop.f32.mrf.mxu0
        %2312 = vmatprep.mubr.f32.mxu0 0.0
        %v2313 = vand.u32 %v1063, 4294901760
        %v2314 = vsub.f32 %v1063, %v2313
        %v2315 = vand.u32 %v2314, 4294901760
        %v2316 = vsub.f32 %v2314, %v2315
        %v2317 = vand.u32 %v2316, 4294901760
        %2318 = vmatmul.mubr.f32.gmra.mxu0 %v2317
        %v2319 = vpop.f32.mrf.mxu0
        %v2320 = vadd.f32 %v717, %v2319
        %v2321 = vpop.f32.mrf.mxu0
        %2322 = vmatprep.mubr.f32.mxu0 0.0
        %v2323 = vand.u32 %v1066, 4294901760
        %v2324 = vsub.f32 %v1066, %v2323
        %v2325 = vand.u32 %v2324, 4294901760
        %v2326 = vsub.f32 %v2324, %v2325
        %v2327 = vand.u32 %v2326, 4294901760
        %2328 = vmatmul.mubr.f32.gmra.mxu0 %v2327
        %v2329 = vpop.f32.mrf.mxu0
        %v2330 = vadd.f32 %v717, %v2329
        %v2331 = vpop.f32.mrf.mxu0
        %2332 = vmatprep.mubr.f32.mxu0 0.0
        %v2333 = vand.u32 %v1069, 4294901760
        %v2334 = vsub.f32 %v1069, %v2333
        %v2335 = vand.u32 %v2334, 4294901760
        %v2336 = vsub.f32 %v2334, %v2335
        %v2337 = vand.u32 %v2336, 4294901760
        %2338 = vmatmul.mubr.f32.gmra.mxu0 %v2337
        %v2339 = vpop.f32.mrf.mxu0
        %v2340 = vadd.f32 %v717, %v2339
        %v2341 = vpop.f32.mrf.mxu0
        %2342 = vmatprep.mubr.f32.mxu0 0.0
        %v2343 = vand.u32 %v1072, 4294901760
        %v2344 = vsub.f32 %v1072, %v2343
        %v2345 = vand.u32 %v2344, 4294901760
        %v2346 = vsub.f32 %v2344, %v2345
        %v2347 = vand.u32 %v2346, 4294901760
        %2348 = vmatmul.mubr.f32.gmra.mxu0 %v2347
        %v2349 = vpop.f32.mrf.mxu0
        %v2350 = vadd.f32 %v717, %v2349
        %v2351 = vpop.f32.mrf.mxu0
        %2352 = vmatprep.mubr.f32.mxu0 0.0
        %v2353 = vand.u32 %v1075, 4294901760
        %v2354 = vsub.f32 %v1075, %v2353
        %v2355 = vand.u32 %v2354, 4294901760
        %v2356 = vsub.f32 %v2354, %v2355
        %v2357 = vand.u32 %v2356, 4294901760
        %2358 = vmatmul.mubr.f32.gmra.mxu0 %v2357
        %v2359 = vpop.f32.mrf.mxu0
        %v2360 = vadd.f32 %v717, %v2359
        %v2361 = vpop.f32.mrf.mxu0
        %2362 = vmatprep.mubr.f32.mxu0 0.0
        %v2363 = vand.u32 %v1078, 4294901760
        %v2364 = vsub.f32 %v1078, %v2363
        %v2365 = vand.u32 %v2364, 4294901760
        %v2366 = vsub.f32 %v2364, %v2365
        %v2367 = vand.u32 %v2366, 4294901760
        %2368 = vmatmul.mubr.f32.gmra.mxu0 %v2367
        %v2369 = vpop.f32.mrf.mxu0
        %v2370 = vadd.f32 %v717, %v2369
        %v2371 = vpop.f32.mrf.mxu0
        %2372 = vmatprep.mubr.f32.mxu0 0.0
        %v2373 = vand.u32 %v1081, 4294901760
        %v2374 = vsub.f32 %v1081, %v2373
        %v2375 = vand.u32 %v2374, 4294901760
        %v2376 = vsub.f32 %v2374, %v2375
        %v2377 = vand.u32 %v2376, 4294901760
        %2378 = vmatmul.mubr.f32.gmra.mxu0 %v2377
        %v2379 = vpop.f32.mrf.mxu0
        %v2380 = vadd.f32 %v717, %v2379
        %v2381 = vpop.f32.mrf.mxu0
        %2382 = vmatprep.mubr.f32.mxu0 0.0
        %v2383 = vand.u32 %v1084, 4294901760
        %v2384 = vsub.f32 %v1084, %v2383
        %v2385 = vand.u32 %v2384, 4294901760
        %v2386 = vsub.f32 %v2384, %v2385
        %v2387 = vand.u32 %v2386, 4294901760
        %2388 = vmatmul.mubr.f32.gmra.mxu0 %v2387
        %v2389 = vpop.f32.mrf.mxu0
        %v2390 = vadd.f32 %v717, %v2389
        %v2391 = vpop.f32.mrf.mxu0
        %2392 = vmatprep.mubr.f32.mxu0 0.0
        %v2393 = vand.u32 %v1087, 4294901760
        %v2394 = vsub.f32 %v1087, %v2393
        %v2395 = vand.u32 %v2394, 4294901760
        %v2396 = vsub.f32 %v2394, %v2395
        %v2397 = vand.u32 %v2396, 4294901760
        %2398 = vmatmul.mubr.f32.gmra.mxu0 %v2397
        %v2399 = vpop.f32.mrf.mxu0
        %v2400 = vadd.f32 %v717, %v2399
        %v2401 = vpop.f32.mrf.mxu0
        %2402 = vmatprep.mubr.f32.mxu0 0.0
        %v2403 = vand.u32 %v1090, 4294901760
        %v2404 = vsub.f32 %v1090, %v2403
        %v2405 = vand.u32 %v2404, 4294901760
        %v2406 = vsub.f32 %v2404, %v2405
        %v2407 = vand.u32 %v2406, 4294901760
        %2408 = vmatmul.mubr.f32.gmra.mxu0 %v2407
        %v2409 = vpop.f32.mrf.mxu0
        %v2410 = vadd.f32 %v717, %v2409
        %v2411 = vpop.f32.mrf.mxu0
        %2412 = vmatprep.mubr.f32.mxu0 0.0
        %v2413 = vand.u32 %v1093, 4294901760
        %v2414 = vsub.f32 %v1093, %v2413
        %v2415 = vand.u32 %v2414, 4294901760
        %v2416 = vsub.f32 %v2414, %v2415
        %v2417 = vand.u32 %v2416, 4294901760
        %2418 = vmatmul.mubr.f32.gmra.mxu0 %v2417
        %v2419 = vpop.f32.mrf.mxu0
        %v2420 = vadd.f32 %v717, %v2419
        %v2421 = vpop.f32.mrf.mxu0
        %2422 = vmatprep.mubr.f32.mxu0 0.0
        %v2423 = vand.u32 %v1096, 4294901760
        %v2424 = vsub.f32 %v1096, %v2423
        %v2425 = vand.u32 %v2424, 4294901760
        %v2426 = vsub.f32 %v2424, %v2425
        %v2427 = vand.u32 %v2426, 4294901760
        %2428 = vmatmul.mubr.f32.gmra.mxu0 %v2427
        %v2429 = vpop.f32.mrf.mxu0
        %v2430 = vadd.f32 %v717, %v2429
        %v2431 = vpop.f32.mrf.mxu0
        %2432 = vmatprep.mubr.f32.mxu0 0.0
        %v2433 = vand.u32 %v1099, 4294901760
        %v2434 = vsub.f32 %v1099, %v2433
        %v2435 = vand.u32 %v2434, 4294901760
        %v2436 = vsub.f32 %v2434, %v2435
        %v2437 = vand.u32 %v2436, 4294901760
        %2438 = vmatmul.mubr.f32.gmra.mxu0 %v2437
        %v2439 = vpop.f32.mrf.mxu0
        %v2440 = vadd.f32 %v717, %v2439
        %v2441 = vpop.f32.mrf.mxu0
        %2442 = vmatprep.mubr.f32.mxu0 0.0
        %v2443 = vand.u32 %v1102, 4294901760
        %v2444 = vsub.f32 %v1102, %v2443
        %v2445 = vand.u32 %v2444, 4294901760
        %v2446 = vsub.f32 %v2444, %v2445
        %v2447 = vand.u32 %v2446, 4294901760
        %2448 = vmatmul.mubr.f32.gmra.mxu0 %v2447
        %v2449 = vpop.f32.mrf.mxu0
        %v2450 = vadd.f32 %v717, %v2449
        %v2451 = vpop.f32.mrf.mxu0
        %2452 = vdwg.mxu0
        %2453 = vmatprep.subr.mxu0 0.0
        %2454 = vmatpush1.msra.mxu0 0.0
        %2455 = vmatprep.subr.mxu0 0.0
        %2456 = vmatpush1.msra.mxu0 0.0
        %2457 = vmatprep.subr.mxu0 0.0
        %2458 = vmatpush1.msra.mxu0 0.0
        %2459 = vmatprep.subr.mxu0 0.0
        %2460 = vmatpush1.msra.mxu0 0.0
        %2461 = vmatprep.subr.mxu0 0.0
        %2462 = vmatpush1.msra.mxu0 0.0
        %2463 = vmatprep.subr.mxu0 0.0
        %2464 = vmatpush1.msra.mxu0 0.0
        %2465 = vmatprep.subr.mxu0 0.0
        %2466 = vmatpush1.msra.mxu0 0.0
        %2467 = vmatprep.subr.mxu0 0.0
        %2468 = vmatpush1.msra.mxu0 0.0
        %2469 = vmatprep.subr.mxu0 0.0
        %2470 = vmatpush1.msra.mxu0 0.0
        %2471 = vmatprep.subr.mxu0 0.0
        %2472 = vmatpush1.msra.mxu0 0.0
        %2473 = vmatprep.subr.mxu0 0.0
        %2474 = vmatpush1.msra.mxu0 0.0
        %2475 = vmatprep.subr.mxu0 0.0
        %2476 = vmatpush1.msra.mxu0 0.0
        %2477 = vmatprep.subr.mxu0 0.0
        %v2478 = vand.u32 %v711, 4294901760
        %v2479 = vsub.f32 %v711, %v2478
        %v2480 = vand.u32 %v2479, 4294901760
        %v2481 = vsub.f32 %v2479, %v2480
        %v2482 = vand.u32 %v2481, 4294901760
        %2483 = vmatpush1.msra.mxu0 %v2482
        %2484 = vmatprep.subr.mxu0 0.0
        %v2485 = vand.u32 %v710, 4294901760
        %v2486 = vsub.f32 %v710, %v2485
        %v2487 = vand.u32 %v2486, 4294901760
        %v2488 = vsub.f32 %v2486, %v2487
        %v2489 = vand.u32 %v2488, 4294901760
        %2490 = vmatpush1.msra.mxu0 %v2489
        %2491 = vmatprep.subr.mxu0 0.0
        %v2492 = vand.u32 %v709, 4294901760
        %v2493 = vsub.f32 %v709, %v2492
        %v2494 = vand.u32 %v2493, 4294901760
        %v2495 = vsub.f32 %v2493, %v2494
        %v2496 = vand.u32 %v2495, 4294901760
        %2497 = vmatpush1.msra.mxu0 %v2496
        %2498 = vmatprep.subr.mxu0 0.0
        %v2499 = vand.u32 %v708, 4294901760
        %v2500 = vsub.f32 %v708, %v2499
        %v2501 = vand.u32 %v2500, 4294901760
        %v2502 = vsub.f32 %v2500, %v2501
        %v2503 = vand.u32 %v2502, 4294901760
        %2504 = vmatpush1.msra.mxu0 %v2503
        %2505 = vmatprep.subr.mxu0 0.0
        %2506 = vmatpush2.msra.mxu0 0.0
        %2507 = vmatprep.subr.mxu0 0.0
        %2508 = vmatpush2.msra.mxu0 0.0
        %2509 = vmatprep.subr.mxu0 0.0
        %2510 = vmatpush2.msra.mxu0 0.0
        %2511 = vmatprep.subr.mxu0 0.0
        %2512 = vmatpush2.msra.mxu0 0.0
        %2513 = vmatprep.subr.mxu0 0.0
        %2514 = vmatpush2.msra.mxu0 0.0
        %2515 = vmatprep.subr.mxu0 0.0
        %2516 = vmatpush2.msra.mxu0 0.0
        %2517 = vmatprep.subr.mxu0 0.0
        %2518 = vmatpush2.msra.mxu0 0.0
        %2519 = vmatprep.subr.mxu0 0.0
        %2520 = vmatpush2.msra.mxu0 0.0
        %2521 = vmatprep.subr.mxu0 0.0
        %2522 = vmatpush2.msra.mxu0 0.0
        %2523 = vmatprep.subr.mxu0 0.0
        %2524 = vmatpush2.msra.mxu0 0.0
        %2525 = vmatprep.subr.mxu0 0.0
        %2526 = vmatpush2.msra.mxu0 0.0
        %2527 = vmatprep.subr.mxu0 0.0
        %2528 = vmatpush2.msra.mxu0 0.0
        %2529 = vmatprep.subr.mxu0 0.0
        %2530 = vmatpush2.msra.mxu0 0.0
        %2531 = vmatprep.subr.mxu0 0.0
        %2532 = vmatpush2.msra.mxu0 0.0
        %2533 = vmatprep.subr.mxu0 0.0
        %2534 = vmatpush2.msra.mxu0 0.0
        %2535 = vmatprep.subr.mxu0 0.0
        %2536 = vmatpush2.msra.mxu0 0.0
        %2537 = vmatprep.mubr.f32.mxu0 0.0
        %v2538 = vand.u32 %v721, 4294901760
        %2539 = vmatmul.mubr.f32.gmra.mxu0 %v2538
        %v2540 = vpop.f32.mrf.mxu0
        %v2541 = vadd.f32 %v1180, %v2540
        %v2542 = vpop.f32.mrf.mxu0
        %2543 = vmatprep.mubr.f32.mxu0 0.0
        %v2544 = vand.u32 %v724, 4294901760
        %2545 = vmatmul.mubr.f32.gmra.mxu0 %v2544
        %v2546 = vpop.f32.mrf.mxu0
        %v2547 = vadd.f32 %v1190, %v2546
        %v2548 = vpop.f32.mrf.mxu0
        %2549 = vmatprep.mubr.f32.mxu0 0.0
        %v2550 = vand.u32 %v727, 4294901760
        %2551 = vmatmul.mubr.f32.gmra.mxu0 %v2550
        %v2552 = vpop.f32.mrf.mxu0
        %v2553 = vadd.f32 %v1200, %v2552
        %v2554 = vpop.f32.mrf.mxu0
        %2555 = vmatprep.mubr.f32.mxu0 0.0
        %v2556 = vand.u32 %v730, 4294901760
        %2557 = vmatmul.mubr.f32.gmra.mxu0 %v2556
        %v2558 = vpop.f32.mrf.mxu0
        %v2559 = vadd.f32 %v1210, %v2558
        %v2560 = vpop.f32.mrf.mxu0
        %2561 = vmatprep.mubr.f32.mxu0 0.0
        %v2562 = vand.u32 %v733, 4294901760
        %2563 = vmatmul.mubr.f32.gmra.mxu0 %v2562
        %v2564 = vpop.f32.mrf.mxu0
        %v2565 = vadd.f32 %v1220, %v2564
        %v2566 = vpop.f32.mrf.mxu0
        %2567 = vmatprep.mubr.f32.mxu0 0.0
        %v2568 = vand.u32 %v736, 4294901760
        %2569 = vmatmul.mubr.f32.gmra.mxu0 %v2568
        %v2570 = vpop.f32.mrf.mxu0
        %v2571 = vadd.f32 %v1230, %v2570
        %v2572 = vpop.f32.mrf.mxu0
        %2573 = vmatprep.mubr.f32.mxu0 0.0
        %v2574 = vand.u32 %v739, 4294901760
        %2575 = vmatmul.mubr.f32.gmra.mxu0 %v2574
        %v2576 = vpop.f32.mrf.mxu0
        %v2577 = vadd.f32 %v1240, %v2576
        %v2578 = vpop.f32.mrf.mxu0
        %2579 = vmatprep.mubr.f32.mxu0 0.0
        %v2580 = vand.u32 %v742, 4294901760
        %2581 = vmatmul.mubr.f32.gmra.mxu0 %v2580
        %v2582 = vpop.f32.mrf.mxu0
        %v2583 = vadd.f32 %v1250, %v2582
        %v2584 = vpop.f32.mrf.mxu0
        %2585 = vmatprep.mubr.f32.mxu0 0.0
        %v2586 = vand.u32 %v745, 4294901760
        %2587 = vmatmul.mubr.f32.gmra.mxu0 %v2586
        %v2588 = vpop.f32.mrf.mxu0
        %v2589 = vadd.f32 %v1260, %v2588
        %v2590 = vpop.f32.mrf.mxu0
        %2591 = vmatprep.mubr.f32.mxu0 0.0
        %v2592 = vand.u32 %v748, 4294901760
        %2593 = vmatmul.mubr.f32.gmra.mxu0 %v2592
        %v2594 = vpop.f32.mrf.mxu0
        %v2595 = vadd.f32 %v1270, %v2594
        %v2596 = vpop.f32.mrf.mxu0
        %2597 = vmatprep.mubr.f32.mxu0 0.0
        %v2598 = vand.u32 %v751, 4294901760
        %2599 = vmatmul.mubr.f32.gmra.mxu0 %v2598
        %v2600 = vpop.f32.mrf.mxu0
        %v2601 = vadd.f32 %v1280, %v2600
        %v2602 = vpop.f32.mrf.mxu0
        %2603 = vmatprep.mubr.f32.mxu0 0.0
        %v2604 = vand.u32 %v754, 4294901760
        %2605 = vmatmul.mubr.f32.gmra.mxu0 %v2604
        %v2606 = vpop.f32.mrf.mxu0
        %v2607 = vadd.f32 %v1290, %v2606
        %v2608 = vpop.f32.mrf.mxu0
        %2609 = vmatprep.mubr.f32.mxu0 0.0
        %v2610 = vand.u32 %v757, 4294901760
        %2611 = vmatmul.mubr.f32.gmra.mxu0 %v2610
        %v2612 = vpop.f32.mrf.mxu0
        %v2613 = vadd.f32 %v1300, %v2612
        %v2614 = vpop.f32.mrf.mxu0
        %2615 = vmatprep.mubr.f32.mxu0 0.0
        %v2616 = vand.u32 %v760, 4294901760
        %2617 = vmatmul.mubr.f32.gmra.mxu0 %v2616
        %v2618 = vpop.f32.mrf.mxu0
        %v2619 = vadd.f32 %v1310, %v2618
        %v2620 = vpop.f32.mrf.mxu0
        %2621 = vmatprep.mubr.f32.mxu0 0.0
        %v2622 = vand.u32 %v763, 4294901760
        %2623 = vmatmul.mubr.f32.gmra.mxu0 %v2622
        %v2624 = vpop.f32.mrf.mxu0
        %v2625 = vadd.f32 %v1320, %v2624
        %v2626 = vpop.f32.mrf.mxu0
        %2627 = vmatprep.mubr.f32.mxu0 0.0
        %v2628 = vand.u32 %v766, 4294901760
        %2629 = vmatmul.mubr.f32.gmra.mxu0 %v2628
        %v2630 = vpop.f32.mrf.mxu0
        %v2631 = vadd.f32 %v1330, %v2630
        %v2632 = vpop.f32.mrf.mxu0
        %2633 = vmatprep.mubr.f32.mxu0 0.0
        %v2634 = vand.u32 %v769, 4294901760
        %2635 = vmatmul.mubr.f32.gmra.mxu0 %v2634
        %v2636 = vpop.f32.mrf.mxu0
        %v2637 = vadd.f32 %v1340, %v2636
        %v2638 = vpop.f32.mrf.mxu0
        %2639 = vmatprep.mubr.f32.mxu0 0.0
        %v2640 = vand.u32 %v772, 4294901760
        %2641 = vmatmul.mubr.f32.gmra.mxu0 %v2640
        %v2642 = vpop.f32.mrf.mxu0
        %v2643 = vadd.f32 %v1350, %v2642
        %v2644 = vpop.f32.mrf.mxu0
        %2645 = vmatprep.mubr.f32.mxu0 0.0
        %v2646 = vand.u32 %v775, 4294901760
        %2647 = vmatmul.mubr.f32.gmra.mxu0 %v2646
        %v2648 = vpop.f32.mrf.mxu0
        %v2649 = vadd.f32 %v1360, %v2648
        %v2650 = vpop.f32.mrf.mxu0
        %2651 = vmatprep.mubr.f32.mxu0 0.0
        %v2652 = vand.u32 %v778, 4294901760
        %2653 = vmatmul.mubr.f32.gmra.mxu0 %v2652
        %v2654 = vpop.f32.mrf.mxu0
        %v2655 = vadd.f32 %v1370, %v2654
        %v2656 = vpop.f32.mrf.mxu0
        %2657 = vmatprep.mubr.f32.mxu0 0.0
        %v2658 = vand.u32 %v781, 4294901760
        %2659 = vmatmul.mubr.f32.gmra.mxu0 %v2658
        %v2660 = vpop.f32.mrf.mxu0
        %v2661 = vadd.f32 %v1380, %v2660
        %v2662 = vpop.f32.mrf.mxu0
        %2663 = vmatprep.mubr.f32.mxu0 0.0
        %v2664 = vand.u32 %v784, 4294901760
        %2665 = vmatmul.mubr.f32.gmra.mxu0 %v2664
        %v2666 = vpop.f32.mrf.mxu0
        %v2667 = vadd.f32 %v1390, %v2666
        %v2668 = vpop.f32.mrf.mxu0
        %2669 = vmatprep.mubr.f32.mxu0 0.0
        %v2670 = vand.u32 %v787, 4294901760
        %2671 = vmatmul.mubr.f32.gmra.mxu0 %v2670
        %v2672 = vpop.f32.mrf.mxu0
        %v2673 = vadd.f32 %v1400, %v2672
        %v2674 = vpop.f32.mrf.mxu0
        %2675 = vmatprep.mubr.f32.mxu0 0.0
        %v2676 = vand.u32 %v790, 4294901760
        %2677 = vmatmul.mubr.f32.gmra.mxu0 %v2676
        %v2678 = vpop.f32.mrf.mxu0
        %v2679 = vadd.f32 %v1410, %v2678
        %v2680 = vpop.f32.mrf.mxu0
        %2681 = vmatprep.mubr.f32.mxu0 0.0
        %v2682 = vand.u32 %v793, 4294901760
        %2683 = vmatmul.mubr.f32.gmra.mxu0 %v2682
        %v2684 = vpop.f32.mrf.mxu0
        %v2685 = vadd.f32 %v1420, %v2684
        %v2686 = vpop.f32.mrf.mxu0
        %2687 = vmatprep.mubr.f32.mxu0 0.0
        %v2688 = vand.u32 %v796, 4294901760
        %2689 = vmatmul.mubr.f32.gmra.mxu0 %v2688
        %v2690 = vpop.f32.mrf.mxu0
        %v2691 = vadd.f32 %v1430, %v2690
        %v2692 = vpop.f32.mrf.mxu0
        %2693 = vmatprep.mubr.f32.mxu0 0.0
        %v2694 = vand.u32 %v799, 4294901760
        %2695 = vmatmul.mubr.f32.gmra.mxu0 %v2694
        %v2696 = vpop.f32.mrf.mxu0
        %v2697 = vadd.f32 %v1440, %v2696
        %v2698 = vpop.f32.mrf.mxu0
        %2699 = vmatprep.mubr.f32.mxu0 0.0
        %v2700 = vand.u32 %v802, 4294901760
        %2701 = vmatmul.mubr.f32.gmra.mxu0 %v2700
        %v2702 = vpop.f32.mrf.mxu0
        %v2703 = vadd.f32 %v1450, %v2702
        %v2704 = vpop.f32.mrf.mxu0
        %2705 = vmatprep.mubr.f32.mxu0 0.0
        %v2706 = vand.u32 %v805, 4294901760
        %2707 = vmatmul.mubr.f32.gmra.mxu0 %v2706
        %v2708 = vpop.f32.mrf.mxu0
        %v2709 = vadd.f32 %v1460, %v2708
        %v2710 = vpop.f32.mrf.mxu0
        %2711 = vmatprep.mubr.f32.mxu0 0.0
        %v2712 = vand.u32 %v808, 4294901760
        %2713 = vmatmul.mubr.f32.gmra.mxu0 %v2712
        %v2714 = vpop.f32.mrf.mxu0
        %v2715 = vadd.f32 %v1470, %v2714
        %v2716 = vpop.f32.mrf.mxu0
        %2717 = vmatprep.mubr.f32.mxu0 0.0
        %v2718 = vand.u32 %v811, 4294901760
        %2719 = vmatmul.mubr.f32.gmra.mxu0 %v2718
        %v2720 = vpop.f32.mrf.mxu0
        %v2721 = vadd.f32 %v1480, %v2720
        %v2722 = vpop.f32.mrf.mxu0
        %2723 = vmatprep.mubr.f32.mxu0 0.0
        %v2724 = vand.u32 %v814, 4294901760
        %2725 = vmatmul.mubr.f32.gmra.mxu0 %v2724
        %v2726 = vpop.f32.mrf.mxu0
        %v2727 = vadd.f32 %v1490, %v2726
        %v2728 = vpop.f32.mrf.mxu0
        %2729 = vmatprep.mubr.f32.mxu0 0.0
        %v2730 = vand.u32 %v817, 4294901760
        %2731 = vmatmul.mubr.f32.gmra.mxu0 %v2730
        %v2732 = vpop.f32.mrf.mxu0
        %v2733 = vadd.f32 %v1500, %v2732
        %v2734 = vpop.f32.mrf.mxu0
        %2735 = vmatprep.mubr.f32.mxu0 0.0
        %v2736 = vand.u32 %v820, 4294901760
        %2737 = vmatmul.mubr.f32.gmra.mxu0 %v2736
        %v2738 = vpop.f32.mrf.mxu0
        %v2739 = vadd.f32 %v1510, %v2738
        %v2740 = vpop.f32.mrf.mxu0
        %2741 = vmatprep.mubr.f32.mxu0 0.0
        %v2742 = vand.u32 %v823, 4294901760
        %2743 = vmatmul.mubr.f32.gmra.mxu0 %v2742
        %v2744 = vpop.f32.mrf.mxu0
        %v2745 = vadd.f32 %v1520, %v2744
        %v2746 = vpop.f32.mrf.mxu0
        %2747 = vmatprep.mubr.f32.mxu0 0.0
        %v2748 = vand.u32 %v826, 4294901760
        %2749 = vmatmul.mubr.f32.gmra.mxu0 %v2748
        %v2750 = vpop.f32.mrf.mxu0
        %v2751 = vadd.f32 %v1530, %v2750
        %v2752 = vpop.f32.mrf.mxu0
        %2753 = vmatprep.mubr.f32.mxu0 0.0
        %v2754 = vand.u32 %v829, 4294901760
        %2755 = vmatmul.mubr.f32.gmra.mxu0 %v2754
        %v2756 = vpop.f32.mrf.mxu0
        %v2757 = vadd.f32 %v1540, %v2756
        %v2758 = vpop.f32.mrf.mxu0
        %2759 = vmatprep.mubr.f32.mxu0 0.0
        %v2760 = vand.u32 %v832, 4294901760
        %2761 = vmatmul.mubr.f32.gmra.mxu0 %v2760
        %v2762 = vpop.f32.mrf.mxu0
        %v2763 = vadd.f32 %v1550, %v2762
        %v2764 = vpop.f32.mrf.mxu0
        %2765 = vmatprep.mubr.f32.mxu0 0.0
        %v2766 = vand.u32 %v835, 4294901760
        %2767 = vmatmul.mubr.f32.gmra.mxu0 %v2766
        %v2768 = vpop.f32.mrf.mxu0
        %v2769 = vadd.f32 %v1560, %v2768
        %v2770 = vpop.f32.mrf.mxu0
        %2771 = vmatprep.mubr.f32.mxu0 0.0
        %v2772 = vand.u32 %v838, 4294901760
        %2773 = vmatmul.mubr.f32.gmra.mxu0 %v2772
        %v2774 = vpop.f32.mrf.mxu0
        %v2775 = vadd.f32 %v1570, %v2774
        %v2776 = vpop.f32.mrf.mxu0
        %2777 = vmatprep.mubr.f32.mxu0 0.0
        %v2778 = vand.u32 %v841, 4294901760
        %2779 = vmatmul.mubr.f32.gmra.mxu0 %v2778
        %v2780 = vpop.f32.mrf.mxu0
        %v2781 = vadd.f32 %v1580, %v2780
        %v2782 = vpop.f32.mrf.mxu0
        %2783 = vmatprep.mubr.f32.mxu0 0.0
        %v2784 = vand.u32 %v844, 4294901760
        %2785 = vmatmul.mubr.f32.gmra.mxu0 %v2784
        %v2786 = vpop.f32.mrf.mxu0
        %v2787 = vadd.f32 %v1590, %v2786
        %v2788 = vpop.f32.mrf.mxu0
        %2789 = vmatprep.mubr.f32.mxu0 0.0
        %v2790 = vand.u32 %v847, 4294901760
        %2791 = vmatmul.mubr.f32.gmra.mxu0 %v2790
        %v2792 = vpop.f32.mrf.mxu0
        %v2793 = vadd.f32 %v1600, %v2792
        %v2794 = vpop.f32.mrf.mxu0
        %2795 = vmatprep.mubr.f32.mxu0 0.0
        %v2796 = vand.u32 %v850, 4294901760
        %2797 = vmatmul.mubr.f32.gmra.mxu0 %v2796
        %v2798 = vpop.f32.mrf.mxu0
        %v2799 = vadd.f32 %v1610, %v2798
        %v2800 = vpop.f32.mrf.mxu0
        %2801 = vmatprep.mubr.f32.mxu0 0.0
        %v2802 = vand.u32 %v853, 4294901760
        %2803 = vmatmul.mubr.f32.gmra.mxu0 %v2802
        %v2804 = vpop.f32.mrf.mxu0
        %v2805 = vadd.f32 %v1620, %v2804
        %v2806 = vpop.f32.mrf.mxu0
        %2807 = vmatprep.mubr.f32.mxu0 0.0
        %v2808 = vand.u32 %v856, 4294901760
        %2809 = vmatmul.mubr.f32.gmra.mxu0 %v2808
        %v2810 = vpop.f32.mrf.mxu0
        %v2811 = vadd.f32 %v1630, %v2810
        %v2812 = vpop.f32.mrf.mxu0
        %2813 = vmatprep.mubr.f32.mxu0 0.0
        %v2814 = vand.u32 %v859, 4294901760
        %2815 = vmatmul.mubr.f32.gmra.mxu0 %v2814
        %v2816 = vpop.f32.mrf.mxu0
        %v2817 = vadd.f32 %v1640, %v2816
        %v2818 = vpop.f32.mrf.mxu0
        %2819 = vmatprep.mubr.f32.mxu0 0.0
        %v2820 = vand.u32 %v862, 4294901760
        %2821 = vmatmul.mubr.f32.gmra.mxu0 %v2820
        %v2822 = vpop.f32.mrf.mxu0
        %v2823 = vadd.f32 %v1650, %v2822
        %v2824 = vpop.f32.mrf.mxu0
        %2825 = vmatprep.mubr.f32.mxu0 0.0
        %v2826 = vand.u32 %v865, 4294901760
        %2827 = vmatmul.mubr.f32.gmra.mxu0 %v2826
        %v2828 = vpop.f32.mrf.mxu0
        %v2829 = vadd.f32 %v1660, %v2828
        %v2830 = vpop.f32.mrf.mxu0
        %2831 = vmatprep.mubr.f32.mxu0 0.0
        %v2832 = vand.u32 %v868, 4294901760
        %2833 = vmatmul.mubr.f32.gmra.mxu0 %v2832
        %v2834 = vpop.f32.mrf.mxu0
        %v2835 = vadd.f32 %v1670, %v2834
        %v2836 = vpop.f32.mrf.mxu0
        %2837 = vmatprep.mubr.f32.mxu0 0.0
        %v2838 = vand.u32 %v871, 4294901760
        %2839 = vmatmul.mubr.f32.gmra.mxu0 %v2838
        %v2840 = vpop.f32.mrf.mxu0
        %v2841 = vadd.f32 %v1680, %v2840
        %v2842 = vpop.f32.mrf.mxu0
        %2843 = vmatprep.mubr.f32.mxu0 0.0
        %v2844 = vand.u32 %v874, 4294901760
        %2845 = vmatmul.mubr.f32.gmra.mxu0 %v2844
        %v2846 = vpop.f32.mrf.mxu0
        %v2847 = vadd.f32 %v1690, %v2846
        %v2848 = vpop.f32.mrf.mxu0
        %2849 = vmatprep.mubr.f32.mxu0 0.0
        %v2850 = vand.u32 %v877, 4294901760
        %2851 = vmatmul.mubr.f32.gmra.mxu0 %v2850
        %v2852 = vpop.f32.mrf.mxu0
        %v2853 = vadd.f32 %v1700, %v2852
        %v2854 = vpop.f32.mrf.mxu0
        %2855 = vmatprep.mubr.f32.mxu0 0.0
        %v2856 = vand.u32 %v880, 4294901760
        %2857 = vmatmul.mubr.f32.gmra.mxu0 %v2856
        %v2858 = vpop.f32.mrf.mxu0
        %v2859 = vadd.f32 %v1710, %v2858
        %v2860 = vpop.f32.mrf.mxu0
        %2861 = vmatprep.mubr.f32.mxu0 0.0
        %v2862 = vand.u32 %v883, 4294901760
        %2863 = vmatmul.mubr.f32.gmra.mxu0 %v2862
        %v2864 = vpop.f32.mrf.mxu0
        %v2865 = vadd.f32 %v1720, %v2864
        %v2866 = vpop.f32.mrf.mxu0
        %2867 = vmatprep.mubr.f32.mxu0 0.0
        %v2868 = vand.u32 %v886, 4294901760
        %2869 = vmatmul.mubr.f32.gmra.mxu0 %v2868
        %v2870 = vpop.f32.mrf.mxu0
        %v2871 = vadd.f32 %v1730, %v2870
        %v2872 = vpop.f32.mrf.mxu0
        %2873 = vmatprep.mubr.f32.mxu0 0.0
        %v2874 = vand.u32 %v889, 4294901760
        %2875 = vmatmul.mubr.f32.gmra.mxu0 %v2874
        %v2876 = vpop.f32.mrf.mxu0
        %v2877 = vadd.f32 %v1740, %v2876
        %v2878 = vpop.f32.mrf.mxu0
        %2879 = vmatprep.mubr.f32.mxu0 0.0
        %v2880 = vand.u32 %v892, 4294901760
        %2881 = vmatmul.mubr.f32.gmra.mxu0 %v2880
        %v2882 = vpop.f32.mrf.mxu0
        %v2883 = vadd.f32 %v1750, %v2882
        %v2884 = vpop.f32.mrf.mxu0
        %2885 = vmatprep.mubr.f32.mxu0 0.0
        %v2886 = vand.u32 %v895, 4294901760
        %2887 = vmatmul.mubr.f32.gmra.mxu0 %v2886
        %v2888 = vpop.f32.mrf.mxu0
        %v2889 = vadd.f32 %v1760, %v2888
        %v2890 = vpop.f32.mrf.mxu0
        %2891 = vmatprep.mubr.f32.mxu0 0.0
        %v2892 = vand.u32 %v898, 4294901760
        %2893 = vmatmul.mubr.f32.gmra.mxu0 %v2892
        %v2894 = vpop.f32.mrf.mxu0
        %v2895 = vadd.f32 %v1770, %v2894
        %v2896 = vpop.f32.mrf.mxu0
        %2897 = vmatprep.mubr.f32.mxu0 0.0
        %v2898 = vand.u32 %v901, 4294901760
        %2899 = vmatmul.mubr.f32.gmra.mxu0 %v2898
        %v2900 = vpop.f32.mrf.mxu0
        %v2901 = vadd.f32 %v1780, %v2900
        %v2902 = vpop.f32.mrf.mxu0
        %2903 = vmatprep.mubr.f32.mxu0 0.0
        %v2904 = vand.u32 %v904, 4294901760
        %2905 = vmatmul.mubr.f32.gmra.mxu0 %v2904
        %v2906 = vpop.f32.mrf.mxu0
        %v2907 = vadd.f32 %v1790, %v2906
        %v2908 = vpop.f32.mrf.mxu0
        %2909 = vmatprep.mubr.f32.mxu0 0.0
        %v2910 = vand.u32 %v907, 4294901760
        %2911 = vmatmul.mubr.f32.gmra.mxu0 %v2910
        %v2912 = vpop.f32.mrf.mxu0
        %v2913 = vadd.f32 %v1800, %v2912
        %v2914 = vpop.f32.mrf.mxu0
        %2915 = vmatprep.mubr.f32.mxu0 0.0
        %v2916 = vand.u32 %v910, 4294901760
        %2917 = vmatmul.mubr.f32.gmra.mxu0 %v2916
        %v2918 = vpop.f32.mrf.mxu0
        %v2919 = vadd.f32 %v1810, %v2918
        %v2920 = vpop.f32.mrf.mxu0
        %2921 = vmatprep.mubr.f32.mxu0 0.0
        %v2922 = vand.u32 %v913, 4294901760
        %2923 = vmatmul.mubr.f32.gmra.mxu0 %v2922
        %v2924 = vpop.f32.mrf.mxu0
        %v2925 = vadd.f32 %v1820, %v2924
        %v2926 = vpop.f32.mrf.mxu0
        %2927 = vmatprep.mubr.f32.mxu0 0.0
        %v2928 = vand.u32 %v916, 4294901760
        %2929 = vmatmul.mubr.f32.gmra.mxu0 %v2928
        %v2930 = vpop.f32.mrf.mxu0
        %v2931 = vadd.f32 %v1830, %v2930
        %v2932 = vpop.f32.mrf.mxu0
        %2933 = vmatprep.mubr.f32.mxu0 0.0
        %v2934 = vand.u32 %v919, 4294901760
        %2935 = vmatmul.mubr.f32.gmra.mxu0 %v2934
        %v2936 = vpop.f32.mrf.mxu0
        %v2937 = vadd.f32 %v1840, %v2936
        %v2938 = vpop.f32.mrf.mxu0
        %2939 = vmatprep.mubr.f32.mxu0 0.0
        %v2940 = vand.u32 %v922, 4294901760
        %2941 = vmatmul.mubr.f32.gmra.mxu0 %v2940
        %v2942 = vpop.f32.mrf.mxu0
        %v2943 = vadd.f32 %v1850, %v2942
        %v2944 = vpop.f32.mrf.mxu0
        %2945 = vmatprep.mubr.f32.mxu0 0.0
        %v2946 = vand.u32 %v925, 4294901760
        %2947 = vmatmul.mubr.f32.gmra.mxu0 %v2946
        %v2948 = vpop.f32.mrf.mxu0
        %v2949 = vadd.f32 %v1860, %v2948
        %v2950 = vpop.f32.mrf.mxu0
        %2951 = vmatprep.mubr.f32.mxu0 0.0
        %v2952 = vand.u32 %v928, 4294901760
        %2953 = vmatmul.mubr.f32.gmra.mxu0 %v2952
        %v2954 = vpop.f32.mrf.mxu0
        %v2955 = vadd.f32 %v1870, %v2954
        %v2956 = vpop.f32.mrf.mxu0
        %2957 = vmatprep.mubr.f32.mxu0 0.0
        %v2958 = vand.u32 %v931, 4294901760
        %2959 = vmatmul.mubr.f32.gmra.mxu0 %v2958
        %v2960 = vpop.f32.mrf.mxu0
        %v2961 = vadd.f32 %v1880, %v2960
        %v2962 = vpop.f32.mrf.mxu0
        %2963 = vmatprep.mubr.f32.mxu0 0.0
        %v2964 = vand.u32 %v934, 4294901760
        %2965 = vmatmul.mubr.f32.gmra.mxu0 %v2964
        %v2966 = vpop.f32.mrf.mxu0
        %v2967 = vadd.f32 %v1890, %v2966
        %v2968 = vpop.f32.mrf.mxu0
        %2969 = vmatprep.mubr.f32.mxu0 0.0
        %v2970 = vand.u32 %v937, 4294901760
        %2971 = vmatmul.mubr.f32.gmra.mxu0 %v2970
        %v2972 = vpop.f32.mrf.mxu0
        %v2973 = vadd.f32 %v1900, %v2972
        %v2974 = vpop.f32.mrf.mxu0
        %2975 = vmatprep.mubr.f32.mxu0 0.0
        %v2976 = vand.u32 %v940, 4294901760
        %2977 = vmatmul.mubr.f32.gmra.mxu0 %v2976
        %v2978 = vpop.f32.mrf.mxu0
        %v2979 = vadd.f32 %v1910, %v2978
        %v2980 = vpop.f32.mrf.mxu0
        %2981 = vmatprep.mubr.f32.mxu0 0.0
        %v2982 = vand.u32 %v943, 4294901760
        %2983 = vmatmul.mubr.f32.gmra.mxu0 %v2982
        %v2984 = vpop.f32.mrf.mxu0
        %v2985 = vadd.f32 %v1920, %v2984
        %v2986 = vpop.f32.mrf.mxu0
        %2987 = vmatprep.mubr.f32.mxu0 0.0
        %v2988 = vand.u32 %v946, 4294901760
        %2989 = vmatmul.mubr.f32.gmra.mxu0 %v2988
        %v2990 = vpop.f32.mrf.mxu0
        %v2991 = vadd.f32 %v1930, %v2990
        %v2992 = vpop.f32.mrf.mxu0
        %2993 = vmatprep.mubr.f32.mxu0 0.0
        %v2994 = vand.u32 %v949, 4294901760
        %2995 = vmatmul.mubr.f32.gmra.mxu0 %v2994
        %v2996 = vpop.f32.mrf.mxu0
        %v2997 = vadd.f32 %v1940, %v2996
        %v2998 = vpop.f32.mrf.mxu0
        %2999 = vmatprep.mubr.f32.mxu0 0.0
        %v3000 = vand.u32 %v952, 4294901760
        %3001 = vmatmul.mubr.f32.gmra.mxu0 %v3000
        %v3002 = vpop.f32.mrf.mxu0
        %v3003 = vadd.f32 %v1950, %v3002
        %v3004 = vpop.f32.mrf.mxu0
        %3005 = vmatprep.mubr.f32.mxu0 0.0
        %v3006 = vand.u32 %v955, 4294901760
        %3007 = vmatmul.mubr.f32.gmra.mxu0 %v3006
        %v3008 = vpop.f32.mrf.mxu0
        %v3009 = vadd.f32 %v1960, %v3008
        %v3010 = vpop.f32.mrf.mxu0
        %3011 = vmatprep.mubr.f32.mxu0 0.0
        %v3012 = vand.u32 %v958, 4294901760
        %3013 = vmatmul.mubr.f32.gmra.mxu0 %v3012
        %v3014 = vpop.f32.mrf.mxu0
        %v3015 = vadd.f32 %v1970, %v3014
        %v3016 = vpop.f32.mrf.mxu0
        %3017 = vmatprep.mubr.f32.mxu0 0.0
        %v3018 = vand.u32 %v961, 4294901760
        %3019 = vmatmul.mubr.f32.gmra.mxu0 %v3018
        %v3020 = vpop.f32.mrf.mxu0
        %v3021 = vadd.f32 %v1980, %v3020
        %v3022 = vpop.f32.mrf.mxu0
        %3023 = vmatprep.mubr.f32.mxu0 0.0
        %v3024 = vand.u32 %v964, 4294901760
        %3025 = vmatmul.mubr.f32.gmra.mxu0 %v3024
        %v3026 = vpop.f32.mrf.mxu0
        %v3027 = vadd.f32 %v1990, %v3026
        %v3028 = vpop.f32.mrf.mxu0
        %3029 = vmatprep.mubr.f32.mxu0 0.0
        %v3030 = vand.u32 %v967, 4294901760
        %3031 = vmatmul.mubr.f32.gmra.mxu0 %v3030
        %v3032 = vpop.f32.mrf.mxu0
        %v3033 = vadd.f32 %v2000, %v3032
        %v3034 = vpop.f32.mrf.mxu0
        %3035 = vmatprep.mubr.f32.mxu0 0.0
        %v3036 = vand.u32 %v970, 4294901760
        %3037 = vmatmul.mubr.f32.gmra.mxu0 %v3036
        %v3038 = vpop.f32.mrf.mxu0
        %v3039 = vadd.f32 %v2010, %v3038
        %v3040 = vpop.f32.mrf.mxu0
        %3041 = vmatprep.mubr.f32.mxu0 0.0
        %v3042 = vand.u32 %v973, 4294901760
        %3043 = vmatmul.mubr.f32.gmra.mxu0 %v3042
        %v3044 = vpop.f32.mrf.mxu0
        %v3045 = vadd.f32 %v2020, %v3044
        %v3046 = vpop.f32.mrf.mxu0
        %3047 = vmatprep.mubr.f32.mxu0 0.0
        %v3048 = vand.u32 %v976, 4294901760
        %3049 = vmatmul.mubr.f32.gmra.mxu0 %v3048
        %v3050 = vpop.f32.mrf.mxu0
        %v3051 = vadd.f32 %v2030, %v3050
        %v3052 = vpop.f32.mrf.mxu0
        %3053 = vmatprep.mubr.f32.mxu0 0.0
        %v3054 = vand.u32 %v979, 4294901760
        %3055 = vmatmul.mubr.f32.gmra.mxu0 %v3054
        %v3056 = vpop.f32.mrf.mxu0
        %v3057 = vadd.f32 %v2040, %v3056
        %v3058 = vpop.f32.mrf.mxu0
        %3059 = vmatprep.mubr.f32.mxu0 0.0
        %v3060 = vand.u32 %v982, 4294901760
        %3061 = vmatmul.mubr.f32.gmra.mxu0 %v3060
        %v3062 = vpop.f32.mrf.mxu0
        %v3063 = vadd.f32 %v2050, %v3062
        %v3064 = vpop.f32.mrf.mxu0
        %3065 = vmatprep.mubr.f32.mxu0 0.0
        %v3066 = vand.u32 %v985, 4294901760
        %3067 = vmatmul.mubr.f32.gmra.mxu0 %v3066
        %v3068 = vpop.f32.mrf.mxu0
        %v3069 = vadd.f32 %v2060, %v3068
        %v3070 = vpop.f32.mrf.mxu0
        %3071 = vmatprep.mubr.f32.mxu0 0.0
        %v3072 = vand.u32 %v988, 4294901760
        %3073 = vmatmul.mubr.f32.gmra.mxu0 %v3072
        %v3074 = vpop.f32.mrf.mxu0
        %v3075 = vadd.f32 %v2070, %v3074
        %v3076 = vpop.f32.mrf.mxu0
        %3077 = vmatprep.mubr.f32.mxu0 0.0
        %v3078 = vand.u32 %v991, 4294901760
        %3079 = vmatmul.mubr.f32.gmra.mxu0 %v3078
        %v3080 = vpop.f32.mrf.mxu0
        %v3081 = vadd.f32 %v2080, %v3080
        %v3082 = vpop.f32.mrf.mxu0
        %3083 = vmatprep.mubr.f32.mxu0 0.0
        %v3084 = vand.u32 %v994, 4294901760
        %3085 = vmatmul.mubr.f32.gmra.mxu0 %v3084
        %v3086 = vpop.f32.mrf.mxu0
        %v3087 = vadd.f32 %v2090, %v3086
        %v3088 = vpop.f32.mrf.mxu0
        %3089 = vmatprep.mubr.f32.mxu0 0.0
        %v3090 = vand.u32 %v997, 4294901760
        %3091 = vmatmul.mubr.f32.gmra.mxu0 %v3090
        %v3092 = vpop.f32.mrf.mxu0
        %v3093 = vadd.f32 %v2100, %v3092
        %v3094 = vpop.f32.mrf.mxu0
        %3095 = vmatprep.mubr.f32.mxu0 0.0
        %v3096 = vand.u32 %v1000, 4294901760
        %3097 = vmatmul.mubr.f32.gmra.mxu0 %v3096
        %v3098 = vpop.f32.mrf.mxu0
        %v3099 = vadd.f32 %v2110, %v3098
        %v3100 = vpop.f32.mrf.mxu0
        %3101 = vmatprep.mubr.f32.mxu0 0.0
        %v3102 = vand.u32 %v1003, 4294901760
        %3103 = vmatmul.mubr.f32.gmra.mxu0 %v3102
        %v3104 = vpop.f32.mrf.mxu0
        %v3105 = vadd.f32 %v2120, %v3104
        %v3106 = vpop.f32.mrf.mxu0
        %3107 = vmatprep.mubr.f32.mxu0 0.0
        %v3108 = vand.u32 %v1006, 4294901760
        %3109 = vmatmul.mubr.f32.gmra.mxu0 %v3108
        %v3110 = vpop.f32.mrf.mxu0
        %v3111 = vadd.f32 %v2130, %v3110
        %v3112 = vpop.f32.mrf.mxu0
        %3113 = vmatprep.mubr.f32.mxu0 0.0
        %v3114 = vand.u32 %v1009, 4294901760
        %3115 = vmatmul.mubr.f32.gmra.mxu0 %v3114
        %v3116 = vpop.f32.mrf.mxu0
        %v3117 = vadd.f32 %v2140, %v3116
        %v3118 = vpop.f32.mrf.mxu0
        %3119 = vmatprep.mubr.f32.mxu0 0.0
        %v3120 = vand.u32 %v1012, 4294901760
        %3121 = vmatmul.mubr.f32.gmra.mxu0 %v3120
        %v3122 = vpop.f32.mrf.mxu0
        %v3123 = vadd.f32 %v2150, %v3122
        %v3124 = vpop.f32.mrf.mxu0
        %3125 = vmatprep.mubr.f32.mxu0 0.0
        %v3126 = vand.u32 %v1015, 4294901760
        %3127 = vmatmul.mubr.f32.gmra.mxu0 %v3126
        %v3128 = vpop.f32.mrf.mxu0
        %v3129 = vadd.f32 %v2160, %v3128
        %v3130 = vpop.f32.mrf.mxu0
        %3131 = vmatprep.mubr.f32.mxu0 0.0
        %v3132 = vand.u32 %v1018, 4294901760
        %3133 = vmatmul.mubr.f32.gmra.mxu0 %v3132
        %v3134 = vpop.f32.mrf.mxu0
        %v3135 = vadd.f32 %v2170, %v3134
        %v3136 = vpop.f32.mrf.mxu0
        %3137 = vmatprep.mubr.f32.mxu0 0.0
        %v3138 = vand.u32 %v1021, 4294901760
        %3139 = vmatmul.mubr.f32.gmra.mxu0 %v3138
        %v3140 = vpop.f32.mrf.mxu0
        %v3141 = vadd.f32 %v2180, %v3140
        %v3142 = vpop.f32.mrf.mxu0
        %3143 = vmatprep.mubr.f32.mxu0 0.0
        %v3144 = vand.u32 %v1024, 4294901760
        %3145 = vmatmul.mubr.f32.gmra.mxu0 %v3144
        %v3146 = vpop.f32.mrf.mxu0
        %v3147 = vadd.f32 %v2190, %v3146
        %v3148 = vpop.f32.mrf.mxu0
        %3149 = vmatprep.mubr.f32.mxu0 0.0
        %v3150 = vand.u32 %v1027, 4294901760
        %3151 = vmatmul.mubr.f32.gmra.mxu0 %v3150
        %v3152 = vpop.f32.mrf.mxu0
        %v3153 = vadd.f32 %v2200, %v3152
        %v3154 = vpop.f32.mrf.mxu0
        %3155 = vmatprep.mubr.f32.mxu0 0.0
        %v3156 = vand.u32 %v1030, 4294901760
        %3157 = vmatmul.mubr.f32.gmra.mxu0 %v3156
        %v3158 = vpop.f32.mrf.mxu0
        %v3159 = vadd.f32 %v2210, %v3158
        %v3160 = vpop.f32.mrf.mxu0
        %3161 = vmatprep.mubr.f32.mxu0 0.0
        %v3162 = vand.u32 %v1033, 4294901760
        %3163 = vmatmul.mubr.f32.gmra.mxu0 %v3162
        %v3164 = vpop.f32.mrf.mxu0
        %v3165 = vadd.f32 %v2220, %v3164
        %v3166 = vpop.f32.mrf.mxu0
        %3167 = vmatprep.mubr.f32.mxu0 0.0
        %v3168 = vand.u32 %v1036, 4294901760
        %3169 = vmatmul.mubr.f32.gmra.mxu0 %v3168
        %v3170 = vpop.f32.mrf.mxu0
        %v3171 = vadd.f32 %v2230, %v3170
        %v3172 = vpop.f32.mrf.mxu0
        %3173 = vmatprep.mubr.f32.mxu0 0.0
        %v3174 = vand.u32 %v1039, 4294901760
        %3175 = vmatmul.mubr.f32.gmra.mxu0 %v3174
        %v3176 = vpop.f32.mrf.mxu0
        %v3177 = vadd.f32 %v2240, %v3176
        %v3178 = vpop.f32.mrf.mxu0
        %3179 = vmatprep.mubr.f32.mxu0 0.0
        %v3180 = vand.u32 %v1042, 4294901760
        %3181 = vmatmul.mubr.f32.gmra.mxu0 %v3180
        %v3182 = vpop.f32.mrf.mxu0
        %v3183 = vadd.f32 %v2250, %v3182
        %v3184 = vpop.f32.mrf.mxu0
        %3185 = vmatprep.mubr.f32.mxu0 0.0
        %v3186 = vand.u32 %v1045, 4294901760
        %3187 = vmatmul.mubr.f32.gmra.mxu0 %v3186
        %v3188 = vpop.f32.mrf.mxu0
        %v3189 = vadd.f32 %v2260, %v3188
        %v3190 = vpop.f32.mrf.mxu0
        %3191 = vmatprep.mubr.f32.mxu0 0.0
        %v3192 = vand.u32 %v1048, 4294901760
        %3193 = vmatmul.mubr.f32.gmra.mxu0 %v3192
        %v3194 = vpop.f32.mrf.mxu0
        %v3195 = vadd.f32 %v2270, %v3194
        %v3196 = vpop.f32.mrf.mxu0
        %3197 = vmatprep.mubr.f32.mxu0 0.0
        %v3198 = vand.u32 %v1051, 4294901760
        %3199 = vmatmul.mubr.f32.gmra.mxu0 %v3198
        %v3200 = vpop.f32.mrf.mxu0
        %v3201 = vadd.f32 %v2280, %v3200
        %v3202 = vpop.f32.mrf.mxu0
        %3203 = vmatprep.mubr.f32.mxu0 0.0
        %v3204 = vand.u32 %v1054, 4294901760
        %3205 = vmatmul.mubr.f32.gmra.mxu0 %v3204
        %v3206 = vpop.f32.mrf.mxu0
        %v3207 = vadd.f32 %v2290, %v3206
        %v3208 = vpop.f32.mrf.mxu0
        %3209 = vmatprep.mubr.f32.mxu0 0.0
        %v3210 = vand.u32 %v1057, 4294901760
        %3211 = vmatmul.mubr.f32.gmra.mxu0 %v3210
        %v3212 = vpop.f32.mrf.mxu0
        %v3213 = vadd.f32 %v2300, %v3212
        %v3214 = vpop.f32.mrf.mxu0
        %3215 = vmatprep.mubr.f32.mxu0 0.0
        %v3216 = vand.u32 %v1060, 4294901760
        %3217 = vmatmul.mubr.f32.gmra.mxu0 %v3216
        %v3218 = vpop.f32.mrf.mxu0
        %v3219 = vadd.f32 %v2310, %v3218
        %v3220 = vpop.f32.mrf.mxu0
        %3221 = vmatprep.mubr.f32.mxu0 0.0
        %v3222 = vand.u32 %v1063, 4294901760
        %3223 = vmatmul.mubr.f32.gmra.mxu0 %v3222
        %v3224 = vpop.f32.mrf.mxu0
        %v3225 = vadd.f32 %v2320, %v3224
        %v3226 = vpop.f32.mrf.mxu0
        %3227 = vmatprep.mubr.f32.mxu0 0.0
        %v3228 = vand.u32 %v1066, 4294901760
        %3229 = vmatmul.mubr.f32.gmra.mxu0 %v3228
        %v3230 = vpop.f32.mrf.mxu0
        %v3231 = vadd.f32 %v2330, %v3230
        %v3232 = vpop.f32.mrf.mxu0
        %3233 = vmatprep.mubr.f32.mxu0 0.0
        %v3234 = vand.u32 %v1069, 4294901760
        %3235 = vmatmul.mubr.f32.gmra.mxu0 %v3234
        %v3236 = vpop.f32.mrf.mxu0
        %v3237 = vadd.f32 %v2340, %v3236
        %v3238 = vpop.f32.mrf.mxu0
        %3239 = vmatprep.mubr.f32.mxu0 0.0
        %v3240 = vand.u32 %v1072, 4294901760
        %3241 = vmatmul.mubr.f32.gmra.mxu0 %v3240
        %v3242 = vpop.f32.mrf.mxu0
        %v3243 = vadd.f32 %v2350, %v3242
        %v3244 = vpop.f32.mrf.mxu0
        %3245 = vmatprep.mubr.f32.mxu0 0.0
        %v3246 = vand.u32 %v1075, 4294901760
        %3247 = vmatmul.mubr.f32.gmra.mxu0 %v3246
        %v3248 = vpop.f32.mrf.mxu0
        %v3249 = vadd.f32 %v2360, %v3248
        %v3250 = vpop.f32.mrf.mxu0
        %3251 = vmatprep.mubr.f32.mxu0 0.0
        %v3252 = vand.u32 %v1078, 4294901760
        %3253 = vmatmul.mubr.f32.gmra.mxu0 %v3252
        %v3254 = vpop.f32.mrf.mxu0
        %v3255 = vadd.f32 %v2370, %v3254
        %v3256 = vpop.f32.mrf.mxu0
        %3257 = vmatprep.mubr.f32.mxu0 0.0
        %v3258 = vand.u32 %v1081, 4294901760
        %3259 = vmatmul.mubr.f32.gmra.mxu0 %v3258
        %v3260 = vpop.f32.mrf.mxu0
        %v3261 = vadd.f32 %v2380, %v3260
        %v3262 = vpop.f32.mrf.mxu0
        %3263 = vmatprep.mubr.f32.mxu0 0.0
        %v3264 = vand.u32 %v1084, 4294901760
        %3265 = vmatmul.mubr.f32.gmra.mxu0 %v3264
        %v3266 = vpop.f32.mrf.mxu0
        %v3267 = vadd.f32 %v2390, %v3266
        %v3268 = vpop.f32.mrf.mxu0
        %3269 = vmatprep.mubr.f32.mxu0 0.0
        %v3270 = vand.u32 %v1087, 4294901760
        %3271 = vmatmul.mubr.f32.gmra.mxu0 %v3270
        %v3272 = vpop.f32.mrf.mxu0
        %v3273 = vadd.f32 %v2400, %v3272
        %v3274 = vpop.f32.mrf.mxu0
        %3275 = vmatprep.mubr.f32.mxu0 0.0
        %v3276 = vand.u32 %v1090, 4294901760
        %3277 = vmatmul.mubr.f32.gmra.mxu0 %v3276
        %v3278 = vpop.f32.mrf.mxu0
        %v3279 = vadd.f32 %v2410, %v3278
        %v3280 = vpop.f32.mrf.mxu0
        %3281 = vmatprep.mubr.f32.mxu0 0.0
        %v3282 = vand.u32 %v1093, 4294901760
        %3283 = vmatmul.mubr.f32.gmra.mxu0 %v3282
        %v3284 = vpop.f32.mrf.mxu0
        %v3285 = vadd.f32 %v2420, %v3284
        %v3286 = vpop.f32.mrf.mxu0
        %3287 = vmatprep.mubr.f32.mxu0 0.0
        %v3288 = vand.u32 %v1096, 4294901760
        %3289 = vmatmul.mubr.f32.gmra.mxu0 %v3288
        %v3290 = vpop.f32.mrf.mxu0
        %v3291 = vadd.f32 %v2430, %v3290
        %v3292 = vpop.f32.mrf.mxu0
        %3293 = vmatprep.mubr.f32.mxu0 0.0
        %v3294 = vand.u32 %v1099, 4294901760
        %3295 = vmatmul.mubr.f32.gmra.mxu0 %v3294
        %v3296 = vpop.f32.mrf.mxu0
        %v3297 = vadd.f32 %v2440, %v3296
        %v3298 = vpop.f32.mrf.mxu0
        %3299 = vmatprep.mubr.f32.mxu0 0.0
        %v3300 = vand.u32 %v1102, 4294901760
        %3301 = vmatmul.mubr.f32.gmra.mxu0 %v3300
        %v3302 = vpop.f32.mrf.mxu0
        %v3303 = vadd.f32 %v2450, %v3302
        %v3304 = vpop.f32.mrf.mxu0
        %3305 = vdwg.mxu0
        %3306 = vmatprep.subr.mxu0 0.0
        %3307 = vmatpush1.msra.mxu0 0.0
        %3308 = vmatprep.subr.mxu0 0.0
        %3309 = vmatpush1.msra.mxu0 0.0
        %3310 = vmatprep.subr.mxu0 0.0
        %3311 = vmatpush1.msra.mxu0 0.0
        %3312 = vmatprep.subr.mxu0 0.0
        %3313 = vmatpush1.msra.mxu0 0.0
        %3314 = vmatprep.subr.mxu0 0.0
        %3315 = vmatpush1.msra.mxu0 0.0
        %3316 = vmatprep.subr.mxu0 0.0
        %3317 = vmatpush1.msra.mxu0 0.0
        %3318 = vmatprep.subr.mxu0 0.0
        %3319 = vmatpush1.msra.mxu0 0.0
        %3320 = vmatprep.subr.mxu0 0.0
        %3321 = vmatpush1.msra.mxu0 0.0
        %3322 = vmatprep.subr.mxu0 0.0
        %3323 = vmatpush1.msra.mxu0 0.0
        %3324 = vmatprep.subr.mxu0 0.0
        %3325 = vmatpush1.msra.mxu0 0.0
        %3326 = vmatprep.subr.mxu0 0.0
        %3327 = vmatpush1.msra.mxu0 0.0
        %3328 = vmatprep.subr.mxu0 0.0
        %3329 = vmatpush1.msra.mxu0 0.0
        %3330 = vmatprep.subr.mxu0 0.0
        %v3331 = vand.u32 %v711, 4294901760
        %v3332 = vsub.f32 %v711, %v3331
        %3333 = vmatpush1.msra.mxu0 %v3332
        %3334 = vmatprep.subr.mxu0 0.0
        %v3335 = vand.u32 %v710, 4294901760
        %v3336 = vsub.f32 %v710, %v3335
        %3337 = vmatpush1.msra.mxu0 %v3336
        %3338 = vmatprep.subr.mxu0 0.0
        %v3339 = vand.u32 %v709, 4294901760
        %v3340 = vsub.f32 %v709, %v3339
        %3341 = vmatpush1.msra.mxu0 %v3340
        %3342 = vmatprep.subr.mxu0 0.0
        %v3343 = vand.u32 %v708, 4294901760
        %v3344 = vsub.f32 %v708, %v3343
        %3345 = vmatpush1.msra.mxu0 %v3344
        %3346 = vmatprep.subr.mxu0 0.0
        %3347 = vmatpush2.msra.mxu0 0.0
        %3348 = vmatprep.subr.mxu0 0.0
        %3349 = vmatpush2.msra.mxu0 0.0
        %3350 = vmatprep.subr.mxu0 0.0
        %3351 = vmatpush2.msra.mxu0 0.0
        %3352 = vmatprep.subr.mxu0 0.0
        %3353 = vmatpush2.msra.mxu0 0.0
        %3354 = vmatprep.subr.mxu0 0.0
        %3355 = vmatpush2.msra.mxu0 0.0
        %3356 = vmatprep.subr.mxu0 0.0
        %3357 = vmatpush2.msra.mxu0 0.0
        %3358 = vmatprep.subr.mxu0 0.0
        %3359 = vmatpush2.msra.mxu0 0.0
        %3360 = vmatprep.subr.mxu0 0.0
        %3361 = vmatpush2.msra.mxu0 0.0
        %3362 = vmatprep.subr.mxu0 0.0
        %3363 = vmatpush2.msra.mxu0 0.0
        %3364 = vmatprep.subr.mxu0 0.0
        %3365 = vmatpush2.msra.mxu0 0.0
        %3366 = vmatprep.subr.mxu0 0.0
        %3367 = vmatpush2.msra.mxu0 0.0
        %3368 = vmatprep.subr.mxu0 0.0
        %3369 = vmatpush2.msra.mxu0 0.0
        %3370 = vmatprep.subr.mxu0 0.0
        %3371 = vmatpush2.msra.mxu0 0.0
        %3372 = vmatprep.subr.mxu0 0.0
        %3373 = vmatpush2.msra.mxu0 0.0
        %3374 = vmatprep.subr.mxu0 0.0
        %3375 = vmatpush2.msra.mxu0 0.0
        %3376 = vmatprep.subr.mxu0 0.0
        %3377 = vmatpush2.msra.mxu0 0.0
        %3378 = vmatprep.mubr.f32.mxu0 0.0
        %v3379 = vand.u32 %v721, 4294901760
        %v3380 = vsub.f32 %v721, %v3379
        %3381 = vmatmul.mubr.f32.gmra.mxu0 %v3380
        %v3382 = vpop.f32.mrf.mxu0
        %v3383 = vadd.f32 %v2541, %v3382
        %v3384 = vpop.f32.mrf.mxu0
        %3385 = vmatprep.mubr.f32.mxu0 0.0
        %v3386 = vand.u32 %v724, 4294901760
        %v3387 = vsub.f32 %v724, %v3386
        %3388 = vmatmul.mubr.f32.gmra.mxu0 %v3387
        %v3389 = vpop.f32.mrf.mxu0
        %v3390 = vadd.f32 %v2547, %v3389
        %v3391 = vpop.f32.mrf.mxu0
        %3392 = vmatprep.mubr.f32.mxu0 0.0
        %v3393 = vand.u32 %v727, 4294901760
        %v3394 = vsub.f32 %v727, %v3393
        %3395 = vmatmul.mubr.f32.gmra.mxu0 %v3394
        %v3396 = vpop.f32.mrf.mxu0
        %v3397 = vadd.f32 %v2553, %v3396
        %v3398 = vpop.f32.mrf.mxu0
        %3399 = vmatprep.mubr.f32.mxu0 0.0
        %v3400 = vand.u32 %v730, 4294901760
        %v3401 = vsub.f32 %v730, %v3400
        %3402 = vmatmul.mubr.f32.gmra.mxu0 %v3401
        %v3403 = vpop.f32.mrf.mxu0
        %v3404 = vadd.f32 %v2559, %v3403
        %v3405 = vpop.f32.mrf.mxu0
        %3406 = vmatprep.mubr.f32.mxu0 0.0
        %v3407 = vand.u32 %v733, 4294901760
        %v3408 = vsub.f32 %v733, %v3407
        %3409 = vmatmul.mubr.f32.gmra.mxu0 %v3408
        %v3410 = vpop.f32.mrf.mxu0
        %v3411 = vadd.f32 %v2565, %v3410
        %v3412 = vpop.f32.mrf.mxu0
        %3413 = vmatprep.mubr.f32.mxu0 0.0
        %v3414 = vand.u32 %v736, 4294901760
        %v3415 = vsub.f32 %v736, %v3414
        %3416 = vmatmul.mubr.f32.gmra.mxu0 %v3415
        %v3417 = vpop.f32.mrf.mxu0
        %v3418 = vadd.f32 %v2571, %v3417
        %v3419 = vpop.f32.mrf.mxu0
        %3420 = vmatprep.mubr.f32.mxu0 0.0
        %v3421 = vand.u32 %v739, 4294901760
        %v3422 = vsub.f32 %v739, %v3421
        %3423 = vmatmul.mubr.f32.gmra.mxu0 %v3422
        %v3424 = vpop.f32.mrf.mxu0
        %v3425 = vadd.f32 %v2577, %v3424
        %v3426 = vpop.f32.mrf.mxu0
        %3427 = vmatprep.mubr.f32.mxu0 0.0
        %v3428 = vand.u32 %v742, 4294901760
        %v3429 = vsub.f32 %v742, %v3428
        %3430 = vmatmul.mubr.f32.gmra.mxu0 %v3429
        %v3431 = vpop.f32.mrf.mxu0
        %v3432 = vadd.f32 %v2583, %v3431
        %v3433 = vpop.f32.mrf.mxu0
        %3434 = vmatprep.mubr.f32.mxu0 0.0
        %v3435 = vand.u32 %v745, 4294901760
        %v3436 = vsub.f32 %v745, %v3435
        %3437 = vmatmul.mubr.f32.gmra.mxu0 %v3436
        %v3438 = vpop.f32.mrf.mxu0
        %v3439 = vadd.f32 %v2589, %v3438
        %v3440 = vpop.f32.mrf.mxu0
        %3441 = vmatprep.mubr.f32.mxu0 0.0
        %v3442 = vand.u32 %v748, 4294901760
        %v3443 = vsub.f32 %v748, %v3442
        %3444 = vmatmul.mubr.f32.gmra.mxu0 %v3443
        %v3445 = vpop.f32.mrf.mxu0
        %v3446 = vadd.f32 %v2595, %v3445
        %v3447 = vpop.f32.mrf.mxu0
        %3448 = vmatprep.mubr.f32.mxu0 0.0
        %v3449 = vand.u32 %v751, 4294901760
        %v3450 = vsub.f32 %v751, %v3449
        %3451 = vmatmul.mubr.f32.gmra.mxu0 %v3450
        %v3452 = vpop.f32.mrf.mxu0
        %v3453 = vadd.f32 %v2601, %v3452
        %v3454 = vpop.f32.mrf.mxu0
        %3455 = vmatprep.mubr.f32.mxu0 0.0
        %v3456 = vand.u32 %v754, 4294901760
        %v3457 = vsub.f32 %v754, %v3456
        %3458 = vmatmul.mubr.f32.gmra.mxu0 %v3457
        %v3459 = vpop.f32.mrf.mxu0
        %v3460 = vadd.f32 %v2607, %v3459
        %v3461 = vpop.f32.mrf.mxu0
        %3462 = vmatprep.mubr.f32.mxu0 0.0
        %v3463 = vand.u32 %v757, 4294901760
        %v3464 = vsub.f32 %v757, %v3463
        %3465 = vmatmul.mubr.f32.gmra.mxu0 %v3464
        %v3466 = vpop.f32.mrf.mxu0
        %v3467 = vadd.f32 %v2613, %v3466
        %v3468 = vpop.f32.mrf.mxu0
        %3469 = vmatprep.mubr.f32.mxu0 0.0
        %v3470 = vand.u32 %v760, 4294901760
        %v3471 = vsub.f32 %v760, %v3470
        %3472 = vmatmul.mubr.f32.gmra.mxu0 %v3471
        %v3473 = vpop.f32.mrf.mxu0
        %v3474 = vadd.f32 %v2619, %v3473
        %v3475 = vpop.f32.mrf.mxu0
        %3476 = vmatprep.mubr.f32.mxu0 0.0
        %v3477 = vand.u32 %v763, 4294901760
        %v3478 = vsub.f32 %v763, %v3477
        %3479 = vmatmul.mubr.f32.gmra.mxu0 %v3478
        %v3480 = vpop.f32.mrf.mxu0
        %v3481 = vadd.f32 %v2625, %v3480
        %v3482 = vpop.f32.mrf.mxu0
        %3483 = vmatprep.mubr.f32.mxu0 0.0
        %v3484 = vand.u32 %v766, 4294901760
        %v3485 = vsub.f32 %v766, %v3484
        %3486 = vmatmul.mubr.f32.gmra.mxu0 %v3485
        %v3487 = vpop.f32.mrf.mxu0
        %v3488 = vadd.f32 %v2631, %v3487
        %v3489 = vpop.f32.mrf.mxu0
        %3490 = vmatprep.mubr.f32.mxu0 0.0
        %v3491 = vand.u32 %v769, 4294901760
        %v3492 = vsub.f32 %v769, %v3491
        %3493 = vmatmul.mubr.f32.gmra.mxu0 %v3492
        %v3494 = vpop.f32.mrf.mxu0
        %v3495 = vadd.f32 %v2637, %v3494
        %v3496 = vpop.f32.mrf.mxu0
        %3497 = vmatprep.mubr.f32.mxu0 0.0
        %v3498 = vand.u32 %v772, 4294901760
        %v3499 = vsub.f32 %v772, %v3498
        %3500 = vmatmul.mubr.f32.gmra.mxu0 %v3499
        %v3501 = vpop.f32.mrf.mxu0
        %v3502 = vadd.f32 %v2643, %v3501
        %v3503 = vpop.f32.mrf.mxu0
        %3504 = vmatprep.mubr.f32.mxu0 0.0
        %v3505 = vand.u32 %v775, 4294901760
        %v3506 = vsub.f32 %v775, %v3505
        %3507 = vmatmul.mubr.f32.gmra.mxu0 %v3506
        %v3508 = vpop.f32.mrf.mxu0
        %v3509 = vadd.f32 %v2649, %v3508
        %v3510 = vpop.f32.mrf.mxu0
        %3511 = vmatprep.mubr.f32.mxu0 0.0
        %v3512 = vand.u32 %v778, 4294901760
        %v3513 = vsub.f32 %v778, %v3512
        %3514 = vmatmul.mubr.f32.gmra.mxu0 %v3513
        %v3515 = vpop.f32.mrf.mxu0
        %v3516 = vadd.f32 %v2655, %v3515
        %v3517 = vpop.f32.mrf.mxu0
        %3518 = vmatprep.mubr.f32.mxu0 0.0
        %v3519 = vand.u32 %v781, 4294901760
        %v3520 = vsub.f32 %v781, %v3519
        %3521 = vmatmul.mubr.f32.gmra.mxu0 %v3520
        %v3522 = vpop.f32.mrf.mxu0
        %v3523 = vadd.f32 %v2661, %v3522
        %v3524 = vpop.f32.mrf.mxu0
        %3525 = vmatprep.mubr.f32.mxu0 0.0
        %v3526 = vand.u32 %v784, 4294901760
        %v3527 = vsub.f32 %v784, %v3526
        %3528 = vmatmul.mubr.f32.gmra.mxu0 %v3527
        %v3529 = vpop.f32.mrf.mxu0
        %v3530 = vadd.f32 %v2667, %v3529
        %v3531 = vpop.f32.mrf.mxu0
        %3532 = vmatprep.mubr.f32.mxu0 0.0
        %v3533 = vand.u32 %v787, 4294901760
        %v3534 = vsub.f32 %v787, %v3533
        %3535 = vmatmul.mubr.f32.gmra.mxu0 %v3534
        %v3536 = vpop.f32.mrf.mxu0
        %v3537 = vadd.f32 %v2673, %v3536
        %v3538 = vpop.f32.mrf.mxu0
        %3539 = vmatprep.mubr.f32.mxu0 0.0
        %v3540 = vand.u32 %v790, 4294901760
        %v3541 = vsub.f32 %v790, %v3540
        %3542 = vmatmul.mubr.f32.gmra.mxu0 %v3541
        %v3543 = vpop.f32.mrf.mxu0
        %v3544 = vadd.f32 %v2679, %v3543
        %v3545 = vpop.f32.mrf.mxu0
        %3546 = vmatprep.mubr.f32.mxu0 0.0
        %v3547 = vand.u32 %v793, 4294901760
        %v3548 = vsub.f32 %v793, %v3547
        %3549 = vmatmul.mubr.f32.gmra.mxu0 %v3548
        %v3550 = vpop.f32.mrf.mxu0
        %v3551 = vadd.f32 %v2685, %v3550
        %v3552 = vpop.f32.mrf.mxu0
        %3553 = vmatprep.mubr.f32.mxu0 0.0
        %v3554 = vand.u32 %v796, 4294901760
        %v3555 = vsub.f32 %v796, %v3554
        %3556 = vmatmul.mubr.f32.gmra.mxu0 %v3555
        %v3557 = vpop.f32.mrf.mxu0
        %v3558 = vadd.f32 %v2691, %v3557
        %v3559 = vpop.f32.mrf.mxu0
        %3560 = vmatprep.mubr.f32.mxu0 0.0
        %v3561 = vand.u32 %v799, 4294901760
        %v3562 = vsub.f32 %v799, %v3561
        %3563 = vmatmul.mubr.f32.gmra.mxu0 %v3562
        %v3564 = vpop.f32.mrf.mxu0
        %v3565 = vadd.f32 %v2697, %v3564
        %v3566 = vpop.f32.mrf.mxu0
        %3567 = vmatprep.mubr.f32.mxu0 0.0
        %v3568 = vand.u32 %v802, 4294901760
        %v3569 = vsub.f32 %v802, %v3568
        %3570 = vmatmul.mubr.f32.gmra.mxu0 %v3569
        %v3571 = vpop.f32.mrf.mxu0
        %v3572 = vadd.f32 %v2703, %v3571
        %v3573 = vpop.f32.mrf.mxu0
        %3574 = vmatprep.mubr.f32.mxu0 0.0
        %v3575 = vand.u32 %v805, 4294901760
        %v3576 = vsub.f32 %v805, %v3575
        %3577 = vmatmul.mubr.f32.gmra.mxu0 %v3576
        %v3578 = vpop.f32.mrf.mxu0
        %v3579 = vadd.f32 %v2709, %v3578
        %v3580 = vpop.f32.mrf.mxu0
        %3581 = vmatprep.mubr.f32.mxu0 0.0
        %v3582 = vand.u32 %v808, 4294901760
        %v3583 = vsub.f32 %v808, %v3582
        %3584 = vmatmul.mubr.f32.gmra.mxu0 %v3583
        %v3585 = vpop.f32.mrf.mxu0
        %v3586 = vadd.f32 %v2715, %v3585
        %v3587 = vpop.f32.mrf.mxu0
        %3588 = vmatprep.mubr.f32.mxu0 0.0
        %v3589 = vand.u32 %v811, 4294901760
        %v3590 = vsub.f32 %v811, %v3589
        %3591 = vmatmul.mubr.f32.gmra.mxu0 %v3590
        %v3592 = vpop.f32.mrf.mxu0
        %v3593 = vadd.f32 %v2721, %v3592
        %v3594 = vpop.f32.mrf.mxu0
        %3595 = vmatprep.mubr.f32.mxu0 0.0
        %v3596 = vand.u32 %v814, 4294901760
        %v3597 = vsub.f32 %v814, %v3596
        %3598 = vmatmul.mubr.f32.gmra.mxu0 %v3597
        %v3599 = vpop.f32.mrf.mxu0
        %v3600 = vadd.f32 %v2727, %v3599
        %v3601 = vpop.f32.mrf.mxu0
        %3602 = vmatprep.mubr.f32.mxu0 0.0
        %v3603 = vand.u32 %v817, 4294901760
        %v3604 = vsub.f32 %v817, %v3603
        %3605 = vmatmul.mubr.f32.gmra.mxu0 %v3604
        %v3606 = vpop.f32.mrf.mxu0
        %v3607 = vadd.f32 %v2733, %v3606
        %v3608 = vpop.f32.mrf.mxu0
        %3609 = vmatprep.mubr.f32.mxu0 0.0
        %v3610 = vand.u32 %v820, 4294901760
        %v3611 = vsub.f32 %v820, %v3610
        %3612 = vmatmul.mubr.f32.gmra.mxu0 %v3611
        %v3613 = vpop.f32.mrf.mxu0
        %v3614 = vadd.f32 %v2739, %v3613
        %v3615 = vpop.f32.mrf.mxu0
        %3616 = vmatprep.mubr.f32.mxu0 0.0
        %v3617 = vand.u32 %v823, 4294901760
        %v3618 = vsub.f32 %v823, %v3617
        %3619 = vmatmul.mubr.f32.gmra.mxu0 %v3618
        %v3620 = vpop.f32.mrf.mxu0
        %v3621 = vadd.f32 %v2745, %v3620
        %v3622 = vpop.f32.mrf.mxu0
        %3623 = vmatprep.mubr.f32.mxu0 0.0
        %v3624 = vand.u32 %v826, 4294901760
        %v3625 = vsub.f32 %v826, %v3624
        %3626 = vmatmul.mubr.f32.gmra.mxu0 %v3625
        %v3627 = vpop.f32.mrf.mxu0
        %v3628 = vadd.f32 %v2751, %v3627
        %v3629 = vpop.f32.mrf.mxu0
        %3630 = vmatprep.mubr.f32.mxu0 0.0
        %v3631 = vand.u32 %v829, 4294901760
        %v3632 = vsub.f32 %v829, %v3631
        %3633 = vmatmul.mubr.f32.gmra.mxu0 %v3632
        %v3634 = vpop.f32.mrf.mxu0
        %v3635 = vadd.f32 %v2757, %v3634
        %v3636 = vpop.f32.mrf.mxu0
        %3637 = vmatprep.mubr.f32.mxu0 0.0
        %v3638 = vand.u32 %v832, 4294901760
        %v3639 = vsub.f32 %v832, %v3638
        %3640 = vmatmul.mubr.f32.gmra.mxu0 %v3639
        %v3641 = vpop.f32.mrf.mxu0
        %v3642 = vadd.f32 %v2763, %v3641
        %v3643 = vpop.f32.mrf.mxu0
        %3644 = vmatprep.mubr.f32.mxu0 0.0
        %v3645 = vand.u32 %v835, 4294901760
        %v3646 = vsub.f32 %v835, %v3645
        %3647 = vmatmul.mubr.f32.gmra.mxu0 %v3646
        %v3648 = vpop.f32.mrf.mxu0
        %v3649 = vadd.f32 %v2769, %v3648
        %v3650 = vpop.f32.mrf.mxu0
        %3651 = vmatprep.mubr.f32.mxu0 0.0
        %v3652 = vand.u32 %v838, 4294901760
        %v3653 = vsub.f32 %v838, %v3652
        %3654 = vmatmul.mubr.f32.gmra.mxu0 %v3653
        %v3655 = vpop.f32.mrf.mxu0
        %v3656 = vadd.f32 %v2775, %v3655
        %v3657 = vpop.f32.mrf.mxu0
        %3658 = vmatprep.mubr.f32.mxu0 0.0
        %v3659 = vand.u32 %v841, 4294901760
        %v3660 = vsub.f32 %v841, %v3659
        %3661 = vmatmul.mubr.f32.gmra.mxu0 %v3660
        %v3662 = vpop.f32.mrf.mxu0
        %v3663 = vadd.f32 %v2781, %v3662
        %v3664 = vpop.f32.mrf.mxu0
        %3665 = vmatprep.mubr.f32.mxu0 0.0
        %v3666 = vand.u32 %v844, 4294901760
        %v3667 = vsub.f32 %v844, %v3666
        %3668 = vmatmul.mubr.f32.gmra.mxu0 %v3667
        %v3669 = vpop.f32.mrf.mxu0
        %v3670 = vadd.f32 %v2787, %v3669
        %v3671 = vpop.f32.mrf.mxu0
        %3672 = vmatprep.mubr.f32.mxu0 0.0
        %v3673 = vand.u32 %v847, 4294901760
        %v3674 = vsub.f32 %v847, %v3673
        %3675 = vmatmul.mubr.f32.gmra.mxu0 %v3674
        %v3676 = vpop.f32.mrf.mxu0
        %v3677 = vadd.f32 %v2793, %v3676
        %v3678 = vpop.f32.mrf.mxu0
        %3679 = vmatprep.mubr.f32.mxu0 0.0
        %v3680 = vand.u32 %v850, 4294901760
        %v3681 = vsub.f32 %v850, %v3680
        %3682 = vmatmul.mubr.f32.gmra.mxu0 %v3681
        %v3683 = vpop.f32.mrf.mxu0
        %v3684 = vadd.f32 %v2799, %v3683
        %v3685 = vpop.f32.mrf.mxu0
        %3686 = vmatprep.mubr.f32.mxu0 0.0
        %v3687 = vand.u32 %v853, 4294901760
        %v3688 = vsub.f32 %v853, %v3687
        %3689 = vmatmul.mubr.f32.gmra.mxu0 %v3688
        %v3690 = vpop.f32.mrf.mxu0
        %v3691 = vadd.f32 %v2805, %v3690
        %v3692 = vpop.f32.mrf.mxu0
        %3693 = vmatprep.mubr.f32.mxu0 0.0
        %v3694 = vand.u32 %v856, 4294901760
        %v3695 = vsub.f32 %v856, %v3694
        %3696 = vmatmul.mubr.f32.gmra.mxu0 %v3695
        %v3697 = vpop.f32.mrf.mxu0
        %v3698 = vadd.f32 %v2811, %v3697
        %v3699 = vpop.f32.mrf.mxu0
        %3700 = vmatprep.mubr.f32.mxu0 0.0
        %v3701 = vand.u32 %v859, 4294901760
        %v3702 = vsub.f32 %v859, %v3701
        %3703 = vmatmul.mubr.f32.gmra.mxu0 %v3702
        %v3704 = vpop.f32.mrf.mxu0
        %v3705 = vadd.f32 %v2817, %v3704
        %v3706 = vpop.f32.mrf.mxu0
        %3707 = vmatprep.mubr.f32.mxu0 0.0
        %v3708 = vand.u32 %v862, 4294901760
        %v3709 = vsub.f32 %v862, %v3708
        %3710 = vmatmul.mubr.f32.gmra.mxu0 %v3709
        %v3711 = vpop.f32.mrf.mxu0
        %v3712 = vadd.f32 %v2823, %v3711
        %v3713 = vpop.f32.mrf.mxu0
        %3714 = vmatprep.mubr.f32.mxu0 0.0
        %v3715 = vand.u32 %v865, 4294901760
        %v3716 = vsub.f32 %v865, %v3715
        %3717 = vmatmul.mubr.f32.gmra.mxu0 %v3716
        %v3718 = vpop.f32.mrf.mxu0
        %v3719 = vadd.f32 %v2829, %v3718
        %v3720 = vpop.f32.mrf.mxu0
        %3721 = vmatprep.mubr.f32.mxu0 0.0
        %v3722 = vand.u32 %v868, 4294901760
        %v3723 = vsub.f32 %v868, %v3722
        %3724 = vmatmul.mubr.f32.gmra.mxu0 %v3723
        %v3725 = vpop.f32.mrf.mxu0
        %v3726 = vadd.f32 %v2835, %v3725
        %v3727 = vpop.f32.mrf.mxu0
        %3728 = vmatprep.mubr.f32.mxu0 0.0
        %v3729 = vand.u32 %v871, 4294901760
        %v3730 = vsub.f32 %v871, %v3729
        %3731 = vmatmul.mubr.f32.gmra.mxu0 %v3730
        %v3732 = vpop.f32.mrf.mxu0
        %v3733 = vadd.f32 %v2841, %v3732
        %v3734 = vpop.f32.mrf.mxu0
        %3735 = vmatprep.mubr.f32.mxu0 0.0
        %v3736 = vand.u32 %v874, 4294901760
        %v3737 = vsub.f32 %v874, %v3736
        %3738 = vmatmul.mubr.f32.gmra.mxu0 %v3737
        %v3739 = vpop.f32.mrf.mxu0
        %v3740 = vadd.f32 %v2847, %v3739
        %v3741 = vpop.f32.mrf.mxu0
        %3742 = vmatprep.mubr.f32.mxu0 0.0
        %v3743 = vand.u32 %v877, 4294901760
        %v3744 = vsub.f32 %v877, %v3743
        %3745 = vmatmul.mubr.f32.gmra.mxu0 %v3744
        %v3746 = vpop.f32.mrf.mxu0
        %v3747 = vadd.f32 %v2853, %v3746
        %v3748 = vpop.f32.mrf.mxu0
        %3749 = vmatprep.mubr.f32.mxu0 0.0
        %v3750 = vand.u32 %v880, 4294901760
        %v3751 = vsub.f32 %v880, %v3750
        %3752 = vmatmul.mubr.f32.gmra.mxu0 %v3751
        %v3753 = vpop.f32.mrf.mxu0
        %v3754 = vadd.f32 %v2859, %v3753
        %v3755 = vpop.f32.mrf.mxu0
        %3756 = vmatprep.mubr.f32.mxu0 0.0
        %v3757 = vand.u32 %v883, 4294901760
        %v3758 = vsub.f32 %v883, %v3757
        %3759 = vmatmul.mubr.f32.gmra.mxu0 %v3758
        %v3760 = vpop.f32.mrf.mxu0
        %v3761 = vadd.f32 %v2865, %v3760
        %v3762 = vpop.f32.mrf.mxu0
        %3763 = vmatprep.mubr.f32.mxu0 0.0
        %v3764 = vand.u32 %v886, 4294901760
        %v3765 = vsub.f32 %v886, %v3764
        %3766 = vmatmul.mubr.f32.gmra.mxu0 %v3765
        %v3767 = vpop.f32.mrf.mxu0
        %v3768 = vadd.f32 %v2871, %v3767
        %v3769 = vpop.f32.mrf.mxu0
        %3770 = vmatprep.mubr.f32.mxu0 0.0
        %v3771 = vand.u32 %v889, 4294901760
        %v3772 = vsub.f32 %v889, %v3771
        %3773 = vmatmul.mubr.f32.gmra.mxu0 %v3772
        %v3774 = vpop.f32.mrf.mxu0
        %v3775 = vadd.f32 %v2877, %v3774
        %v3776 = vpop.f32.mrf.mxu0
        %3777 = vmatprep.mubr.f32.mxu0 0.0
        %v3778 = vand.u32 %v892, 4294901760
        %v3779 = vsub.f32 %v892, %v3778
        %3780 = vmatmul.mubr.f32.gmra.mxu0 %v3779
        %v3781 = vpop.f32.mrf.mxu0
        %v3782 = vadd.f32 %v2883, %v3781
        %v3783 = vpop.f32.mrf.mxu0
        %3784 = vmatprep.mubr.f32.mxu0 0.0
        %v3785 = vand.u32 %v895, 4294901760
        %v3786 = vsub.f32 %v895, %v3785
        %3787 = vmatmul.mubr.f32.gmra.mxu0 %v3786
        %v3788 = vpop.f32.mrf.mxu0
        %v3789 = vadd.f32 %v2889, %v3788
        %v3790 = vpop.f32.mrf.mxu0
        %3791 = vmatprep.mubr.f32.mxu0 0.0
        %v3792 = vand.u32 %v898, 4294901760
        %v3793 = vsub.f32 %v898, %v3792
        %3794 = vmatmul.mubr.f32.gmra.mxu0 %v3793
        %v3795 = vpop.f32.mrf.mxu0
        %v3796 = vadd.f32 %v2895, %v3795
        %v3797 = vpop.f32.mrf.mxu0
        %3798 = vmatprep.mubr.f32.mxu0 0.0
        %v3799 = vand.u32 %v901, 4294901760
        %v3800 = vsub.f32 %v901, %v3799
        %3801 = vmatmul.mubr.f32.gmra.mxu0 %v3800
        %v3802 = vpop.f32.mrf.mxu0
        %v3803 = vadd.f32 %v2901, %v3802
        %v3804 = vpop.f32.mrf.mxu0
        %3805 = vmatprep.mubr.f32.mxu0 0.0
        %v3806 = vand.u32 %v904, 4294901760
        %v3807 = vsub.f32 %v904, %v3806
        %3808 = vmatmul.mubr.f32.gmra.mxu0 %v3807
        %v3809 = vpop.f32.mrf.mxu0
        %v3810 = vadd.f32 %v2907, %v3809
        %v3811 = vpop.f32.mrf.mxu0
        %3812 = vmatprep.mubr.f32.mxu0 0.0
        %v3813 = vand.u32 %v907, 4294901760
        %v3814 = vsub.f32 %v907, %v3813
        %3815 = vmatmul.mubr.f32.gmra.mxu0 %v3814
        %v3816 = vpop.f32.mrf.mxu0
        %v3817 = vadd.f32 %v2913, %v3816
        %v3818 = vpop.f32.mrf.mxu0
        %3819 = vmatprep.mubr.f32.mxu0 0.0
        %v3820 = vand.u32 %v910, 4294901760
        %v3821 = vsub.f32 %v910, %v3820
        %3822 = vmatmul.mubr.f32.gmra.mxu0 %v3821
        %v3823 = vpop.f32.mrf.mxu0
        %v3824 = vadd.f32 %v2919, %v3823
        %v3825 = vpop.f32.mrf.mxu0
        %3826 = vmatprep.mubr.f32.mxu0 0.0
        %v3827 = vand.u32 %v913, 4294901760
        %v3828 = vsub.f32 %v913, %v3827
        %3829 = vmatmul.mubr.f32.gmra.mxu0 %v3828
        %v3830 = vpop.f32.mrf.mxu0
        %v3831 = vadd.f32 %v2925, %v3830
        %v3832 = vpop.f32.mrf.mxu0
        %3833 = vmatprep.mubr.f32.mxu0 0.0
        %v3834 = vand.u32 %v916, 4294901760
        %v3835 = vsub.f32 %v916, %v3834
        %3836 = vmatmul.mubr.f32.gmra.mxu0 %v3835
        %v3837 = vpop.f32.mrf.mxu0
        %v3838 = vadd.f32 %v2931, %v3837
        %v3839 = vpop.f32.mrf.mxu0
        %3840 = vmatprep.mubr.f32.mxu0 0.0
        %v3841 = vand.u32 %v919, 4294901760
        %v3842 = vsub.f32 %v919, %v3841
        %3843 = vmatmul.mubr.f32.gmra.mxu0 %v3842
        %v3844 = vpop.f32.mrf.mxu0
        %v3845 = vadd.f32 %v2937, %v3844
        %v3846 = vpop.f32.mrf.mxu0
        %3847 = vmatprep.mubr.f32.mxu0 0.0
        %v3848 = vand.u32 %v922, 4294901760
        %v3849 = vsub.f32 %v922, %v3848
        %3850 = vmatmul.mubr.f32.gmra.mxu0 %v3849
        %v3851 = vpop.f32.mrf.mxu0
        %v3852 = vadd.f32 %v2943, %v3851
        %v3853 = vpop.f32.mrf.mxu0
        %3854 = vmatprep.mubr.f32.mxu0 0.0
        %v3855 = vand.u32 %v925, 4294901760
        %v3856 = vsub.f32 %v925, %v3855
        %3857 = vmatmul.mubr.f32.gmra.mxu0 %v3856
        %v3858 = vpop.f32.mrf.mxu0
        %v3859 = vadd.f32 %v2949, %v3858
        %v3860 = vpop.f32.mrf.mxu0
        %3861 = vmatprep.mubr.f32.mxu0 0.0
        %v3862 = vand.u32 %v928, 4294901760
        %v3863 = vsub.f32 %v928, %v3862
        %3864 = vmatmul.mubr.f32.gmra.mxu0 %v3863
        %v3865 = vpop.f32.mrf.mxu0
        %v3866 = vadd.f32 %v2955, %v3865
        %v3867 = vpop.f32.mrf.mxu0
        %3868 = vmatprep.mubr.f32.mxu0 0.0
        %v3869 = vand.u32 %v931, 4294901760
        %v3870 = vsub.f32 %v931, %v3869
        %3871 = vmatmul.mubr.f32.gmra.mxu0 %v3870
        %v3872 = vpop.f32.mrf.mxu0
        %v3873 = vadd.f32 %v2961, %v3872
        %v3874 = vpop.f32.mrf.mxu0
        %3875 = vmatprep.mubr.f32.mxu0 0.0
        %v3876 = vand.u32 %v934, 4294901760
        %v3877 = vsub.f32 %v934, %v3876
        %3878 = vmatmul.mubr.f32.gmra.mxu0 %v3877
        %v3879 = vpop.f32.mrf.mxu0
        %v3880 = vadd.f32 %v2967, %v3879
        %v3881 = vpop.f32.mrf.mxu0
        %3882 = vmatprep.mubr.f32.mxu0 0.0
        %v3883 = vand.u32 %v937, 4294901760
        %v3884 = vsub.f32 %v937, %v3883
        %3885 = vmatmul.mubr.f32.gmra.mxu0 %v3884
        %v3886 = vpop.f32.mrf.mxu0
        %v3887 = vadd.f32 %v2973, %v3886
        %v3888 = vpop.f32.mrf.mxu0
        %3889 = vmatprep.mubr.f32.mxu0 0.0
        %v3890 = vand.u32 %v940, 4294901760
        %v3891 = vsub.f32 %v940, %v3890
        %3892 = vmatmul.mubr.f32.gmra.mxu0 %v3891
        %v3893 = vpop.f32.mrf.mxu0
        %v3894 = vadd.f32 %v2979, %v3893
        %v3895 = vpop.f32.mrf.mxu0
        %3896 = vmatprep.mubr.f32.mxu0 0.0
        %v3897 = vand.u32 %v943, 4294901760
        %v3898 = vsub.f32 %v943, %v3897
        %3899 = vmatmul.mubr.f32.gmra.mxu0 %v3898
        %v3900 = vpop.f32.mrf.mxu0
        %v3901 = vadd.f32 %v2985, %v3900
        %v3902 = vpop.f32.mrf.mxu0
        %3903 = vmatprep.mubr.f32.mxu0 0.0
        %v3904 = vand.u32 %v946, 4294901760
        %v3905 = vsub.f32 %v946, %v3904
        %3906 = vmatmul.mubr.f32.gmra.mxu0 %v3905
        %v3907 = vpop.f32.mrf.mxu0
        %v3908 = vadd.f32 %v2991, %v3907
        %v3909 = vpop.f32.mrf.mxu0
        %3910 = vmatprep.mubr.f32.mxu0 0.0
        %v3911 = vand.u32 %v949, 4294901760
        %v3912 = vsub.f32 %v949, %v3911
        %3913 = vmatmul.mubr.f32.gmra.mxu0 %v3912
        %v3914 = vpop.f32.mrf.mxu0
        %v3915 = vadd.f32 %v2997, %v3914
        %v3916 = vpop.f32.mrf.mxu0
        %3917 = vmatprep.mubr.f32.mxu0 0.0
        %v3918 = vand.u32 %v952, 4294901760
        %v3919 = vsub.f32 %v952, %v3918
        %3920 = vmatmul.mubr.f32.gmra.mxu0 %v3919
        %v3921 = vpop.f32.mrf.mxu0
        %v3922 = vadd.f32 %v3003, %v3921
        %v3923 = vpop.f32.mrf.mxu0
        %3924 = vmatprep.mubr.f32.mxu0 0.0
        %v3925 = vand.u32 %v955, 4294901760
        %v3926 = vsub.f32 %v955, %v3925
        %3927 = vmatmul.mubr.f32.gmra.mxu0 %v3926
        %v3928 = vpop.f32.mrf.mxu0
        %v3929 = vadd.f32 %v3009, %v3928
        %v3930 = vpop.f32.mrf.mxu0
        %3931 = vmatprep.mubr.f32.mxu0 0.0
        %v3932 = vand.u32 %v958, 4294901760
        %v3933 = vsub.f32 %v958, %v3932
        %3934 = vmatmul.mubr.f32.gmra.mxu0 %v3933
        %v3935 = vpop.f32.mrf.mxu0
        %v3936 = vadd.f32 %v3015, %v3935
        %v3937 = vpop.f32.mrf.mxu0
        %3938 = vmatprep.mubr.f32.mxu0 0.0
        %v3939 = vand.u32 %v961, 4294901760
        %v3940 = vsub.f32 %v961, %v3939
        %3941 = vmatmul.mubr.f32.gmra.mxu0 %v3940
        %v3942 = vpop.f32.mrf.mxu0
        %v3943 = vadd.f32 %v3021, %v3942
        %v3944 = vpop.f32.mrf.mxu0
        %3945 = vmatprep.mubr.f32.mxu0 0.0
        %v3946 = vand.u32 %v964, 4294901760
        %v3947 = vsub.f32 %v964, %v3946
        %3948 = vmatmul.mubr.f32.gmra.mxu0 %v3947
        %v3949 = vpop.f32.mrf.mxu0
        %v3950 = vadd.f32 %v3027, %v3949
        %v3951 = vpop.f32.mrf.mxu0
        %3952 = vmatprep.mubr.f32.mxu0 0.0
        %v3953 = vand.u32 %v967, 4294901760
        %v3954 = vsub.f32 %v967, %v3953
        %3955 = vmatmul.mubr.f32.gmra.mxu0 %v3954
        %v3956 = vpop.f32.mrf.mxu0
        %v3957 = vadd.f32 %v3033, %v3956
        %v3958 = vpop.f32.mrf.mxu0
        %3959 = vmatprep.mubr.f32.mxu0 0.0
        %v3960 = vand.u32 %v970, 4294901760
        %v3961 = vsub.f32 %v970, %v3960
        %3962 = vmatmul.mubr.f32.gmra.mxu0 %v3961
        %v3963 = vpop.f32.mrf.mxu0
        %v3964 = vadd.f32 %v3039, %v3963
        %v3965 = vpop.f32.mrf.mxu0
        %3966 = vmatprep.mubr.f32.mxu0 0.0
        %v3967 = vand.u32 %v973, 4294901760
        %v3968 = vsub.f32 %v973, %v3967
        %3969 = vmatmul.mubr.f32.gmra.mxu0 %v3968
        %v3970 = vpop.f32.mrf.mxu0
        %v3971 = vadd.f32 %v3045, %v3970
        %v3972 = vpop.f32.mrf.mxu0
        %3973 = vmatprep.mubr.f32.mxu0 0.0
        %v3974 = vand.u32 %v976, 4294901760
        %v3975 = vsub.f32 %v976, %v3974
        %3976 = vmatmul.mubr.f32.gmra.mxu0 %v3975
        %v3977 = vpop.f32.mrf.mxu0
        %v3978 = vadd.f32 %v3051, %v3977
        %v3979 = vpop.f32.mrf.mxu0
        %3980 = vmatprep.mubr.f32.mxu0 0.0
        %v3981 = vand.u32 %v979, 4294901760
        %v3982 = vsub.f32 %v979, %v3981
        %3983 = vmatmul.mubr.f32.gmra.mxu0 %v3982
        %v3984 = vpop.f32.mrf.mxu0
        %v3985 = vadd.f32 %v3057, %v3984
        %v3986 = vpop.f32.mrf.mxu0
        %3987 = vmatprep.mubr.f32.mxu0 0.0
        %v3988 = vand.u32 %v982, 4294901760
        %v3989 = vsub.f32 %v982, %v3988
        %3990 = vmatmul.mubr.f32.gmra.mxu0 %v3989
        %v3991 = vpop.f32.mrf.mxu0
        %v3992 = vadd.f32 %v3063, %v3991
        %v3993 = vpop.f32.mrf.mxu0
        %3994 = vmatprep.mubr.f32.mxu0 0.0
        %v3995 = vand.u32 %v985, 4294901760
        %v3996 = vsub.f32 %v985, %v3995
        %3997 = vmatmul.mubr.f32.gmra.mxu0 %v3996
        %v3998 = vpop.f32.mrf.mxu0
        %v3999 = vadd.f32 %v3069, %v3998
        %v4000 = vpop.f32.mrf.mxu0
        %4001 = vmatprep.mubr.f32.mxu0 0.0
        %v4002 = vand.u32 %v988, 4294901760
        %v4003 = vsub.f32 %v988, %v4002
        %4004 = vmatmul.mubr.f32.gmra.mxu0 %v4003
        %v4005 = vpop.f32.mrf.mxu0
        %v4006 = vadd.f32 %v3075, %v4005
        %v4007 = vpop.f32.mrf.mxu0
        %4008 = vmatprep.mubr.f32.mxu0 0.0
        %v4009 = vand.u32 %v991, 4294901760
        %v4010 = vsub.f32 %v991, %v4009
        %4011 = vmatmul.mubr.f32.gmra.mxu0 %v4010
        %v4012 = vpop.f32.mrf.mxu0
        %v4013 = vadd.f32 %v3081, %v4012
        %v4014 = vpop.f32.mrf.mxu0
        %4015 = vmatprep.mubr.f32.mxu0 0.0
        %v4016 = vand.u32 %v994, 4294901760
        %v4017 = vsub.f32 %v994, %v4016
        %4018 = vmatmul.mubr.f32.gmra.mxu0 %v4017
        %v4019 = vpop.f32.mrf.mxu0
        %v4020 = vadd.f32 %v3087, %v4019
        %v4021 = vpop.f32.mrf.mxu0
        %4022 = vmatprep.mubr.f32.mxu0 0.0
        %v4023 = vand.u32 %v997, 4294901760
        %v4024 = vsub.f32 %v997, %v4023
        %4025 = vmatmul.mubr.f32.gmra.mxu0 %v4024
        %v4026 = vpop.f32.mrf.mxu0
        %v4027 = vadd.f32 %v3093, %v4026
        %v4028 = vpop.f32.mrf.mxu0
        %4029 = vmatprep.mubr.f32.mxu0 0.0
        %v4030 = vand.u32 %v1000, 4294901760
        %v4031 = vsub.f32 %v1000, %v4030
        %4032 = vmatmul.mubr.f32.gmra.mxu0 %v4031
        %v4033 = vpop.f32.mrf.mxu0
        %v4034 = vadd.f32 %v3099, %v4033
        %v4035 = vpop.f32.mrf.mxu0
        %4036 = vmatprep.mubr.f32.mxu0 0.0
        %v4037 = vand.u32 %v1003, 4294901760
        %v4038 = vsub.f32 %v1003, %v4037
        %4039 = vmatmul.mubr.f32.gmra.mxu0 %v4038
        %v4040 = vpop.f32.mrf.mxu0
        %v4041 = vadd.f32 %v3105, %v4040
        %v4042 = vpop.f32.mrf.mxu0
        %4043 = vmatprep.mubr.f32.mxu0 0.0
        %v4044 = vand.u32 %v1006, 4294901760
        %v4045 = vsub.f32 %v1006, %v4044
        %4046 = vmatmul.mubr.f32.gmra.mxu0 %v4045
        %v4047 = vpop.f32.mrf.mxu0
        %v4048 = vadd.f32 %v3111, %v4047
        %v4049 = vpop.f32.mrf.mxu0
        %4050 = vmatprep.mubr.f32.mxu0 0.0
        %v4051 = vand.u32 %v1009, 4294901760
        %v4052 = vsub.f32 %v1009, %v4051
        %4053 = vmatmul.mubr.f32.gmra.mxu0 %v4052
        %v4054 = vpop.f32.mrf.mxu0
        %v4055 = vadd.f32 %v3117, %v4054
        %v4056 = vpop.f32.mrf.mxu0
        %4057 = vmatprep.mubr.f32.mxu0 0.0
        %v4058 = vand.u32 %v1012, 4294901760
        %v4059 = vsub.f32 %v1012, %v4058
        %4060 = vmatmul.mubr.f32.gmra.mxu0 %v4059
        %v4061 = vpop.f32.mrf.mxu0
        %v4062 = vadd.f32 %v3123, %v4061
        %v4063 = vpop.f32.mrf.mxu0
        %4064 = vmatprep.mubr.f32.mxu0 0.0
        %v4065 = vand.u32 %v1015, 4294901760
        %v4066 = vsub.f32 %v1015, %v4065
        %4067 = vmatmul.mubr.f32.gmra.mxu0 %v4066
        %v4068 = vpop.f32.mrf.mxu0
        %v4069 = vadd.f32 %v3129, %v4068
        %v4070 = vpop.f32.mrf.mxu0
        %4071 = vmatprep.mubr.f32.mxu0 0.0
        %v4072 = vand.u32 %v1018, 4294901760
        %v4073 = vsub.f32 %v1018, %v4072
        %4074 = vmatmul.mubr.f32.gmra.mxu0 %v4073
        %v4075 = vpop.f32.mrf.mxu0
        %v4076 = vadd.f32 %v3135, %v4075
        %v4077 = vpop.f32.mrf.mxu0
        %4078 = vmatprep.mubr.f32.mxu0 0.0
        %v4079 = vand.u32 %v1021, 4294901760
        %v4080 = vsub.f32 %v1021, %v4079
        %4081 = vmatmul.mubr.f32.gmra.mxu0 %v4080
        %v4082 = vpop.f32.mrf.mxu0
        %v4083 = vadd.f32 %v3141, %v4082
        %v4084 = vpop.f32.mrf.mxu0
        %4085 = vmatprep.mubr.f32.mxu0 0.0
        %v4086 = vand.u32 %v1024, 4294901760
        %v4087 = vsub.f32 %v1024, %v4086
        %4088 = vmatmul.mubr.f32.gmra.mxu0 %v4087
        %v4089 = vpop.f32.mrf.mxu0
        %v4090 = vadd.f32 %v3147, %v4089
        %v4091 = vpop.f32.mrf.mxu0
        %4092 = vmatprep.mubr.f32.mxu0 0.0
        %v4093 = vand.u32 %v1027, 4294901760
        %v4094 = vsub.f32 %v1027, %v4093
        %4095 = vmatmul.mubr.f32.gmra.mxu0 %v4094
        %v4096 = vpop.f32.mrf.mxu0
        %v4097 = vadd.f32 %v3153, %v4096
        %v4098 = vpop.f32.mrf.mxu0
        %4099 = vmatprep.mubr.f32.mxu0 0.0
        %v4100 = vand.u32 %v1030, 4294901760
        %v4101 = vsub.f32 %v1030, %v4100
        %4102 = vmatmul.mubr.f32.gmra.mxu0 %v4101
        %v4103 = vpop.f32.mrf.mxu0
        %v4104 = vadd.f32 %v3159, %v4103
        %v4105 = vpop.f32.mrf.mxu0
        %4106 = vmatprep.mubr.f32.mxu0 0.0
        %v4107 = vand.u32 %v1033, 4294901760
        %v4108 = vsub.f32 %v1033, %v4107
        %4109 = vmatmul.mubr.f32.gmra.mxu0 %v4108
        %v4110 = vpop.f32.mrf.mxu0
        %v4111 = vadd.f32 %v3165, %v4110
        %v4112 = vpop.f32.mrf.mxu0
        %4113 = vmatprep.mubr.f32.mxu0 0.0
        %v4114 = vand.u32 %v1036, 4294901760
        %v4115 = vsub.f32 %v1036, %v4114
        %4116 = vmatmul.mubr.f32.gmra.mxu0 %v4115
        %v4117 = vpop.f32.mrf.mxu0
        %v4118 = vadd.f32 %v3171, %v4117
        %v4119 = vpop.f32.mrf.mxu0
        %4120 = vmatprep.mubr.f32.mxu0 0.0
        %v4121 = vand.u32 %v1039, 4294901760
        %v4122 = vsub.f32 %v1039, %v4121
        %4123 = vmatmul.mubr.f32.gmra.mxu0 %v4122
        %v4124 = vpop.f32.mrf.mxu0
        %v4125 = vadd.f32 %v3177, %v4124
        %v4126 = vpop.f32.mrf.mxu0
        %4127 = vmatprep.mubr.f32.mxu0 0.0
        %v4128 = vand.u32 %v1042, 4294901760
        %v4129 = vsub.f32 %v1042, %v4128
        %4130 = vmatmul.mubr.f32.gmra.mxu0 %v4129
        %v4131 = vpop.f32.mrf.mxu0
        %v4132 = vadd.f32 %v3183, %v4131
        %v4133 = vpop.f32.mrf.mxu0
        %4134 = vmatprep.mubr.f32.mxu0 0.0
        %v4135 = vand.u32 %v1045, 4294901760
        %v4136 = vsub.f32 %v1045, %v4135
        %4137 = vmatmul.mubr.f32.gmra.mxu0 %v4136
        %v4138 = vpop.f32.mrf.mxu0
        %v4139 = vadd.f32 %v3189, %v4138
        %v4140 = vpop.f32.mrf.mxu0
        %4141 = vmatprep.mubr.f32.mxu0 0.0
        %v4142 = vand.u32 %v1048, 4294901760
        %v4143 = vsub.f32 %v1048, %v4142
        %4144 = vmatmul.mubr.f32.gmra.mxu0 %v4143
        %v4145 = vpop.f32.mrf.mxu0
        %v4146 = vadd.f32 %v3195, %v4145
        %v4147 = vpop.f32.mrf.mxu0
        %4148 = vmatprep.mubr.f32.mxu0 0.0
        %v4149 = vand.u32 %v1051, 4294901760
        %v4150 = vsub.f32 %v1051, %v4149
        %4151 = vmatmul.mubr.f32.gmra.mxu0 %v4150
        %v4152 = vpop.f32.mrf.mxu0
        %v4153 = vadd.f32 %v3201, %v4152
        %v4154 = vpop.f32.mrf.mxu0
        %4155 = vmatprep.mubr.f32.mxu0 0.0
        %v4156 = vand.u32 %v1054, 4294901760
        %v4157 = vsub.f32 %v1054, %v4156
        %4158 = vmatmul.mubr.f32.gmra.mxu0 %v4157
        %v4159 = vpop.f32.mrf.mxu0
        %v4160 = vadd.f32 %v3207, %v4159
        %v4161 = vpop.f32.mrf.mxu0
        %4162 = vmatprep.mubr.f32.mxu0 0.0
        %v4163 = vand.u32 %v1057, 4294901760
        %v4164 = vsub.f32 %v1057, %v4163
        %4165 = vmatmul.mubr.f32.gmra.mxu0 %v4164
        %v4166 = vpop.f32.mrf.mxu0
        %v4167 = vadd.f32 %v3213, %v4166
        %v4168 = vpop.f32.mrf.mxu0
        %4169 = vmatprep.mubr.f32.mxu0 0.0
        %v4170 = vand.u32 %v1060, 4294901760
        %v4171 = vsub.f32 %v1060, %v4170
        %4172 = vmatmul.mubr.f32.gmra.mxu0 %v4171
        %v4173 = vpop.f32.mrf.mxu0
        %v4174 = vadd.f32 %v3219, %v4173
        %v4175 = vpop.f32.mrf.mxu0
        %4176 = vmatprep.mubr.f32.mxu0 0.0
        %v4177 = vand.u32 %v1063, 4294901760
        %v4178 = vsub.f32 %v1063, %v4177
        %4179 = vmatmul.mubr.f32.gmra.mxu0 %v4178
        %v4180 = vpop.f32.mrf.mxu0
        %v4181 = vadd.f32 %v3225, %v4180
        %v4182 = vpop.f32.mrf.mxu0
        %4183 = vmatprep.mubr.f32.mxu0 0.0
        %v4184 = vand.u32 %v1066, 4294901760
        %v4185 = vsub.f32 %v1066, %v4184
        %4186 = vmatmul.mubr.f32.gmra.mxu0 %v4185
        %v4187 = vpop.f32.mrf.mxu0
        %v4188 = vadd.f32 %v3231, %v4187
        %v4189 = vpop.f32.mrf.mxu0
        %4190 = vmatprep.mubr.f32.mxu0 0.0
        %v4191 = vand.u32 %v1069, 4294901760
        %v4192 = vsub.f32 %v1069, %v4191
        %4193 = vmatmul.mubr.f32.gmra.mxu0 %v4192
        %v4194 = vpop.f32.mrf.mxu0
        %v4195 = vadd.f32 %v3237, %v4194
        %v4196 = vpop.f32.mrf.mxu0
        %4197 = vmatprep.mubr.f32.mxu0 0.0
        %v4198 = vand.u32 %v1072, 4294901760
        %v4199 = vsub.f32 %v1072, %v4198
        %4200 = vmatmul.mubr.f32.gmra.mxu0 %v4199
        %v4201 = vpop.f32.mrf.mxu0
        %v4202 = vadd.f32 %v3243, %v4201
        %v4203 = vpop.f32.mrf.mxu0
        %4204 = vmatprep.mubr.f32.mxu0 0.0
        %v4205 = vand.u32 %v1075, 4294901760
        %v4206 = vsub.f32 %v1075, %v4205
        %4207 = vmatmul.mubr.f32.gmra.mxu0 %v4206
        %v4208 = vpop.f32.mrf.mxu0
        %v4209 = vadd.f32 %v3249, %v4208
        %v4210 = vpop.f32.mrf.mxu0
        %4211 = vmatprep.mubr.f32.mxu0 0.0
        %v4212 = vand.u32 %v1078, 4294901760
        %v4213 = vsub.f32 %v1078, %v4212
        %4214 = vmatmul.mubr.f32.gmra.mxu0 %v4213
        %v4215 = vpop.f32.mrf.mxu0
        %v4216 = vadd.f32 %v3255, %v4215
        %v4217 = vpop.f32.mrf.mxu0
        %4218 = vmatprep.mubr.f32.mxu0 0.0
        %v4219 = vand.u32 %v1081, 4294901760
        %v4220 = vsub.f32 %v1081, %v4219
        %4221 = vmatmul.mubr.f32.gmra.mxu0 %v4220
        %v4222 = vpop.f32.mrf.mxu0
        %v4223 = vadd.f32 %v3261, %v4222
        %v4224 = vpop.f32.mrf.mxu0
        %4225 = vmatprep.mubr.f32.mxu0 0.0
        %v4226 = vand.u32 %v1084, 4294901760
        %v4227 = vsub.f32 %v1084, %v4226
        %4228 = vmatmul.mubr.f32.gmra.mxu0 %v4227
        %v4229 = vpop.f32.mrf.mxu0
        %v4230 = vadd.f32 %v3267, %v4229
        %v4231 = vpop.f32.mrf.mxu0
        %4232 = vmatprep.mubr.f32.mxu0 0.0
        %v4233 = vand.u32 %v1087, 4294901760
        %v4234 = vsub.f32 %v1087, %v4233
        %4235 = vmatmul.mubr.f32.gmra.mxu0 %v4234
        %v4236 = vpop.f32.mrf.mxu0
        %v4237 = vadd.f32 %v3273, %v4236
        %v4238 = vpop.f32.mrf.mxu0
        %4239 = vmatprep.mubr.f32.mxu0 0.0
        %v4240 = vand.u32 %v1090, 4294901760
        %v4241 = vsub.f32 %v1090, %v4240
        %4242 = vmatmul.mubr.f32.gmra.mxu0 %v4241
        %v4243 = vpop.f32.mrf.mxu0
        %v4244 = vadd.f32 %v3279, %v4243
        %v4245 = vpop.f32.mrf.mxu0
        %4246 = vmatprep.mubr.f32.mxu0 0.0
        %v4247 = vand.u32 %v1093, 4294901760
        %v4248 = vsub.f32 %v1093, %v4247
        %4249 = vmatmul.mubr.f32.gmra.mxu0 %v4248
        %v4250 = vpop.f32.mrf.mxu0
        %v4251 = vadd.f32 %v3285, %v4250
        %v4252 = vpop.f32.mrf.mxu0
        %4253 = vmatprep.mubr.f32.mxu0 0.0
        %v4254 = vand.u32 %v1096, 4294901760
        %v4255 = vsub.f32 %v1096, %v4254
        %4256 = vmatmul.mubr.f32.gmra.mxu0 %v4255
        %v4257 = vpop.f32.mrf.mxu0
        %v4258 = vadd.f32 %v3291, %v4257
        %v4259 = vpop.f32.mrf.mxu0
        %4260 = vmatprep.mubr.f32.mxu0 0.0
        %v4261 = vand.u32 %v1099, 4294901760
        %v4262 = vsub.f32 %v1099, %v4261
        %4263 = vmatmul.mubr.f32.gmra.mxu0 %v4262
        %v4264 = vpop.f32.mrf.mxu0
        %v4265 = vadd.f32 %v3297, %v4264
        %v4266 = vpop.f32.mrf.mxu0
        %4267 = vmatprep.mubr.f32.mxu0 0.0
        %v4268 = vand.u32 %v1102, 4294901760
        %v4269 = vsub.f32 %v1102, %v4268
        %4270 = vmatmul.mubr.f32.gmra.mxu0 %v4269
        %v4271 = vpop.f32.mrf.mxu0
        %v4272 = vadd.f32 %v3303, %v4271
        %v4273 = vpop.f32.mrf.mxu0
        %4274 = vdwg.mxu0
        %4275 = vmatprep.subr.mxu0 0.0
        %4276 = vmatpush1.msra.mxu0 0.0
        %4277 = vmatprep.subr.mxu0 0.0
        %4278 = vmatpush1.msra.mxu0 0.0
        %4279 = vmatprep.subr.mxu0 0.0
        %4280 = vmatpush1.msra.mxu0 0.0
        %4281 = vmatprep.subr.mxu0 0.0
        %4282 = vmatpush1.msra.mxu0 0.0
        %4283 = vmatprep.subr.mxu0 0.0
        %4284 = vmatpush1.msra.mxu0 0.0
        %4285 = vmatprep.subr.mxu0 0.0
        %4286 = vmatpush1.msra.mxu0 0.0
        %4287 = vmatprep.subr.mxu0 0.0
        %4288 = vmatpush1.msra.mxu0 0.0
        %4289 = vmatprep.subr.mxu0 0.0
        %4290 = vmatpush1.msra.mxu0 0.0
        %4291 = vmatprep.subr.mxu0 0.0
        %4292 = vmatpush1.msra.mxu0 0.0
        %4293 = vmatprep.subr.mxu0 0.0
        %4294 = vmatpush1.msra.mxu0 0.0
        %4295 = vmatprep.subr.mxu0 0.0
        %4296 = vmatpush1.msra.mxu0 0.0
        %4297 = vmatprep.subr.mxu0 0.0
        %4298 = vmatpush1.msra.mxu0 0.0
        %4299 = vmatprep.subr.mxu0 0.0
        %v4300 = vand.u32 %v711, 4294901760
        %4301 = vmatpush1.msra.mxu0 %v4300
        %4302 = vmatprep.subr.mxu0 0.0
        %v4303 = vand.u32 %v710, 4294901760
        %4304 = vmatpush1.msra.mxu0 %v4303
        %4305 = vmatprep.subr.mxu0 0.0
        %v4306 = vand.u32 %v709, 4294901760
        %4307 = vmatpush1.msra.mxu0 %v4306
        %4308 = vmatprep.subr.mxu0 0.0
        %v4309 = vand.u32 %v708, 4294901760
        %4310 = vmatpush1.msra.mxu0 %v4309
        %4311 = vmatprep.subr.mxu0 0.0
        %4312 = vmatpush2.msra.mxu0 0.0
        %4313 = vmatprep.subr.mxu0 0.0
        %4314 = vmatpush2.msra.mxu0 0.0
        %4315 = vmatprep.subr.mxu0 0.0
        %4316 = vmatpush2.msra.mxu0 0.0
        %4317 = vmatprep.subr.mxu0 0.0
        %4318 = vmatpush2.msra.mxu0 0.0
        %4319 = vmatprep.subr.mxu0 0.0
        %4320 = vmatpush2.msra.mxu0 0.0
        %4321 = vmatprep.subr.mxu0 0.0
        %4322 = vmatpush2.msra.mxu0 0.0
        %4323 = vmatprep.subr.mxu0 0.0
        %4324 = vmatpush2.msra.mxu0 0.0
        %4325 = vmatprep.subr.mxu0 0.0
        %4326 = vmatpush2.msra.mxu0 0.0
        %4327 = vmatprep.subr.mxu0 0.0
        %4328 = vmatpush2.msra.mxu0 0.0
        %4329 = vmatprep.subr.mxu0 0.0
        %4330 = vmatpush2.msra.mxu0 0.0
        %4331 = vmatprep.subr.mxu0 0.0
        %4332 = vmatpush2.msra.mxu0 0.0
        %4333 = vmatprep.subr.mxu0 0.0
        %4334 = vmatpush2.msra.mxu0 0.0
        %4335 = vmatprep.subr.mxu0 0.0
        %4336 = vmatpush2.msra.mxu0 0.0
        %4337 = vmatprep.subr.mxu0 0.0
        %4338 = vmatpush2.msra.mxu0 0.0
        %4339 = vmatprep.subr.mxu0 0.0
        %4340 = vmatpush2.msra.mxu0 0.0
        %4341 = vmatprep.subr.mxu0 0.0
        %4342 = vmatpush2.msra.mxu0 0.0
        %4343 = vmatprep.mubr.f32.mxu0 0.0
        %v4344 = vand.u32 %v721, 4294901760
        %v4345 = vsub.f32 %v721, %v4344
        %v4346 = vand.u32 %v4345, 4294901760
        %4347 = vmatmul.mubr.f32.gmra.mxu0 %v4346
        %v4348 = vpop.f32.mrf.mxu0
        %v4349 = vadd.f32 %v3383, %v4348
        %v4350 = vpop.f32.mrf.mxu0
        %4351 = vmatprep.mubr.f32.mxu0 0.0
        %v4352 = vand.u32 %v724, 4294901760
        %v4353 = vsub.f32 %v724, %v4352
        %v4354 = vand.u32 %v4353, 4294901760
        %4355 = vmatmul.mubr.f32.gmra.mxu0 %v4354
        %v4356 = vpop.f32.mrf.mxu0
        %v4357 = vadd.f32 %v3390, %v4356
        %v4358 = vpop.f32.mrf.mxu0
        %4359 = vmatprep.mubr.f32.mxu0 0.0
        %v4360 = vand.u32 %v727, 4294901760
        %v4361 = vsub.f32 %v727, %v4360
        %v4362 = vand.u32 %v4361, 4294901760
        %4363 = vmatmul.mubr.f32.gmra.mxu0 %v4362
        %v4364 = vpop.f32.mrf.mxu0
        %v4365 = vadd.f32 %v3397, %v4364
        %v4366 = vpop.f32.mrf.mxu0
        %4367 = vmatprep.mubr.f32.mxu0 0.0
        %v4368 = vand.u32 %v730, 4294901760
        %v4369 = vsub.f32 %v730, %v4368
        %v4370 = vand.u32 %v4369, 4294901760
        %4371 = vmatmul.mubr.f32.gmra.mxu0 %v4370
        %v4372 = vpop.f32.mrf.mxu0
        %v4373 = vadd.f32 %v3404, %v4372
        %v4374 = vpop.f32.mrf.mxu0
        %4375 = vmatprep.mubr.f32.mxu0 0.0
        %v4376 = vand.u32 %v733, 4294901760
        %v4377 = vsub.f32 %v733, %v4376
        %v4378 = vand.u32 %v4377, 4294901760
        %4379 = vmatmul.mubr.f32.gmra.mxu0 %v4378
        %v4380 = vpop.f32.mrf.mxu0
        %v4381 = vadd.f32 %v3411, %v4380
        %v4382 = vpop.f32.mrf.mxu0
        %4383 = vmatprep.mubr.f32.mxu0 0.0
        %v4384 = vand.u32 %v736, 4294901760
        %v4385 = vsub.f32 %v736, %v4384
        %v4386 = vand.u32 %v4385, 4294901760
        %4387 = vmatmul.mubr.f32.gmra.mxu0 %v4386
        %v4388 = vpop.f32.mrf.mxu0
        %v4389 = vadd.f32 %v3418, %v4388
        %v4390 = vpop.f32.mrf.mxu0
        %4391 = vmatprep.mubr.f32.mxu0 0.0
        %v4392 = vand.u32 %v739, 4294901760
        %v4393 = vsub.f32 %v739, %v4392
        %v4394 = vand.u32 %v4393, 4294901760
        %4395 = vmatmul.mubr.f32.gmra.mxu0 %v4394
        %v4396 = vpop.f32.mrf.mxu0
        %v4397 = vadd.f32 %v3425, %v4396
        %v4398 = vpop.f32.mrf.mxu0
        %4399 = vmatprep.mubr.f32.mxu0 0.0
        %v4400 = vand.u32 %v742, 4294901760
        %v4401 = vsub.f32 %v742, %v4400
        %v4402 = vand.u32 %v4401, 4294901760
        %4403 = vmatmul.mubr.f32.gmra.mxu0 %v4402
        %v4404 = vpop.f32.mrf.mxu0
        %v4405 = vadd.f32 %v3432, %v4404
        %v4406 = vpop.f32.mrf.mxu0
        %4407 = vmatprep.mubr.f32.mxu0 0.0
        %v4408 = vand.u32 %v745, 4294901760
        %v4409 = vsub.f32 %v745, %v4408
        %v4410 = vand.u32 %v4409, 4294901760
        %4411 = vmatmul.mubr.f32.gmra.mxu0 %v4410
        %v4412 = vpop.f32.mrf.mxu0
        %v4413 = vadd.f32 %v3439, %v4412
        %v4414 = vpop.f32.mrf.mxu0
        %4415 = vmatprep.mubr.f32.mxu0 0.0
        %v4416 = vand.u32 %v748, 4294901760
        %v4417 = vsub.f32 %v748, %v4416
        %v4418 = vand.u32 %v4417, 4294901760
        %4419 = vmatmul.mubr.f32.gmra.mxu0 %v4418
        %v4420 = vpop.f32.mrf.mxu0
        %v4421 = vadd.f32 %v3446, %v4420
        %v4422 = vpop.f32.mrf.mxu0
        %4423 = vmatprep.mubr.f32.mxu0 0.0
        %v4424 = vand.u32 %v751, 4294901760
        %v4425 = vsub.f32 %v751, %v4424
        %v4426 = vand.u32 %v4425, 4294901760
        %4427 = vmatmul.mubr.f32.gmra.mxu0 %v4426
        %v4428 = vpop.f32.mrf.mxu0
        %v4429 = vadd.f32 %v3453, %v4428
        %v4430 = vpop.f32.mrf.mxu0
        %4431 = vmatprep.mubr.f32.mxu0 0.0
        %v4432 = vand.u32 %v754, 4294901760
        %v4433 = vsub.f32 %v754, %v4432
        %v4434 = vand.u32 %v4433, 4294901760
        %4435 = vmatmul.mubr.f32.gmra.mxu0 %v4434
        %v4436 = vpop.f32.mrf.mxu0
        %v4437 = vadd.f32 %v3460, %v4436
        %v4438 = vpop.f32.mrf.mxu0
        %4439 = vmatprep.mubr.f32.mxu0 0.0
        %v4440 = vand.u32 %v757, 4294901760
        %v4441 = vsub.f32 %v757, %v4440
        %v4442 = vand.u32 %v4441, 4294901760
        %4443 = vmatmul.mubr.f32.gmra.mxu0 %v4442
        %v4444 = vpop.f32.mrf.mxu0
        %v4445 = vadd.f32 %v3467, %v4444
        %v4446 = vpop.f32.mrf.mxu0
        %4447 = vmatprep.mubr.f32.mxu0 0.0
        %v4448 = vand.u32 %v760, 4294901760
        %v4449 = vsub.f32 %v760, %v4448
        %v4450 = vand.u32 %v4449, 4294901760
        %4451 = vmatmul.mubr.f32.gmra.mxu0 %v4450
        %v4452 = vpop.f32.mrf.mxu0
        %v4453 = vadd.f32 %v3474, %v4452
        %v4454 = vpop.f32.mrf.mxu0
        %4455 = vmatprep.mubr.f32.mxu0 0.0
        %v4456 = vand.u32 %v763, 4294901760
        %v4457 = vsub.f32 %v763, %v4456
        %v4458 = vand.u32 %v4457, 4294901760
        %4459 = vmatmul.mubr.f32.gmra.mxu0 %v4458
        %v4460 = vpop.f32.mrf.mxu0
        %v4461 = vadd.f32 %v3481, %v4460
        %v4462 = vpop.f32.mrf.mxu0
        %4463 = vmatprep.mubr.f32.mxu0 0.0
        %v4464 = vand.u32 %v766, 4294901760
        %v4465 = vsub.f32 %v766, %v4464
        %v4466 = vand.u32 %v4465, 4294901760
        %4467 = vmatmul.mubr.f32.gmra.mxu0 %v4466
        %v4468 = vpop.f32.mrf.mxu0
        %v4469 = vadd.f32 %v3488, %v4468
        %v4470 = vpop.f32.mrf.mxu0
        %4471 = vmatprep.mubr.f32.mxu0 0.0
        %v4472 = vand.u32 %v769, 4294901760
        %v4473 = vsub.f32 %v769, %v4472
        %v4474 = vand.u32 %v4473, 4294901760
        %4475 = vmatmul.mubr.f32.gmra.mxu0 %v4474
        %v4476 = vpop.f32.mrf.mxu0
        %v4477 = vadd.f32 %v3495, %v4476
        %v4478 = vpop.f32.mrf.mxu0
        %4479 = vmatprep.mubr.f32.mxu0 0.0
        %v4480 = vand.u32 %v772, 4294901760
        %v4481 = vsub.f32 %v772, %v4480
        %v4482 = vand.u32 %v4481, 4294901760
        %4483 = vmatmul.mubr.f32.gmra.mxu0 %v4482
        %v4484 = vpop.f32.mrf.mxu0
        %v4485 = vadd.f32 %v3502, %v4484
        %v4486 = vpop.f32.mrf.mxu0
        %4487 = vmatprep.mubr.f32.mxu0 0.0
        %v4488 = vand.u32 %v775, 4294901760
        %v4489 = vsub.f32 %v775, %v4488
        %v4490 = vand.u32 %v4489, 4294901760
        %4491 = vmatmul.mubr.f32.gmra.mxu0 %v4490
        %v4492 = vpop.f32.mrf.mxu0
        %v4493 = vadd.f32 %v3509, %v4492
        %v4494 = vpop.f32.mrf.mxu0
        %4495 = vmatprep.mubr.f32.mxu0 0.0
        %v4496 = vand.u32 %v778, 4294901760
        %v4497 = vsub.f32 %v778, %v4496
        %v4498 = vand.u32 %v4497, 4294901760
        %4499 = vmatmul.mubr.f32.gmra.mxu0 %v4498
        %v4500 = vpop.f32.mrf.mxu0
        %v4501 = vadd.f32 %v3516, %v4500
        %v4502 = vpop.f32.mrf.mxu0
        %4503 = vmatprep.mubr.f32.mxu0 0.0
        %v4504 = vand.u32 %v781, 4294901760
        %v4505 = vsub.f32 %v781, %v4504
        %v4506 = vand.u32 %v4505, 4294901760
        %4507 = vmatmul.mubr.f32.gmra.mxu0 %v4506
        %v4508 = vpop.f32.mrf.mxu0
        %v4509 = vadd.f32 %v3523, %v4508
        %v4510 = vpop.f32.mrf.mxu0
        %4511 = vmatprep.mubr.f32.mxu0 0.0
        %v4512 = vand.u32 %v784, 4294901760
        %v4513 = vsub.f32 %v784, %v4512
        %v4514 = vand.u32 %v4513, 4294901760
        %4515 = vmatmul.mubr.f32.gmra.mxu0 %v4514
        %v4516 = vpop.f32.mrf.mxu0
        %v4517 = vadd.f32 %v3530, %v4516
        %v4518 = vpop.f32.mrf.mxu0
        %4519 = vmatprep.mubr.f32.mxu0 0.0
        %v4520 = vand.u32 %v787, 4294901760
        %v4521 = vsub.f32 %v787, %v4520
        %v4522 = vand.u32 %v4521, 4294901760
        %4523 = vmatmul.mubr.f32.gmra.mxu0 %v4522
        %v4524 = vpop.f32.mrf.mxu0
        %v4525 = vadd.f32 %v3537, %v4524
        %v4526 = vpop.f32.mrf.mxu0
        %4527 = vmatprep.mubr.f32.mxu0 0.0
        %v4528 = vand.u32 %v790, 4294901760
        %v4529 = vsub.f32 %v790, %v4528
        %v4530 = vand.u32 %v4529, 4294901760
        %4531 = vmatmul.mubr.f32.gmra.mxu0 %v4530
        %v4532 = vpop.f32.mrf.mxu0
        %v4533 = vadd.f32 %v3544, %v4532
        %v4534 = vpop.f32.mrf.mxu0
        %4535 = vmatprep.mubr.f32.mxu0 0.0
        %v4536 = vand.u32 %v793, 4294901760
        %v4537 = vsub.f32 %v793, %v4536
        %v4538 = vand.u32 %v4537, 4294901760
        %4539 = vmatmul.mubr.f32.gmra.mxu0 %v4538
        %v4540 = vpop.f32.mrf.mxu0
        %v4541 = vadd.f32 %v3551, %v4540
        %v4542 = vpop.f32.mrf.mxu0
        %4543 = vmatprep.mubr.f32.mxu0 0.0
        %v4544 = vand.u32 %v796, 4294901760
        %v4545 = vsub.f32 %v796, %v4544
        %v4546 = vand.u32 %v4545, 4294901760
        %4547 = vmatmul.mubr.f32.gmra.mxu0 %v4546
        %v4548 = vpop.f32.mrf.mxu0
        %v4549 = vadd.f32 %v3558, %v4548
        %v4550 = vpop.f32.mrf.mxu0
        %4551 = vmatprep.mubr.f32.mxu0 0.0
        %v4552 = vand.u32 %v799, 4294901760
        %v4553 = vsub.f32 %v799, %v4552
        %v4554 = vand.u32 %v4553, 4294901760
        %4555 = vmatmul.mubr.f32.gmra.mxu0 %v4554
        %v4556 = vpop.f32.mrf.mxu0
        %v4557 = vadd.f32 %v3565, %v4556
        %v4558 = vpop.f32.mrf.mxu0
        %4559 = vmatprep.mubr.f32.mxu0 0.0
        %v4560 = vand.u32 %v802, 4294901760
        %v4561 = vsub.f32 %v802, %v4560
        %v4562 = vand.u32 %v4561, 4294901760
        %4563 = vmatmul.mubr.f32.gmra.mxu0 %v4562
        %v4564 = vpop.f32.mrf.mxu0
        %v4565 = vadd.f32 %v3572, %v4564
        %v4566 = vpop.f32.mrf.mxu0
        %4567 = vmatprep.mubr.f32.mxu0 0.0
        %v4568 = vand.u32 %v805, 4294901760
        %v4569 = vsub.f32 %v805, %v4568
        %v4570 = vand.u32 %v4569, 4294901760
        %4571 = vmatmul.mubr.f32.gmra.mxu0 %v4570
        %v4572 = vpop.f32.mrf.mxu0
        %v4573 = vadd.f32 %v3579, %v4572
        %v4574 = vpop.f32.mrf.mxu0
        %4575 = vmatprep.mubr.f32.mxu0 0.0
        %v4576 = vand.u32 %v808, 4294901760
        %v4577 = vsub.f32 %v808, %v4576
        %v4578 = vand.u32 %v4577, 4294901760
        %4579 = vmatmul.mubr.f32.gmra.mxu0 %v4578
        %v4580 = vpop.f32.mrf.mxu0
        %v4581 = vadd.f32 %v3586, %v4580
        %v4582 = vpop.f32.mrf.mxu0
        %4583 = vmatprep.mubr.f32.mxu0 0.0
        %v4584 = vand.u32 %v811, 4294901760
        %v4585 = vsub.f32 %v811, %v4584
        %v4586 = vand.u32 %v4585, 4294901760
        %4587 = vmatmul.mubr.f32.gmra.mxu0 %v4586
        %v4588 = vpop.f32.mrf.mxu0
        %v4589 = vadd.f32 %v3593, %v4588
        %v4590 = vpop.f32.mrf.mxu0
        %4591 = vmatprep.mubr.f32.mxu0 0.0
        %v4592 = vand.u32 %v814, 4294901760
        %v4593 = vsub.f32 %v814, %v4592
        %v4594 = vand.u32 %v4593, 4294901760
        %4595 = vmatmul.mubr.f32.gmra.mxu0 %v4594
        %v4596 = vpop.f32.mrf.mxu0
        %v4597 = vadd.f32 %v3600, %v4596
        %v4598 = vpop.f32.mrf.mxu0
        %4599 = vmatprep.mubr.f32.mxu0 0.0
        %v4600 = vand.u32 %v817, 4294901760
        %v4601 = vsub.f32 %v817, %v4600
        %v4602 = vand.u32 %v4601, 4294901760
        %4603 = vmatmul.mubr.f32.gmra.mxu0 %v4602
        %v4604 = vpop.f32.mrf.mxu0
        %v4605 = vadd.f32 %v3607, %v4604
        %v4606 = vpop.f32.mrf.mxu0
        %4607 = vmatprep.mubr.f32.mxu0 0.0
        %v4608 = vand.u32 %v820, 4294901760
        %v4609 = vsub.f32 %v820, %v4608
        %v4610 = vand.u32 %v4609, 4294901760
        %4611 = vmatmul.mubr.f32.gmra.mxu0 %v4610
        %v4612 = vpop.f32.mrf.mxu0
        %v4613 = vadd.f32 %v3614, %v4612
        %v4614 = vpop.f32.mrf.mxu0
        %4615 = vmatprep.mubr.f32.mxu0 0.0
        %v4616 = vand.u32 %v823, 4294901760
        %v4617 = vsub.f32 %v823, %v4616
        %v4618 = vand.u32 %v4617, 4294901760
        %4619 = vmatmul.mubr.f32.gmra.mxu0 %v4618
        %v4620 = vpop.f32.mrf.mxu0
        %v4621 = vadd.f32 %v3621, %v4620
        %v4622 = vpop.f32.mrf.mxu0
        %4623 = vmatprep.mubr.f32.mxu0 0.0
        %v4624 = vand.u32 %v826, 4294901760
        %v4625 = vsub.f32 %v826, %v4624
        %v4626 = vand.u32 %v4625, 4294901760
        %4627 = vmatmul.mubr.f32.gmra.mxu0 %v4626
        %v4628 = vpop.f32.mrf.mxu0
        %v4629 = vadd.f32 %v3628, %v4628
        %v4630 = vpop.f32.mrf.mxu0
        %4631 = vmatprep.mubr.f32.mxu0 0.0
        %v4632 = vand.u32 %v829, 4294901760
        %v4633 = vsub.f32 %v829, %v4632
        %v4634 = vand.u32 %v4633, 4294901760
        %4635 = vmatmul.mubr.f32.gmra.mxu0 %v4634
        %v4636 = vpop.f32.mrf.mxu0
        %v4637 = vadd.f32 %v3635, %v4636
        %v4638 = vpop.f32.mrf.mxu0
        %4639 = vmatprep.mubr.f32.mxu0 0.0
        %v4640 = vand.u32 %v832, 4294901760
        %v4641 = vsub.f32 %v832, %v4640
        %v4642 = vand.u32 %v4641, 4294901760
        %4643 = vmatmul.mubr.f32.gmra.mxu0 %v4642
        %v4644 = vpop.f32.mrf.mxu0
        %v4645 = vadd.f32 %v3642, %v4644
        %v4646 = vpop.f32.mrf.mxu0
        %4647 = vmatprep.mubr.f32.mxu0 0.0
        %v4648 = vand.u32 %v835, 4294901760
        %v4649 = vsub.f32 %v835, %v4648
        %v4650 = vand.u32 %v4649, 4294901760
        %4651 = vmatmul.mubr.f32.gmra.mxu0 %v4650
        %v4652 = vpop.f32.mrf.mxu0
        %v4653 = vadd.f32 %v3649, %v4652
        %v4654 = vpop.f32.mrf.mxu0
        %4655 = vmatprep.mubr.f32.mxu0 0.0
        %v4656 = vand.u32 %v838, 4294901760
        %v4657 = vsub.f32 %v838, %v4656
        %v4658 = vand.u32 %v4657, 4294901760
        %4659 = vmatmul.mubr.f32.gmra.mxu0 %v4658
        %v4660 = vpop.f32.mrf.mxu0
        %v4661 = vadd.f32 %v3656, %v4660
        %v4662 = vpop.f32.mrf.mxu0
        %4663 = vmatprep.mubr.f32.mxu0 0.0
        %v4664 = vand.u32 %v841, 4294901760
        %v4665 = vsub.f32 %v841, %v4664
        %v4666 = vand.u32 %v4665, 4294901760
        %4667 = vmatmul.mubr.f32.gmra.mxu0 %v4666
        %v4668 = vpop.f32.mrf.mxu0
        %v4669 = vadd.f32 %v3663, %v4668
        %v4670 = vpop.f32.mrf.mxu0
        %4671 = vmatprep.mubr.f32.mxu0 0.0
        %v4672 = vand.u32 %v844, 4294901760
        %v4673 = vsub.f32 %v844, %v4672
        %v4674 = vand.u32 %v4673, 4294901760
        %4675 = vmatmul.mubr.f32.gmra.mxu0 %v4674
        %v4676 = vpop.f32.mrf.mxu0
        %v4677 = vadd.f32 %v3670, %v4676
        %v4678 = vpop.f32.mrf.mxu0
        %4679 = vmatprep.mubr.f32.mxu0 0.0
        %v4680 = vand.u32 %v847, 4294901760
        %v4681 = vsub.f32 %v847, %v4680
        %v4682 = vand.u32 %v4681, 4294901760
        %4683 = vmatmul.mubr.f32.gmra.mxu0 %v4682
        %v4684 = vpop.f32.mrf.mxu0
        %v4685 = vadd.f32 %v3677, %v4684
        %v4686 = vpop.f32.mrf.mxu0
        %4687 = vmatprep.mubr.f32.mxu0 0.0
        %v4688 = vand.u32 %v850, 4294901760
        %v4689 = vsub.f32 %v850, %v4688
        %v4690 = vand.u32 %v4689, 4294901760
        %4691 = vmatmul.mubr.f32.gmra.mxu0 %v4690
        %v4692 = vpop.f32.mrf.mxu0
        %v4693 = vadd.f32 %v3684, %v4692
        %v4694 = vpop.f32.mrf.mxu0
        %4695 = vmatprep.mubr.f32.mxu0 0.0
        %v4696 = vand.u32 %v853, 4294901760
        %v4697 = vsub.f32 %v853, %v4696
        %v4698 = vand.u32 %v4697, 4294901760
        %4699 = vmatmul.mubr.f32.gmra.mxu0 %v4698
        %v4700 = vpop.f32.mrf.mxu0
        %v4701 = vadd.f32 %v3691, %v4700
        %v4702 = vpop.f32.mrf.mxu0
        %4703 = vmatprep.mubr.f32.mxu0 0.0
        %v4704 = vand.u32 %v856, 4294901760
        %v4705 = vsub.f32 %v856, %v4704
        %v4706 = vand.u32 %v4705, 4294901760
        %4707 = vmatmul.mubr.f32.gmra.mxu0 %v4706
        %v4708 = vpop.f32.mrf.mxu0
        %v4709 = vadd.f32 %v3698, %v4708
        %v4710 = vpop.f32.mrf.mxu0
        %4711 = vmatprep.mubr.f32.mxu0 0.0
        %v4712 = vand.u32 %v859, 4294901760
        %v4713 = vsub.f32 %v859, %v4712
        %v4714 = vand.u32 %v4713, 4294901760
        %4715 = vmatmul.mubr.f32.gmra.mxu0 %v4714
        %v4716 = vpop.f32.mrf.mxu0
        %v4717 = vadd.f32 %v3705, %v4716
        %v4718 = vpop.f32.mrf.mxu0
        %4719 = vmatprep.mubr.f32.mxu0 0.0
        %v4720 = vand.u32 %v862, 4294901760
        %v4721 = vsub.f32 %v862, %v4720
        %v4722 = vand.u32 %v4721, 4294901760
        %4723 = vmatmul.mubr.f32.gmra.mxu0 %v4722
        %v4724 = vpop.f32.mrf.mxu0
        %v4725 = vadd.f32 %v3712, %v4724
        %v4726 = vpop.f32.mrf.mxu0
        %4727 = vmatprep.mubr.f32.mxu0 0.0
        %v4728 = vand.u32 %v865, 4294901760
        %v4729 = vsub.f32 %v865, %v4728
        %v4730 = vand.u32 %v4729, 4294901760
        %4731 = vmatmul.mubr.f32.gmra.mxu0 %v4730
        %v4732 = vpop.f32.mrf.mxu0
        %v4733 = vadd.f32 %v3719, %v4732
        %v4734 = vpop.f32.mrf.mxu0
        %4735 = vmatprep.mubr.f32.mxu0 0.0
        %v4736 = vand.u32 %v868, 4294901760
        %v4737 = vsub.f32 %v868, %v4736
        %v4738 = vand.u32 %v4737, 4294901760
        %4739 = vmatmul.mubr.f32.gmra.mxu0 %v4738
        %v4740 = vpop.f32.mrf.mxu0
        %v4741 = vadd.f32 %v3726, %v4740
        %v4742 = vpop.f32.mrf.mxu0
        %4743 = vmatprep.mubr.f32.mxu0 0.0
        %v4744 = vand.u32 %v871, 4294901760
        %v4745 = vsub.f32 %v871, %v4744
        %v4746 = vand.u32 %v4745, 4294901760
        %4747 = vmatmul.mubr.f32.gmra.mxu0 %v4746
        %v4748 = vpop.f32.mrf.mxu0
        %v4749 = vadd.f32 %v3733, %v4748
        %v4750 = vpop.f32.mrf.mxu0
        %4751 = vmatprep.mubr.f32.mxu0 0.0
        %v4752 = vand.u32 %v874, 4294901760
        %v4753 = vsub.f32 %v874, %v4752
        %v4754 = vand.u32 %v4753, 4294901760
        %4755 = vmatmul.mubr.f32.gmra.mxu0 %v4754
        %v4756 = vpop.f32.mrf.mxu0
        %v4757 = vadd.f32 %v3740, %v4756
        %v4758 = vpop.f32.mrf.mxu0
        %4759 = vmatprep.mubr.f32.mxu0 0.0
        %v4760 = vand.u32 %v877, 4294901760
        %v4761 = vsub.f32 %v877, %v4760
        %v4762 = vand.u32 %v4761, 4294901760
        %4763 = vmatmul.mubr.f32.gmra.mxu0 %v4762
        %v4764 = vpop.f32.mrf.mxu0
        %v4765 = vadd.f32 %v3747, %v4764
        %v4766 = vpop.f32.mrf.mxu0
        %4767 = vmatprep.mubr.f32.mxu0 0.0
        %v4768 = vand.u32 %v880, 4294901760
        %v4769 = vsub.f32 %v880, %v4768
        %v4770 = vand.u32 %v4769, 4294901760
        %4771 = vmatmul.mubr.f32.gmra.mxu0 %v4770
        %v4772 = vpop.f32.mrf.mxu0
        %v4773 = vadd.f32 %v3754, %v4772
        %v4774 = vpop.f32.mrf.mxu0
        %4775 = vmatprep.mubr.f32.mxu0 0.0
        %v4776 = vand.u32 %v883, 4294901760
        %v4777 = vsub.f32 %v883, %v4776
        %v4778 = vand.u32 %v4777, 4294901760
        %4779 = vmatmul.mubr.f32.gmra.mxu0 %v4778
        %v4780 = vpop.f32.mrf.mxu0
        %v4781 = vadd.f32 %v3761, %v4780
        %v4782 = vpop.f32.mrf.mxu0
        %4783 = vmatprep.mubr.f32.mxu0 0.0
        %v4784 = vand.u32 %v886, 4294901760
        %v4785 = vsub.f32 %v886, %v4784
        %v4786 = vand.u32 %v4785, 4294901760
        %4787 = vmatmul.mubr.f32.gmra.mxu0 %v4786
        %v4788 = vpop.f32.mrf.mxu0
        %v4789 = vadd.f32 %v3768, %v4788
        %v4790 = vpop.f32.mrf.mxu0
        %4791 = vmatprep.mubr.f32.mxu0 0.0
        %v4792 = vand.u32 %v889, 4294901760
        %v4793 = vsub.f32 %v889, %v4792
        %v4794 = vand.u32 %v4793, 4294901760
        %4795 = vmatmul.mubr.f32.gmra.mxu0 %v4794
        %v4796 = vpop.f32.mrf.mxu0
        %v4797 = vadd.f32 %v3775, %v4796
        %v4798 = vpop.f32.mrf.mxu0
        %4799 = vmatprep.mubr.f32.mxu0 0.0
        %v4800 = vand.u32 %v892, 4294901760
        %v4801 = vsub.f32 %v892, %v4800
        %v4802 = vand.u32 %v4801, 4294901760
        %4803 = vmatmul.mubr.f32.gmra.mxu0 %v4802
        %v4804 = vpop.f32.mrf.mxu0
        %v4805 = vadd.f32 %v3782, %v4804
        %v4806 = vpop.f32.mrf.mxu0
        %4807 = vmatprep.mubr.f32.mxu0 0.0
        %v4808 = vand.u32 %v895, 4294901760
        %v4809 = vsub.f32 %v895, %v4808
        %v4810 = vand.u32 %v4809, 4294901760
        %4811 = vmatmul.mubr.f32.gmra.mxu0 %v4810
        %v4812 = vpop.f32.mrf.mxu0
        %v4813 = vadd.f32 %v3789, %v4812
        %v4814 = vpop.f32.mrf.mxu0
        %4815 = vmatprep.mubr.f32.mxu0 0.0
        %v4816 = vand.u32 %v898, 4294901760
        %v4817 = vsub.f32 %v898, %v4816
        %v4818 = vand.u32 %v4817, 4294901760
        %4819 = vmatmul.mubr.f32.gmra.mxu0 %v4818
        %v4820 = vpop.f32.mrf.mxu0
        %v4821 = vadd.f32 %v3796, %v4820
        %v4822 = vpop.f32.mrf.mxu0
        %4823 = vmatprep.mubr.f32.mxu0 0.0
        %v4824 = vand.u32 %v901, 4294901760
        %v4825 = vsub.f32 %v901, %v4824
        %v4826 = vand.u32 %v4825, 4294901760
        %4827 = vmatmul.mubr.f32.gmra.mxu0 %v4826
        %v4828 = vpop.f32.mrf.mxu0
        %v4829 = vadd.f32 %v3803, %v4828
        %v4830 = vpop.f32.mrf.mxu0
        %4831 = vmatprep.mubr.f32.mxu0 0.0
        %v4832 = vand.u32 %v904, 4294901760
        %v4833 = vsub.f32 %v904, %v4832
        %v4834 = vand.u32 %v4833, 4294901760
        %4835 = vmatmul.mubr.f32.gmra.mxu0 %v4834
        %v4836 = vpop.f32.mrf.mxu0
        %v4837 = vadd.f32 %v3810, %v4836
        %v4838 = vpop.f32.mrf.mxu0
        %4839 = vmatprep.mubr.f32.mxu0 0.0
        %v4840 = vand.u32 %v907, 4294901760
        %v4841 = vsub.f32 %v907, %v4840
        %v4842 = vand.u32 %v4841, 4294901760
        %4843 = vmatmul.mubr.f32.gmra.mxu0 %v4842
        %v4844 = vpop.f32.mrf.mxu0
        %v4845 = vadd.f32 %v3817, %v4844
        %v4846 = vpop.f32.mrf.mxu0
        %4847 = vmatprep.mubr.f32.mxu0 0.0
        %v4848 = vand.u32 %v910, 4294901760
        %v4849 = vsub.f32 %v910, %v4848
        %v4850 = vand.u32 %v4849, 4294901760
        %4851 = vmatmul.mubr.f32.gmra.mxu0 %v4850
        %v4852 = vpop.f32.mrf.mxu0
        %v4853 = vadd.f32 %v3824, %v4852
        %v4854 = vpop.f32.mrf.mxu0
        %4855 = vmatprep.mubr.f32.mxu0 0.0
        %v4856 = vand.u32 %v913, 4294901760
        %v4857 = vsub.f32 %v913, %v4856
        %v4858 = vand.u32 %v4857, 4294901760
        %4859 = vmatmul.mubr.f32.gmra.mxu0 %v4858
        %v4860 = vpop.f32.mrf.mxu0
        %v4861 = vadd.f32 %v3831, %v4860
        %v4862 = vpop.f32.mrf.mxu0
        %4863 = vmatprep.mubr.f32.mxu0 0.0
        %v4864 = vand.u32 %v916, 4294901760
        %v4865 = vsub.f32 %v916, %v4864
        %v4866 = vand.u32 %v4865, 4294901760
        %4867 = vmatmul.mubr.f32.gmra.mxu0 %v4866
        %v4868 = vpop.f32.mrf.mxu0
        %v4869 = vadd.f32 %v3838, %v4868
        %v4870 = vpop.f32.mrf.mxu0
        %4871 = vmatprep.mubr.f32.mxu0 0.0
        %v4872 = vand.u32 %v919, 4294901760
        %v4873 = vsub.f32 %v919, %v4872
        %v4874 = vand.u32 %v4873, 4294901760
        %4875 = vmatmul.mubr.f32.gmra.mxu0 %v4874
        %v4876 = vpop.f32.mrf.mxu0
        %v4877 = vadd.f32 %v3845, %v4876
        %v4878 = vpop.f32.mrf.mxu0
        %4879 = vmatprep.mubr.f32.mxu0 0.0
        %v4880 = vand.u32 %v922, 4294901760
        %v4881 = vsub.f32 %v922, %v4880
        %v4882 = vand.u32 %v4881, 4294901760
        %4883 = vmatmul.mubr.f32.gmra.mxu0 %v4882
        %v4884 = vpop.f32.mrf.mxu0
        %v4885 = vadd.f32 %v3852, %v4884
        %v4886 = vpop.f32.mrf.mxu0
        %4887 = vmatprep.mubr.f32.mxu0 0.0
        %v4888 = vand.u32 %v925, 4294901760
        %v4889 = vsub.f32 %v925, %v4888
        %v4890 = vand.u32 %v4889, 4294901760
        %4891 = vmatmul.mubr.f32.gmra.mxu0 %v4890
        %v4892 = vpop.f32.mrf.mxu0
        %v4893 = vadd.f32 %v3859, %v4892
        %v4894 = vpop.f32.mrf.mxu0
        %4895 = vmatprep.mubr.f32.mxu0 0.0
        %v4896 = vand.u32 %v928, 4294901760
        %v4897 = vsub.f32 %v928, %v4896
        %v4898 = vand.u32 %v4897, 4294901760
        %4899 = vmatmul.mubr.f32.gmra.mxu0 %v4898
        %v4900 = vpop.f32.mrf.mxu0
        %v4901 = vadd.f32 %v3866, %v4900
        %v4902 = vpop.f32.mrf.mxu0
        %4903 = vmatprep.mubr.f32.mxu0 0.0
        %v4904 = vand.u32 %v931, 4294901760
        %v4905 = vsub.f32 %v931, %v4904
        %v4906 = vand.u32 %v4905, 4294901760
        %4907 = vmatmul.mubr.f32.gmra.mxu0 %v4906
        %v4908 = vpop.f32.mrf.mxu0
        %v4909 = vadd.f32 %v3873, %v4908
        %v4910 = vpop.f32.mrf.mxu0
        %4911 = vmatprep.mubr.f32.mxu0 0.0
        %v4912 = vand.u32 %v934, 4294901760
        %v4913 = vsub.f32 %v934, %v4912
        %v4914 = vand.u32 %v4913, 4294901760
        %4915 = vmatmul.mubr.f32.gmra.mxu0 %v4914
        %v4916 = vpop.f32.mrf.mxu0
        %v4917 = vadd.f32 %v3880, %v4916
        %v4918 = vpop.f32.mrf.mxu0
        %4919 = vmatprep.mubr.f32.mxu0 0.0
        %v4920 = vand.u32 %v937, 4294901760
        %v4921 = vsub.f32 %v937, %v4920
        %v4922 = vand.u32 %v4921, 4294901760
        %4923 = vmatmul.mubr.f32.gmra.mxu0 %v4922
        %v4924 = vpop.f32.mrf.mxu0
        %v4925 = vadd.f32 %v3887, %v4924
        %v4926 = vpop.f32.mrf.mxu0
        %4927 = vmatprep.mubr.f32.mxu0 0.0
        %v4928 = vand.u32 %v940, 4294901760
        %v4929 = vsub.f32 %v940, %v4928
        %v4930 = vand.u32 %v4929, 4294901760
        %4931 = vmatmul.mubr.f32.gmra.mxu0 %v4930
        %v4932 = vpop.f32.mrf.mxu0
        %v4933 = vadd.f32 %v3894, %v4932
        %v4934 = vpop.f32.mrf.mxu0
        %4935 = vmatprep.mubr.f32.mxu0 0.0
        %v4936 = vand.u32 %v943, 4294901760
        %v4937 = vsub.f32 %v943, %v4936
        %v4938 = vand.u32 %v4937, 4294901760
        %4939 = vmatmul.mubr.f32.gmra.mxu0 %v4938
        %v4940 = vpop.f32.mrf.mxu0
        %v4941 = vadd.f32 %v3901, %v4940
        %v4942 = vpop.f32.mrf.mxu0
        %4943 = vmatprep.mubr.f32.mxu0 0.0
        %v4944 = vand.u32 %v946, 4294901760
        %v4945 = vsub.f32 %v946, %v4944
        %v4946 = vand.u32 %v4945, 4294901760
        %4947 = vmatmul.mubr.f32.gmra.mxu0 %v4946
        %v4948 = vpop.f32.mrf.mxu0
        %v4949 = vadd.f32 %v3908, %v4948
        %v4950 = vpop.f32.mrf.mxu0
        %4951 = vmatprep.mubr.f32.mxu0 0.0
        %v4952 = vand.u32 %v949, 4294901760
        %v4953 = vsub.f32 %v949, %v4952
        %v4954 = vand.u32 %v4953, 4294901760
        %4955 = vmatmul.mubr.f32.gmra.mxu0 %v4954
        %v4956 = vpop.f32.mrf.mxu0
        %v4957 = vadd.f32 %v3915, %v4956
        %v4958 = vpop.f32.mrf.mxu0
        %4959 = vmatprep.mubr.f32.mxu0 0.0
        %v4960 = vand.u32 %v952, 4294901760
        %v4961 = vsub.f32 %v952, %v4960
        %v4962 = vand.u32 %v4961, 4294901760
        %4963 = vmatmul.mubr.f32.gmra.mxu0 %v4962
        %v4964 = vpop.f32.mrf.mxu0
        %v4965 = vadd.f32 %v3922, %v4964
        %v4966 = vpop.f32.mrf.mxu0
        %4967 = vmatprep.mubr.f32.mxu0 0.0
        %v4968 = vand.u32 %v955, 4294901760
        %v4969 = vsub.f32 %v955, %v4968
        %v4970 = vand.u32 %v4969, 4294901760
        %4971 = vmatmul.mubr.f32.gmra.mxu0 %v4970
        %v4972 = vpop.f32.mrf.mxu0
        %v4973 = vadd.f32 %v3929, %v4972
        %v4974 = vpop.f32.mrf.mxu0
        %4975 = vmatprep.mubr.f32.mxu0 0.0
        %v4976 = vand.u32 %v958, 4294901760
        %v4977 = vsub.f32 %v958, %v4976
        %v4978 = vand.u32 %v4977, 4294901760
        %4979 = vmatmul.mubr.f32.gmra.mxu0 %v4978
        %v4980 = vpop.f32.mrf.mxu0
        %v4981 = vadd.f32 %v3936, %v4980
        %v4982 = vpop.f32.mrf.mxu0
        %4983 = vmatprep.mubr.f32.mxu0 0.0
        %v4984 = vand.u32 %v961, 4294901760
        %v4985 = vsub.f32 %v961, %v4984
        %v4986 = vand.u32 %v4985, 4294901760
        %4987 = vmatmul.mubr.f32.gmra.mxu0 %v4986
        %v4988 = vpop.f32.mrf.mxu0
        %v4989 = vadd.f32 %v3943, %v4988
        %v4990 = vpop.f32.mrf.mxu0
        %4991 = vmatprep.mubr.f32.mxu0 0.0
        %v4992 = vand.u32 %v964, 4294901760
        %v4993 = vsub.f32 %v964, %v4992
        %v4994 = vand.u32 %v4993, 4294901760
        %4995 = vmatmul.mubr.f32.gmra.mxu0 %v4994
        %v4996 = vpop.f32.mrf.mxu0
        %v4997 = vadd.f32 %v3950, %v4996
        %v4998 = vpop.f32.mrf.mxu0
        %4999 = vmatprep.mubr.f32.mxu0 0.0
        %v5000 = vand.u32 %v967, 4294901760
        %v5001 = vsub.f32 %v967, %v5000
        %v5002 = vand.u32 %v5001, 4294901760
        %5003 = vmatmul.mubr.f32.gmra.mxu0 %v5002
        %v5004 = vpop.f32.mrf.mxu0
        %v5005 = vadd.f32 %v3957, %v5004
        %v5006 = vpop.f32.mrf.mxu0
        %5007 = vmatprep.mubr.f32.mxu0 0.0
        %v5008 = vand.u32 %v970, 4294901760
        %v5009 = vsub.f32 %v970, %v5008
        %v5010 = vand.u32 %v5009, 4294901760
        %5011 = vmatmul.mubr.f32.gmra.mxu0 %v5010
        %v5012 = vpop.f32.mrf.mxu0
        %v5013 = vadd.f32 %v3964, %v5012
        %v5014 = vpop.f32.mrf.mxu0
        %5015 = vmatprep.mubr.f32.mxu0 0.0
        %v5016 = vand.u32 %v973, 4294901760
        %v5017 = vsub.f32 %v973, %v5016
        %v5018 = vand.u32 %v5017, 4294901760
        %5019 = vmatmul.mubr.f32.gmra.mxu0 %v5018
        %v5020 = vpop.f32.mrf.mxu0
        %v5021 = vadd.f32 %v3971, %v5020
        %v5022 = vpop.f32.mrf.mxu0
        %5023 = vmatprep.mubr.f32.mxu0 0.0
        %v5024 = vand.u32 %v976, 4294901760
        %v5025 = vsub.f32 %v976, %v5024
        %v5026 = vand.u32 %v5025, 4294901760
        %5027 = vmatmul.mubr.f32.gmra.mxu0 %v5026
        %v5028 = vpop.f32.mrf.mxu0
        %v5029 = vadd.f32 %v3978, %v5028
        %v5030 = vpop.f32.mrf.mxu0
        %5031 = vmatprep.mubr.f32.mxu0 0.0
        %v5032 = vand.u32 %v979, 4294901760
        %v5033 = vsub.f32 %v979, %v5032
        %v5034 = vand.u32 %v5033, 4294901760
        %5035 = vmatmul.mubr.f32.gmra.mxu0 %v5034
        %v5036 = vpop.f32.mrf.mxu0
        %v5037 = vadd.f32 %v3985, %v5036
        %v5038 = vpop.f32.mrf.mxu0
        %5039 = vmatprep.mubr.f32.mxu0 0.0
        %v5040 = vand.u32 %v982, 4294901760
        %v5041 = vsub.f32 %v982, %v5040
        %v5042 = vand.u32 %v5041, 4294901760
        %5043 = vmatmul.mubr.f32.gmra.mxu0 %v5042
        %v5044 = vpop.f32.mrf.mxu0
        %v5045 = vadd.f32 %v3992, %v5044
        %v5046 = vpop.f32.mrf.mxu0
        %5047 = vmatprep.mubr.f32.mxu0 0.0
        %v5048 = vand.u32 %v985, 4294901760
        %v5049 = vsub.f32 %v985, %v5048
        %v5050 = vand.u32 %v5049, 4294901760
        %5051 = vmatmul.mubr.f32.gmra.mxu0 %v5050
        %v5052 = vpop.f32.mrf.mxu0
        %v5053 = vadd.f32 %v3999, %v5052
        %v5054 = vpop.f32.mrf.mxu0
        %5055 = vmatprep.mubr.f32.mxu0 0.0
        %v5056 = vand.u32 %v988, 4294901760
        %v5057 = vsub.f32 %v988, %v5056
        %v5058 = vand.u32 %v5057, 4294901760
        %5059 = vmatmul.mubr.f32.gmra.mxu0 %v5058
        %v5060 = vpop.f32.mrf.mxu0
        %v5061 = vadd.f32 %v4006, %v5060
        %v5062 = vpop.f32.mrf.mxu0
        %5063 = vmatprep.mubr.f32.mxu0 0.0
        %v5064 = vand.u32 %v991, 4294901760
        %v5065 = vsub.f32 %v991, %v5064
        %v5066 = vand.u32 %v5065, 4294901760
        %5067 = vmatmul.mubr.f32.gmra.mxu0 %v5066
        %v5068 = vpop.f32.mrf.mxu0
        %v5069 = vadd.f32 %v4013, %v5068
        %v5070 = vpop.f32.mrf.mxu0
        %5071 = vmatprep.mubr.f32.mxu0 0.0
        %v5072 = vand.u32 %v994, 4294901760
        %v5073 = vsub.f32 %v994, %v5072
        %v5074 = vand.u32 %v5073, 4294901760
        %5075 = vmatmul.mubr.f32.gmra.mxu0 %v5074
        %v5076 = vpop.f32.mrf.mxu0
        %v5077 = vadd.f32 %v4020, %v5076
        %v5078 = vpop.f32.mrf.mxu0
        %5079 = vmatprep.mubr.f32.mxu0 0.0
        %v5080 = vand.u32 %v997, 4294901760
        %v5081 = vsub.f32 %v997, %v5080
        %v5082 = vand.u32 %v5081, 4294901760
        %5083 = vmatmul.mubr.f32.gmra.mxu0 %v5082
        %v5084 = vpop.f32.mrf.mxu0
        %v5085 = vadd.f32 %v4027, %v5084
        %v5086 = vpop.f32.mrf.mxu0
        %5087 = vmatprep.mubr.f32.mxu0 0.0
        %v5088 = vand.u32 %v1000, 4294901760
        %v5089 = vsub.f32 %v1000, %v5088
        %v5090 = vand.u32 %v5089, 4294901760
        %5091 = vmatmul.mubr.f32.gmra.mxu0 %v5090
        %v5092 = vpop.f32.mrf.mxu0
        %v5093 = vadd.f32 %v4034, %v5092
        %v5094 = vpop.f32.mrf.mxu0
        %5095 = vmatprep.mubr.f32.mxu0 0.0
        %v5096 = vand.u32 %v1003, 4294901760
        %v5097 = vsub.f32 %v1003, %v5096
        %v5098 = vand.u32 %v5097, 4294901760
        %5099 = vmatmul.mubr.f32.gmra.mxu0 %v5098
        %v5100 = vpop.f32.mrf.mxu0
        %v5101 = vadd.f32 %v4041, %v5100
        %v5102 = vpop.f32.mrf.mxu0
        %5103 = vmatprep.mubr.f32.mxu0 0.0
        %v5104 = vand.u32 %v1006, 4294901760
        %v5105 = vsub.f32 %v1006, %v5104
        %v5106 = vand.u32 %v5105, 4294901760
        %5107 = vmatmul.mubr.f32.gmra.mxu0 %v5106
        %v5108 = vpop.f32.mrf.mxu0
        %v5109 = vadd.f32 %v4048, %v5108
        %v5110 = vpop.f32.mrf.mxu0
        %5111 = vmatprep.mubr.f32.mxu0 0.0
        %v5112 = vand.u32 %v1009, 4294901760
        %v5113 = vsub.f32 %v1009, %v5112
        %v5114 = vand.u32 %v5113, 4294901760
        %5115 = vmatmul.mubr.f32.gmra.mxu0 %v5114
        %v5116 = vpop.f32.mrf.mxu0
        %v5117 = vadd.f32 %v4055, %v5116
        %v5118 = vpop.f32.mrf.mxu0
        %5119 = vmatprep.mubr.f32.mxu0 0.0
        %v5120 = vand.u32 %v1012, 4294901760
        %v5121 = vsub.f32 %v1012, %v5120
        %v5122 = vand.u32 %v5121, 4294901760
        %5123 = vmatmul.mubr.f32.gmra.mxu0 %v5122
        %v5124 = vpop.f32.mrf.mxu0
        %v5125 = vadd.f32 %v4062, %v5124
        %v5126 = vpop.f32.mrf.mxu0
        %5127 = vmatprep.mubr.f32.mxu0 0.0
        %v5128 = vand.u32 %v1015, 4294901760
        %v5129 = vsub.f32 %v1015, %v5128
        %v5130 = vand.u32 %v5129, 4294901760
        %5131 = vmatmul.mubr.f32.gmra.mxu0 %v5130
        %v5132 = vpop.f32.mrf.mxu0
        %v5133 = vadd.f32 %v4069, %v5132
        %v5134 = vpop.f32.mrf.mxu0
        %5135 = vmatprep.mubr.f32.mxu0 0.0
        %v5136 = vand.u32 %v1018, 4294901760
        %v5137 = vsub.f32 %v1018, %v5136
        %v5138 = vand.u32 %v5137, 4294901760
        %5139 = vmatmul.mubr.f32.gmra.mxu0 %v5138
        %v5140 = vpop.f32.mrf.mxu0
        %v5141 = vadd.f32 %v4076, %v5140
        %v5142 = vpop.f32.mrf.mxu0
        %5143 = vmatprep.mubr.f32.mxu0 0.0
        %v5144 = vand.u32 %v1021, 4294901760
        %v5145 = vsub.f32 %v1021, %v5144
        %v5146 = vand.u32 %v5145, 4294901760
        %5147 = vmatmul.mubr.f32.gmra.mxu0 %v5146
        %v5148 = vpop.f32.mrf.mxu0
        %v5149 = vadd.f32 %v4083, %v5148
        %v5150 = vpop.f32.mrf.mxu0
        %5151 = vmatprep.mubr.f32.mxu0 0.0
        %v5152 = vand.u32 %v1024, 4294901760
        %v5153 = vsub.f32 %v1024, %v5152
        %v5154 = vand.u32 %v5153, 4294901760
        %5155 = vmatmul.mubr.f32.gmra.mxu0 %v5154
        %v5156 = vpop.f32.mrf.mxu0
        %v5157 = vadd.f32 %v4090, %v5156
        %v5158 = vpop.f32.mrf.mxu0
        %5159 = vmatprep.mubr.f32.mxu0 0.0
        %v5160 = vand.u32 %v1027, 4294901760
        %v5161 = vsub.f32 %v1027, %v5160
        %v5162 = vand.u32 %v5161, 4294901760
        %5163 = vmatmul.mubr.f32.gmra.mxu0 %v5162
        %v5164 = vpop.f32.mrf.mxu0
        %v5165 = vadd.f32 %v4097, %v5164
        %v5166 = vpop.f32.mrf.mxu0
        %5167 = vmatprep.mubr.f32.mxu0 0.0
        %v5168 = vand.u32 %v1030, 4294901760
        %v5169 = vsub.f32 %v1030, %v5168
        %v5170 = vand.u32 %v5169, 4294901760
        %5171 = vmatmul.mubr.f32.gmra.mxu0 %v5170
        %v5172 = vpop.f32.mrf.mxu0
        %v5173 = vadd.f32 %v4104, %v5172
        %v5174 = vpop.f32.mrf.mxu0
        %5175 = vmatprep.mubr.f32.mxu0 0.0
        %v5176 = vand.u32 %v1033, 4294901760
        %v5177 = vsub.f32 %v1033, %v5176
        %v5178 = vand.u32 %v5177, 4294901760
        %5179 = vmatmul.mubr.f32.gmra.mxu0 %v5178
        %v5180 = vpop.f32.mrf.mxu0
        %v5181 = vadd.f32 %v4111, %v5180
        %v5182 = vpop.f32.mrf.mxu0
        %5183 = vmatprep.mubr.f32.mxu0 0.0
        %v5184 = vand.u32 %v1036, 4294901760
        %v5185 = vsub.f32 %v1036, %v5184
        %v5186 = vand.u32 %v5185, 4294901760
        %5187 = vmatmul.mubr.f32.gmra.mxu0 %v5186
        %v5188 = vpop.f32.mrf.mxu0
        %v5189 = vadd.f32 %v4118, %v5188
        %v5190 = vpop.f32.mrf.mxu0
        %5191 = vmatprep.mubr.f32.mxu0 0.0
        %v5192 = vand.u32 %v1039, 4294901760
        %v5193 = vsub.f32 %v1039, %v5192
        %v5194 = vand.u32 %v5193, 4294901760
        %5195 = vmatmul.mubr.f32.gmra.mxu0 %v5194
        %v5196 = vpop.f32.mrf.mxu0
        %v5197 = vadd.f32 %v4125, %v5196
        %v5198 = vpop.f32.mrf.mxu0
        %5199 = vmatprep.mubr.f32.mxu0 0.0
        %v5200 = vand.u32 %v1042, 4294901760
        %v5201 = vsub.f32 %v1042, %v5200
        %v5202 = vand.u32 %v5201, 4294901760
        %5203 = vmatmul.mubr.f32.gmra.mxu0 %v5202
        %v5204 = vpop.f32.mrf.mxu0
        %v5205 = vadd.f32 %v4132, %v5204
        %v5206 = vpop.f32.mrf.mxu0
        %5207 = vmatprep.mubr.f32.mxu0 0.0
        %v5208 = vand.u32 %v1045, 4294901760
        %v5209 = vsub.f32 %v1045, %v5208
        %v5210 = vand.u32 %v5209, 4294901760
        %5211 = vmatmul.mubr.f32.gmra.mxu0 %v5210
        %v5212 = vpop.f32.mrf.mxu0
        %v5213 = vadd.f32 %v4139, %v5212
        %v5214 = vpop.f32.mrf.mxu0
        %5215 = vmatprep.mubr.f32.mxu0 0.0
        %v5216 = vand.u32 %v1048, 4294901760
        %v5217 = vsub.f32 %v1048, %v5216
        %v5218 = vand.u32 %v5217, 4294901760
        %5219 = vmatmul.mubr.f32.gmra.mxu0 %v5218
        %v5220 = vpop.f32.mrf.mxu0
        %v5221 = vadd.f32 %v4146, %v5220
        %v5222 = vpop.f32.mrf.mxu0
        %5223 = vmatprep.mubr.f32.mxu0 0.0
        %v5224 = vand.u32 %v1051, 4294901760
        %v5225 = vsub.f32 %v1051, %v5224
        %v5226 = vand.u32 %v5225, 4294901760
        %5227 = vmatmul.mubr.f32.gmra.mxu0 %v5226
        %v5228 = vpop.f32.mrf.mxu0
        %v5229 = vadd.f32 %v4153, %v5228
        %v5230 = vpop.f32.mrf.mxu0
        %5231 = vmatprep.mubr.f32.mxu0 0.0
        %v5232 = vand.u32 %v1054, 4294901760
        %v5233 = vsub.f32 %v1054, %v5232
        %v5234 = vand.u32 %v5233, 4294901760
        %5235 = vmatmul.mubr.f32.gmra.mxu0 %v5234
        %v5236 = vpop.f32.mrf.mxu0
        %v5237 = vadd.f32 %v4160, %v5236
        %v5238 = vpop.f32.mrf.mxu0
        %5239 = vmatprep.mubr.f32.mxu0 0.0
        %v5240 = vand.u32 %v1057, 4294901760
        %v5241 = vsub.f32 %v1057, %v5240
        %v5242 = vand.u32 %v5241, 4294901760
        %5243 = vmatmul.mubr.f32.gmra.mxu0 %v5242
        %v5244 = vpop.f32.mrf.mxu0
        %v5245 = vadd.f32 %v4167, %v5244
        %v5246 = vpop.f32.mrf.mxu0
        %5247 = vmatprep.mubr.f32.mxu0 0.0
        %v5248 = vand.u32 %v1060, 4294901760
        %v5249 = vsub.f32 %v1060, %v5248
        %v5250 = vand.u32 %v5249, 4294901760
        %5251 = vmatmul.mubr.f32.gmra.mxu0 %v5250
        %v5252 = vpop.f32.mrf.mxu0
        %v5253 = vadd.f32 %v4174, %v5252
        %v5254 = vpop.f32.mrf.mxu0
        %5255 = vmatprep.mubr.f32.mxu0 0.0
        %v5256 = vand.u32 %v1063, 4294901760
        %v5257 = vsub.f32 %v1063, %v5256
        %v5258 = vand.u32 %v5257, 4294901760
        %5259 = vmatmul.mubr.f32.gmra.mxu0 %v5258
        %v5260 = vpop.f32.mrf.mxu0
        %v5261 = vadd.f32 %v4181, %v5260
        %v5262 = vpop.f32.mrf.mxu0
        %5263 = vmatprep.mubr.f32.mxu0 0.0
        %v5264 = vand.u32 %v1066, 4294901760
        %v5265 = vsub.f32 %v1066, %v5264
        %v5266 = vand.u32 %v5265, 4294901760
        %5267 = vmatmul.mubr.f32.gmra.mxu0 %v5266
        %v5268 = vpop.f32.mrf.mxu0
        %v5269 = vadd.f32 %v4188, %v5268
        %v5270 = vpop.f32.mrf.mxu0
        %5271 = vmatprep.mubr.f32.mxu0 0.0
        %v5272 = vand.u32 %v1069, 4294901760
        %v5273 = vsub.f32 %v1069, %v5272
        %v5274 = vand.u32 %v5273, 4294901760
        %5275 = vmatmul.mubr.f32.gmra.mxu0 %v5274
        %v5276 = vpop.f32.mrf.mxu0
        %v5277 = vadd.f32 %v4195, %v5276
        %v5278 = vpop.f32.mrf.mxu0
        %5279 = vmatprep.mubr.f32.mxu0 0.0
        %v5280 = vand.u32 %v1072, 4294901760
        %v5281 = vsub.f32 %v1072, %v5280
        %v5282 = vand.u32 %v5281, 4294901760
        %5283 = vmatmul.mubr.f32.gmra.mxu0 %v5282
        %v5284 = vpop.f32.mrf.mxu0
        %v5285 = vadd.f32 %v4202, %v5284
        %v5286 = vpop.f32.mrf.mxu0
        %5287 = vmatprep.mubr.f32.mxu0 0.0
        %v5288 = vand.u32 %v1075, 4294901760
        %v5289 = vsub.f32 %v1075, %v5288
        %v5290 = vand.u32 %v5289, 4294901760
        %5291 = vmatmul.mubr.f32.gmra.mxu0 %v5290
        %v5292 = vpop.f32.mrf.mxu0
        %v5293 = vadd.f32 %v4209, %v5292
        %v5294 = vpop.f32.mrf.mxu0
        %5295 = vmatprep.mubr.f32.mxu0 0.0
        %v5296 = vand.u32 %v1078, 4294901760
        %v5297 = vsub.f32 %v1078, %v5296
        %v5298 = vand.u32 %v5297, 4294901760
        %5299 = vmatmul.mubr.f32.gmra.mxu0 %v5298
        %v5300 = vpop.f32.mrf.mxu0
        %v5301 = vadd.f32 %v4216, %v5300
        %v5302 = vpop.f32.mrf.mxu0
        %5303 = vmatprep.mubr.f32.mxu0 0.0
        %v5304 = vand.u32 %v1081, 4294901760
        %v5305 = vsub.f32 %v1081, %v5304
        %v5306 = vand.u32 %v5305, 4294901760
        %5307 = vmatmul.mubr.f32.gmra.mxu0 %v5306
        %v5308 = vpop.f32.mrf.mxu0
        %v5309 = vadd.f32 %v4223, %v5308
        %v5310 = vpop.f32.mrf.mxu0
        %5311 = vmatprep.mubr.f32.mxu0 0.0
        %v5312 = vand.u32 %v1084, 4294901760
        %v5313 = vsub.f32 %v1084, %v5312
        %v5314 = vand.u32 %v5313, 4294901760
        %5315 = vmatmul.mubr.f32.gmra.mxu0 %v5314
        %v5316 = vpop.f32.mrf.mxu0
        %v5317 = vadd.f32 %v4230, %v5316
        %v5318 = vpop.f32.mrf.mxu0
        %5319 = vmatprep.mubr.f32.mxu0 0.0
        %v5320 = vand.u32 %v1087, 4294901760
        %v5321 = vsub.f32 %v1087, %v5320
        %v5322 = vand.u32 %v5321, 4294901760
        %5323 = vmatmul.mubr.f32.gmra.mxu0 %v5322
        %v5324 = vpop.f32.mrf.mxu0
        %v5325 = vadd.f32 %v4237, %v5324
        %v5326 = vpop.f32.mrf.mxu0
        %5327 = vmatprep.mubr.f32.mxu0 0.0
        %v5328 = vand.u32 %v1090, 4294901760
        %v5329 = vsub.f32 %v1090, %v5328
        %v5330 = vand.u32 %v5329, 4294901760
        %5331 = vmatmul.mubr.f32.gmra.mxu0 %v5330
        %v5332 = vpop.f32.mrf.mxu0
        %v5333 = vadd.f32 %v4244, %v5332
        %v5334 = vpop.f32.mrf.mxu0
        %5335 = vmatprep.mubr.f32.mxu0 0.0
        %v5336 = vand.u32 %v1093, 4294901760
        %v5337 = vsub.f32 %v1093, %v5336
        %v5338 = vand.u32 %v5337, 4294901760
        %5339 = vmatmul.mubr.f32.gmra.mxu0 %v5338
        %v5340 = vpop.f32.mrf.mxu0
        %v5341 = vadd.f32 %v4251, %v5340
        %v5342 = vpop.f32.mrf.mxu0
        %5343 = vmatprep.mubr.f32.mxu0 0.0
        %v5344 = vand.u32 %v1096, 4294901760
        %v5345 = vsub.f32 %v1096, %v5344
        %v5346 = vand.u32 %v5345, 4294901760
        %5347 = vmatmul.mubr.f32.gmra.mxu0 %v5346
        %v5348 = vpop.f32.mrf.mxu0
        %v5349 = vadd.f32 %v4258, %v5348
        %v5350 = vpop.f32.mrf.mxu0
        %5351 = vmatprep.mubr.f32.mxu0 0.0
        %v5352 = vand.u32 %v1099, 4294901760
        %v5353 = vsub.f32 %v1099, %v5352
        %v5354 = vand.u32 %v5353, 4294901760
        %5355 = vmatmul.mubr.f32.gmra.mxu0 %v5354
        %v5356 = vpop.f32.mrf.mxu0
        %v5357 = vadd.f32 %v4265, %v5356
        %v5358 = vpop.f32.mrf.mxu0
        %5359 = vmatprep.mubr.f32.mxu0 0.0
        %v5360 = vand.u32 %v1102, 4294901760
        %v5361 = vsub.f32 %v1102, %v5360
        %v5362 = vand.u32 %v5361, 4294901760
        %5363 = vmatmul.mubr.f32.gmra.mxu0 %v5362
        %v5364 = vpop.f32.mrf.mxu0
        %v5365 = vadd.f32 %v4272, %v5364
        %v5366 = vpop.f32.mrf.mxu0
        %5367 = vdwg.mxu0
        %5368 = vmatprep.subr.mxu0 0.0
        %5369 = vmatpush1.msra.mxu0 0.0
        %5370 = vmatprep.subr.mxu0 0.0
        %5371 = vmatpush1.msra.mxu0 0.0
        %5372 = vmatprep.subr.mxu0 0.0
        %5373 = vmatpush1.msra.mxu0 0.0
        %5374 = vmatprep.subr.mxu0 0.0
        %5375 = vmatpush1.msra.mxu0 0.0
        %5376 = vmatprep.subr.mxu0 0.0
        %5377 = vmatpush1.msra.mxu0 0.0
        %5378 = vmatprep.subr.mxu0 0.0
        %5379 = vmatpush1.msra.mxu0 0.0
        %5380 = vmatprep.subr.mxu0 0.0
        %5381 = vmatpush1.msra.mxu0 0.0
        %5382 = vmatprep.subr.mxu0 0.0
        %5383 = vmatpush1.msra.mxu0 0.0
        %5384 = vmatprep.subr.mxu0 0.0
        %5385 = vmatpush1.msra.mxu0 0.0
        %5386 = vmatprep.subr.mxu0 0.0
        %5387 = vmatpush1.msra.mxu0 0.0
        %5388 = vmatprep.subr.mxu0 0.0
        %5389 = vmatpush1.msra.mxu0 0.0
        %5390 = vmatprep.subr.mxu0 0.0
        %5391 = vmatpush1.msra.mxu0 0.0
        %5392 = vmatprep.subr.mxu0 0.0
        %v5393 = vand.u32 %v711, 4294901760
        %v5394 = vsub.f32 %v711, %v5393
        %v5395 = vand.u32 %v5394, 4294901760
        %5396 = vmatpush1.msra.mxu0 %v5395
        %5397 = vmatprep.subr.mxu0 0.0
        %v5398 = vand.u32 %v710, 4294901760
        %v5399 = vsub.f32 %v710, %v5398
        %v5400 = vand.u32 %v5399, 4294901760
        %5401 = vmatpush1.msra.mxu0 %v5400
        %5402 = vmatprep.subr.mxu0 0.0
        %v5403 = vand.u32 %v709, 4294901760
        %v5404 = vsub.f32 %v709, %v5403
        %v5405 = vand.u32 %v5404, 4294901760
        %5406 = vmatpush1.msra.mxu0 %v5405
        %5407 = vmatprep.subr.mxu0 0.0
        %v5408 = vand.u32 %v708, 4294901760
        %v5409 = vsub.f32 %v708, %v5408
        %v5410 = vand.u32 %v5409, 4294901760
        %5411 = vmatpush1.msra.mxu0 %v5410
        %5412 = vmatprep.subr.mxu0 0.0
        %5413 = vmatpush2.msra.mxu0 0.0
        %5414 = vmatprep.subr.mxu0 0.0
        %5415 = vmatpush2.msra.mxu0 0.0
        %5416 = vmatprep.subr.mxu0 0.0
        %5417 = vmatpush2.msra.mxu0 0.0
        %5418 = vmatprep.subr.mxu0 0.0
        %5419 = vmatpush2.msra.mxu0 0.0
        %5420 = vmatprep.subr.mxu0 0.0
        %5421 = vmatpush2.msra.mxu0 0.0
        %5422 = vmatprep.subr.mxu0 0.0
        %5423 = vmatpush2.msra.mxu0 0.0
        %5424 = vmatprep.subr.mxu0 0.0
        %5425 = vmatpush2.msra.mxu0 0.0
        %5426 = vmatprep.subr.mxu0 0.0
        %5427 = vmatpush2.msra.mxu0 0.0
        %5428 = vmatprep.subr.mxu0 0.0
        %5429 = vmatpush2.msra.mxu0 0.0
        %5430 = vmatprep.subr.mxu0 0.0
        %5431 = vmatpush2.msra.mxu0 0.0
        %5432 = vmatprep.subr.mxu0 0.0
        %5433 = vmatpush2.msra.mxu0 0.0
        %5434 = vmatprep.subr.mxu0 0.0
        %5435 = vmatpush2.msra.mxu0 0.0
        %5436 = vmatprep.subr.mxu0 0.0
        %5437 = vmatpush2.msra.mxu0 0.0
        %5438 = vmatprep.subr.mxu0 0.0
        %5439 = vmatpush2.msra.mxu0 0.0
        %5440 = vmatprep.subr.mxu0 0.0
        %5441 = vmatpush2.msra.mxu0 0.0
        %5442 = vmatprep.subr.mxu0 0.0
        %5443 = vmatpush2.msra.mxu0 0.0
        %5444 = vmatprep.mubr.f32.mxu0 0.0
        %v5445 = vand.u32 %v721, 4294901760
        %5446 = vmatmul.mubr.f32.gmra.mxu0 %v5445
        %v5447 = vpop.f32.mrf.mxu0
        %v5448 = vadd.f32 %v4349, %v5447
        %v5449 = vpop.f32.mrf.mxu0
        %5450 = vmatprep.mubr.f32.mxu0 0.0
        %v5451 = vand.u32 %v724, 4294901760
        %5452 = vmatmul.mubr.f32.gmra.mxu0 %v5451
        %v5453 = vpop.f32.mrf.mxu0
        %v5454 = vadd.f32 %v4357, %v5453
        %v5455 = vpop.f32.mrf.mxu0
        %5456 = vmatprep.mubr.f32.mxu0 0.0
        %v5457 = vand.u32 %v727, 4294901760
        %5458 = vmatmul.mubr.f32.gmra.mxu0 %v5457
        %v5459 = vpop.f32.mrf.mxu0
        %v5460 = vadd.f32 %v4365, %v5459
        %v5461 = vpop.f32.mrf.mxu0
        %5462 = vmatprep.mubr.f32.mxu0 0.0
        %v5463 = vand.u32 %v730, 4294901760
        %5464 = vmatmul.mubr.f32.gmra.mxu0 %v5463
        %v5465 = vpop.f32.mrf.mxu0
        %v5466 = vadd.f32 %v4373, %v5465
        %v5467 = vpop.f32.mrf.mxu0
        %5468 = vmatprep.mubr.f32.mxu0 0.0
        %v5469 = vand.u32 %v733, 4294901760
        %5470 = vmatmul.mubr.f32.gmra.mxu0 %v5469
        %v5471 = vpop.f32.mrf.mxu0
        %v5472 = vadd.f32 %v4381, %v5471
        %v5473 = vpop.f32.mrf.mxu0
        %5474 = vmatprep.mubr.f32.mxu0 0.0
        %v5475 = vand.u32 %v736, 4294901760
        %5476 = vmatmul.mubr.f32.gmra.mxu0 %v5475
        %v5477 = vpop.f32.mrf.mxu0
        %v5478 = vadd.f32 %v4389, %v5477
        %v5479 = vpop.f32.mrf.mxu0
        %5480 = vmatprep.mubr.f32.mxu0 0.0
        %v5481 = vand.u32 %v739, 4294901760
        %5482 = vmatmul.mubr.f32.gmra.mxu0 %v5481
        %v5483 = vpop.f32.mrf.mxu0
        %v5484 = vadd.f32 %v4397, %v5483
        %v5485 = vpop.f32.mrf.mxu0
        %5486 = vmatprep.mubr.f32.mxu0 0.0
        %v5487 = vand.u32 %v742, 4294901760
        %5488 = vmatmul.mubr.f32.gmra.mxu0 %v5487
        %v5489 = vpop.f32.mrf.mxu0
        %v5490 = vadd.f32 %v4405, %v5489
        %v5491 = vpop.f32.mrf.mxu0
        %5492 = vmatprep.mubr.f32.mxu0 0.0
        %v5493 = vand.u32 %v745, 4294901760
        %5494 = vmatmul.mubr.f32.gmra.mxu0 %v5493
        %v5495 = vpop.f32.mrf.mxu0
        %v5496 = vadd.f32 %v4413, %v5495
        %v5497 = vpop.f32.mrf.mxu0
        %5498 = vmatprep.mubr.f32.mxu0 0.0
        %v5499 = vand.u32 %v748, 4294901760
        %5500 = vmatmul.mubr.f32.gmra.mxu0 %v5499
        %v5501 = vpop.f32.mrf.mxu0
        %v5502 = vadd.f32 %v4421, %v5501
        %v5503 = vpop.f32.mrf.mxu0
        %5504 = vmatprep.mubr.f32.mxu0 0.0
        %v5505 = vand.u32 %v751, 4294901760
        %5506 = vmatmul.mubr.f32.gmra.mxu0 %v5505
        %v5507 = vpop.f32.mrf.mxu0
        %v5508 = vadd.f32 %v4429, %v5507
        %v5509 = vpop.f32.mrf.mxu0
        %5510 = vmatprep.mubr.f32.mxu0 0.0
        %v5511 = vand.u32 %v754, 4294901760
        %5512 = vmatmul.mubr.f32.gmra.mxu0 %v5511
        %v5513 = vpop.f32.mrf.mxu0
        %v5514 = vadd.f32 %v4437, %v5513
        %v5515 = vpop.f32.mrf.mxu0
        %5516 = vmatprep.mubr.f32.mxu0 0.0
        %v5517 = vand.u32 %v757, 4294901760
        %5518 = vmatmul.mubr.f32.gmra.mxu0 %v5517
        %v5519 = vpop.f32.mrf.mxu0
        %v5520 = vadd.f32 %v4445, %v5519
        %v5521 = vpop.f32.mrf.mxu0
        %5522 = vmatprep.mubr.f32.mxu0 0.0
        %v5523 = vand.u32 %v760, 4294901760
        %5524 = vmatmul.mubr.f32.gmra.mxu0 %v5523
        %v5525 = vpop.f32.mrf.mxu0
        %v5526 = vadd.f32 %v4453, %v5525
        %v5527 = vpop.f32.mrf.mxu0
        %5528 = vmatprep.mubr.f32.mxu0 0.0
        %v5529 = vand.u32 %v763, 4294901760
        %5530 = vmatmul.mubr.f32.gmra.mxu0 %v5529
        %v5531 = vpop.f32.mrf.mxu0
        %v5532 = vadd.f32 %v4461, %v5531
        %v5533 = vpop.f32.mrf.mxu0
        %5534 = vmatprep.mubr.f32.mxu0 0.0
        %v5535 = vand.u32 %v766, 4294901760
        %5536 = vmatmul.mubr.f32.gmra.mxu0 %v5535
        %v5537 = vpop.f32.mrf.mxu0
        %v5538 = vadd.f32 %v4469, %v5537
        %v5539 = vpop.f32.mrf.mxu0
        %5540 = vmatprep.mubr.f32.mxu0 0.0
        %v5541 = vand.u32 %v769, 4294901760
        %5542 = vmatmul.mubr.f32.gmra.mxu0 %v5541
        %v5543 = vpop.f32.mrf.mxu0
        %v5544 = vadd.f32 %v4477, %v5543
        %v5545 = vpop.f32.mrf.mxu0
        %5546 = vmatprep.mubr.f32.mxu0 0.0
        %v5547 = vand.u32 %v772, 4294901760
        %5548 = vmatmul.mubr.f32.gmra.mxu0 %v5547
        %v5549 = vpop.f32.mrf.mxu0
        %v5550 = vadd.f32 %v4485, %v5549
        %v5551 = vpop.f32.mrf.mxu0
        %5552 = vmatprep.mubr.f32.mxu0 0.0
        %v5553 = vand.u32 %v775, 4294901760
        %5554 = vmatmul.mubr.f32.gmra.mxu0 %v5553
        %v5555 = vpop.f32.mrf.mxu0
        %v5556 = vadd.f32 %v4493, %v5555
        %v5557 = vpop.f32.mrf.mxu0
        %5558 = vmatprep.mubr.f32.mxu0 0.0
        %v5559 = vand.u32 %v778, 4294901760
        %5560 = vmatmul.mubr.f32.gmra.mxu0 %v5559
        %v5561 = vpop.f32.mrf.mxu0
        %v5562 = vadd.f32 %v4501, %v5561
        %v5563 = vpop.f32.mrf.mxu0
        %5564 = vmatprep.mubr.f32.mxu0 0.0
        %v5565 = vand.u32 %v781, 4294901760
        %5566 = vmatmul.mubr.f32.gmra.mxu0 %v5565
        %v5567 = vpop.f32.mrf.mxu0
        %v5568 = vadd.f32 %v4509, %v5567
        %v5569 = vpop.f32.mrf.mxu0
        %5570 = vmatprep.mubr.f32.mxu0 0.0
        %v5571 = vand.u32 %v784, 4294901760
        %5572 = vmatmul.mubr.f32.gmra.mxu0 %v5571
        %v5573 = vpop.f32.mrf.mxu0
        %v5574 = vadd.f32 %v4517, %v5573
        %v5575 = vpop.f32.mrf.mxu0
        %5576 = vmatprep.mubr.f32.mxu0 0.0
        %v5577 = vand.u32 %v787, 4294901760
        %5578 = vmatmul.mubr.f32.gmra.mxu0 %v5577
        %v5579 = vpop.f32.mrf.mxu0
        %v5580 = vadd.f32 %v4525, %v5579
        %v5581 = vpop.f32.mrf.mxu0
        %5582 = vmatprep.mubr.f32.mxu0 0.0
        %v5583 = vand.u32 %v790, 4294901760
        %5584 = vmatmul.mubr.f32.gmra.mxu0 %v5583
        %v5585 = vpop.f32.mrf.mxu0
        %v5586 = vadd.f32 %v4533, %v5585
        %v5587 = vpop.f32.mrf.mxu0
        %5588 = vmatprep.mubr.f32.mxu0 0.0
        %v5589 = vand.u32 %v793, 4294901760
        %5590 = vmatmul.mubr.f32.gmra.mxu0 %v5589
        %v5591 = vpop.f32.mrf.mxu0
        %v5592 = vadd.f32 %v4541, %v5591
        %v5593 = vpop.f32.mrf.mxu0
        %5594 = vmatprep.mubr.f32.mxu0 0.0
        %v5595 = vand.u32 %v796, 4294901760
        %5596 = vmatmul.mubr.f32.gmra.mxu0 %v5595
        %v5597 = vpop.f32.mrf.mxu0
        %v5598 = vadd.f32 %v4549, %v5597
        %v5599 = vpop.f32.mrf.mxu0
        %5600 = vmatprep.mubr.f32.mxu0 0.0
        %v5601 = vand.u32 %v799, 4294901760
        %5602 = vmatmul.mubr.f32.gmra.mxu0 %v5601
        %v5603 = vpop.f32.mrf.mxu0
        %v5604 = vadd.f32 %v4557, %v5603
        %v5605 = vpop.f32.mrf.mxu0
        %5606 = vmatprep.mubr.f32.mxu0 0.0
        %v5607 = vand.u32 %v802, 4294901760
        %5608 = vmatmul.mubr.f32.gmra.mxu0 %v5607
        %v5609 = vpop.f32.mrf.mxu0
        %v5610 = vadd.f32 %v4565, %v5609
        %v5611 = vpop.f32.mrf.mxu0
        %5612 = vmatprep.mubr.f32.mxu0 0.0
        %v5613 = vand.u32 %v805, 4294901760
        %5614 = vmatmul.mubr.f32.gmra.mxu0 %v5613
        %v5615 = vpop.f32.mrf.mxu0
        %v5616 = vadd.f32 %v4573, %v5615
        %v5617 = vpop.f32.mrf.mxu0
        %5618 = vmatprep.mubr.f32.mxu0 0.0
        %v5619 = vand.u32 %v808, 4294901760
        %5620 = vmatmul.mubr.f32.gmra.mxu0 %v5619
        %v5621 = vpop.f32.mrf.mxu0
        %v5622 = vadd.f32 %v4581, %v5621
        %v5623 = vpop.f32.mrf.mxu0
        %5624 = vmatprep.mubr.f32.mxu0 0.0
        %v5625 = vand.u32 %v811, 4294901760
        %5626 = vmatmul.mubr.f32.gmra.mxu0 %v5625
        %v5627 = vpop.f32.mrf.mxu0
        %v5628 = vadd.f32 %v4589, %v5627
        %v5629 = vpop.f32.mrf.mxu0
        %5630 = vmatprep.mubr.f32.mxu0 0.0
        %v5631 = vand.u32 %v814, 4294901760
        %5632 = vmatmul.mubr.f32.gmra.mxu0 %v5631
        %v5633 = vpop.f32.mrf.mxu0
        %v5634 = vadd.f32 %v4597, %v5633
        %v5635 = vpop.f32.mrf.mxu0
        %5636 = vmatprep.mubr.f32.mxu0 0.0
        %v5637 = vand.u32 %v817, 4294901760
        %5638 = vmatmul.mubr.f32.gmra.mxu0 %v5637
        %v5639 = vpop.f32.mrf.mxu0
        %v5640 = vadd.f32 %v4605, %v5639
        %v5641 = vpop.f32.mrf.mxu0
        %5642 = vmatprep.mubr.f32.mxu0 0.0
        %v5643 = vand.u32 %v820, 4294901760
        %5644 = vmatmul.mubr.f32.gmra.mxu0 %v5643
        %v5645 = vpop.f32.mrf.mxu0
        %v5646 = vadd.f32 %v4613, %v5645
        %v5647 = vpop.f32.mrf.mxu0
        %5648 = vmatprep.mubr.f32.mxu0 0.0
        %v5649 = vand.u32 %v823, 4294901760
        %5650 = vmatmul.mubr.f32.gmra.mxu0 %v5649
        %v5651 = vpop.f32.mrf.mxu0
        %v5652 = vadd.f32 %v4621, %v5651
        %v5653 = vpop.f32.mrf.mxu0
        %5654 = vmatprep.mubr.f32.mxu0 0.0
        %v5655 = vand.u32 %v826, 4294901760
        %5656 = vmatmul.mubr.f32.gmra.mxu0 %v5655
        %v5657 = vpop.f32.mrf.mxu0
        %v5658 = vadd.f32 %v4629, %v5657
        %v5659 = vpop.f32.mrf.mxu0
        %5660 = vmatprep.mubr.f32.mxu0 0.0
        %v5661 = vand.u32 %v829, 4294901760
        %5662 = vmatmul.mubr.f32.gmra.mxu0 %v5661
        %v5663 = vpop.f32.mrf.mxu0
        %v5664 = vadd.f32 %v4637, %v5663
        %v5665 = vpop.f32.mrf.mxu0
        %5666 = vmatprep.mubr.f32.mxu0 0.0
        %v5667 = vand.u32 %v832, 4294901760
        %5668 = vmatmul.mubr.f32.gmra.mxu0 %v5667
        %v5669 = vpop.f32.mrf.mxu0
        %v5670 = vadd.f32 %v4645, %v5669
        %v5671 = vpop.f32.mrf.mxu0
        %5672 = vmatprep.mubr.f32.mxu0 0.0
        %v5673 = vand.u32 %v835, 4294901760
        %5674 = vmatmul.mubr.f32.gmra.mxu0 %v5673
        %v5675 = vpop.f32.mrf.mxu0
        %v5676 = vadd.f32 %v4653, %v5675
        %v5677 = vpop.f32.mrf.mxu0
        %5678 = vmatprep.mubr.f32.mxu0 0.0
        %v5679 = vand.u32 %v838, 4294901760
        %5680 = vmatmul.mubr.f32.gmra.mxu0 %v5679
        %v5681 = vpop.f32.mrf.mxu0
        %v5682 = vadd.f32 %v4661, %v5681
        %v5683 = vpop.f32.mrf.mxu0
        %5684 = vmatprep.mubr.f32.mxu0 0.0
        %v5685 = vand.u32 %v841, 4294901760
        %5686 = vmatmul.mubr.f32.gmra.mxu0 %v5685
        %v5687 = vpop.f32.mrf.mxu0
        %v5688 = vadd.f32 %v4669, %v5687
        %v5689 = vpop.f32.mrf.mxu0
        %5690 = vmatprep.mubr.f32.mxu0 0.0
        %v5691 = vand.u32 %v844, 4294901760
        %5692 = vmatmul.mubr.f32.gmra.mxu0 %v5691
        %v5693 = vpop.f32.mrf.mxu0
        %v5694 = vadd.f32 %v4677, %v5693
        %v5695 = vpop.f32.mrf.mxu0
        %5696 = vmatprep.mubr.f32.mxu0 0.0
        %v5697 = vand.u32 %v847, 4294901760
        %5698 = vmatmul.mubr.f32.gmra.mxu0 %v5697
        %v5699 = vpop.f32.mrf.mxu0
        %v5700 = vadd.f32 %v4685, %v5699
        %v5701 = vpop.f32.mrf.mxu0
        %5702 = vmatprep.mubr.f32.mxu0 0.0
        %v5703 = vand.u32 %v850, 4294901760
        %5704 = vmatmul.mubr.f32.gmra.mxu0 %v5703
        %v5705 = vpop.f32.mrf.mxu0
        %v5706 = vadd.f32 %v4693, %v5705
        %v5707 = vpop.f32.mrf.mxu0
        %5708 = vmatprep.mubr.f32.mxu0 0.0
        %v5709 = vand.u32 %v853, 4294901760
        %5710 = vmatmul.mubr.f32.gmra.mxu0 %v5709
        %v5711 = vpop.f32.mrf.mxu0
        %v5712 = vadd.f32 %v4701, %v5711
        %v5713 = vpop.f32.mrf.mxu0
        %5714 = vmatprep.mubr.f32.mxu0 0.0
        %v5715 = vand.u32 %v856, 4294901760
        %5716 = vmatmul.mubr.f32.gmra.mxu0 %v5715
        %v5717 = vpop.f32.mrf.mxu0
        %v5718 = vadd.f32 %v4709, %v5717
        %v5719 = vpop.f32.mrf.mxu0
        %5720 = vmatprep.mubr.f32.mxu0 0.0
        %v5721 = vand.u32 %v859, 4294901760
        %5722 = vmatmul.mubr.f32.gmra.mxu0 %v5721
        %v5723 = vpop.f32.mrf.mxu0
        %v5724 = vadd.f32 %v4717, %v5723
        %v5725 = vpop.f32.mrf.mxu0
        %5726 = vmatprep.mubr.f32.mxu0 0.0
        %v5727 = vand.u32 %v862, 4294901760
        %5728 = vmatmul.mubr.f32.gmra.mxu0 %v5727
        %v5729 = vpop.f32.mrf.mxu0
        %v5730 = vadd.f32 %v4725, %v5729
        %v5731 = vpop.f32.mrf.mxu0
        %5732 = vmatprep.mubr.f32.mxu0 0.0
        %v5733 = vand.u32 %v865, 4294901760
        %5734 = vmatmul.mubr.f32.gmra.mxu0 %v5733
        %v5735 = vpop.f32.mrf.mxu0
        %v5736 = vadd.f32 %v4733, %v5735
        %v5737 = vpop.f32.mrf.mxu0
        %5738 = vmatprep.mubr.f32.mxu0 0.0
        %v5739 = vand.u32 %v868, 4294901760
        %5740 = vmatmul.mubr.f32.gmra.mxu0 %v5739
        %v5741 = vpop.f32.mrf.mxu0
        %v5742 = vadd.f32 %v4741, %v5741
        %v5743 = vpop.f32.mrf.mxu0
        %5744 = vmatprep.mubr.f32.mxu0 0.0
        %v5745 = vand.u32 %v871, 4294901760
        %5746 = vmatmul.mubr.f32.gmra.mxu0 %v5745
        %v5747 = vpop.f32.mrf.mxu0
        %v5748 = vadd.f32 %v4749, %v5747
        %v5749 = vpop.f32.mrf.mxu0
        %5750 = vmatprep.mubr.f32.mxu0 0.0
        %v5751 = vand.u32 %v874, 4294901760
        %5752 = vmatmul.mubr.f32.gmra.mxu0 %v5751
        %v5753 = vpop.f32.mrf.mxu0
        %v5754 = vadd.f32 %v4757, %v5753
        %v5755 = vpop.f32.mrf.mxu0
        %5756 = vmatprep.mubr.f32.mxu0 0.0
        %v5757 = vand.u32 %v877, 4294901760
        %5758 = vmatmul.mubr.f32.gmra.mxu0 %v5757
        %v5759 = vpop.f32.mrf.mxu0
        %v5760 = vadd.f32 %v4765, %v5759
        %v5761 = vpop.f32.mrf.mxu0
        %5762 = vmatprep.mubr.f32.mxu0 0.0
        %v5763 = vand.u32 %v880, 4294901760
        %5764 = vmatmul.mubr.f32.gmra.mxu0 %v5763
        %v5765 = vpop.f32.mrf.mxu0
        %v5766 = vadd.f32 %v4773, %v5765
        %v5767 = vpop.f32.mrf.mxu0
        %5768 = vmatprep.mubr.f32.mxu0 0.0
        %v5769 = vand.u32 %v883, 4294901760
        %5770 = vmatmul.mubr.f32.gmra.mxu0 %v5769
        %v5771 = vpop.f32.mrf.mxu0
        %v5772 = vadd.f32 %v4781, %v5771
        %v5773 = vpop.f32.mrf.mxu0
        %5774 = vmatprep.mubr.f32.mxu0 0.0
        %v5775 = vand.u32 %v886, 4294901760
        %5776 = vmatmul.mubr.f32.gmra.mxu0 %v5775
        %v5777 = vpop.f32.mrf.mxu0
        %v5778 = vadd.f32 %v4789, %v5777
        %v5779 = vpop.f32.mrf.mxu0
        %5780 = vmatprep.mubr.f32.mxu0 0.0
        %v5781 = vand.u32 %v889, 4294901760
        %5782 = vmatmul.mubr.f32.gmra.mxu0 %v5781
        %v5783 = vpop.f32.mrf.mxu0
        %v5784 = vadd.f32 %v4797, %v5783
        %v5785 = vpop.f32.mrf.mxu0
        %5786 = vmatprep.mubr.f32.mxu0 0.0
        %v5787 = vand.u32 %v892, 4294901760
        %5788 = vmatmul.mubr.f32.gmra.mxu0 %v5787
        %v5789 = vpop.f32.mrf.mxu0
        %v5790 = vadd.f32 %v4805, %v5789
        %v5791 = vpop.f32.mrf.mxu0
        %5792 = vmatprep.mubr.f32.mxu0 0.0
        %v5793 = vand.u32 %v895, 4294901760
        %5794 = vmatmul.mubr.f32.gmra.mxu0 %v5793
        %v5795 = vpop.f32.mrf.mxu0
        %v5796 = vadd.f32 %v4813, %v5795
        %v5797 = vpop.f32.mrf.mxu0
        %5798 = vmatprep.mubr.f32.mxu0 0.0
        %v5799 = vand.u32 %v898, 4294901760
        %5800 = vmatmul.mubr.f32.gmra.mxu0 %v5799
        %v5801 = vpop.f32.mrf.mxu0
        %v5802 = vadd.f32 %v4821, %v5801
        %v5803 = vpop.f32.mrf.mxu0
        %5804 = vmatprep.mubr.f32.mxu0 0.0
        %v5805 = vand.u32 %v901, 4294901760
        %5806 = vmatmul.mubr.f32.gmra.mxu0 %v5805
        %v5807 = vpop.f32.mrf.mxu0
        %v5808 = vadd.f32 %v4829, %v5807
        %v5809 = vpop.f32.mrf.mxu0
        %5810 = vmatprep.mubr.f32.mxu0 0.0
        %v5811 = vand.u32 %v904, 4294901760
        %5812 = vmatmul.mubr.f32.gmra.mxu0 %v5811
        %v5813 = vpop.f32.mrf.mxu0
        %v5814 = vadd.f32 %v4837, %v5813
        %v5815 = vpop.f32.mrf.mxu0
        %5816 = vmatprep.mubr.f32.mxu0 0.0
        %v5817 = vand.u32 %v907, 4294901760
        %5818 = vmatmul.mubr.f32.gmra.mxu0 %v5817
        %v5819 = vpop.f32.mrf.mxu0
        %v5820 = vadd.f32 %v4845, %v5819
        %v5821 = vpop.f32.mrf.mxu0
        %5822 = vmatprep.mubr.f32.mxu0 0.0
        %v5823 = vand.u32 %v910, 4294901760
        %5824 = vmatmul.mubr.f32.gmra.mxu0 %v5823
        %v5825 = vpop.f32.mrf.mxu0
        %v5826 = vadd.f32 %v4853, %v5825
        %v5827 = vpop.f32.mrf.mxu0
        %5828 = vmatprep.mubr.f32.mxu0 0.0
        %v5829 = vand.u32 %v913, 4294901760
        %5830 = vmatmul.mubr.f32.gmra.mxu0 %v5829
        %v5831 = vpop.f32.mrf.mxu0
        %v5832 = vadd.f32 %v4861, %v5831
        %v5833 = vpop.f32.mrf.mxu0
        %5834 = vmatprep.mubr.f32.mxu0 0.0
        %v5835 = vand.u32 %v916, 4294901760
        %5836 = vmatmul.mubr.f32.gmra.mxu0 %v5835
        %v5837 = vpop.f32.mrf.mxu0
        %v5838 = vadd.f32 %v4869, %v5837
        %v5839 = vpop.f32.mrf.mxu0
        %5840 = vmatprep.mubr.f32.mxu0 0.0
        %v5841 = vand.u32 %v919, 4294901760
        %5842 = vmatmul.mubr.f32.gmra.mxu0 %v5841
        %v5843 = vpop.f32.mrf.mxu0
        %v5844 = vadd.f32 %v4877, %v5843
        %v5845 = vpop.f32.mrf.mxu0
        %5846 = vmatprep.mubr.f32.mxu0 0.0
        %v5847 = vand.u32 %v922, 4294901760
        %5848 = vmatmul.mubr.f32.gmra.mxu0 %v5847
        %v5849 = vpop.f32.mrf.mxu0
        %v5850 = vadd.f32 %v4885, %v5849
        %v5851 = vpop.f32.mrf.mxu0
        %5852 = vmatprep.mubr.f32.mxu0 0.0
        %v5853 = vand.u32 %v925, 4294901760
        %5854 = vmatmul.mubr.f32.gmra.mxu0 %v5853
        %v5855 = vpop.f32.mrf.mxu0
        %v5856 = vadd.f32 %v4893, %v5855
        %v5857 = vpop.f32.mrf.mxu0
        %5858 = vmatprep.mubr.f32.mxu0 0.0
        %v5859 = vand.u32 %v928, 4294901760
        %5860 = vmatmul.mubr.f32.gmra.mxu0 %v5859
        %v5861 = vpop.f32.mrf.mxu0
        %v5862 = vadd.f32 %v4901, %v5861
        %v5863 = vpop.f32.mrf.mxu0
        %5864 = vmatprep.mubr.f32.mxu0 0.0
        %v5865 = vand.u32 %v931, 4294901760
        %5866 = vmatmul.mubr.f32.gmra.mxu0 %v5865
        %v5867 = vpop.f32.mrf.mxu0
        %v5868 = vadd.f32 %v4909, %v5867
        %v5869 = vpop.f32.mrf.mxu0
        %5870 = vmatprep.mubr.f32.mxu0 0.0
        %v5871 = vand.u32 %v934, 4294901760
        %5872 = vmatmul.mubr.f32.gmra.mxu0 %v5871
        %v5873 = vpop.f32.mrf.mxu0
        %v5874 = vadd.f32 %v4917, %v5873
        %v5875 = vpop.f32.mrf.mxu0
        %5876 = vmatprep.mubr.f32.mxu0 0.0
        %v5877 = vand.u32 %v937, 4294901760
        %5878 = vmatmul.mubr.f32.gmra.mxu0 %v5877
        %v5879 = vpop.f32.mrf.mxu0
        %v5880 = vadd.f32 %v4925, %v5879
        %v5881 = vpop.f32.mrf.mxu0
        %5882 = vmatprep.mubr.f32.mxu0 0.0
        %v5883 = vand.u32 %v940, 4294901760
        %5884 = vmatmul.mubr.f32.gmra.mxu0 %v5883
        %v5885 = vpop.f32.mrf.mxu0
        %v5886 = vadd.f32 %v4933, %v5885
        %v5887 = vpop.f32.mrf.mxu0
        %5888 = vmatprep.mubr.f32.mxu0 0.0
        %v5889 = vand.u32 %v943, 4294901760
        %5890 = vmatmul.mubr.f32.gmra.mxu0 %v5889
        %v5891 = vpop.f32.mrf.mxu0
        %v5892 = vadd.f32 %v4941, %v5891
        %v5893 = vpop.f32.mrf.mxu0
        %5894 = vmatprep.mubr.f32.mxu0 0.0
        %v5895 = vand.u32 %v946, 4294901760
        %5896 = vmatmul.mubr.f32.gmra.mxu0 %v5895
        %v5897 = vpop.f32.mrf.mxu0
        %v5898 = vadd.f32 %v4949, %v5897
        %v5899 = vpop.f32.mrf.mxu0
        %5900 = vmatprep.mubr.f32.mxu0 0.0
        %v5901 = vand.u32 %v949, 4294901760
        %5902 = vmatmul.mubr.f32.gmra.mxu0 %v5901
        %v5903 = vpop.f32.mrf.mxu0
        %v5904 = vadd.f32 %v4957, %v5903
        %v5905 = vpop.f32.mrf.mxu0
        %5906 = vmatprep.mubr.f32.mxu0 0.0
        %v5907 = vand.u32 %v952, 4294901760
        %5908 = vmatmul.mubr.f32.gmra.mxu0 %v5907
        %v5909 = vpop.f32.mrf.mxu0
        %v5910 = vadd.f32 %v4965, %v5909
        %v5911 = vpop.f32.mrf.mxu0
        %5912 = vmatprep.mubr.f32.mxu0 0.0
        %v5913 = vand.u32 %v955, 4294901760
        %5914 = vmatmul.mubr.f32.gmra.mxu0 %v5913
        %v5915 = vpop.f32.mrf.mxu0
        %v5916 = vadd.f32 %v4973, %v5915
        %v5917 = vpop.f32.mrf.mxu0
        %5918 = vmatprep.mubr.f32.mxu0 0.0
        %v5919 = vand.u32 %v958, 4294901760
        %5920 = vmatmul.mubr.f32.gmra.mxu0 %v5919
        %v5921 = vpop.f32.mrf.mxu0
        %v5922 = vadd.f32 %v4981, %v5921
        %v5923 = vpop.f32.mrf.mxu0
        %5924 = vmatprep.mubr.f32.mxu0 0.0
        %v5925 = vand.u32 %v961, 4294901760
        %5926 = vmatmul.mubr.f32.gmra.mxu0 %v5925
        %v5927 = vpop.f32.mrf.mxu0
        %v5928 = vadd.f32 %v4989, %v5927
        %v5929 = vpop.f32.mrf.mxu0
        %5930 = vmatprep.mubr.f32.mxu0 0.0
        %v5931 = vand.u32 %v964, 4294901760
        %5932 = vmatmul.mubr.f32.gmra.mxu0 %v5931
        %v5933 = vpop.f32.mrf.mxu0
        %v5934 = vadd.f32 %v4997, %v5933
        %v5935 = vpop.f32.mrf.mxu0
        %5936 = vmatprep.mubr.f32.mxu0 0.0
        %v5937 = vand.u32 %v967, 4294901760
        %5938 = vmatmul.mubr.f32.gmra.mxu0 %v5937
        %v5939 = vpop.f32.mrf.mxu0
        %v5940 = vadd.f32 %v5005, %v5939
        %v5941 = vpop.f32.mrf.mxu0
        %5942 = vmatprep.mubr.f32.mxu0 0.0
        %v5943 = vand.u32 %v970, 4294901760
        %5944 = vmatmul.mubr.f32.gmra.mxu0 %v5943
        %v5945 = vpop.f32.mrf.mxu0
        %v5946 = vadd.f32 %v5013, %v5945
        %v5947 = vpop.f32.mrf.mxu0
        %5948 = vmatprep.mubr.f32.mxu0 0.0
        %v5949 = vand.u32 %v973, 4294901760
        %5950 = vmatmul.mubr.f32.gmra.mxu0 %v5949
        %v5951 = vpop.f32.mrf.mxu0
        %v5952 = vadd.f32 %v5021, %v5951
        %v5953 = vpop.f32.mrf.mxu0
        %5954 = vmatprep.mubr.f32.mxu0 0.0
        %v5955 = vand.u32 %v976, 4294901760
        %5956 = vmatmul.mubr.f32.gmra.mxu0 %v5955
        %v5957 = vpop.f32.mrf.mxu0
        %v5958 = vadd.f32 %v5029, %v5957
        %v5959 = vpop.f32.mrf.mxu0
        %5960 = vmatprep.mubr.f32.mxu0 0.0
        %v5961 = vand.u32 %v979, 4294901760
        %5962 = vmatmul.mubr.f32.gmra.mxu0 %v5961
        %v5963 = vpop.f32.mrf.mxu0
        %v5964 = vadd.f32 %v5037, %v5963
        %v5965 = vpop.f32.mrf.mxu0
        %5966 = vmatprep.mubr.f32.mxu0 0.0
        %v5967 = vand.u32 %v982, 4294901760
        %5968 = vmatmul.mubr.f32.gmra.mxu0 %v5967
        %v5969 = vpop.f32.mrf.mxu0
        %v5970 = vadd.f32 %v5045, %v5969
        %v5971 = vpop.f32.mrf.mxu0
        %5972 = vmatprep.mubr.f32.mxu0 0.0
        %v5973 = vand.u32 %v985, 4294901760
        %5974 = vmatmul.mubr.f32.gmra.mxu0 %v5973
        %v5975 = vpop.f32.mrf.mxu0
        %v5976 = vadd.f32 %v5053, %v5975
        %v5977 = vpop.f32.mrf.mxu0
        %5978 = vmatprep.mubr.f32.mxu0 0.0
        %v5979 = vand.u32 %v988, 4294901760
        %5980 = vmatmul.mubr.f32.gmra.mxu0 %v5979
        %v5981 = vpop.f32.mrf.mxu0
        %v5982 = vadd.f32 %v5061, %v5981
        %v5983 = vpop.f32.mrf.mxu0
        %5984 = vmatprep.mubr.f32.mxu0 0.0
        %v5985 = vand.u32 %v991, 4294901760
        %5986 = vmatmul.mubr.f32.gmra.mxu0 %v5985
        %v5987 = vpop.f32.mrf.mxu0
        %v5988 = vadd.f32 %v5069, %v5987
        %v5989 = vpop.f32.mrf.mxu0
        %5990 = vmatprep.mubr.f32.mxu0 0.0
        %v5991 = vand.u32 %v994, 4294901760
        %5992 = vmatmul.mubr.f32.gmra.mxu0 %v5991
        %v5993 = vpop.f32.mrf.mxu0
        %v5994 = vadd.f32 %v5077, %v5993
        %v5995 = vpop.f32.mrf.mxu0
        %5996 = vmatprep.mubr.f32.mxu0 0.0
        %v5997 = vand.u32 %v997, 4294901760
        %5998 = vmatmul.mubr.f32.gmra.mxu0 %v5997
        %v5999 = vpop.f32.mrf.mxu0
        %v6000 = vadd.f32 %v5085, %v5999
        %v6001 = vpop.f32.mrf.mxu0
        %6002 = vmatprep.mubr.f32.mxu0 0.0
        %v6003 = vand.u32 %v1000, 4294901760
        %6004 = vmatmul.mubr.f32.gmra.mxu0 %v6003
        %v6005 = vpop.f32.mrf.mxu0
        %v6006 = vadd.f32 %v5093, %v6005
        %v6007 = vpop.f32.mrf.mxu0
        %6008 = vmatprep.mubr.f32.mxu0 0.0
        %v6009 = vand.u32 %v1003, 4294901760
        %6010 = vmatmul.mubr.f32.gmra.mxu0 %v6009
        %v6011 = vpop.f32.mrf.mxu0
        %v6012 = vadd.f32 %v5101, %v6011
        %v6013 = vpop.f32.mrf.mxu0
        %6014 = vmatprep.mubr.f32.mxu0 0.0
        %v6015 = vand.u32 %v1006, 4294901760
        %6016 = vmatmul.mubr.f32.gmra.mxu0 %v6015
        %v6017 = vpop.f32.mrf.mxu0
        %v6018 = vadd.f32 %v5109, %v6017
        %v6019 = vpop.f32.mrf.mxu0
        %6020 = vmatprep.mubr.f32.mxu0 0.0
        %v6021 = vand.u32 %v1009, 4294901760
        %6022 = vmatmul.mubr.f32.gmra.mxu0 %v6021
        %v6023 = vpop.f32.mrf.mxu0
        %v6024 = vadd.f32 %v5117, %v6023
        %v6025 = vpop.f32.mrf.mxu0
        %6026 = vmatprep.mubr.f32.mxu0 0.0
        %v6027 = vand.u32 %v1012, 4294901760
        %6028 = vmatmul.mubr.f32.gmra.mxu0 %v6027
        %v6029 = vpop.f32.mrf.mxu0
        %v6030 = vadd.f32 %v5125, %v6029
        %v6031 = vpop.f32.mrf.mxu0
        %6032 = vmatprep.mubr.f32.mxu0 0.0
        %v6033 = vand.u32 %v1015, 4294901760
        %6034 = vmatmul.mubr.f32.gmra.mxu0 %v6033
        %v6035 = vpop.f32.mrf.mxu0
        %v6036 = vadd.f32 %v5133, %v6035
        %v6037 = vpop.f32.mrf.mxu0
        %6038 = vmatprep.mubr.f32.mxu0 0.0
        %v6039 = vand.u32 %v1018, 4294901760
        %6040 = vmatmul.mubr.f32.gmra.mxu0 %v6039
        %v6041 = vpop.f32.mrf.mxu0
        %v6042 = vadd.f32 %v5141, %v6041
        %v6043 = vpop.f32.mrf.mxu0
        %6044 = vmatprep.mubr.f32.mxu0 0.0
        %v6045 = vand.u32 %v1021, 4294901760
        %6046 = vmatmul.mubr.f32.gmra.mxu0 %v6045
        %v6047 = vpop.f32.mrf.mxu0
        %v6048 = vadd.f32 %v5149, %v6047
        %v6049 = vpop.f32.mrf.mxu0
        %6050 = vmatprep.mubr.f32.mxu0 0.0
        %v6051 = vand.u32 %v1024, 4294901760
        %6052 = vmatmul.mubr.f32.gmra.mxu0 %v6051
        %v6053 = vpop.f32.mrf.mxu0
        %v6054 = vadd.f32 %v5157, %v6053
        %v6055 = vpop.f32.mrf.mxu0
        %6056 = vmatprep.mubr.f32.mxu0 0.0
        %v6057 = vand.u32 %v1027, 4294901760
        %6058 = vmatmul.mubr.f32.gmra.mxu0 %v6057
        %v6059 = vpop.f32.mrf.mxu0
        %v6060 = vadd.f32 %v5165, %v6059
        %v6061 = vpop.f32.mrf.mxu0
        %6062 = vmatprep.mubr.f32.mxu0 0.0
        %v6063 = vand.u32 %v1030, 4294901760
        %6064 = vmatmul.mubr.f32.gmra.mxu0 %v6063
        %v6065 = vpop.f32.mrf.mxu0
        %v6066 = vadd.f32 %v5173, %v6065
        %v6067 = vpop.f32.mrf.mxu0
        %6068 = vmatprep.mubr.f32.mxu0 0.0
        %v6069 = vand.u32 %v1033, 4294901760
        %6070 = vmatmul.mubr.f32.gmra.mxu0 %v6069
        %v6071 = vpop.f32.mrf.mxu0
        %v6072 = vadd.f32 %v5181, %v6071
        %v6073 = vpop.f32.mrf.mxu0
        %6074 = vmatprep.mubr.f32.mxu0 0.0
        %v6075 = vand.u32 %v1036, 4294901760
        %6076 = vmatmul.mubr.f32.gmra.mxu0 %v6075
        %v6077 = vpop.f32.mrf.mxu0
        %v6078 = vadd.f32 %v5189, %v6077
        %v6079 = vpop.f32.mrf.mxu0
        %6080 = vmatprep.mubr.f32.mxu0 0.0
        %v6081 = vand.u32 %v1039, 4294901760
        %6082 = vmatmul.mubr.f32.gmra.mxu0 %v6081
        %v6083 = vpop.f32.mrf.mxu0
        %v6084 = vadd.f32 %v5197, %v6083
        %v6085 = vpop.f32.mrf.mxu0
        %6086 = vmatprep.mubr.f32.mxu0 0.0
        %v6087 = vand.u32 %v1042, 4294901760
        %6088 = vmatmul.mubr.f32.gmra.mxu0 %v6087
        %v6089 = vpop.f32.mrf.mxu0
        %v6090 = vadd.f32 %v5205, %v6089
        %v6091 = vpop.f32.mrf.mxu0
        %6092 = vmatprep.mubr.f32.mxu0 0.0
        %v6093 = vand.u32 %v1045, 4294901760
        %6094 = vmatmul.mubr.f32.gmra.mxu0 %v6093
        %v6095 = vpop.f32.mrf.mxu0
        %v6096 = vadd.f32 %v5213, %v6095
        %v6097 = vpop.f32.mrf.mxu0
        %6098 = vmatprep.mubr.f32.mxu0 0.0
        %v6099 = vand.u32 %v1048, 4294901760
        %6100 = vmatmul.mubr.f32.gmra.mxu0 %v6099
        %v6101 = vpop.f32.mrf.mxu0
        %v6102 = vadd.f32 %v5221, %v6101
        %v6103 = vpop.f32.mrf.mxu0
        %6104 = vmatprep.mubr.f32.mxu0 0.0
        %v6105 = vand.u32 %v1051, 4294901760
        %6106 = vmatmul.mubr.f32.gmra.mxu0 %v6105
        %v6107 = vpop.f32.mrf.mxu0
        %v6108 = vadd.f32 %v5229, %v6107
        %v6109 = vpop.f32.mrf.mxu0
        %6110 = vmatprep.mubr.f32.mxu0 0.0
        %v6111 = vand.u32 %v1054, 4294901760
        %6112 = vmatmul.mubr.f32.gmra.mxu0 %v6111
        %v6113 = vpop.f32.mrf.mxu0
        %v6114 = vadd.f32 %v5237, %v6113
        %v6115 = vpop.f32.mrf.mxu0
        %6116 = vmatprep.mubr.f32.mxu0 0.0
        %v6117 = vand.u32 %v1057, 4294901760
        %6118 = vmatmul.mubr.f32.gmra.mxu0 %v6117
        %v6119 = vpop.f32.mrf.mxu0
        %v6120 = vadd.f32 %v5245, %v6119
        %v6121 = vpop.f32.mrf.mxu0
        %6122 = vmatprep.mubr.f32.mxu0 0.0
        %v6123 = vand.u32 %v1060, 4294901760
        %6124 = vmatmul.mubr.f32.gmra.mxu0 %v6123
        %v6125 = vpop.f32.mrf.mxu0
        %v6126 = vadd.f32 %v5253, %v6125
        %v6127 = vpop.f32.mrf.mxu0
        %6128 = vmatprep.mubr.f32.mxu0 0.0
        %v6129 = vand.u32 %v1063, 4294901760
        %6130 = vmatmul.mubr.f32.gmra.mxu0 %v6129
        %v6131 = vpop.f32.mrf.mxu0
        %v6132 = vadd.f32 %v5261, %v6131
        %v6133 = vpop.f32.mrf.mxu0
        %6134 = vmatprep.mubr.f32.mxu0 0.0
        %v6135 = vand.u32 %v1066, 4294901760
        %6136 = vmatmul.mubr.f32.gmra.mxu0 %v6135
        %v6137 = vpop.f32.mrf.mxu0
        %v6138 = vadd.f32 %v5269, %v6137
        %v6139 = vpop.f32.mrf.mxu0
        %6140 = vmatprep.mubr.f32.mxu0 0.0
        %v6141 = vand.u32 %v1069, 4294901760
        %6142 = vmatmul.mubr.f32.gmra.mxu0 %v6141
        %v6143 = vpop.f32.mrf.mxu0
        %v6144 = vadd.f32 %v5277, %v6143
        %v6145 = vpop.f32.mrf.mxu0
        %6146 = vmatprep.mubr.f32.mxu0 0.0
        %v6147 = vand.u32 %v1072, 4294901760
        %6148 = vmatmul.mubr.f32.gmra.mxu0 %v6147
        %v6149 = vpop.f32.mrf.mxu0
        %v6150 = vadd.f32 %v5285, %v6149
        %v6151 = vpop.f32.mrf.mxu0
        %6152 = vmatprep.mubr.f32.mxu0 0.0
        %v6153 = vand.u32 %v1075, 4294901760
        %6154 = vmatmul.mubr.f32.gmra.mxu0 %v6153
        %v6155 = vpop.f32.mrf.mxu0
        %v6156 = vadd.f32 %v5293, %v6155
        %v6157 = vpop.f32.mrf.mxu0
        %6158 = vmatprep.mubr.f32.mxu0 0.0
        %v6159 = vand.u32 %v1078, 4294901760
        %6160 = vmatmul.mubr.f32.gmra.mxu0 %v6159
        %v6161 = vpop.f32.mrf.mxu0
        %v6162 = vadd.f32 %v5301, %v6161
        %v6163 = vpop.f32.mrf.mxu0
        %6164 = vmatprep.mubr.f32.mxu0 0.0
        %v6165 = vand.u32 %v1081, 4294901760
        %6166 = vmatmul.mubr.f32.gmra.mxu0 %v6165
        %v6167 = vpop.f32.mrf.mxu0
        %v6168 = vadd.f32 %v5309, %v6167
        %v6169 = vpop.f32.mrf.mxu0
        %6170 = vmatprep.mubr.f32.mxu0 0.0
        %v6171 = vand.u32 %v1084, 4294901760
        %6172 = vmatmul.mubr.f32.gmra.mxu0 %v6171
        %v6173 = vpop.f32.mrf.mxu0
        %v6174 = vadd.f32 %v5317, %v6173
        %v6175 = vpop.f32.mrf.mxu0
        %6176 = vmatprep.mubr.f32.mxu0 0.0
        %v6177 = vand.u32 %v1087, 4294901760
        %6178 = vmatmul.mubr.f32.gmra.mxu0 %v6177
        %v6179 = vpop.f32.mrf.mxu0
        %v6180 = vadd.f32 %v5325, %v6179
        %v6181 = vpop.f32.mrf.mxu0
        %6182 = vmatprep.mubr.f32.mxu0 0.0
        %v6183 = vand.u32 %v1090, 4294901760
        %6184 = vmatmul.mubr.f32.gmra.mxu0 %v6183
        %v6185 = vpop.f32.mrf.mxu0
        %v6186 = vadd.f32 %v5333, %v6185
        %v6187 = vpop.f32.mrf.mxu0
        %6188 = vmatprep.mubr.f32.mxu0 0.0
        %v6189 = vand.u32 %v1093, 4294901760
        %6190 = vmatmul.mubr.f32.gmra.mxu0 %v6189
        %v6191 = vpop.f32.mrf.mxu0
        %v6192 = vadd.f32 %v5341, %v6191
        %v6193 = vpop.f32.mrf.mxu0
        %6194 = vmatprep.mubr.f32.mxu0 0.0
        %v6195 = vand.u32 %v1096, 4294901760
        %6196 = vmatmul.mubr.f32.gmra.mxu0 %v6195
        %v6197 = vpop.f32.mrf.mxu0
        %v6198 = vadd.f32 %v5349, %v6197
        %v6199 = vpop.f32.mrf.mxu0
        %6200 = vmatprep.mubr.f32.mxu0 0.0
        %v6201 = vand.u32 %v1099, 4294901760
        %6202 = vmatmul.mubr.f32.gmra.mxu0 %v6201
        %v6203 = vpop.f32.mrf.mxu0
        %v6204 = vadd.f32 %v5357, %v6203
        %v6205 = vpop.f32.mrf.mxu0
        %6206 = vmatprep.mubr.f32.mxu0 0.0
        %v6207 = vand.u32 %v1102, 4294901760
        %6208 = vmatmul.mubr.f32.gmra.mxu0 %v6207
        %v6209 = vpop.f32.mrf.mxu0
        %v6210 = vadd.f32 %v5365, %v6209
        %v6211 = vpop.f32.mrf.mxu0
        %6212 = vdwg.mxu0
        %6213 = vmatprep.subr.mxu0 0.0
        %6214 = vmatpush1.msra.mxu0 0.0
        %6215 = vmatprep.subr.mxu0 0.0
        %6216 = vmatpush1.msra.mxu0 0.0
        %6217 = vmatprep.subr.mxu0 0.0
        %6218 = vmatpush1.msra.mxu0 0.0
        %6219 = vmatprep.subr.mxu0 0.0
        %6220 = vmatpush1.msra.mxu0 0.0
        %6221 = vmatprep.subr.mxu0 0.0
        %6222 = vmatpush1.msra.mxu0 0.0
        %6223 = vmatprep.subr.mxu0 0.0
        %6224 = vmatpush1.msra.mxu0 0.0
        %6225 = vmatprep.subr.mxu0 0.0
        %6226 = vmatpush1.msra.mxu0 0.0
        %6227 = vmatprep.subr.mxu0 0.0
        %6228 = vmatpush1.msra.mxu0 0.0
        %6229 = vmatprep.subr.mxu0 0.0
        %6230 = vmatpush1.msra.mxu0 0.0
        %6231 = vmatprep.subr.mxu0 0.0
        %6232 = vmatpush1.msra.mxu0 0.0
        %6233 = vmatprep.subr.mxu0 0.0
        %6234 = vmatpush1.msra.mxu0 0.0
        %6235 = vmatprep.subr.mxu0 0.0
        %6236 = vmatpush1.msra.mxu0 0.0
        %6237 = vmatprep.subr.mxu0 0.0
        %v6238 = vand.u32 %v711, 4294901760
        %6239 = vmatpush1.msra.mxu0 %v6238
        %6240 = vmatprep.subr.mxu0 0.0
        %v6241 = vand.u32 %v710, 4294901760
        %6242 = vmatpush1.msra.mxu0 %v6241
        %6243 = vmatprep.subr.mxu0 0.0
        %v6244 = vand.u32 %v709, 4294901760
        %6245 = vmatpush1.msra.mxu0 %v6244
        %6246 = vmatprep.subr.mxu0 0.0
        %v6247 = vand.u32 %v708, 4294901760
        %6248 = vmatpush1.msra.mxu0 %v6247
        %6249 = vmatprep.subr.mxu0 0.0
        %6250 = vmatpush2.msra.mxu0 0.0
        %6251 = vmatprep.subr.mxu0 0.0
        %6252 = vmatpush2.msra.mxu0 0.0
        %6253 = vmatprep.subr.mxu0 0.0
        %6254 = vmatpush2.msra.mxu0 0.0
        %6255 = vmatprep.subr.mxu0 0.0
        %6256 = vmatpush2.msra.mxu0 0.0
        %6257 = vmatprep.subr.mxu0 0.0
        %6258 = vmatpush2.msra.mxu0 0.0
        %6259 = vmatprep.subr.mxu0 0.0
        %6260 = vmatpush2.msra.mxu0 0.0
        %6261 = vmatprep.subr.mxu0 0.0
        %6262 = vmatpush2.msra.mxu0 0.0
        %6263 = vmatprep.subr.mxu0 0.0
        %6264 = vmatpush2.msra.mxu0 0.0
        %6265 = vmatprep.subr.mxu0 0.0
        %6266 = vmatpush2.msra.mxu0 0.0
        %6267 = vmatprep.subr.mxu0 0.0
        %6268 = vmatpush2.msra.mxu0 0.0
        %6269 = vmatprep.subr.mxu0 0.0
        %6270 = vmatpush2.msra.mxu0 0.0
        %6271 = vmatprep.subr.mxu0 0.0
        %6272 = vmatpush2.msra.mxu0 0.0
        %6273 = vmatprep.subr.mxu0 0.0
        %6274 = vmatpush2.msra.mxu0 0.0
        %6275 = vmatprep.subr.mxu0 0.0
        %6276 = vmatpush2.msra.mxu0 0.0
        %6277 = vmatprep.subr.mxu0 0.0
        %6278 = vmatpush2.msra.mxu0 0.0
        %6279 = vmatprep.subr.mxu0 0.0
        %6280 = vmatpush2.msra.mxu0 0.0
        %6281 = vmatprep.mubr.f32.mxu0 0.0
        %v6282 = vand.u32 %v721, 4294901760
        %6283 = vmatmul.mubr.f32.gmra.mxu0 %v6282
        %v6284 = vpop.f32.mrf.mxu0
        %v6285 = vadd.f32 %v5448, %v6284
        %v6286 = vpop.f32.mrf.mxu0
        %6287 = vmatprep.mubr.f32.mxu0 0.0
        %v6288 = vand.u32 %v724, 4294901760
        %6289 = vmatmul.mubr.f32.gmra.mxu0 %v6288
        %v6290 = vpop.f32.mrf.mxu0
        %v6291 = vadd.f32 %v5454, %v6290
        %v6292 = vpop.f32.mrf.mxu0
        %6293 = vmatprep.mubr.f32.mxu0 0.0
        %v6294 = vand.u32 %v727, 4294901760
        %6295 = vmatmul.mubr.f32.gmra.mxu0 %v6294
        %v6296 = vpop.f32.mrf.mxu0
        %v6297 = vadd.f32 %v5460, %v6296
        %v6298 = vpop.f32.mrf.mxu0
        %6299 = vmatprep.mubr.f32.mxu0 0.0
        %v6300 = vand.u32 %v730, 4294901760
        %6301 = vmatmul.mubr.f32.gmra.mxu0 %v6300
        %v6302 = vpop.f32.mrf.mxu0
        %v6303 = vadd.f32 %v5466, %v6302
        %v6304 = vpop.f32.mrf.mxu0
        %6305 = vmatprep.mubr.f32.mxu0 0.0
        %v6306 = vand.u32 %v733, 4294901760
        %6307 = vmatmul.mubr.f32.gmra.mxu0 %v6306
        %v6308 = vpop.f32.mrf.mxu0
        %v6309 = vadd.f32 %v5472, %v6308
        %v6310 = vpop.f32.mrf.mxu0
        %6311 = vmatprep.mubr.f32.mxu0 0.0
        %v6312 = vand.u32 %v736, 4294901760
        %6313 = vmatmul.mubr.f32.gmra.mxu0 %v6312
        %v6314 = vpop.f32.mrf.mxu0
        %v6315 = vadd.f32 %v5478, %v6314
        %v6316 = vpop.f32.mrf.mxu0
        %6317 = vmatprep.mubr.f32.mxu0 0.0
        %v6318 = vand.u32 %v739, 4294901760
        %6319 = vmatmul.mubr.f32.gmra.mxu0 %v6318
        %v6320 = vpop.f32.mrf.mxu0
        %v6321 = vadd.f32 %v5484, %v6320
        %v6322 = vpop.f32.mrf.mxu0
        %6323 = vmatprep.mubr.f32.mxu0 0.0
        %v6324 = vand.u32 %v742, 4294901760
        %6325 = vmatmul.mubr.f32.gmra.mxu0 %v6324
        %v6326 = vpop.f32.mrf.mxu0
        %v6327 = vadd.f32 %v5490, %v6326
        %v6328 = vpop.f32.mrf.mxu0
        %6329 = vmatprep.mubr.f32.mxu0 0.0
        %v6330 = vand.u32 %v745, 4294901760
        %6331 = vmatmul.mubr.f32.gmra.mxu0 %v6330
        %v6332 = vpop.f32.mrf.mxu0
        %v6333 = vadd.f32 %v5496, %v6332
        %v6334 = vpop.f32.mrf.mxu0
        %6335 = vmatprep.mubr.f32.mxu0 0.0
        %v6336 = vand.u32 %v748, 4294901760
        %6337 = vmatmul.mubr.f32.gmra.mxu0 %v6336
        %v6338 = vpop.f32.mrf.mxu0
        %v6339 = vadd.f32 %v5502, %v6338
        %v6340 = vpop.f32.mrf.mxu0
        %6341 = vmatprep.mubr.f32.mxu0 0.0
        %v6342 = vand.u32 %v751, 4294901760
        %6343 = vmatmul.mubr.f32.gmra.mxu0 %v6342
        %v6344 = vpop.f32.mrf.mxu0
        %v6345 = vadd.f32 %v5508, %v6344
        %v6346 = vpop.f32.mrf.mxu0
        %6347 = vmatprep.mubr.f32.mxu0 0.0
        %v6348 = vand.u32 %v754, 4294901760
        %6349 = vmatmul.mubr.f32.gmra.mxu0 %v6348
        %v6350 = vpop.f32.mrf.mxu0
        %v6351 = vadd.f32 %v5514, %v6350
        %v6352 = vpop.f32.mrf.mxu0
        %6353 = vmatprep.mubr.f32.mxu0 0.0
        %v6354 = vand.u32 %v757, 4294901760
        %6355 = vmatmul.mubr.f32.gmra.mxu0 %v6354
        %v6356 = vpop.f32.mrf.mxu0
        %v6357 = vadd.f32 %v5520, %v6356
        %v6358 = vpop.f32.mrf.mxu0
        %6359 = vmatprep.mubr.f32.mxu0 0.0
        %v6360 = vand.u32 %v760, 4294901760
        %6361 = vmatmul.mubr.f32.gmra.mxu0 %v6360
        %v6362 = vpop.f32.mrf.mxu0
        %v6363 = vadd.f32 %v5526, %v6362
        %v6364 = vpop.f32.mrf.mxu0
        %6365 = vmatprep.mubr.f32.mxu0 0.0
        %v6366 = vand.u32 %v763, 4294901760
        %6367 = vmatmul.mubr.f32.gmra.mxu0 %v6366
        %v6368 = vpop.f32.mrf.mxu0
        %v6369 = vadd.f32 %v5532, %v6368
        %v6370 = vpop.f32.mrf.mxu0
        %6371 = vmatprep.mubr.f32.mxu0 0.0
        %v6372 = vand.u32 %v766, 4294901760
        %6373 = vmatmul.mubr.f32.gmra.mxu0 %v6372
        %v6374 = vpop.f32.mrf.mxu0
        %v6375 = vadd.f32 %v5538, %v6374
        %v6376 = vpop.f32.mrf.mxu0
        %6377 = vmatprep.mubr.f32.mxu0 0.0
        %v6378 = vand.u32 %v769, 4294901760
        %6379 = vmatmul.mubr.f32.gmra.mxu0 %v6378
        %v6380 = vpop.f32.mrf.mxu0
        %v6381 = vadd.f32 %v5544, %v6380
        %v6382 = vpop.f32.mrf.mxu0
        %6383 = vmatprep.mubr.f32.mxu0 0.0
        %v6384 = vand.u32 %v772, 4294901760
        %6385 = vmatmul.mubr.f32.gmra.mxu0 %v6384
        %v6386 = vpop.f32.mrf.mxu0
        %v6387 = vadd.f32 %v5550, %v6386
        %v6388 = vpop.f32.mrf.mxu0
        %6389 = vmatprep.mubr.f32.mxu0 0.0
        %v6390 = vand.u32 %v775, 4294901760
        %6391 = vmatmul.mubr.f32.gmra.mxu0 %v6390
        %v6392 = vpop.f32.mrf.mxu0
        %v6393 = vadd.f32 %v5556, %v6392
        %v6394 = vpop.f32.mrf.mxu0
        %6395 = vmatprep.mubr.f32.mxu0 0.0
        %v6396 = vand.u32 %v778, 4294901760
        %6397 = vmatmul.mubr.f32.gmra.mxu0 %v6396
        %v6398 = vpop.f32.mrf.mxu0
        %v6399 = vadd.f32 %v5562, %v6398
        %v6400 = vpop.f32.mrf.mxu0
        %6401 = vmatprep.mubr.f32.mxu0 0.0
        %v6402 = vand.u32 %v781, 4294901760
        %6403 = vmatmul.mubr.f32.gmra.mxu0 %v6402
        %v6404 = vpop.f32.mrf.mxu0
        %v6405 = vadd.f32 %v5568, %v6404
        %v6406 = vpop.f32.mrf.mxu0
        %6407 = vmatprep.mubr.f32.mxu0 0.0
        %v6408 = vand.u32 %v784, 4294901760
        %6409 = vmatmul.mubr.f32.gmra.mxu0 %v6408
        %v6410 = vpop.f32.mrf.mxu0
        %v6411 = vadd.f32 %v5574, %v6410
        %v6412 = vpop.f32.mrf.mxu0
        %6413 = vmatprep.mubr.f32.mxu0 0.0
        %v6414 = vand.u32 %v787, 4294901760
        %6415 = vmatmul.mubr.f32.gmra.mxu0 %v6414
        %v6416 = vpop.f32.mrf.mxu0
        %v6417 = vadd.f32 %v5580, %v6416
        %v6418 = vpop.f32.mrf.mxu0
        %6419 = vmatprep.mubr.f32.mxu0 0.0
        %v6420 = vand.u32 %v790, 4294901760
        %6421 = vmatmul.mubr.f32.gmra.mxu0 %v6420
        %v6422 = vpop.f32.mrf.mxu0
        %v6423 = vadd.f32 %v5586, %v6422
        %v6424 = vpop.f32.mrf.mxu0
        %6425 = vmatprep.mubr.f32.mxu0 0.0
        %v6426 = vand.u32 %v793, 4294901760
        %6427 = vmatmul.mubr.f32.gmra.mxu0 %v6426
        %v6428 = vpop.f32.mrf.mxu0
        %v6429 = vadd.f32 %v5592, %v6428
        %v6430 = vpop.f32.mrf.mxu0
        %6431 = vmatprep.mubr.f32.mxu0 0.0
        %v6432 = vand.u32 %v796, 4294901760
        %6433 = vmatmul.mubr.f32.gmra.mxu0 %v6432
        %v6434 = vpop.f32.mrf.mxu0
        %v6435 = vadd.f32 %v5598, %v6434
        %v6436 = vpop.f32.mrf.mxu0
        %6437 = vmatprep.mubr.f32.mxu0 0.0
        %v6438 = vand.u32 %v799, 4294901760
        %6439 = vmatmul.mubr.f32.gmra.mxu0 %v6438
        %v6440 = vpop.f32.mrf.mxu0
        %v6441 = vadd.f32 %v5604, %v6440
        %v6442 = vpop.f32.mrf.mxu0
        %6443 = vmatprep.mubr.f32.mxu0 0.0
        %v6444 = vand.u32 %v802, 4294901760
        %6445 = vmatmul.mubr.f32.gmra.mxu0 %v6444
        %v6446 = vpop.f32.mrf.mxu0
        %v6447 = vadd.f32 %v5610, %v6446
        %v6448 = vpop.f32.mrf.mxu0
        %6449 = vmatprep.mubr.f32.mxu0 0.0
        %v6450 = vand.u32 %v805, 4294901760
        %6451 = vmatmul.mubr.f32.gmra.mxu0 %v6450
        %v6452 = vpop.f32.mrf.mxu0
        %v6453 = vadd.f32 %v5616, %v6452
        %v6454 = vpop.f32.mrf.mxu0
        %6455 = vmatprep.mubr.f32.mxu0 0.0
        %v6456 = vand.u32 %v808, 4294901760
        %6457 = vmatmul.mubr.f32.gmra.mxu0 %v6456
        %v6458 = vpop.f32.mrf.mxu0
        %v6459 = vadd.f32 %v5622, %v6458
        %v6460 = vpop.f32.mrf.mxu0
        %6461 = vmatprep.mubr.f32.mxu0 0.0
        %v6462 = vand.u32 %v811, 4294901760
        %6463 = vmatmul.mubr.f32.gmra.mxu0 %v6462
        %v6464 = vpop.f32.mrf.mxu0
        %v6465 = vadd.f32 %v5628, %v6464
        %v6466 = vpop.f32.mrf.mxu0
        %6467 = vmatprep.mubr.f32.mxu0 0.0
        %v6468 = vand.u32 %v814, 4294901760
        %6469 = vmatmul.mubr.f32.gmra.mxu0 %v6468
        %v6470 = vpop.f32.mrf.mxu0
        %v6471 = vadd.f32 %v5634, %v6470
        %v6472 = vpop.f32.mrf.mxu0
        %6473 = vmatprep.mubr.f32.mxu0 0.0
        %v6474 = vand.u32 %v817, 4294901760
        %6475 = vmatmul.mubr.f32.gmra.mxu0 %v6474
        %v6476 = vpop.f32.mrf.mxu0
        %v6477 = vadd.f32 %v5640, %v6476
        %v6478 = vpop.f32.mrf.mxu0
        %6479 = vmatprep.mubr.f32.mxu0 0.0
        %v6480 = vand.u32 %v820, 4294901760
        %6481 = vmatmul.mubr.f32.gmra.mxu0 %v6480
        %v6482 = vpop.f32.mrf.mxu0
        %v6483 = vadd.f32 %v5646, %v6482
        %v6484 = vpop.f32.mrf.mxu0
        %6485 = vmatprep.mubr.f32.mxu0 0.0
        %v6486 = vand.u32 %v823, 4294901760
        %6487 = vmatmul.mubr.f32.gmra.mxu0 %v6486
        %v6488 = vpop.f32.mrf.mxu0
        %v6489 = vadd.f32 %v5652, %v6488
        %v6490 = vpop.f32.mrf.mxu0
        %6491 = vmatprep.mubr.f32.mxu0 0.0
        %v6492 = vand.u32 %v826, 4294901760
        %6493 = vmatmul.mubr.f32.gmra.mxu0 %v6492
        %v6494 = vpop.f32.mrf.mxu0
        %v6495 = vadd.f32 %v5658, %v6494
        %v6496 = vpop.f32.mrf.mxu0
        %6497 = vmatprep.mubr.f32.mxu0 0.0
        %v6498 = vand.u32 %v829, 4294901760
        %6499 = vmatmul.mubr.f32.gmra.mxu0 %v6498
        %v6500 = vpop.f32.mrf.mxu0
        %v6501 = vadd.f32 %v5664, %v6500
        %v6502 = vpop.f32.mrf.mxu0
        %6503 = vmatprep.mubr.f32.mxu0 0.0
        %v6504 = vand.u32 %v832, 4294901760
        %6505 = vmatmul.mubr.f32.gmra.mxu0 %v6504
        %v6506 = vpop.f32.mrf.mxu0
        %v6507 = vadd.f32 %v5670, %v6506
        %v6508 = vpop.f32.mrf.mxu0
        %6509 = vmatprep.mubr.f32.mxu0 0.0
        %v6510 = vand.u32 %v835, 4294901760
        %6511 = vmatmul.mubr.f32.gmra.mxu0 %v6510
        %v6512 = vpop.f32.mrf.mxu0
        %v6513 = vadd.f32 %v5676, %v6512
        %v6514 = vpop.f32.mrf.mxu0
        %6515 = vmatprep.mubr.f32.mxu0 0.0
        %v6516 = vand.u32 %v838, 4294901760
        %6517 = vmatmul.mubr.f32.gmra.mxu0 %v6516
        %v6518 = vpop.f32.mrf.mxu0
        %v6519 = vadd.f32 %v5682, %v6518
        %v6520 = vpop.f32.mrf.mxu0
        %6521 = vmatprep.mubr.f32.mxu0 0.0
        %v6522 = vand.u32 %v841, 4294901760
        %6523 = vmatmul.mubr.f32.gmra.mxu0 %v6522
        %v6524 = vpop.f32.mrf.mxu0
        %v6525 = vadd.f32 %v5688, %v6524
        %v6526 = vpop.f32.mrf.mxu0
        %6527 = vmatprep.mubr.f32.mxu0 0.0
        %v6528 = vand.u32 %v844, 4294901760
        %6529 = vmatmul.mubr.f32.gmra.mxu0 %v6528
        %v6530 = vpop.f32.mrf.mxu0
        %v6531 = vadd.f32 %v5694, %v6530
        %v6532 = vpop.f32.mrf.mxu0
        %6533 = vmatprep.mubr.f32.mxu0 0.0
        %v6534 = vand.u32 %v847, 4294901760
        %6535 = vmatmul.mubr.f32.gmra.mxu0 %v6534
        %v6536 = vpop.f32.mrf.mxu0
        %v6537 = vadd.f32 %v5700, %v6536
        %v6538 = vpop.f32.mrf.mxu0
        %6539 = vmatprep.mubr.f32.mxu0 0.0
        %v6540 = vand.u32 %v850, 4294901760
        %6541 = vmatmul.mubr.f32.gmra.mxu0 %v6540
        %v6542 = vpop.f32.mrf.mxu0
        %v6543 = vadd.f32 %v5706, %v6542
        %v6544 = vpop.f32.mrf.mxu0
        %6545 = vmatprep.mubr.f32.mxu0 0.0
        %v6546 = vand.u32 %v853, 4294901760
        %6547 = vmatmul.mubr.f32.gmra.mxu0 %v6546
        %v6548 = vpop.f32.mrf.mxu0
        %v6549 = vadd.f32 %v5712, %v6548
        %v6550 = vpop.f32.mrf.mxu0
        %6551 = vmatprep.mubr.f32.mxu0 0.0
        %v6552 = vand.u32 %v856, 4294901760
        %6553 = vmatmul.mubr.f32.gmra.mxu0 %v6552
        %v6554 = vpop.f32.mrf.mxu0
        %v6555 = vadd.f32 %v5718, %v6554
        %v6556 = vpop.f32.mrf.mxu0
        %6557 = vmatprep.mubr.f32.mxu0 0.0
        %v6558 = vand.u32 %v859, 4294901760
        %6559 = vmatmul.mubr.f32.gmra.mxu0 %v6558
        %v6560 = vpop.f32.mrf.mxu0
        %v6561 = vadd.f32 %v5724, %v6560
        %v6562 = vpop.f32.mrf.mxu0
        %6563 = vmatprep.mubr.f32.mxu0 0.0
        %v6564 = vand.u32 %v862, 4294901760
        %6565 = vmatmul.mubr.f32.gmra.mxu0 %v6564
        %v6566 = vpop.f32.mrf.mxu0
        %v6567 = vadd.f32 %v5730, %v6566
        %v6568 = vpop.f32.mrf.mxu0
        %6569 = vmatprep.mubr.f32.mxu0 0.0
        %v6570 = vand.u32 %v865, 4294901760
        %6571 = vmatmul.mubr.f32.gmra.mxu0 %v6570
        %v6572 = vpop.f32.mrf.mxu0
        %v6573 = vadd.f32 %v5736, %v6572
        %v6574 = vpop.f32.mrf.mxu0
        %6575 = vmatprep.mubr.f32.mxu0 0.0
        %v6576 = vand.u32 %v868, 4294901760
        %6577 = vmatmul.mubr.f32.gmra.mxu0 %v6576
        %v6578 = vpop.f32.mrf.mxu0
        %v6579 = vadd.f32 %v5742, %v6578
        %v6580 = vpop.f32.mrf.mxu0
        %6581 = vmatprep.mubr.f32.mxu0 0.0
        %v6582 = vand.u32 %v871, 4294901760
        %6583 = vmatmul.mubr.f32.gmra.mxu0 %v6582
        %v6584 = vpop.f32.mrf.mxu0
        %v6585 = vadd.f32 %v5748, %v6584
        %v6586 = vpop.f32.mrf.mxu0
        %6587 = vmatprep.mubr.f32.mxu0 0.0
        %v6588 = vand.u32 %v874, 4294901760
        %6589 = vmatmul.mubr.f32.gmra.mxu0 %v6588
        %v6590 = vpop.f32.mrf.mxu0
        %v6591 = vadd.f32 %v5754, %v6590
        %v6592 = vpop.f32.mrf.mxu0
        %6593 = vmatprep.mubr.f32.mxu0 0.0
        %v6594 = vand.u32 %v877, 4294901760
        %6595 = vmatmul.mubr.f32.gmra.mxu0 %v6594
        %v6596 = vpop.f32.mrf.mxu0
        %v6597 = vadd.f32 %v5760, %v6596
        %v6598 = vpop.f32.mrf.mxu0
        %6599 = vmatprep.mubr.f32.mxu0 0.0
        %v6600 = vand.u32 %v880, 4294901760
        %6601 = vmatmul.mubr.f32.gmra.mxu0 %v6600
        %v6602 = vpop.f32.mrf.mxu0
        %v6603 = vadd.f32 %v5766, %v6602
        %v6604 = vpop.f32.mrf.mxu0
        %6605 = vmatprep.mubr.f32.mxu0 0.0
        %v6606 = vand.u32 %v883, 4294901760
        %6607 = vmatmul.mubr.f32.gmra.mxu0 %v6606
        %v6608 = vpop.f32.mrf.mxu0
        %v6609 = vadd.f32 %v5772, %v6608
        %v6610 = vpop.f32.mrf.mxu0
        %6611 = vmatprep.mubr.f32.mxu0 0.0
        %v6612 = vand.u32 %v886, 4294901760
        %6613 = vmatmul.mubr.f32.gmra.mxu0 %v6612
        %v6614 = vpop.f32.mrf.mxu0
        %v6615 = vadd.f32 %v5778, %v6614
        %v6616 = vpop.f32.mrf.mxu0
        %6617 = vmatprep.mubr.f32.mxu0 0.0
        %v6618 = vand.u32 %v889, 4294901760
        %6619 = vmatmul.mubr.f32.gmra.mxu0 %v6618
        %v6620 = vpop.f32.mrf.mxu0
        %v6621 = vadd.f32 %v5784, %v6620
        %v6622 = vpop.f32.mrf.mxu0
        %6623 = vmatprep.mubr.f32.mxu0 0.0
        %v6624 = vand.u32 %v892, 4294901760
        %6625 = vmatmul.mubr.f32.gmra.mxu0 %v6624
        %v6626 = vpop.f32.mrf.mxu0
        %v6627 = vadd.f32 %v5790, %v6626
        %v6628 = vpop.f32.mrf.mxu0
        %6629 = vmatprep.mubr.f32.mxu0 0.0
        %v6630 = vand.u32 %v895, 4294901760
        %6631 = vmatmul.mubr.f32.gmra.mxu0 %v6630
        %v6632 = vpop.f32.mrf.mxu0
        %v6633 = vadd.f32 %v5796, %v6632
        %v6634 = vpop.f32.mrf.mxu0
        %6635 = vmatprep.mubr.f32.mxu0 0.0
        %v6636 = vand.u32 %v898, 4294901760
        %6637 = vmatmul.mubr.f32.gmra.mxu0 %v6636
        %v6638 = vpop.f32.mrf.mxu0
        %v6639 = vadd.f32 %v5802, %v6638
        %v6640 = vpop.f32.mrf.mxu0
        %6641 = vmatprep.mubr.f32.mxu0 0.0
        %v6642 = vand.u32 %v901, 4294901760
        %6643 = vmatmul.mubr.f32.gmra.mxu0 %v6642
        %v6644 = vpop.f32.mrf.mxu0
        %v6645 = vadd.f32 %v5808, %v6644
        %v6646 = vpop.f32.mrf.mxu0
        %6647 = vmatprep.mubr.f32.mxu0 0.0
        %v6648 = vand.u32 %v904, 4294901760
        %6649 = vmatmul.mubr.f32.gmra.mxu0 %v6648
        %v6650 = vpop.f32.mrf.mxu0
        %v6651 = vadd.f32 %v5814, %v6650
        %v6652 = vpop.f32.mrf.mxu0
        %6653 = vmatprep.mubr.f32.mxu0 0.0
        %v6654 = vand.u32 %v907, 4294901760
        %6655 = vmatmul.mubr.f32.gmra.mxu0 %v6654
        %v6656 = vpop.f32.mrf.mxu0
        %v6657 = vadd.f32 %v5820, %v6656
        %v6658 = vpop.f32.mrf.mxu0
        %6659 = vmatprep.mubr.f32.mxu0 0.0
        %v6660 = vand.u32 %v910, 4294901760
        %6661 = vmatmul.mubr.f32.gmra.mxu0 %v6660
        %v6662 = vpop.f32.mrf.mxu0
        %v6663 = vadd.f32 %v5826, %v6662
        %v6664 = vpop.f32.mrf.mxu0
        %6665 = vmatprep.mubr.f32.mxu0 0.0
        %v6666 = vand.u32 %v913, 4294901760
        %6667 = vmatmul.mubr.f32.gmra.mxu0 %v6666
        %v6668 = vpop.f32.mrf.mxu0
        %v6669 = vadd.f32 %v5832, %v6668
        %v6670 = vpop.f32.mrf.mxu0
        %6671 = vmatprep.mubr.f32.mxu0 0.0
        %v6672 = vand.u32 %v916, 4294901760
        %6673 = vmatmul.mubr.f32.gmra.mxu0 %v6672
        %v6674 = vpop.f32.mrf.mxu0
        %v6675 = vadd.f32 %v5838, %v6674
        %v6676 = vpop.f32.mrf.mxu0
        %6677 = vmatprep.mubr.f32.mxu0 0.0
        %v6678 = vand.u32 %v919, 4294901760
        %6679 = vmatmul.mubr.f32.gmra.mxu0 %v6678
        %v6680 = vpop.f32.mrf.mxu0
        %v6681 = vadd.f32 %v5844, %v6680
        %v6682 = vpop.f32.mrf.mxu0
        %6683 = vmatprep.mubr.f32.mxu0 0.0
        %v6684 = vand.u32 %v922, 4294901760
        %6685 = vmatmul.mubr.f32.gmra.mxu0 %v6684
        %v6686 = vpop.f32.mrf.mxu0
        %v6687 = vadd.f32 %v5850, %v6686
        %v6688 = vpop.f32.mrf.mxu0
        %6689 = vmatprep.mubr.f32.mxu0 0.0
        %v6690 = vand.u32 %v925, 4294901760
        %6691 = vmatmul.mubr.f32.gmra.mxu0 %v6690
        %v6692 = vpop.f32.mrf.mxu0
        %v6693 = vadd.f32 %v5856, %v6692
        %v6694 = vpop.f32.mrf.mxu0
        %6695 = vmatprep.mubr.f32.mxu0 0.0
        %v6696 = vand.u32 %v928, 4294901760
        %6697 = vmatmul.mubr.f32.gmra.mxu0 %v6696
        %v6698 = vpop.f32.mrf.mxu0
        %v6699 = vadd.f32 %v5862, %v6698
        %v6700 = vpop.f32.mrf.mxu0
        %6701 = vmatprep.mubr.f32.mxu0 0.0
        %v6702 = vand.u32 %v931, 4294901760
        %6703 = vmatmul.mubr.f32.gmra.mxu0 %v6702
        %v6704 = vpop.f32.mrf.mxu0
        %v6705 = vadd.f32 %v5868, %v6704
        %v6706 = vpop.f32.mrf.mxu0
        %6707 = vmatprep.mubr.f32.mxu0 0.0
        %v6708 = vand.u32 %v934, 4294901760
        %6709 = vmatmul.mubr.f32.gmra.mxu0 %v6708
        %v6710 = vpop.f32.mrf.mxu0
        %v6711 = vadd.f32 %v5874, %v6710
        %v6712 = vpop.f32.mrf.mxu0
        %6713 = vmatprep.mubr.f32.mxu0 0.0
        %v6714 = vand.u32 %v937, 4294901760
        %6715 = vmatmul.mubr.f32.gmra.mxu0 %v6714
        %v6716 = vpop.f32.mrf.mxu0
        %v6717 = vadd.f32 %v5880, %v6716
        %v6718 = vpop.f32.mrf.mxu0
        %6719 = vmatprep.mubr.f32.mxu0 0.0
        %v6720 = vand.u32 %v940, 4294901760
        %6721 = vmatmul.mubr.f32.gmra.mxu0 %v6720
        %v6722 = vpop.f32.mrf.mxu0
        %v6723 = vadd.f32 %v5886, %v6722
        %v6724 = vpop.f32.mrf.mxu0
        %6725 = vmatprep.mubr.f32.mxu0 0.0
        %v6726 = vand.u32 %v943, 4294901760
        %6727 = vmatmul.mubr.f32.gmra.mxu0 %v6726
        %v6728 = vpop.f32.mrf.mxu0
        %v6729 = vadd.f32 %v5892, %v6728
        %v6730 = vpop.f32.mrf.mxu0
        %6731 = vmatprep.mubr.f32.mxu0 0.0
        %v6732 = vand.u32 %v946, 4294901760
        %6733 = vmatmul.mubr.f32.gmra.mxu0 %v6732
        %v6734 = vpop.f32.mrf.mxu0
        %v6735 = vadd.f32 %v5898, %v6734
        %v6736 = vpop.f32.mrf.mxu0
        %6737 = vmatprep.mubr.f32.mxu0 0.0
        %v6738 = vand.u32 %v949, 4294901760
        %6739 = vmatmul.mubr.f32.gmra.mxu0 %v6738
        %v6740 = vpop.f32.mrf.mxu0
        %v6741 = vadd.f32 %v5904, %v6740
        %v6742 = vpop.f32.mrf.mxu0
        %6743 = vmatprep.mubr.f32.mxu0 0.0
        %v6744 = vand.u32 %v952, 4294901760
        %6745 = vmatmul.mubr.f32.gmra.mxu0 %v6744
        %v6746 = vpop.f32.mrf.mxu0
        %v6747 = vadd.f32 %v5910, %v6746
        %v6748 = vpop.f32.mrf.mxu0
        %6749 = vmatprep.mubr.f32.mxu0 0.0
        %v6750 = vand.u32 %v955, 4294901760
        %6751 = vmatmul.mubr.f32.gmra.mxu0 %v6750
        %v6752 = vpop.f32.mrf.mxu0
        %v6753 = vadd.f32 %v5916, %v6752
        %v6754 = vpop.f32.mrf.mxu0
        %6755 = vmatprep.mubr.f32.mxu0 0.0
        %v6756 = vand.u32 %v958, 4294901760
        %6757 = vmatmul.mubr.f32.gmra.mxu0 %v6756
        %v6758 = vpop.f32.mrf.mxu0
        %v6759 = vadd.f32 %v5922, %v6758
        %v6760 = vpop.f32.mrf.mxu0
        %6761 = vmatprep.mubr.f32.mxu0 0.0
        %v6762 = vand.u32 %v961, 4294901760
        %6763 = vmatmul.mubr.f32.gmra.mxu0 %v6762
        %v6764 = vpop.f32.mrf.mxu0
        %v6765 = vadd.f32 %v5928, %v6764
        %v6766 = vpop.f32.mrf.mxu0
        %6767 = vmatprep.mubr.f32.mxu0 0.0
        %v6768 = vand.u32 %v964, 4294901760
        %6769 = vmatmul.mubr.f32.gmra.mxu0 %v6768
        %v6770 = vpop.f32.mrf.mxu0
        %v6771 = vadd.f32 %v5934, %v6770
        %v6772 = vpop.f32.mrf.mxu0
        %6773 = vmatprep.mubr.f32.mxu0 0.0
        %v6774 = vand.u32 %v967, 4294901760
        %6775 = vmatmul.mubr.f32.gmra.mxu0 %v6774
        %v6776 = vpop.f32.mrf.mxu0
        %v6777 = vadd.f32 %v5940, %v6776
        %v6778 = vpop.f32.mrf.mxu0
        %6779 = vmatprep.mubr.f32.mxu0 0.0
        %v6780 = vand.u32 %v970, 4294901760
        %6781 = vmatmul.mubr.f32.gmra.mxu0 %v6780
        %v6782 = vpop.f32.mrf.mxu0
        %v6783 = vadd.f32 %v5946, %v6782
        %v6784 = vpop.f32.mrf.mxu0
        %6785 = vmatprep.mubr.f32.mxu0 0.0
        %v6786 = vand.u32 %v973, 4294901760
        %6787 = vmatmul.mubr.f32.gmra.mxu0 %v6786
        %v6788 = vpop.f32.mrf.mxu0
        %v6789 = vadd.f32 %v5952, %v6788
        %v6790 = vpop.f32.mrf.mxu0
        %6791 = vmatprep.mubr.f32.mxu0 0.0
        %v6792 = vand.u32 %v976, 4294901760
        %6793 = vmatmul.mubr.f32.gmra.mxu0 %v6792
        %v6794 = vpop.f32.mrf.mxu0
        %v6795 = vadd.f32 %v5958, %v6794
        %v6796 = vpop.f32.mrf.mxu0
        %6797 = vmatprep.mubr.f32.mxu0 0.0
        %v6798 = vand.u32 %v979, 4294901760
        %6799 = vmatmul.mubr.f32.gmra.mxu0 %v6798
        %v6800 = vpop.f32.mrf.mxu0
        %v6801 = vadd.f32 %v5964, %v6800
        %v6802 = vpop.f32.mrf.mxu0
        %6803 = vmatprep.mubr.f32.mxu0 0.0
        %v6804 = vand.u32 %v982, 4294901760
        %6805 = vmatmul.mubr.f32.gmra.mxu0 %v6804
        %v6806 = vpop.f32.mrf.mxu0
        %v6807 = vadd.f32 %v5970, %v6806
        %v6808 = vpop.f32.mrf.mxu0
        %6809 = vmatprep.mubr.f32.mxu0 0.0
        %v6810 = vand.u32 %v985, 4294901760
        %6811 = vmatmul.mubr.f32.gmra.mxu0 %v6810
        %v6812 = vpop.f32.mrf.mxu0
        %v6813 = vadd.f32 %v5976, %v6812
        %v6814 = vpop.f32.mrf.mxu0
        %6815 = vmatprep.mubr.f32.mxu0 0.0
        %v6816 = vand.u32 %v988, 4294901760
        %6817 = vmatmul.mubr.f32.gmra.mxu0 %v6816
        %v6818 = vpop.f32.mrf.mxu0
        %v6819 = vadd.f32 %v5982, %v6818
        %v6820 = vpop.f32.mrf.mxu0
        %6821 = vmatprep.mubr.f32.mxu0 0.0
        %v6822 = vand.u32 %v991, 4294901760
        %6823 = vmatmul.mubr.f32.gmra.mxu0 %v6822
        %v6824 = vpop.f32.mrf.mxu0
        %v6825 = vadd.f32 %v5988, %v6824
        %v6826 = vpop.f32.mrf.mxu0
        %6827 = vmatprep.mubr.f32.mxu0 0.0
        %v6828 = vand.u32 %v994, 4294901760
        %6829 = vmatmul.mubr.f32.gmra.mxu0 %v6828
        %v6830 = vpop.f32.mrf.mxu0
        %v6831 = vadd.f32 %v5994, %v6830
        %v6832 = vpop.f32.mrf.mxu0
        %6833 = vmatprep.mubr.f32.mxu0 0.0
        %v6834 = vand.u32 %v997, 4294901760
        %6835 = vmatmul.mubr.f32.gmra.mxu0 %v6834
        %v6836 = vpop.f32.mrf.mxu0
        %v6837 = vadd.f32 %v6000, %v6836
        %v6838 = vpop.f32.mrf.mxu0
        %6839 = vmatprep.mubr.f32.mxu0 0.0
        %v6840 = vand.u32 %v1000, 4294901760
        %6841 = vmatmul.mubr.f32.gmra.mxu0 %v6840
        %v6842 = vpop.f32.mrf.mxu0
        %v6843 = vadd.f32 %v6006, %v6842
        %v6844 = vpop.f32.mrf.mxu0
        %6845 = vmatprep.mubr.f32.mxu0 0.0
        %v6846 = vand.u32 %v1003, 4294901760
        %6847 = vmatmul.mubr.f32.gmra.mxu0 %v6846
        %v6848 = vpop.f32.mrf.mxu0
        %v6849 = vadd.f32 %v6012, %v6848
        %v6850 = vpop.f32.mrf.mxu0
        %6851 = vmatprep.mubr.f32.mxu0 0.0
        %v6852 = vand.u32 %v1006, 4294901760
        %6853 = vmatmul.mubr.f32.gmra.mxu0 %v6852
        %v6854 = vpop.f32.mrf.mxu0
        %v6855 = vadd.f32 %v6018, %v6854
        %v6856 = vpop.f32.mrf.mxu0
        %6857 = vmatprep.mubr.f32.mxu0 0.0
        %v6858 = vand.u32 %v1009, 4294901760
        %6859 = vmatmul.mubr.f32.gmra.mxu0 %v6858
        %v6860 = vpop.f32.mrf.mxu0
        %v6861 = vadd.f32 %v6024, %v6860
        %v6862 = vpop.f32.mrf.mxu0
        %6863 = vmatprep.mubr.f32.mxu0 0.0
        %v6864 = vand.u32 %v1012, 4294901760
        %6865 = vmatmul.mubr.f32.gmra.mxu0 %v6864
        %v6866 = vpop.f32.mrf.mxu0
        %v6867 = vadd.f32 %v6030, %v6866
        %v6868 = vpop.f32.mrf.mxu0
        %6869 = vmatprep.mubr.f32.mxu0 0.0
        %v6870 = vand.u32 %v1015, 4294901760
        %6871 = vmatmul.mubr.f32.gmra.mxu0 %v6870
        %v6872 = vpop.f32.mrf.mxu0
        %v6873 = vadd.f32 %v6036, %v6872
        %v6874 = vpop.f32.mrf.mxu0
        %6875 = vmatprep.mubr.f32.mxu0 0.0
        %v6876 = vand.u32 %v1018, 4294901760
        %6877 = vmatmul.mubr.f32.gmra.mxu0 %v6876
        %v6878 = vpop.f32.mrf.mxu0
        %v6879 = vadd.f32 %v6042, %v6878
        %v6880 = vpop.f32.mrf.mxu0
        %6881 = vmatprep.mubr.f32.mxu0 0.0
        %v6882 = vand.u32 %v1021, 4294901760
        %6883 = vmatmul.mubr.f32.gmra.mxu0 %v6882
        %v6884 = vpop.f32.mrf.mxu0
        %v6885 = vadd.f32 %v6048, %v6884
        %v6886 = vpop.f32.mrf.mxu0
        %6887 = vmatprep.mubr.f32.mxu0 0.0
        %v6888 = vand.u32 %v1024, 4294901760
        %6889 = vmatmul.mubr.f32.gmra.mxu0 %v6888
        %v6890 = vpop.f32.mrf.mxu0
        %v6891 = vadd.f32 %v6054, %v6890
        %v6892 = vpop.f32.mrf.mxu0
        %6893 = vmatprep.mubr.f32.mxu0 0.0
        %v6894 = vand.u32 %v1027, 4294901760
        %6895 = vmatmul.mubr.f32.gmra.mxu0 %v6894
        %v6896 = vpop.f32.mrf.mxu0
        %v6897 = vadd.f32 %v6060, %v6896
        %v6898 = vpop.f32.mrf.mxu0
        %6899 = vmatprep.mubr.f32.mxu0 0.0
        %v6900 = vand.u32 %v1030, 4294901760
        %6901 = vmatmul.mubr.f32.gmra.mxu0 %v6900
        %v6902 = vpop.f32.mrf.mxu0
        %v6903 = vadd.f32 %v6066, %v6902
        %v6904 = vpop.f32.mrf.mxu0
        %6905 = vmatprep.mubr.f32.mxu0 0.0
        %v6906 = vand.u32 %v1033, 4294901760
        %6907 = vmatmul.mubr.f32.gmra.mxu0 %v6906
        %v6908 = vpop.f32.mrf.mxu0
        %v6909 = vadd.f32 %v6072, %v6908
        %v6910 = vpop.f32.mrf.mxu0
        %6911 = vmatprep.mubr.f32.mxu0 0.0
        %v6912 = vand.u32 %v1036, 4294901760
        %6913 = vmatmul.mubr.f32.gmra.mxu0 %v6912
        %v6914 = vpop.f32.mrf.mxu0
        %v6915 = vadd.f32 %v6078, %v6914
        %v6916 = vpop.f32.mrf.mxu0
        %6917 = vmatprep.mubr.f32.mxu0 0.0
        %v6918 = vand.u32 %v1039, 4294901760
        %6919 = vmatmul.mubr.f32.gmra.mxu0 %v6918
        %v6920 = vpop.f32.mrf.mxu0
        %v6921 = vadd.f32 %v6084, %v6920
        %v6922 = vpop.f32.mrf.mxu0
        %6923 = vmatprep.mubr.f32.mxu0 0.0
        %v6924 = vand.u32 %v1042, 4294901760
        %6925 = vmatmul.mubr.f32.gmra.mxu0 %v6924
        %v6926 = vpop.f32.mrf.mxu0
        %v6927 = vadd.f32 %v6090, %v6926
        %v6928 = vpop.f32.mrf.mxu0
        %6929 = vmatprep.mubr.f32.mxu0 0.0
        %v6930 = vand.u32 %v1045, 4294901760
        %6931 = vmatmul.mubr.f32.gmra.mxu0 %v6930
        %v6932 = vpop.f32.mrf.mxu0
        %v6933 = vadd.f32 %v6096, %v6932
        %v6934 = vpop.f32.mrf.mxu0
        %6935 = vmatprep.mubr.f32.mxu0 0.0
        %v6936 = vand.u32 %v1048, 4294901760
        %6937 = vmatmul.mubr.f32.gmra.mxu0 %v6936
        %v6938 = vpop.f32.mrf.mxu0
        %v6939 = vadd.f32 %v6102, %v6938
        %v6940 = vpop.f32.mrf.mxu0
        %6941 = vmatprep.mubr.f32.mxu0 0.0
        %v6942 = vand.u32 %v1051, 4294901760
        %6943 = vmatmul.mubr.f32.gmra.mxu0 %v6942
        %v6944 = vpop.f32.mrf.mxu0
        %v6945 = vadd.f32 %v6108, %v6944
        %v6946 = vpop.f32.mrf.mxu0
        %6947 = vmatprep.mubr.f32.mxu0 0.0
        %v6948 = vand.u32 %v1054, 4294901760
        %6949 = vmatmul.mubr.f32.gmra.mxu0 %v6948
        %v6950 = vpop.f32.mrf.mxu0
        %v6951 = vadd.f32 %v6114, %v6950
        %v6952 = vpop.f32.mrf.mxu0
        %6953 = vmatprep.mubr.f32.mxu0 0.0
        %v6954 = vand.u32 %v1057, 4294901760
        %6955 = vmatmul.mubr.f32.gmra.mxu0 %v6954
        %v6956 = vpop.f32.mrf.mxu0
        %v6957 = vadd.f32 %v6120, %v6956
        %v6958 = vpop.f32.mrf.mxu0
        %6959 = vmatprep.mubr.f32.mxu0 0.0
        %v6960 = vand.u32 %v1060, 4294901760
        %6961 = vmatmul.mubr.f32.gmra.mxu0 %v6960
        %v6962 = vpop.f32.mrf.mxu0
        %v6963 = vadd.f32 %v6126, %v6962
        %v6964 = vpop.f32.mrf.mxu0
        %6965 = vmatprep.mubr.f32.mxu0 0.0
        %v6966 = vand.u32 %v1063, 4294901760
        %6967 = vmatmul.mubr.f32.gmra.mxu0 %v6966
        %v6968 = vpop.f32.mrf.mxu0
        %v6969 = vadd.f32 %v6132, %v6968
        %v6970 = vpop.f32.mrf.mxu0
        %6971 = vmatprep.mubr.f32.mxu0 0.0
        %v6972 = vand.u32 %v1066, 4294901760
        %6973 = vmatmul.mubr.f32.gmra.mxu0 %v6972
        %v6974 = vpop.f32.mrf.mxu0
        %v6975 = vadd.f32 %v6138, %v6974
        %v6976 = vpop.f32.mrf.mxu0
        %6977 = vmatprep.mubr.f32.mxu0 0.0
        %v6978 = vand.u32 %v1069, 4294901760
        %6979 = vmatmul.mubr.f32.gmra.mxu0 %v6978
        %v6980 = vpop.f32.mrf.mxu0
        %v6981 = vadd.f32 %v6144, %v6980
        %v6982 = vpop.f32.mrf.mxu0
        %6983 = vmatprep.mubr.f32.mxu0 0.0
        %v6984 = vand.u32 %v1072, 4294901760
        %6985 = vmatmul.mubr.f32.gmra.mxu0 %v6984
        %v6986 = vpop.f32.mrf.mxu0
        %v6987 = vadd.f32 %v6150, %v6986
        %v6988 = vpop.f32.mrf.mxu0
        %6989 = vmatprep.mubr.f32.mxu0 0.0
        %v6990 = vand.u32 %v1075, 4294901760
        %6991 = vmatmul.mubr.f32.gmra.mxu0 %v6990
        %v6992 = vpop.f32.mrf.mxu0
        %v6993 = vadd.f32 %v6156, %v6992
        %v6994 = vpop.f32.mrf.mxu0
        %6995 = vmatprep.mubr.f32.mxu0 0.0
        %v6996 = vand.u32 %v1078, 4294901760
        %6997 = vmatmul.mubr.f32.gmra.mxu0 %v6996
        %v6998 = vpop.f32.mrf.mxu0
        %v6999 = vadd.f32 %v6162, %v6998
        %v7000 = vpop.f32.mrf.mxu0
        %7001 = vmatprep.mubr.f32.mxu0 0.0
        %v7002 = vand.u32 %v1081, 4294901760
        %7003 = vmatmul.mubr.f32.gmra.mxu0 %v7002
        %v7004 = vpop.f32.mrf.mxu0
        %v7005 = vadd.f32 %v6168, %v7004
        %v7006 = vpop.f32.mrf.mxu0
        %7007 = vmatprep.mubr.f32.mxu0 0.0
        %v7008 = vand.u32 %v1084, 4294901760
        %7009 = vmatmul.mubr.f32.gmra.mxu0 %v7008
        %v7010 = vpop.f32.mrf.mxu0
        %v7011 = vadd.f32 %v6174, %v7010
        %v7012 = vpop.f32.mrf.mxu0
        %7013 = vmatprep.mubr.f32.mxu0 0.0
        %v7014 = vand.u32 %v1087, 4294901760
        %7015 = vmatmul.mubr.f32.gmra.mxu0 %v7014
        %v7016 = vpop.f32.mrf.mxu0
        %v7017 = vadd.f32 %v6180, %v7016
        %v7018 = vpop.f32.mrf.mxu0
        %7019 = vmatprep.mubr.f32.mxu0 0.0
        %v7020 = vand.u32 %v1090, 4294901760
        %7021 = vmatmul.mubr.f32.gmra.mxu0 %v7020
        %v7022 = vpop.f32.mrf.mxu0
        %v7023 = vadd.f32 %v6186, %v7022
        %v7024 = vpop.f32.mrf.mxu0
        %7025 = vmatprep.mubr.f32.mxu0 0.0
        %v7026 = vand.u32 %v1093, 4294901760
        %7027 = vmatmul.mubr.f32.gmra.mxu0 %v7026
        %v7028 = vpop.f32.mrf.mxu0
        %v7029 = vadd.f32 %v6192, %v7028
        %v7030 = vpop.f32.mrf.mxu0
        %7031 = vmatprep.mubr.f32.mxu0 0.0
        %v7032 = vand.u32 %v1096, 4294901760
        %7033 = vmatmul.mubr.f32.gmra.mxu0 %v7032
        %v7034 = vpop.f32.mrf.mxu0
        %v7035 = vadd.f32 %v6198, %v7034
        %v7036 = vpop.f32.mrf.mxu0
        %7037 = vmatprep.mubr.f32.mxu0 0.0
        %v7038 = vand.u32 %v1099, 4294901760
        %7039 = vmatmul.mubr.f32.gmra.mxu0 %v7038
        %v7040 = vpop.f32.mrf.mxu0
        %v7041 = vadd.f32 %v6204, %v7040
        %v7042 = vpop.f32.mrf.mxu0
        %7043 = vmatprep.mubr.f32.mxu0 0.0
        %v7044 = vand.u32 %v1102, 4294901760
        %7045 = vmatmul.mubr.f32.gmra.mxu0 %v7044
        %v7046 = vpop.f32.mrf.mxu0
        %v7047 = vadd.f32 %v6210, %v7046
        %v7048 = vpop.f32.mrf.mxu0
        %7049 = vdwg.mxu0
        %v7050 = vld [vmem:[%s5] sm:$0x1]
        %v7051 = vstv %s337
        %v7052 = vmul.f32 %v7051, %v7050
        %vm7053 = vcmp.gt.f32.partialorder %v6285, 0.0
        %vm7054 = vcmp.gt.f32.partialorder %v6291, 0.0
        %vm7055 = vcmp.gt.f32.partialorder %v6297, 0.0
        %vm7056 = vcmp.gt.f32.partialorder %v6303, 0.0
        %vm7057 = vcmp.gt.f32.partialorder %v6309, 0.0
        %vm7058 = vcmp.gt.f32.partialorder %v6315, 0.0
        %vm7059 = vcmp.gt.f32.partialorder %v6321, 0.0
        %vm7060 = vcmp.gt.f32.partialorder %v6327, 0.0
        %vm7061 = vcmp.gt.f32.partialorder %v6333, 0.0
        %vm7062 = vcmp.gt.f32.partialorder %v6339, 0.0
        %vm7063 = vcmp.gt.f32.partialorder %v6345, 0.0
        %vm7064 = vcmp.gt.f32.partialorder %v6351, 0.0
        %vm7065 = vcmp.gt.f32.partialorder %v6357, 0.0
        %vm7066 = vcmp.gt.f32.partialorder %v6363, 0.0
        %vm7067 = vcmp.gt.f32.partialorder %v6369, 0.0
        %vm7068 = vcmp.gt.f32.partialorder %v6375, 0.0
        %vm7069 = vcmp.gt.f32.partialorder %v6381, 0.0
        %vm7070 = vcmp.gt.f32.partialorder %v6387, 0.0
        %vm7071 = vcmp.gt.f32.partialorder %v6393, 0.0
        %vm7072 = vcmp.gt.f32.partialorder %v6399, 0.0
        %vm7073 = vcmp.gt.f32.partialorder %v6405, 0.0
        %vm7074 = vcmp.gt.f32.partialorder %v6411, 0.0
        %vm7075 = vcmp.gt.f32.partialorder %v6417, 0.0
        %vm7076 = vcmp.gt.f32.partialorder %v6423, 0.0
        %vm7077 = vcmp.gt.f32.partialorder %v6429, 0.0
        %vm7078 = vcmp.gt.f32.partialorder %v6435, 0.0
        %vm7079 = vcmp.gt.f32.partialorder %v6441, 0.0
        %vm7080 = vcmp.gt.f32.partialorder %v6447, 0.0
        %vm7081 = vcmp.gt.f32.partialorder %v6453, 0.0
        %vm7082 = vcmp.gt.f32.partialorder %v6459, 0.0
        %vm7083 = vcmp.gt.f32.partialorder %v6465, 0.0
        %vm7084 = vcmp.gt.f32.partialorder %v6471, 0.0
        %vm7085 = vcmp.gt.f32.partialorder %v6477, 0.0
        %vm7086 = vcmp.gt.f32.partialorder %v6483, 0.0
        %vm7087 = vcmp.gt.f32.partialorder %v6489, 0.0
        %vm7088 = vcmp.gt.f32.partialorder %v6495, 0.0
        %vm7089 = vcmp.gt.f32.partialorder %v6501, 0.0
        %vm7090 = vcmp.gt.f32.partialorder %v6507, 0.0
        %vm7091 = vcmp.gt.f32.partialorder %v6513, 0.0
        %vm7092 = vcmp.gt.f32.partialorder %v6519, 0.0
        %vm7093 = vcmp.gt.f32.partialorder %v6525, 0.0
        %vm7094 = vcmp.gt.f32.partialorder %v6531, 0.0
        %vm7095 = vcmp.gt.f32.partialorder %v6537, 0.0
        %vm7096 = vcmp.gt.f32.partialorder %v6543, 0.0
        %vm7097 = vcmp.gt.f32.partialorder %v6549, 0.0
        %vm7098 = vcmp.gt.f32.partialorder %v6555, 0.0
        %vm7099 = vcmp.gt.f32.partialorder %v6561, 0.0
        %vm7100 = vcmp.gt.f32.partialorder %v6567, 0.0
        %vm7101 = vcmp.gt.f32.partialorder %v6573, 0.0
        %vm7102 = vcmp.gt.f32.partialorder %v6579, 0.0
        %vm7103 = vcmp.gt.f32.partialorder %v6585, 0.0
        %vm7104 = vcmp.gt.f32.partialorder %v6591, 0.0
        %vm7105 = vcmp.gt.f32.partialorder %v6597, 0.0
        %vm7106 = vcmp.gt.f32.partialorder %v6603, 0.0
        %vm7107 = vcmp.gt.f32.partialorder %v6609, 0.0
        %vm7108 = vcmp.gt.f32.partialorder %v6615, 0.0
        %vm7109 = vcmp.gt.f32.partialorder %v6621, 0.0
        %vm7110 = vcmp.gt.f32.partialorder %v6627, 0.0
        %vm7111 = vcmp.gt.f32.partialorder %v6633, 0.0
        %vm7112 = vcmp.gt.f32.partialorder %v6639, 0.0
        %vm7113 = vcmp.gt.f32.partialorder %v6645, 0.0
        %vm7114 = vcmp.gt.f32.partialorder %v6651, 0.0
        %vm7115 = vcmp.gt.f32.partialorder %v6657, 0.0
        %vm7116 = vcmp.gt.f32.partialorder %v6663, 0.0
        %vm7117 = vcmp.gt.f32.partialorder %v6669, 0.0
        %vm7118 = vcmp.gt.f32.partialorder %v6675, 0.0
        %vm7119 = vcmp.gt.f32.partialorder %v6681, 0.0
        %vm7120 = vcmp.gt.f32.partialorder %v6687, 0.0
        %vm7121 = vcmp.gt.f32.partialorder %v6693, 0.0
        %vm7122 = vcmp.gt.f32.partialorder %v6699, 0.0
        %vm7123 = vcmp.gt.f32.partialorder %v6705, 0.0
        %vm7124 = vcmp.gt.f32.partialorder %v6711, 0.0
        %vm7125 = vcmp.gt.f32.partialorder %v6717, 0.0
        %vm7126 = vcmp.gt.f32.partialorder %v6723, 0.0
        %vm7127 = vcmp.gt.f32.partialorder %v6729, 0.0
        %vm7128 = vcmp.gt.f32.partialorder %v6735, 0.0
        %vm7129 = vcmp.gt.f32.partialorder %v6741, 0.0
        %vm7130 = vcmp.gt.f32.partialorder %v6747, 0.0
        %vm7131 = vcmp.gt.f32.partialorder %v6753, 0.0
        %vm7132 = vcmp.gt.f32.partialorder %v6759, 0.0
        %vm7133 = vcmp.gt.f32.partialorder %v6765, 0.0
        %vm7134 = vcmp.gt.f32.partialorder %v6771, 0.0
        %vm7135 = vcmp.gt.f32.partialorder %v6777, 0.0
        %vm7136 = vcmp.gt.f32.partialorder %v6783, 0.0
        %vm7137 = vcmp.gt.f32.partialorder %v6789, 0.0
        %vm7138 = vcmp.gt.f32.partialorder %v6795, 0.0
        %vm7139 = vcmp.gt.f32.partialorder %v6801, 0.0
        %vm7140 = vcmp.gt.f32.partialorder %v6807, 0.0
        %vm7141 = vcmp.gt.f32.partialorder %v6813, 0.0
        %vm7142 = vcmp.gt.f32.partialorder %v6819, 0.0
        %vm7143 = vcmp.gt.f32.partialorder %v6825, 0.0
        %vm7144 = vcmp.gt.f32.partialorder %v6831, 0.0
        %vm7145 = vcmp.gt.f32.partialorder %v6837, 0.0
        %vm7146 = vcmp.gt.f32.partialorder %v6843, 0.0
        %vm7147 = vcmp.gt.f32.partialorder %v6849, 0.0
        %vm7148 = vcmp.gt.f32.partialorder %v6855, 0.0
        %vm7149 = vcmp.gt.f32.partialorder %v6861, 0.0
        %vm7150 = vcmp.gt.f32.partialorder %v6867, 0.0
        %vm7151 = vcmp.gt.f32.partialorder %v6873, 0.0
        %vm7152 = vcmp.gt.f32.partialorder %v6879, 0.0
        %vm7153 = vcmp.gt.f32.partialorder %v6885, 0.0
        %vm7154 = vcmp.gt.f32.partialorder %v6891, 0.0
        %vm7155 = vcmp.gt.f32.partialorder %v6897, 0.0
        %vm7156 = vcmp.gt.f32.partialorder %v6903, 0.0
        %vm7157 = vcmp.gt.f32.partialorder %v6909, 0.0
        %vm7158 = vcmp.gt.f32.partialorder %v6915, 0.0
        %vm7159 = vcmp.gt.f32.partialorder %v6921, 0.0
        %vm7160 = vcmp.gt.f32.partialorder %v6927, 0.0
        %vm7161 = vcmp.gt.f32.partialorder %v6933, 0.0
        %vm7162 = vcmp.gt.f32.partialorder %v6939, 0.0
        %vm7163 = vcmp.gt.f32.partialorder %v6945, 0.0
        %vm7164 = vcmp.gt.f32.partialorder %v6951, 0.0
        %vm7165 = vcmp.gt.f32.partialorder %v6957, 0.0
        %vm7166 = vcmp.gt.f32.partialorder %v6963, 0.0
        %vm7167 = vcmp.gt.f32.partialorder %v6969, 0.0
        %vm7168 = vcmp.gt.f32.partialorder %v6975, 0.0
        %vm7169 = vcmp.gt.f32.partialorder %v6981, 0.0
        %vm7170 = vcmp.gt.f32.partialorder %v6987, 0.0
        %vm7171 = vcmp.gt.f32.partialorder %v6993, 0.0
        %vm7172 = vcmp.gt.f32.partialorder %v6999, 0.0
        %vm7173 = vcmp.gt.f32.partialorder %v7005, 0.0
        %vm7174 = vcmp.gt.f32.partialorder %v7011, 0.0
        %vm7175 = vcmp.gt.f32.partialorder %v7017, 0.0
        %vm7176 = vcmp.gt.f32.partialorder %v7023, 0.0
        %vm7177 = vcmp.gt.f32.partialorder %v7029, 0.0
        %vm7178 = vcmp.gt.f32.partialorder %v7035, 0.0
        %vm7179 = vcmp.gt.f32.partialorder %v7041, 0.0
        %vm7180 = vcmp.gt.f32.partialorder %v7047, 0.0
        %v7182 = vlaneseq
        %v7183 = vshrl.u32 %v7182, 7
        %v7184 = vsub.s32 0, %v7183
        %v7185 = vrot.slane %v7050, %v7184
        %v7188 = vlaneseq
        %v7189 = vshrl.u32 %v7188, 7
        %v7190 = vsub.s32 0, %v7189
        %v7191 = vrot.slane %v7052, %v7190
        %v7193 = vsel %vm7053, %v7185, %v7191
        %v7194 = vsel %vm7054, %v7185, %v7191
        %v7195 = vsel %vm7055, %v7185, %v7191
        %v7196 = vsel %vm7056, %v7185, %v7191
        %v7197 = vsel %vm7057, %v7185, %v7191
        %v7198 = vsel %vm7058, %v7185, %v7191
        %v7199 = vsel %vm7059, %v7185, %v7191
        %v7200 = vsel %vm7060, %v7185, %v7191
        %v7201 = vsel %vm7061, %v7185, %v7191
        %v7202 = vsel %vm7062, %v7185, %v7191
        %v7203 = vsel %vm7063, %v7185, %v7191
        %v7204 = vsel %vm7064, %v7185, %v7191
        %v7205 = vsel %vm7065, %v7185, %v7191
        %v7206 = vsel %vm7066, %v7185, %v7191
        %v7207 = vsel %vm7067, %v7185, %v7191
        %v7208 = vsel %vm7068, %v7185, %v7191
        %v7209 = vsel %vm7069, %v7185, %v7191
        %v7210 = vsel %vm7070, %v7185, %v7191
        %v7211 = vsel %vm7071, %v7185, %v7191
        %v7212 = vsel %vm7072, %v7185, %v7191
        %v7213 = vsel %vm7073, %v7185, %v7191
        %v7214 = vsel %vm7074, %v7185, %v7191
        %v7215 = vsel %vm7075, %v7185, %v7191
        %v7216 = vsel %vm7076, %v7185, %v7191
        %v7217 = vsel %vm7077, %v7185, %v7191
        %v7218 = vsel %vm7078, %v7185, %v7191
        %v7219 = vsel %vm7079, %v7185, %v7191
        %v7220 = vsel %vm7080, %v7185, %v7191
        %v7221 = vsel %vm7081, %v7185, %v7191
        %v7222 = vsel %vm7082, %v7185, %v7191
        %v7223 = vsel %vm7083, %v7185, %v7191
        %v7224 = vsel %vm7084, %v7185, %v7191
        %v7225 = vsel %vm7085, %v7185, %v7191
        %v7226 = vsel %vm7086, %v7185, %v7191
        %v7227 = vsel %vm7087, %v7185, %v7191
        %v7228 = vsel %vm7088, %v7185, %v7191
        %v7229 = vsel %vm7089, %v7185, %v7191
        %v7230 = vsel %vm7090, %v7185, %v7191
        %v7231 = vsel %vm7091, %v7185, %v7191
        %v7232 = vsel %vm7092, %v7185, %v7191
        %v7233 = vsel %vm7093, %v7185, %v7191
        %v7234 = vsel %vm7094, %v7185, %v7191
        %v7235 = vsel %vm7095, %v7185, %v7191
        %v7236 = vsel %vm7096, %v7185, %v7191
        %v7237 = vsel %vm7097, %v7185, %v7191
        %v7238 = vsel %vm7098, %v7185, %v7191
        %v7239 = vsel %vm7099, %v7185, %v7191
        %v7240 = vsel %vm7100, %v7185, %v7191
        %v7241 = vsel %vm7101, %v7185, %v7191
        %v7242 = vsel %vm7102, %v7185, %v7191
        %v7243 = vsel %vm7103, %v7185, %v7191
        %v7244 = vsel %vm7104, %v7185, %v7191
        %v7245 = vsel %vm7105, %v7185, %v7191
        %v7246 = vsel %vm7106, %v7185, %v7191
        %v7247 = vsel %vm7107, %v7185, %v7191
        %v7248 = vsel %vm7108, %v7185, %v7191
        %v7249 = vsel %vm7109, %v7185, %v7191
        %v7250 = vsel %vm7110, %v7185, %v7191
        %v7251 = vsel %vm7111, %v7185, %v7191
        %v7252 = vsel %vm7112, %v7185, %v7191
        %v7253 = vsel %vm7113, %v7185, %v7191
        %v7254 = vsel %vm7114, %v7185, %v7191
        %v7255 = vsel %vm7115, %v7185, %v7191
        %v7256 = vsel %vm7116, %v7185, %v7191
        %v7257 = vsel %vm7117, %v7185, %v7191
        %v7258 = vsel %vm7118, %v7185, %v7191
        %v7259 = vsel %vm7119, %v7185, %v7191
        %v7260 = vsel %vm7120, %v7185, %v7191
        %v7261 = vsel %vm7121, %v7185, %v7191
        %v7262 = vsel %vm7122, %v7185, %v7191
        %v7263 = vsel %vm7123, %v7185, %v7191
        %v7264 = vsel %vm7124, %v7185, %v7191
        %v7265 = vsel %vm7125, %v7185, %v7191
        %v7266 = vsel %vm7126, %v7185, %v7191
        %v7267 = vsel %vm7127, %v7185, %v7191
        %v7268 = vsel %vm7128, %v7185, %v7191
        %v7269 = vsel %vm7129, %v7185, %v7191
        %v7270 = vsel %vm7130, %v7185, %v7191
        %v7271 = vsel %vm7131, %v7185, %v7191
        %v7272 = vsel %vm7132, %v7185, %v7191
        %v7273 = vsel %vm7133, %v7185, %v7191
        %v7274 = vsel %vm7134, %v7185, %v7191
        %v7275 = vsel %vm7135, %v7185, %v7191
        %v7276 = vsel %vm7136, %v7185, %v7191
        %v7277 = vsel %vm7137, %v7185, %v7191
        %v7278 = vsel %vm7138, %v7185, %v7191
        %v7279 = vsel %vm7139, %v7185, %v7191
        %v7280 = vsel %vm7140, %v7185, %v7191
        %v7281 = vsel %vm7141, %v7185, %v7191
        %v7282 = vsel %vm7142, %v7185, %v7191
        %v7283 = vsel %vm7143, %v7185, %v7191
        %v7284 = vsel %vm7144, %v7185, %v7191
        %v7285 = vsel %vm7145, %v7185, %v7191
        %v7286 = vsel %vm7146, %v7185, %v7191
        %v7287 = vsel %vm7147, %v7185, %v7191
        %v7288 = vsel %vm7148, %v7185, %v7191
        %v7289 = vsel %vm7149, %v7185, %v7191
        %v7290 = vsel %vm7150, %v7185, %v7191
        %v7291 = vsel %vm7151, %v7185, %v7191
        %v7292 = vsel %vm7152, %v7185, %v7191
        %v7293 = vsel %vm7153, %v7185, %v7191
        %v7294 = vsel %vm7154, %v7185, %v7191
        %v7295 = vsel %vm7155, %v7185, %v7191
        %v7296 = vsel %vm7156, %v7185, %v7191
        %v7297 = vsel %vm7157, %v7185, %v7191
        %v7298 = vsel %vm7158, %v7185, %v7191
        %v7299 = vsel %vm7159, %v7185, %v7191
        %v7300 = vsel %vm7160, %v7185, %v7191
        %v7301 = vsel %vm7161, %v7185, %v7191
        %v7302 = vsel %vm7162, %v7185, %v7191
        %v7303 = vsel %vm7163, %v7185, %v7191
        %v7304 = vsel %vm7164, %v7185, %v7191
        %v7305 = vsel %vm7165, %v7185, %v7191
        %v7306 = vsel %vm7166, %v7185, %v7191
        %v7307 = vsel %vm7167, %v7185, %v7191
        %v7308 = vsel %vm7168, %v7185, %v7191
        %v7309 = vsel %vm7169, %v7185, %v7191
        %v7310 = vsel %vm7170, %v7185, %v7191
        %v7311 = vsel %vm7171, %v7185, %v7191
        %v7312 = vsel %vm7172, %v7185, %v7191
        %v7313 = vsel %vm7173, %v7185, %v7191
        %v7314 = vsel %vm7174, %v7185, %v7191
        %v7315 = vsel %vm7175, %v7185, %v7191
        %v7316 = vsel %vm7176, %v7185, %v7191
        %v7317 = vsel %vm7177, %v7185, %v7191
        %v7318 = vsel %vm7178, %v7185, %v7191
        %v7319 = vsel %vm7179, %v7185, %v7191
        %v7320 = vsel %vm7180, %v7185, %v7191
        %v7321 = vmul.f32 %v6285, %v7193
        %v7322 = vmul.f32 %v6291, %v7194
        %v7323 = vmul.f32 %v6297, %v7195
        %v7324 = vmul.f32 %v6303, %v7196
        %v7325 = vmul.f32 %v6309, %v7197
        %v7326 = vmul.f32 %v6315, %v7198
        %v7327 = vmul.f32 %v6321, %v7199
        %v7328 = vmul.f32 %v6327, %v7200
        %v7329 = vmul.f32 %v6333, %v7201
        %v7330 = vmul.f32 %v6339, %v7202
        %v7331 = vmul.f32 %v6345, %v7203
        %v7332 = vmul.f32 %v6351, %v7204
        %v7333 = vmul.f32 %v6357, %v7205
        %v7334 = vmul.f32 %v6363, %v7206
        %v7335 = vmul.f32 %v6369, %v7207
        %v7336 = vmul.f32 %v6375, %v7208
        %v7337 = vmul.f32 %v6381, %v7209
        %v7338 = vmul.f32 %v6387, %v7210
        %v7339 = vmul.f32 %v6393, %v7211
        %v7340 = vmul.f32 %v6399, %v7212
        %v7341 = vmul.f32 %v6405, %v7213
        %v7342 = vmul.f32 %v6411, %v7214
        %v7343 = vmul.f32 %v6417, %v7215
        %v7344 = vmul.f32 %v6423, %v7216
        %v7345 = vmul.f32 %v6429, %v7217
        %v7346 = vmul.f32 %v6435, %v7218
        %v7347 = vmul.f32 %v6441, %v7219
        %v7348 = vmul.f32 %v6447, %v7220
        %v7349 = vmul.f32 %v6453, %v7221
        %v7350 = vmul.f32 %v6459, %v7222
        %v7351 = vmul.f32 %v6465, %v7223
        %v7352 = vmul.f32 %v6471, %v7224
        %v7353 = vmul.f32 %v6477, %v7225
        %v7354 = vmul.f32 %v6483, %v7226
        %v7355 = vmul.f32 %v6489, %v7227
        %v7356 = vmul.f32 %v6495, %v7228
        %v7357 = vmul.f32 %v6501, %v7229
        %v7358 = vmul.f32 %v6507, %v7230
        %v7359 = vmul.f32 %v6513, %v7231
        %v7360 = vmul.f32 %v6519, %v7232
        %v7361 = vmul.f32 %v6525, %v7233
        %v7362 = vmul.f32 %v6531, %v7234
        %v7363 = vmul.f32 %v6537, %v7235
        %v7364 = vmul.f32 %v6543, %v7236
        %v7365 = vmul.f32 %v6549, %v7237
        %v7366 = vmul.f32 %v6555, %v7238
        %v7367 = vmul.f32 %v6561, %v7239
        %v7368 = vmul.f32 %v6567, %v7240
        %v7369 = vmul.f32 %v6573, %v7241
        %v7370 = vmul.f32 %v6579, %v7242
        %v7371 = vmul.f32 %v6585, %v7243
        %v7372 = vmul.f32 %v6591, %v7244
        %v7373 = vmul.f32 %v6597, %v7245
        %v7374 = vmul.f32 %v6603, %v7246
        %v7375 = vmul.f32 %v6609, %v7247
        %v7376 = vmul.f32 %v6615, %v7248
        %v7377 = vmul.f32 %v6621, %v7249
        %v7378 = vmul.f32 %v6627, %v7250
        %v7379 = vmul.f32 %v6633, %v7251
        %v7380 = vmul.f32 %v6639, %v7252
        %v7381 = vmul.f32 %v6645, %v7253
        %v7382 = vmul.f32 %v6651, %v7254
        %v7383 = vmul.f32 %v6657, %v7255
        %v7384 = vmul.f32 %v6663, %v7256
        %v7385 = vmul.f32 %v6669, %v7257
        %v7386 = vmul.f32 %v6675, %v7258
        %v7387 = vmul.f32 %v6681, %v7259
        %v7388 = vmul.f32 %v6687, %v7260
        %v7389 = vmul.f32 %v6693, %v7261
        %v7390 = vmul.f32 %v6699, %v7262
        %v7391 = vmul.f32 %v6705, %v7263
        %v7392 = vmul.f32 %v6711, %v7264
        %v7393 = vmul.f32 %v6717, %v7265
        %v7394 = vmul.f32 %v6723, %v7266
        %v7395 = vmul.f32 %v6729, %v7267
        %v7396 = vmul.f32 %v6735, %v7268
        %v7397 = vmul.f32 %v6741, %v7269
        %v7398 = vmul.f32 %v6747, %v7270
        %v7399 = vmul.f32 %v6753, %v7271
        %v7400 = vmul.f32 %v6759, %v7272
        %v7401 = vmul.f32 %v6765, %v7273
        %v7402 = vmul.f32 %v6771, %v7274
        %v7403 = vmul.f32 %v6777, %v7275
        %v7404 = vmul.f32 %v6783, %v7276
        %v7405 = vmul.f32 %v6789, %v7277
        %v7406 = vmul.f32 %v6795, %v7278
        %v7407 = vmul.f32 %v6801, %v7279
        %v7408 = vmul.f32 %v6807, %v7280
        %v7409 = vmul.f32 %v6813, %v7281
        %v7410 = vmul.f32 %v6819, %v7282
        %v7411 = vmul.f32 %v6825, %v7283
        %v7412 = vmul.f32 %v6831, %v7284
        %v7413 = vmul.f32 %v6837, %v7285
        %v7414 = vmul.f32 %v6843, %v7286
        %v7415 = vmul.f32 %v6849, %v7287
        %v7416 = vmul.f32 %v6855, %v7288
        %v7417 = vmul.f32 %v6861, %v7289
        %v7418 = vmul.f32 %v6867, %v7290
        %v7419 = vmul.f32 %v6873, %v7291
        %v7420 = vmul.f32 %v6879, %v7292
        %v7421 = vmul.f32 %v6885, %v7293
        %v7422 = vmul.f32 %v6891, %v7294
        %v7423 = vmul.f32 %v6897, %v7295
        %v7424 = vmul.f32 %v6903, %v7296
        %v7425 = vmul.f32 %v6909, %v7297
        %v7426 = vmul.f32 %v6915, %v7298
        %v7427 = vmul.f32 %v6921, %v7299
        %v7428 = vmul.f32 %v6927, %v7300
        %v7429 = vmul.f32 %v6933, %v7301
        %v7430 = vmul.f32 %v6939, %v7302
        %v7431 = vmul.f32 %v6945, %v7303
        %v7432 = vmul.f32 %v6951, %v7304
        %v7433 = vmul.f32 %v6957, %v7305
        %v7434 = vmul.f32 %v6963, %v7306
        %v7435 = vmul.f32 %v6969, %v7307
        %v7436 = vmul.f32 %v6975, %v7308
        %v7437 = vmul.f32 %v6981, %v7309
        %v7438 = vmul.f32 %v6987, %v7310
        %v7439 = vmul.f32 %v6993, %v7311
        %v7440 = vmul.f32 %v6999, %v7312
        %v7441 = vmul.f32 %v7005, %v7313
        %v7442 = vmul.f32 %v7011, %v7314
        %v7443 = vmul.f32 %v7017, %v7315
        %v7444 = vmul.f32 %v7023, %v7316
        %v7445 = vmul.f32 %v7029, %v7317
        %v7446 = vmul.f32 %v7035, %v7318
        %v7447 = vmul.f32 %v7041, %v7319
        %v7448 = vmul.f32 %v7047, %v7320
        %v7449 = vsel %vm719, %v7321, 0.0
        %7450 = vadd.xlane.f32.xlu0 %v7449
        %v7451 = vpop.xlane.xlu0 %7450
        %v7452 = vsel %vm719, %v7322, 0.0
        %7453 = vadd.xlane.f32.xlu0 %v7452
        %v7454 = vpop.xlane.xlu0 %7453
        %v7455 = vsel %vm719, %v7323, 0.0
        %7456 = vadd.xlane.f32.xlu0 %v7455
        %v7457 = vpop.xlane.xlu0 %7456
        %v7458 = vsel %vm719, %v7324, 0.0
        %7459 = vadd.xlane.f32.xlu0 %v7458
        %v7460 = vpop.xlane.xlu0 %7459
        %v7461 = vsel %vm719, %v7325, 0.0
        %7462 = vadd.xlane.f32.xlu0 %v7461
        %v7463 = vpop.xlane.xlu0 %7462
        %v7464 = vsel %vm719, %v7326, 0.0
        %7465 = vadd.xlane.f32.xlu0 %v7464
        %v7466 = vpop.xlane.xlu0 %7465
        %v7467 = vsel %vm719, %v7327, 0.0
        %7468 = vadd.xlane.f32.xlu0 %v7467
        %v7469 = vpop.xlane.xlu0 %7468
        %v7470 = vsel %vm719, %v7328, 0.0
        %7471 = vadd.xlane.f32.xlu0 %v7470
        %v7472 = vpop.xlane.xlu0 %7471
        %v7473 = vsel %vm719, %v7329, 0.0
        %7474 = vadd.xlane.f32.xlu0 %v7473
        %v7475 = vpop.xlane.xlu0 %7474
        %v7476 = vsel %vm719, %v7330, 0.0
        %7477 = vadd.xlane.f32.xlu0 %v7476
        %v7478 = vpop.xlane.xlu0 %7477
        %v7479 = vsel %vm719, %v7331, 0.0
        %7480 = vadd.xlane.f32.xlu0 %v7479
        %v7481 = vpop.xlane.xlu0 %7480
        %v7482 = vsel %vm719, %v7332, 0.0
        %7483 = vadd.xlane.f32.xlu0 %v7482
        %v7484 = vpop.xlane.xlu0 %7483
        %v7485 = vsel %vm719, %v7333, 0.0
        %7486 = vadd.xlane.f32.xlu0 %v7485
        %v7487 = vpop.xlane.xlu0 %7486
        %v7488 = vsel %vm719, %v7334, 0.0
        %7489 = vadd.xlane.f32.xlu0 %v7488
        %v7490 = vpop.xlane.xlu0 %7489
        %v7491 = vsel %vm719, %v7335, 0.0
        %7492 = vadd.xlane.f32.xlu0 %v7491
        %v7493 = vpop.xlane.xlu0 %7492
        %v7494 = vsel %vm719, %v7336, 0.0
        %7495 = vadd.xlane.f32.xlu0 %v7494
        %v7496 = vpop.xlane.xlu0 %7495
        %v7497 = vsel %vm719, %v7337, 0.0
        %7498 = vadd.xlane.f32.xlu0 %v7497
        %v7499 = vpop.xlane.xlu0 %7498
        %v7500 = vsel %vm719, %v7338, 0.0
        %7501 = vadd.xlane.f32.xlu0 %v7500
        %v7502 = vpop.xlane.xlu0 %7501
        %v7503 = vsel %vm719, %v7339, 0.0
        %7504 = vadd.xlane.f32.xlu0 %v7503
        %v7505 = vpop.xlane.xlu0 %7504
        %v7506 = vsel %vm719, %v7340, 0.0
        %7507 = vadd.xlane.f32.xlu0 %v7506
        %v7508 = vpop.xlane.xlu0 %7507
        %v7509 = vsel %vm719, %v7341, 0.0
        %7510 = vadd.xlane.f32.xlu0 %v7509
        %v7511 = vpop.xlane.xlu0 %7510
        %v7512 = vsel %vm719, %v7342, 0.0
        %7513 = vadd.xlane.f32.xlu0 %v7512
        %v7514 = vpop.xlane.xlu0 %7513
        %v7515 = vsel %vm719, %v7343, 0.0
        %7516 = vadd.xlane.f32.xlu0 %v7515
        %v7517 = vpop.xlane.xlu0 %7516
        %v7518 = vsel %vm719, %v7344, 0.0
        %7519 = vadd.xlane.f32.xlu0 %v7518
        %v7520 = vpop.xlane.xlu0 %7519
        %v7521 = vsel %vm719, %v7345, 0.0
        %7522 = vadd.xlane.f32.xlu0 %v7521
        %v7523 = vpop.xlane.xlu0 %7522
        %v7524 = vsel %vm719, %v7346, 0.0
        %7525 = vadd.xlane.f32.xlu0 %v7524
        %v7526 = vpop.xlane.xlu0 %7525
        %v7527 = vsel %vm719, %v7347, 0.0
        %7528 = vadd.xlane.f32.xlu0 %v7527
        %v7529 = vpop.xlane.xlu0 %7528
        %v7530 = vsel %vm719, %v7348, 0.0
        %7531 = vadd.xlane.f32.xlu0 %v7530
        %v7532 = vpop.xlane.xlu0 %7531
        %v7533 = vsel %vm719, %v7349, 0.0
        %7534 = vadd.xlane.f32.xlu0 %v7533
        %v7535 = vpop.xlane.xlu0 %7534
        %v7536 = vsel %vm719, %v7350, 0.0
        %7537 = vadd.xlane.f32.xlu0 %v7536
        %v7538 = vpop.xlane.xlu0 %7537
        %v7539 = vsel %vm719, %v7351, 0.0
        %7540 = vadd.xlane.f32.xlu0 %v7539
        %v7541 = vpop.xlane.xlu0 %7540
        %v7542 = vsel %vm719, %v7352, 0.0
        %7543 = vadd.xlane.f32.xlu0 %v7542
        %v7544 = vpop.xlane.xlu0 %7543
        %v7545 = vsel %vm719, %v7353, 0.0
        %7546 = vadd.xlane.f32.xlu0 %v7545
        %v7547 = vpop.xlane.xlu0 %7546
        %v7548 = vsel %vm719, %v7354, 0.0
        %7549 = vadd.xlane.f32.xlu0 %v7548
        %v7550 = vpop.xlane.xlu0 %7549
        %v7551 = vsel %vm719, %v7355, 0.0
        %7552 = vadd.xlane.f32.xlu0 %v7551
        %v7553 = vpop.xlane.xlu0 %7552
        %v7554 = vsel %vm719, %v7356, 0.0
        %7555 = vadd.xlane.f32.xlu0 %v7554
        %v7556 = vpop.xlane.xlu0 %7555
        %v7557 = vsel %vm719, %v7357, 0.0
        %7558 = vadd.xlane.f32.xlu0 %v7557
        %v7559 = vpop.xlane.xlu0 %7558
        %v7560 = vsel %vm719, %v7358, 0.0
        %7561 = vadd.xlane.f32.xlu0 %v7560
        %v7562 = vpop.xlane.xlu0 %7561
        %v7563 = vsel %vm719, %v7359, 0.0
        %7564 = vadd.xlane.f32.xlu0 %v7563
        %v7565 = vpop.xlane.xlu0 %7564
        %v7566 = vsel %vm719, %v7360, 0.0
        %7567 = vadd.xlane.f32.xlu0 %v7566
        %v7568 = vpop.xlane.xlu0 %7567
        %v7569 = vsel %vm719, %v7361, 0.0
        %7570 = vadd.xlane.f32.xlu0 %v7569
        %v7571 = vpop.xlane.xlu0 %7570
        %v7572 = vsel %vm719, %v7362, 0.0
        %7573 = vadd.xlane.f32.xlu0 %v7572
        %v7574 = vpop.xlane.xlu0 %7573
        %v7575 = vsel %vm719, %v7363, 0.0
        %7576 = vadd.xlane.f32.xlu0 %v7575
        %v7577 = vpop.xlane.xlu0 %7576
        %v7578 = vsel %vm719, %v7364, 0.0
        %7579 = vadd.xlane.f32.xlu0 %v7578
        %v7580 = vpop.xlane.xlu0 %7579
        %v7581 = vsel %vm719, %v7365, 0.0
        %7582 = vadd.xlane.f32.xlu0 %v7581
        %v7583 = vpop.xlane.xlu0 %7582
        %v7584 = vsel %vm719, %v7366, 0.0
        %7585 = vadd.xlane.f32.xlu0 %v7584
        %v7586 = vpop.xlane.xlu0 %7585
        %v7587 = vsel %vm719, %v7367, 0.0
        %7588 = vadd.xlane.f32.xlu0 %v7587
        %v7589 = vpop.xlane.xlu0 %7588
        %v7590 = vsel %vm719, %v7368, 0.0
        %7591 = vadd.xlane.f32.xlu0 %v7590
        %v7592 = vpop.xlane.xlu0 %7591
        %v7593 = vsel %vm719, %v7369, 0.0
        %7594 = vadd.xlane.f32.xlu0 %v7593
        %v7595 = vpop.xlane.xlu0 %7594
        %v7596 = vsel %vm719, %v7370, 0.0
        %7597 = vadd.xlane.f32.xlu0 %v7596
        %v7598 = vpop.xlane.xlu0 %7597
        %v7599 = vsel %vm719, %v7371, 0.0
        %7600 = vadd.xlane.f32.xlu0 %v7599
        %v7601 = vpop.xlane.xlu0 %7600
        %v7602 = vsel %vm719, %v7372, 0.0
        %7603 = vadd.xlane.f32.xlu0 %v7602
        %v7604 = vpop.xlane.xlu0 %7603
        %v7605 = vsel %vm719, %v7373, 0.0
        %7606 = vadd.xlane.f32.xlu0 %v7605
        %v7607 = vpop.xlane.xlu0 %7606
        %v7608 = vsel %vm719, %v7374, 0.0
        %7609 = vadd.xlane.f32.xlu0 %v7608
        %v7610 = vpop.xlane.xlu0 %7609
        %v7611 = vsel %vm719, %v7375, 0.0
        %7612 = vadd.xlane.f32.xlu0 %v7611
        %v7613 = vpop.xlane.xlu0 %7612
        %v7614 = vsel %vm719, %v7376, 0.0
        %7615 = vadd.xlane.f32.xlu0 %v7614
        %v7616 = vpop.xlane.xlu0 %7615
        %v7617 = vsel %vm719, %v7377, 0.0
        %7618 = vadd.xlane.f32.xlu0 %v7617
        %v7619 = vpop.xlane.xlu0 %7618
        %v7620 = vsel %vm719, %v7378, 0.0
        %7621 = vadd.xlane.f32.xlu0 %v7620
        %v7622 = vpop.xlane.xlu0 %7621
        %v7623 = vsel %vm719, %v7379, 0.0
        %7624 = vadd.xlane.f32.xlu0 %v7623
        %v7625 = vpop.xlane.xlu0 %7624
        %v7626 = vsel %vm719, %v7380, 0.0
        %7627 = vadd.xlane.f32.xlu0 %v7626
        %v7628 = vpop.xlane.xlu0 %7627
        %v7629 = vsel %vm719, %v7381, 0.0
        %7630 = vadd.xlane.f32.xlu0 %v7629
        %v7631 = vpop.xlane.xlu0 %7630
        %v7632 = vsel %vm719, %v7382, 0.0
        %7633 = vadd.xlane.f32.xlu0 %v7632
        %v7634 = vpop.xlane.xlu0 %7633
        %v7635 = vsel %vm719, %v7383, 0.0
        %7636 = vadd.xlane.f32.xlu0 %v7635
        %v7637 = vpop.xlane.xlu0 %7636
        %v7638 = vsel %vm719, %v7384, 0.0
        %7639 = vadd.xlane.f32.xlu0 %v7638
        %v7640 = vpop.xlane.xlu0 %7639
        %v7641 = vsel %vm719, %v7385, 0.0
        %7642 = vadd.xlane.f32.xlu0 %v7641
        %v7643 = vpop.xlane.xlu0 %7642
        %v7644 = vsel %vm719, %v7386, 0.0
        %7645 = vadd.xlane.f32.xlu0 %v7644
        %v7646 = vpop.xlane.xlu0 %7645
        %v7647 = vsel %vm719, %v7387, 0.0
        %7648 = vadd.xlane.f32.xlu0 %v7647
        %v7649 = vpop.xlane.xlu0 %7648
        %v7650 = vsel %vm719, %v7388, 0.0
        %7651 = vadd.xlane.f32.xlu0 %v7650
        %v7652 = vpop.xlane.xlu0 %7651
        %v7653 = vsel %vm719, %v7389, 0.0
        %7654 = vadd.xlane.f32.xlu0 %v7653
        %v7655 = vpop.xlane.xlu0 %7654
        %v7656 = vsel %vm719, %v7390, 0.0
        %7657 = vadd.xlane.f32.xlu0 %v7656
        %v7658 = vpop.xlane.xlu0 %7657
        %v7659 = vsel %vm719, %v7391, 0.0
        %7660 = vadd.xlane.f32.xlu0 %v7659
        %v7661 = vpop.xlane.xlu0 %7660
        %v7662 = vsel %vm719, %v7392, 0.0
        %7663 = vadd.xlane.f32.xlu0 %v7662
        %v7664 = vpop.xlane.xlu0 %7663
        %v7665 = vsel %vm719, %v7393, 0.0
        %7666 = vadd.xlane.f32.xlu0 %v7665
        %v7667 = vpop.xlane.xlu0 %7666
        %v7668 = vsel %vm719, %v7394, 0.0
        %7669 = vadd.xlane.f32.xlu0 %v7668
        %v7670 = vpop.xlane.xlu0 %7669
        %v7671 = vsel %vm719, %v7395, 0.0
        %7672 = vadd.xlane.f32.xlu0 %v7671
        %v7673 = vpop.xlane.xlu0 %7672
        %v7674 = vsel %vm719, %v7396, 0.0
        %7675 = vadd.xlane.f32.xlu0 %v7674
        %v7676 = vpop.xlane.xlu0 %7675
        %v7677 = vsel %vm719, %v7397, 0.0
        %7678 = vadd.xlane.f32.xlu0 %v7677
        %v7679 = vpop.xlane.xlu0 %7678
        %v7680 = vsel %vm719, %v7398, 0.0
        %7681 = vadd.xlane.f32.xlu0 %v7680
        %v7682 = vpop.xlane.xlu0 %7681
        %v7683 = vsel %vm719, %v7399, 0.0
        %7684 = vadd.xlane.f32.xlu0 %v7683
        %v7685 = vpop.xlane.xlu0 %7684
        %v7686 = vsel %vm719, %v7400, 0.0
        %7687 = vadd.xlane.f32.xlu0 %v7686
        %v7688 = vpop.xlane.xlu0 %7687
        %v7689 = vsel %vm719, %v7401, 0.0
        %7690 = vadd.xlane.f32.xlu0 %v7689
        %v7691 = vpop.xlane.xlu0 %7690
        %v7692 = vsel %vm719, %v7402, 0.0
        %7693 = vadd.xlane.f32.xlu0 %v7692
        %v7694 = vpop.xlane.xlu0 %7693
        %v7695 = vsel %vm719, %v7403, 0.0
        %7696 = vadd.xlane.f32.xlu0 %v7695
        %v7697 = vpop.xlane.xlu0 %7696
        %v7698 = vsel %vm719, %v7404, 0.0
        %7699 = vadd.xlane.f32.xlu0 %v7698
        %v7700 = vpop.xlane.xlu0 %7699
        %v7701 = vsel %vm719, %v7405, 0.0
        %7702 = vadd.xlane.f32.xlu0 %v7701
        %v7703 = vpop.xlane.xlu0 %7702
        %v7704 = vsel %vm719, %v7406, 0.0
        %7705 = vadd.xlane.f32.xlu0 %v7704
        %v7706 = vpop.xlane.xlu0 %7705
        %v7707 = vsel %vm719, %v7407, 0.0
        %7708 = vadd.xlane.f32.xlu0 %v7707
        %v7709 = vpop.xlane.xlu0 %7708
        %v7710 = vsel %vm719, %v7408, 0.0
        %7711 = vadd.xlane.f32.xlu0 %v7710
        %v7712 = vpop.xlane.xlu0 %7711
        %v7713 = vsel %vm719, %v7409, 0.0
        %7714 = vadd.xlane.f32.xlu0 %v7713
        %v7715 = vpop.xlane.xlu0 %7714
        %v7716 = vsel %vm719, %v7410, 0.0
        %7717 = vadd.xlane.f32.xlu0 %v7716
        %v7718 = vpop.xlane.xlu0 %7717
        %v7719 = vsel %vm719, %v7411, 0.0
        %7720 = vadd.xlane.f32.xlu0 %v7719
        %v7721 = vpop.xlane.xlu0 %7720
        %v7722 = vsel %vm719, %v7412, 0.0
        %7723 = vadd.xlane.f32.xlu0 %v7722
        %v7724 = vpop.xlane.xlu0 %7723
        %v7725 = vsel %vm719, %v7413, 0.0
        %7726 = vadd.xlane.f32.xlu0 %v7725
        %v7727 = vpop.xlane.xlu0 %7726
        %v7728 = vsel %vm719, %v7414, 0.0
        %7729 = vadd.xlane.f32.xlu0 %v7728
        %v7730 = vpop.xlane.xlu0 %7729
        %v7731 = vsel %vm719, %v7415, 0.0
        %7732 = vadd.xlane.f32.xlu0 %v7731
        %v7733 = vpop.xlane.xlu0 %7732
        %v7734 = vsel %vm719, %v7416, 0.0
        %7735 = vadd.xlane.f32.xlu0 %v7734
        %v7736 = vpop.xlane.xlu0 %7735
        %v7737 = vsel %vm719, %v7417, 0.0
        %7738 = vadd.xlane.f32.xlu0 %v7737
        %v7739 = vpop.xlane.xlu0 %7738
        %v7740 = vsel %vm719, %v7418, 0.0
        %7741 = vadd.xlane.f32.xlu0 %v7740
        %v7742 = vpop.xlane.xlu0 %7741
        %v7743 = vsel %vm719, %v7419, 0.0
        %7744 = vadd.xlane.f32.xlu0 %v7743
        %v7745 = vpop.xlane.xlu0 %7744
        %v7746 = vsel %vm719, %v7420, 0.0
        %7747 = vadd.xlane.f32.xlu0 %v7746
        %v7748 = vpop.xlane.xlu0 %7747
        %v7749 = vsel %vm719, %v7421, 0.0
        %7750 = vadd.xlane.f32.xlu0 %v7749
        %v7751 = vpop.xlane.xlu0 %7750
        %v7752 = vsel %vm719, %v7422, 0.0
        %7753 = vadd.xlane.f32.xlu0 %v7752
        %v7754 = vpop.xlane.xlu0 %7753
        %v7755 = vsel %vm719, %v7423, 0.0
        %7756 = vadd.xlane.f32.xlu0 %v7755
        %v7757 = vpop.xlane.xlu0 %7756
        %v7758 = vsel %vm719, %v7424, 0.0
        %7759 = vadd.xlane.f32.xlu0 %v7758
        %v7760 = vpop.xlane.xlu0 %7759
        %v7761 = vsel %vm719, %v7425, 0.0
        %7762 = vadd.xlane.f32.xlu0 %v7761
        %v7763 = vpop.xlane.xlu0 %7762
        %v7764 = vsel %vm719, %v7426, 0.0
        %7765 = vadd.xlane.f32.xlu0 %v7764
        %v7766 = vpop.xlane.xlu0 %7765
        %v7767 = vsel %vm719, %v7427, 0.0
        %7768 = vadd.xlane.f32.xlu0 %v7767
        %v7769 = vpop.xlane.xlu0 %7768
        %v7770 = vsel %vm719, %v7428, 0.0
        %7771 = vadd.xlane.f32.xlu0 %v7770
        %v7772 = vpop.xlane.xlu0 %7771
        %v7773 = vsel %vm719, %v7429, 0.0
        %7774 = vadd.xlane.f32.xlu0 %v7773
        %v7775 = vpop.xlane.xlu0 %7774
        %v7776 = vsel %vm719, %v7430, 0.0
        %7777 = vadd.xlane.f32.xlu0 %v7776
        %v7778 = vpop.xlane.xlu0 %7777
        %v7779 = vsel %vm719, %v7431, 0.0
        %7780 = vadd.xlane.f32.xlu0 %v7779
        %v7781 = vpop.xlane.xlu0 %7780
        %v7782 = vsel %vm719, %v7432, 0.0
        %7783 = vadd.xlane.f32.xlu0 %v7782
        %v7784 = vpop.xlane.xlu0 %7783
        %v7785 = vsel %vm719, %v7433, 0.0
        %7786 = vadd.xlane.f32.xlu0 %v7785
        %v7787 = vpop.xlane.xlu0 %7786
        %v7788 = vsel %vm719, %v7434, 0.0
        %7789 = vadd.xlane.f32.xlu0 %v7788
        %v7790 = vpop.xlane.xlu0 %7789
        %v7791 = vsel %vm719, %v7435, 0.0
        %7792 = vadd.xlane.f32.xlu0 %v7791
        %v7793 = vpop.xlane.xlu0 %7792
        %v7794 = vsel %vm719, %v7436, 0.0
        %7795 = vadd.xlane.f32.xlu0 %v7794
        %v7796 = vpop.xlane.xlu0 %7795
        %v7797 = vsel %vm719, %v7437, 0.0
        %7798 = vadd.xlane.f32.xlu0 %v7797
        %v7799 = vpop.xlane.xlu0 %7798
        %v7800 = vsel %vm719, %v7438, 0.0
        %7801 = vadd.xlane.f32.xlu0 %v7800
        %v7802 = vpop.xlane.xlu0 %7801
        %v7803 = vsel %vm719, %v7439, 0.0
        %7804 = vadd.xlane.f32.xlu0 %v7803
        %v7805 = vpop.xlane.xlu0 %7804
        %v7806 = vsel %vm719, %v7440, 0.0
        %7807 = vadd.xlane.f32.xlu0 %v7806
        %v7808 = vpop.xlane.xlu0 %7807
        %v7809 = vsel %vm719, %v7441, 0.0
        %7810 = vadd.xlane.f32.xlu0 %v7809
        %v7811 = vpop.xlane.xlu0 %7810
        %v7812 = vsel %vm719, %v7442, 0.0
        %7813 = vadd.xlane.f32.xlu0 %v7812
        %v7814 = vpop.xlane.xlu0 %7813
        %v7815 = vsel %vm719, %v7443, 0.0
        %7816 = vadd.xlane.f32.xlu0 %v7815
        %v7817 = vpop.xlane.xlu0 %7816
        %v7818 = vsel %vm719, %v7444, 0.0
        %7819 = vadd.xlane.f32.xlu0 %v7818
        %v7820 = vpop.xlane.xlu0 %7819
        %v7821 = vsel %vm719, %v7445, 0.0
        %7822 = vadd.xlane.f32.xlu0 %v7821
        %v7823 = vpop.xlane.xlu0 %7822
        %v7824 = vsel %vm719, %v7446, 0.0
        %7825 = vadd.xlane.f32.xlu0 %v7824
        %v7826 = vpop.xlane.xlu0 %7825
        %v7827 = vsel %vm719, %v7447, 0.0
        %7828 = vadd.xlane.f32.xlu0 %v7827
        %v7829 = vpop.xlane.xlu0 %7828
        %v7830 = vsel %vm719, %v7448, 0.0
        %7831 = vadd.xlane.f32.xlu0 %v7830
        %v7832 = vpop.xlane.xlu0 %7831
        %v7833 = vstv %s338
        %v7834 = vadd.f32 %v7451, %v7833
        %v7835 = vadd.f32 %v7454, %v7833
        %v7836 = vadd.f32 %v7457, %v7833
        %v7837 = vadd.f32 %v7460, %v7833
        %v7838 = vadd.f32 %v7463, %v7833
        %v7839 = vadd.f32 %v7466, %v7833
        %v7840 = vadd.f32 %v7469, %v7833
        %v7841 = vadd.f32 %v7472, %v7833
        %v7842 = vadd.f32 %v7475, %v7833
        %v7843 = vadd.f32 %v7478, %v7833
        %v7844 = vadd.f32 %v7481, %v7833
        %v7845 = vadd.f32 %v7484, %v7833
        %v7846 = vadd.f32 %v7487, %v7833
        %v7847 = vadd.f32 %v7490, %v7833
        %v7848 = vadd.f32 %v7493, %v7833
        %v7849 = vadd.f32 %v7496, %v7833
        %v7850 = vadd.f32 %v7499, %v7833
        %v7851 = vadd.f32 %v7502, %v7833
        %v7852 = vadd.f32 %v7505, %v7833
        %v7853 = vadd.f32 %v7508, %v7833
        %v7854 = vadd.f32 %v7511, %v7833
        %v7855 = vadd.f32 %v7514, %v7833
        %v7856 = vadd.f32 %v7517, %v7833
        %v7857 = vadd.f32 %v7520, %v7833
        %v7858 = vadd.f32 %v7523, %v7833
        %v7859 = vadd.f32 %v7526, %v7833
        %v7860 = vadd.f32 %v7529, %v7833
        %v7861 = vadd.f32 %v7532, %v7833
        %v7862 = vadd.f32 %v7535, %v7833
        %v7863 = vadd.f32 %v7538, %v7833
        %v7864 = vadd.f32 %v7541, %v7833
        %v7865 = vadd.f32 %v7544, %v7833
        %v7866 = vadd.f32 %v7547, %v7833
        %v7867 = vadd.f32 %v7550, %v7833
        %v7868 = vadd.f32 %v7553, %v7833
        %v7869 = vadd.f32 %v7556, %v7833
        %v7870 = vadd.f32 %v7559, %v7833
        %v7871 = vadd.f32 %v7562, %v7833
        %v7872 = vadd.f32 %v7565, %v7833
        %v7873 = vadd.f32 %v7568, %v7833
        %v7874 = vadd.f32 %v7571, %v7833
        %v7875 = vadd.f32 %v7574, %v7833
        %v7876 = vadd.f32 %v7577, %v7833
        %v7877 = vadd.f32 %v7580, %v7833
        %v7878 = vadd.f32 %v7583, %v7833
        %v7879 = vadd.f32 %v7586, %v7833
        %v7880 = vadd.f32 %v7589, %v7833
        %v7881 = vadd.f32 %v7592, %v7833
        %v7882 = vadd.f32 %v7595, %v7833
        %v7883 = vadd.f32 %v7598, %v7833
        %v7884 = vadd.f32 %v7601, %v7833
        %v7885 = vadd.f32 %v7604, %v7833
        %v7886 = vadd.f32 %v7607, %v7833
        %v7887 = vadd.f32 %v7610, %v7833
        %v7888 = vadd.f32 %v7613, %v7833
        %v7889 = vadd.f32 %v7616, %v7833
        %v7890 = vadd.f32 %v7619, %v7833
        %v7891 = vadd.f32 %v7622, %v7833
        %v7892 = vadd.f32 %v7625, %v7833
        %v7893 = vadd.f32 %v7628, %v7833
        %v7894 = vadd.f32 %v7631, %v7833
        %v7895 = vadd.f32 %v7634, %v7833
        %v7896 = vadd.f32 %v7637, %v7833
        %v7897 = vadd.f32 %v7640, %v7833
        %v7898 = vadd.f32 %v7643, %v7833
        %v7899 = vadd.f32 %v7646, %v7833
        %v7900 = vadd.f32 %v7649, %v7833
        %v7901 = vadd.f32 %v7652, %v7833
        %v7902 = vadd.f32 %v7655, %v7833
        %v7903 = vadd.f32 %v7658, %v7833
        %v7904 = vadd.f32 %v7661, %v7833
        %v7905 = vadd.f32 %v7664, %v7833
        %v7906 = vadd.f32 %v7667, %v7833
        %v7907 = vadd.f32 %v7670, %v7833
        %v7908 = vadd.f32 %v7673, %v7833
        %v7909 = vadd.f32 %v7676, %v7833
        %v7910 = vadd.f32 %v7679, %v7833
        %v7911 = vadd.f32 %v7682, %v7833
        %v7912 = vadd.f32 %v7685, %v7833
        %v7913 = vadd.f32 %v7688, %v7833
        %v7914 = vadd.f32 %v7691, %v7833
        %v7915 = vadd.f32 %v7694, %v7833
        %v7916 = vadd.f32 %v7697, %v7833
        %v7917 = vadd.f32 %v7700, %v7833
        %v7918 = vadd.f32 %v7703, %v7833
        %v7919 = vadd.f32 %v7706, %v7833
        %v7920 = vadd.f32 %v7709, %v7833
        %v7921 = vadd.f32 %v7712, %v7833
        %v7922 = vadd.f32 %v7715, %v7833
        %v7923 = vadd.f32 %v7718, %v7833
        %v7924 = vadd.f32 %v7721, %v7833
        %v7925 = vadd.f32 %v7724, %v7833
        %v7926 = vadd.f32 %v7727, %v7833
        %v7927 = vadd.f32 %v7730, %v7833
        %v7928 = vadd.f32 %v7733, %v7833
        %v7929 = vadd.f32 %v7736, %v7833
        %v7930 = vadd.f32 %v7739, %v7833
        %v7931 = vadd.f32 %v7742, %v7833
        %v7932 = vadd.f32 %v7745, %v7833
        %v7933 = vadd.f32 %v7748, %v7833
        %v7934 = vadd.f32 %v7751, %v7833
        %v7935 = vadd.f32 %v7754, %v7833
        %v7936 = vadd.f32 %v7757, %v7833
        %v7937 = vadd.f32 %v7760, %v7833
        %v7938 = vadd.f32 %v7763, %v7833
        %v7939 = vadd.f32 %v7766, %v7833
        %v7940 = vadd.f32 %v7769, %v7833
        %v7941 = vadd.f32 %v7772, %v7833
        %v7942 = vadd.f32 %v7775, %v7833
        %v7943 = vadd.f32 %v7778, %v7833
        %v7944 = vadd.f32 %v7781, %v7833
        %v7945 = vadd.f32 %v7784, %v7833
        %v7946 = vadd.f32 %v7787, %v7833
        %v7947 = vadd.f32 %v7790, %v7833
        %v7948 = vadd.f32 %v7793, %v7833
        %v7949 = vadd.f32 %v7796, %v7833
        %v7950 = vadd.f32 %v7799, %v7833
        %v7951 = vadd.f32 %v7802, %v7833
        %v7952 = vadd.f32 %v7805, %v7833
        %v7953 = vadd.f32 %v7808, %v7833
        %v7954 = vadd.f32 %v7811, %v7833
        %v7955 = vadd.f32 %v7814, %v7833
        %v7956 = vadd.f32 %v7817, %v7833
        %v7957 = vadd.f32 %v7820, %v7833
        %v7958 = vadd.f32 %v7823, %v7833
        %v7959 = vadd.f32 %v7826, %v7833
        %v7960 = vadd.f32 %v7829, %v7833
        %v7961 = vadd.f32 %v7832, %v7833
        %v7962 = vxor.u32 %v7834, 2147483648
        %v7963 = vxor.u32 %v7835, 2147483648
        %v7964 = vxor.u32 %v7836, 2147483648
        %v7965 = vxor.u32 %v7837, 2147483648
        %v7966 = vxor.u32 %v7838, 2147483648
        %v7967 = vxor.u32 %v7839, 2147483648
        %v7968 = vxor.u32 %v7840, 2147483648
        %v7969 = vxor.u32 %v7841, 2147483648
        %v7970 = vxor.u32 %v7842, 2147483648
        %v7971 = vxor.u32 %v7843, 2147483648
        %v7972 = vxor.u32 %v7844, 2147483648
        %v7973 = vxor.u32 %v7845, 2147483648
        %v7974 = vxor.u32 %v7846, 2147483648
        %v7975 = vxor.u32 %v7847, 2147483648
        %v7976 = vxor.u32 %v7848, 2147483648
        %v7977 = vxor.u32 %v7849, 2147483648
        %v7978 = vxor.u32 %v7850, 2147483648
        %v7979 = vxor.u32 %v7851, 2147483648
        %v7980 = vxor.u32 %v7852, 2147483648
        %v7981 = vxor.u32 %v7853, 2147483648
        %v7982 = vxor.u32 %v7854, 2147483648
        %v7983 = vxor.u32 %v7855, 2147483648
        %v7984 = vxor.u32 %v7856, 2147483648
        %v7985 = vxor.u32 %v7857, 2147483648
        %v7986 = vxor.u32 %v7858, 2147483648
        %v7987 = vxor.u32 %v7859, 2147483648
        %v7988 = vxor.u32 %v7860, 2147483648
        %v7989 = vxor.u32 %v7861, 2147483648
        %v7990 = vxor.u32 %v7862, 2147483648
        %v7991 = vxor.u32 %v7863, 2147483648
        %v7992 = vxor.u32 %v7864, 2147483648
        %v7993 = vxor.u32 %v7865, 2147483648
        %v7994 = vxor.u32 %v7866, 2147483648
        %v7995 = vxor.u32 %v7867, 2147483648
        %v7996 = vxor.u32 %v7868, 2147483648
        %v7997 = vxor.u32 %v7869, 2147483648
        %v7998 = vxor.u32 %v7870, 2147483648
        %v7999 = vxor.u32 %v7871, 2147483648
        %v8000 = vxor.u32 %v7872, 2147483648
        %v8001 = vxor.u32 %v7873, 2147483648
        %v8002 = vxor.u32 %v7874, 2147483648
        %v8003 = vxor.u32 %v7875, 2147483648
        %v8004 = vxor.u32 %v7876, 2147483648
        %v8005 = vxor.u32 %v7877, 2147483648
        %v8006 = vxor.u32 %v7878, 2147483648
        %v8007 = vxor.u32 %v7879, 2147483648
        %v8008 = vxor.u32 %v7880, 2147483648
        %v8009 = vxor.u32 %v7881, 2147483648
        %v8010 = vxor.u32 %v7882, 2147483648
        %v8011 = vxor.u32 %v7883, 2147483648
        %v8012 = vxor.u32 %v7884, 2147483648
        %v8013 = vxor.u32 %v7885, 2147483648
        %v8014 = vxor.u32 %v7886, 2147483648
        %v8015 = vxor.u32 %v7887, 2147483648
        %v8016 = vxor.u32 %v7888, 2147483648
        %v8017 = vxor.u32 %v7889, 2147483648
        %v8018 = vxor.u32 %v7890, 2147483648
        %v8019 = vxor.u32 %v7891, 2147483648
        %v8020 = vxor.u32 %v7892, 2147483648
        %v8021 = vxor.u32 %v7893, 2147483648
        %v8022 = vxor.u32 %v7894, 2147483648
        %v8023 = vxor.u32 %v7895, 2147483648
        %v8024 = vxor.u32 %v7896, 2147483648
        %v8025 = vxor.u32 %v7897, 2147483648
        %v8026 = vxor.u32 %v7898, 2147483648
        %v8027 = vxor.u32 %v7899, 2147483648
        %v8028 = vxor.u32 %v7900, 2147483648
        %v8029 = vxor.u32 %v7901, 2147483648
        %v8030 = vxor.u32 %v7902, 2147483648
        %v8031 = vxor.u32 %v7903, 2147483648
        %v8032 = vxor.u32 %v7904, 2147483648
        %v8033 = vxor.u32 %v7905, 2147483648
        %v8034 = vxor.u32 %v7906, 2147483648
        %v8035 = vxor.u32 %v7907, 2147483648
        %v8036 = vxor.u32 %v7908, 2147483648
        %v8037 = vxor.u32 %v7909, 2147483648
        %v8038 = vxor.u32 %v7910, 2147483648
        %v8039 = vxor.u32 %v7911, 2147483648
        %v8040 = vxor.u32 %v7912, 2147483648
        %v8041 = vxor.u32 %v7913, 2147483648
        %v8042 = vxor.u32 %v7914, 2147483648
        %v8043 = vxor.u32 %v7915, 2147483648
        %v8044 = vxor.u32 %v7916, 2147483648
        %v8045 = vxor.u32 %v7917, 2147483648
        %v8046 = vxor.u32 %v7918, 2147483648
        %v8047 = vxor.u32 %v7919, 2147483648
        %v8048 = vxor.u32 %v7920, 2147483648
        %v8049 = vxor.u32 %v7921, 2147483648
        %v8050 = vxor.u32 %v7922, 2147483648
        %v8051 = vxor.u32 %v7923, 2147483648
        %v8052 = vxor.u32 %v7924, 2147483648
        %v8053 = vxor.u32 %v7925, 2147483648
        %v8054 = vxor.u32 %v7926, 2147483648
        %v8055 = vxor.u32 %v7927, 2147483648
        %v8056 = vxor.u32 %v7928, 2147483648
        %v8057 = vxor.u32 %v7929, 2147483648
        %v8058 = vxor.u32 %v7930, 2147483648
        %v8059 = vxor.u32 %v7931, 2147483648
        %v8060 = vxor.u32 %v7932, 2147483648
        %v8061 = vxor.u32 %v7933, 2147483648
        %v8062 = vxor.u32 %v7934, 2147483648
        %v8063 = vxor.u32 %v7935, 2147483648
        %v8064 = vxor.u32 %v7936, 2147483648
        %v8065 = vxor.u32 %v7937, 2147483648
        %v8066 = vxor.u32 %v7938, 2147483648
        %v8067 = vxor.u32 %v7939, 2147483648
        %v8068 = vxor.u32 %v7940, 2147483648
        %v8069 = vxor.u32 %v7941, 2147483648
        %v8070 = vxor.u32 %v7942, 2147483648
        %v8071 = vxor.u32 %v7943, 2147483648
        %v8072 = vxor.u32 %v7944, 2147483648
        %v8073 = vxor.u32 %v7945, 2147483648
        %v8074 = vxor.u32 %v7946, 2147483648
        %v8075 = vxor.u32 %v7947, 2147483648
        %v8076 = vxor.u32 %v7948, 2147483648
        %v8077 = vxor.u32 %v7949, 2147483648
        %v8078 = vxor.u32 %v7950, 2147483648
        %v8079 = vxor.u32 %v7951, 2147483648
        %v8080 = vxor.u32 %v7952, 2147483648
        %v8081 = vxor.u32 %v7953, 2147483648
        %v8082 = vxor.u32 %v7954, 2147483648
        %v8083 = vxor.u32 %v7955, 2147483648
        %v8084 = vxor.u32 %v7956, 2147483648
        %v8085 = vxor.u32 %v7957, 2147483648
        %v8086 = vxor.u32 %v7958, 2147483648
        %v8087 = vxor.u32 %v7959, 2147483648
        %v8088 = vxor.u32 %v7960, 2147483648
        %v8089 = vxor.u32 %v7961, 2147483648
        %v8090 = vmul.f32 %v7962, 1.442695
        %v8091 = vpow.pop %v8090
        %v8092 = vmul.f32 %v7963, 1.442695
        %v8093 = vpow.pop %v8092
        %v8094 = vmul.f32 %v7964, 1.442695
        %v8095 = vpow.pop %v8094
        %v8096 = vmul.f32 %v7965, 1.442695
        %v8097 = vpow.pop %v8096
        %v8098 = vmul.f32 %v7966, 1.442695
        %v8099 = vpow.pop %v8098
        %v8100 = vmul.f32 %v7967, 1.442695
        %v8101 = vpow.pop %v8100
        %v8102 = vmul.f32 %v7968, 1.442695
        %v8103 = vpow.pop %v8102
        %v8104 = vmul.f32 %v7969, 1.442695
        %v8105 = vpow.pop %v8104
        %v8106 = vmul.f32 %v7970, 1.442695
        %v8107 = vpow.pop %v8106
        %v8108 = vmul.f32 %v7971, 1.442695
        %v8109 = vpow.pop %v8108
        %v8110 = vmul.f32 %v7972, 1.442695
        %v8111 = vpow.pop %v8110
        %v8112 = vmul.f32 %v7973, 1.442695
        %v8113 = vpow.pop %v8112
        %v8114 = vmul.f32 %v7974, 1.442695
        %v8115 = vpow.pop %v8114
        %v8116 = vmul.f32 %v7975, 1.442695
        %v8117 = vpow.pop %v8116
        %v8118 = vmul.f32 %v7976, 1.442695
        %v8119 = vpow.pop %v8118
        %v8120 = vmul.f32 %v7977, 1.442695
        %v8121 = vpow.pop %v8120
        %v8122 = vmul.f32 %v7978, 1.442695
        %v8123 = vpow.pop %v8122
        %v8124 = vmul.f32 %v7979, 1.442695
        %v8125 = vpow.pop %v8124
        %v8126 = vmul.f32 %v7980, 1.442695
        %v8127 = vpow.pop %v8126
        %v8128 = vmul.f32 %v7981, 1.442695
        %v8129 = vpow.pop %v8128
        %v8130 = vmul.f32 %v7982, 1.442695
        %v8131 = vpow.pop %v8130
        %v8132 = vmul.f32 %v7983, 1.442695
        %v8133 = vpow.pop %v8132
        %v8134 = vmul.f32 %v7984, 1.442695
        %v8135 = vpow.pop %v8134
        %v8136 = vmul.f32 %v7985, 1.442695
        %v8137 = vpow.pop %v8136
        %v8138 = vmul.f32 %v7986, 1.442695
        %v8139 = vpow.pop %v8138
        %v8140 = vmul.f32 %v7987, 1.442695
        %v8141 = vpow.pop %v8140
        %v8142 = vmul.f32 %v7988, 1.442695
        %v8143 = vpow.pop %v8142
        %v8144 = vmul.f32 %v7989, 1.442695
        %v8145 = vpow.pop %v8144
        %v8146 = vmul.f32 %v7990, 1.442695
        %v8147 = vpow.pop %v8146
        %v8148 = vmul.f32 %v7991, 1.442695
        %v8149 = vpow.pop %v8148
        %v8150 = vmul.f32 %v7992, 1.442695
        %v8151 = vpow.pop %v8150
        %v8152 = vmul.f32 %v7993, 1.442695
        %v8153 = vpow.pop %v8152
        %v8154 = vmul.f32 %v7994, 1.442695
        %v8155 = vpow.pop %v8154
        %v8156 = vmul.f32 %v7995, 1.442695
        %v8157 = vpow.pop %v8156
        %v8158 = vmul.f32 %v7996, 1.442695
        %v8159 = vpow.pop %v8158
        %v8160 = vmul.f32 %v7997, 1.442695
        %v8161 = vpow.pop %v8160
        %v8162 = vmul.f32 %v7998, 1.442695
        %v8163 = vpow.pop %v8162
        %v8164 = vmul.f32 %v7999, 1.442695
        %v8165 = vpow.pop %v8164
        %v8166 = vmul.f32 %v8000, 1.442695
        %v8167 = vpow.pop %v8166
        %v8168 = vmul.f32 %v8001, 1.442695
        %v8169 = vpow.pop %v8168
        %v8170 = vmul.f32 %v8002, 1.442695
        %v8171 = vpow.pop %v8170
        %v8172 = vmul.f32 %v8003, 1.442695
        %v8173 = vpow.pop %v8172
        %v8174 = vmul.f32 %v8004, 1.442695
        %v8175 = vpow.pop %v8174
        %v8176 = vmul.f32 %v8005, 1.442695
        %v8177 = vpow.pop %v8176
        %v8178 = vmul.f32 %v8006, 1.442695
        %v8179 = vpow.pop %v8178
        %v8180 = vmul.f32 %v8007, 1.442695
        %v8181 = vpow.pop %v8180
        %v8182 = vmul.f32 %v8008, 1.442695
        %v8183 = vpow.pop %v8182
        %v8184 = vmul.f32 %v8009, 1.442695
        %v8185 = vpow.pop %v8184
        %v8186 = vmul.f32 %v8010, 1.442695
        %v8187 = vpow.pop %v8186
        %v8188 = vmul.f32 %v8011, 1.442695
        %v8189 = vpow.pop %v8188
        %v8190 = vmul.f32 %v8012, 1.442695
        %v8191 = vpow.pop %v8190
        %v8192 = vmul.f32 %v8013, 1.442695
        %v8193 = vpow.pop %v8192
        %v8194 = vmul.f32 %v8014, 1.442695
        %v8195 = vpow.pop %v8194
        %v8196 = vmul.f32 %v8015, 1.442695
        %v8197 = vpow.pop %v8196
        %v8198 = vmul.f32 %v8016, 1.442695
        %v8199 = vpow.pop %v8198
        %v8200 = vmul.f32 %v8017, 1.442695
        %v8201 = vpow.pop %v8200
        %v8202 = vmul.f32 %v8018, 1.442695
        %v8203 = vpow.pop %v8202
        %v8204 = vmul.f32 %v8019, 1.442695
        %v8205 = vpow.pop %v8204
        %v8206 = vmul.f32 %v8020, 1.442695
        %v8207 = vpow.pop %v8206
        %v8208 = vmul.f32 %v8021, 1.442695
        %v8209 = vpow.pop %v8208
        %v8210 = vmul.f32 %v8022, 1.442695
        %v8211 = vpow.pop %v8210
        %v8212 = vmul.f32 %v8023, 1.442695
        %v8213 = vpow.pop %v8212
        %v8214 = vmul.f32 %v8024, 1.442695
        %v8215 = vpow.pop %v8214
        %v8216 = vmul.f32 %v8025, 1.442695
        %v8217 = vpow.pop %v8216
        %v8218 = vmul.f32 %v8026, 1.442695
        %v8219 = vpow.pop %v8218
        %v8220 = vmul.f32 %v8027, 1.442695
        %v8221 = vpow.pop %v8220
        %v8222 = vmul.f32 %v8028, 1.442695
        %v8223 = vpow.pop %v8222
        %v8224 = vmul.f32 %v8029, 1.442695
        %v8225 = vpow.pop %v8224
        %v8226 = vmul.f32 %v8030, 1.442695
        %v8227 = vpow.pop %v8226
        %v8228 = vmul.f32 %v8031, 1.442695
        %v8229 = vpow.pop %v8228
        %v8230 = vmul.f32 %v8032, 1.442695
        %v8231 = vpow.pop %v8230
        %v8232 = vmul.f32 %v8033, 1.442695
        %v8233 = vpow.pop %v8232
        %v8234 = vmul.f32 %v8034, 1.442695
        %v8235 = vpow.pop %v8234
        %v8236 = vmul.f32 %v8035, 1.442695
        %v8237 = vpow.pop %v8236
        %v8238 = vmul.f32 %v8036, 1.442695
        %v8239 = vpow.pop %v8238
        %v8240 = vmul.f32 %v8037, 1.442695
        %v8241 = vpow.pop %v8240
        %v8242 = vmul.f32 %v8038, 1.442695
        %v8243 = vpow.pop %v8242
        %v8244 = vmul.f32 %v8039, 1.442695
        %v8245 = vpow.pop %v8244
        %v8246 = vmul.f32 %v8040, 1.442695
        %v8247 = vpow.pop %v8246
        %v8248 = vmul.f32 %v8041, 1.442695
        %v8249 = vpow.pop %v8248
        %v8250 = vmul.f32 %v8042, 1.442695
        %v8251 = vpow.pop %v8250
        %v8252 = vmul.f32 %v8043, 1.442695
        %v8253 = vpow.pop %v8252
        %v8254 = vmul.f32 %v8044, 1.442695
        %v8255 = vpow.pop %v8254
        %v8256 = vmul.f32 %v8045, 1.442695
        %v8257 = vpow.pop %v8256
        %v8258 = vmul.f32 %v8046, 1.442695
        %v8259 = vpow.pop %v8258
        %v8260 = vmul.f32 %v8047, 1.442695
        %v8261 = vpow.pop %v8260
        %v8262 = vmul.f32 %v8048, 1.442695
        %v8263 = vpow.pop %v8262
        %v8264 = vmul.f32 %v8049, 1.442695
        %v8265 = vpow.pop %v8264
        %v8266 = vmul.f32 %v8050, 1.442695
        %v8267 = vpow.pop %v8266
        %v8268 = vmul.f32 %v8051, 1.442695
        %v8269 = vpow.pop %v8268
        %v8270 = vmul.f32 %v8052, 1.442695
        %v8271 = vpow.pop %v8270
        %v8272 = vmul.f32 %v8053, 1.442695
        %v8273 = vpow.pop %v8272
        %v8274 = vmul.f32 %v8054, 1.442695
        %v8275 = vpow.pop %v8274
        %v8276 = vmul.f32 %v8055, 1.442695
        %v8277 = vpow.pop %v8276
        %v8278 = vmul.f32 %v8056, 1.442695
        %v8279 = vpow.pop %v8278
        %v8280 = vmul.f32 %v8057, 1.442695
        %v8281 = vpow.pop %v8280
        %v8282 = vmul.f32 %v8058, 1.442695
        %v8283 = vpow.pop %v8282
        %v8284 = vmul.f32 %v8059, 1.442695
        %v8285 = vpow.pop %v8284
        %v8286 = vmul.f32 %v8060, 1.442695
        %v8287 = vpow.pop %v8286
        %v8288 = vmul.f32 %v8061, 1.442695
        %v8289 = vpow.pop %v8288
        %v8290 = vmul.f32 %v8062, 1.442695
        %v8291 = vpow.pop %v8290
        %v8292 = vmul.f32 %v8063, 1.442695
        %v8293 = vpow.pop %v8292
        %v8294 = vmul.f32 %v8064, 1.442695
        %v8295 = vpow.pop %v8294
        %v8296 = vmul.f32 %v8065, 1.442695
        %v8297 = vpow.pop %v8296
        %v8298 = vmul.f32 %v8066, 1.442695
        %v8299 = vpow.pop %v8298
        %v8300 = vmul.f32 %v8067, 1.442695
        %v8301 = vpow.pop %v8300
        %v8302 = vmul.f32 %v8068, 1.442695
        %v8303 = vpow.pop %v8302
        %v8304 = vmul.f32 %v8069, 1.442695
        %v8305 = vpow.pop %v8304
        %v8306 = vmul.f32 %v8070, 1.442695
        %v8307 = vpow.pop %v8306
        %v8308 = vmul.f32 %v8071, 1.442695
        %v8309 = vpow.pop %v8308
        %v8310 = vmul.f32 %v8072, 1.442695
        %v8311 = vpow.pop %v8310
        %v8312 = vmul.f32 %v8073, 1.442695
        %v8313 = vpow.pop %v8312
        %v8314 = vmul.f32 %v8074, 1.442695
        %v8315 = vpow.pop %v8314
        %v8316 = vmul.f32 %v8075, 1.442695
        %v8317 = vpow.pop %v8316
        %v8318 = vmul.f32 %v8076, 1.442695
        %v8319 = vpow.pop %v8318
        %v8320 = vmul.f32 %v8077, 1.442695
        %v8321 = vpow.pop %v8320
        %v8322 = vmul.f32 %v8078, 1.442695
        %v8323 = vpow.pop %v8322
        %v8324 = vmul.f32 %v8079, 1.442695
        %v8325 = vpow.pop %v8324
        %v8326 = vmul.f32 %v8080, 1.442695
        %v8327 = vpow.pop %v8326
        %v8328 = vmul.f32 %v8081, 1.442695
        %v8329 = vpow.pop %v8328
        %v8330 = vmul.f32 %v8082, 1.442695
        %v8331 = vpow.pop %v8330
        %v8332 = vmul.f32 %v8083, 1.442695
        %v8333 = vpow.pop %v8332
        %v8334 = vmul.f32 %v8084, 1.442695
        %v8335 = vpow.pop %v8334
        %v8336 = vmul.f32 %v8085, 1.442695
        %v8337 = vpow.pop %v8336
        %v8338 = vmul.f32 %v8086, 1.442695
        %v8339 = vpow.pop %v8338
        %v8340 = vmul.f32 %v8087, 1.442695
        %v8341 = vpow.pop %v8340
        %v8342 = vmul.f32 %v8088, 1.442695
        %v8343 = vpow.pop %v8342
        %v8344 = vmul.f32 %v8089, 1.442695
        %v8345 = vpow.pop %v8344
        %v8346 = vadd.f32 %v8091, 1.0
        %v8347 = vadd.f32 %v8093, 1.0
        %v8348 = vadd.f32 %v8095, 1.0
        %v8349 = vadd.f32 %v8097, 1.0
        %v8350 = vadd.f32 %v8099, 1.0
        %v8351 = vadd.f32 %v8101, 1.0
        %v8352 = vadd.f32 %v8103, 1.0
        %v8353 = vadd.f32 %v8105, 1.0
        %v8354 = vadd.f32 %v8107, 1.0
        %v8355 = vadd.f32 %v8109, 1.0
        %v8356 = vadd.f32 %v8111, 1.0
        %v8357 = vadd.f32 %v8113, 1.0
        %v8358 = vadd.f32 %v8115, 1.0
        %v8359 = vadd.f32 %v8117, 1.0
        %v8360 = vadd.f32 %v8119, 1.0
        %v8361 = vadd.f32 %v8121, 1.0
        %v8362 = vadd.f32 %v8123, 1.0
        %v8363 = vadd.f32 %v8125, 1.0
        %v8364 = vadd.f32 %v8127, 1.0
        %v8365 = vadd.f32 %v8129, 1.0
        %v8366 = vadd.f32 %v8131, 1.0
        %v8367 = vadd.f32 %v8133, 1.0
        %v8368 = vadd.f32 %v8135, 1.0
        %v8369 = vadd.f32 %v8137, 1.0
        %v8370 = vadd.f32 %v8139, 1.0
        %v8371 = vadd.f32 %v8141, 1.0
        %v8372 = vadd.f32 %v8143, 1.0
        %v8373 = vadd.f32 %v8145, 1.0
        %v8374 = vadd.f32 %v8147, 1.0
        %v8375 = vadd.f32 %v8149, 1.0
        %v8376 = vadd.f32 %v8151, 1.0
        %v8377 = vadd.f32 %v8153, 1.0
        %v8378 = vadd.f32 %v8155, 1.0
        %v8379 = vadd.f32 %v8157, 1.0
        %v8380 = vadd.f32 %v8159, 1.0
        %v8381 = vadd.f32 %v8161, 1.0
        %v8382 = vadd.f32 %v8163, 1.0
        %v8383 = vadd.f32 %v8165, 1.0
        %v8384 = vadd.f32 %v8167, 1.0
        %v8385 = vadd.f32 %v8169, 1.0
        %v8386 = vadd.f32 %v8171, 1.0
        %v8387 = vadd.f32 %v8173, 1.0
        %v8388 = vadd.f32 %v8175, 1.0
        %v8389 = vadd.f32 %v8177, 1.0
        %v8390 = vadd.f32 %v8179, 1.0
        %v8391 = vadd.f32 %v8181, 1.0
        %v8392 = vadd.f32 %v8183, 1.0
        %v8393 = vadd.f32 %v8185, 1.0
        %v8394 = vadd.f32 %v8187, 1.0
        %v8395 = vadd.f32 %v8189, 1.0
        %v8396 = vadd.f32 %v8191, 1.0
        %v8397 = vadd.f32 %v8193, 1.0
        %v8398 = vadd.f32 %v8195, 1.0
        %v8399 = vadd.f32 %v8197, 1.0
        %v8400 = vadd.f32 %v8199, 1.0
        %v8401 = vadd.f32 %v8201, 1.0
        %v8402 = vadd.f32 %v8203, 1.0
        %v8403 = vadd.f32 %v8205, 1.0
        %v8404 = vadd.f32 %v8207, 1.0
        %v8405 = vadd.f32 %v8209, 1.0
        %v8406 = vadd.f32 %v8211, 1.0
        %v8407 = vadd.f32 %v8213, 1.0
        %v8408 = vadd.f32 %v8215, 1.0
        %v8409 = vadd.f32 %v8217, 1.0
        %v8410 = vadd.f32 %v8219, 1.0
        %v8411 = vadd.f32 %v8221, 1.0
        %v8412 = vadd.f32 %v8223, 1.0
        %v8413 = vadd.f32 %v8225, 1.0
        %v8414 = vadd.f32 %v8227, 1.0
        %v8415 = vadd.f32 %v8229, 1.0
        %v8416 = vadd.f32 %v8231, 1.0
        %v8417 = vadd.f32 %v8233, 1.0
        %v8418 = vadd.f32 %v8235, 1.0
        %v8419 = vadd.f32 %v8237, 1.0
        %v8420 = vadd.f32 %v8239, 1.0
        %v8421 = vadd.f32 %v8241, 1.0
        %v8422 = vadd.f32 %v8243, 1.0
        %v8423 = vadd.f32 %v8245, 1.0
        %v8424 = vadd.f32 %v8247, 1.0
        %v8425 = vadd.f32 %v8249, 1.0
        %v8426 = vadd.f32 %v8251, 1.0
        %v8427 = vadd.f32 %v8253, 1.0
        %v8428 = vadd.f32 %v8255, 1.0
        %v8429 = vadd.f32 %v8257, 1.0
        %v8430 = vadd.f32 %v8259, 1.0
        %v8431 = vadd.f32 %v8261, 1.0
        %v8432 = vadd.f32 %v8263, 1.0
        %v8433 = vadd.f32 %v8265, 1.0
        %v8434 = vadd.f32 %v8267, 1.0
        %v8435 = vadd.f32 %v8269, 1.0
        %v8436 = vadd.f32 %v8271, 1.0
        %v8437 = vadd.f32 %v8273, 1.0
        %v8438 = vadd.f32 %v8275, 1.0
        %v8439 = vadd.f32 %v8277, 1.0
        %v8440 = vadd.f32 %v8279, 1.0
        %v8441 = vadd.f32 %v8281, 1.0
        %v8442 = vadd.f32 %v8283, 1.0
        %v8443 = vadd.f32 %v8285, 1.0
        %v8444 = vadd.f32 %v8287, 1.0
        %v8445 = vadd.f32 %v8289, 1.0
        %v8446 = vadd.f32 %v8291, 1.0
        %v8447 = vadd.f32 %v8293, 1.0
        %v8448 = vadd.f32 %v8295, 1.0
        %v8449 = vadd.f32 %v8297, 1.0
        %v8450 = vadd.f32 %v8299, 1.0
        %v8451 = vadd.f32 %v8301, 1.0
        %v8452 = vadd.f32 %v8303, 1.0
        %v8453 = vadd.f32 %v8305, 1.0
        %v8454 = vadd.f32 %v8307, 1.0
        %v8455 = vadd.f32 %v8309, 1.0
        %v8456 = vadd.f32 %v8311, 1.0
        %v8457 = vadd.f32 %v8313, 1.0
        %v8458 = vadd.f32 %v8315, 1.0
        %v8459 = vadd.f32 %v8317, 1.0
        %v8460 = vadd.f32 %v8319, 1.0
        %v8461 = vadd.f32 %v8321, 1.0
        %v8462 = vadd.f32 %v8323, 1.0
        %v8463 = vadd.f32 %v8325, 1.0
        %v8464 = vadd.f32 %v8327, 1.0
        %v8465 = vadd.f32 %v8329, 1.0
        %v8466 = vadd.f32 %v8331, 1.0
        %v8467 = vadd.f32 %v8333, 1.0
        %v8468 = vadd.f32 %v8335, 1.0
        %v8469 = vadd.f32 %v8337, 1.0
        %v8470 = vadd.f32 %v8339, 1.0
        %v8471 = vadd.f32 %v8341, 1.0
        %v8472 = vadd.f32 %v8343, 1.0
        %v8473 = vadd.f32 %v8345, 1.0
        %v8474 = vrcp.pop %v8346
        %v8475 = vmul.f32 1.0, %v8474
        %v8476 = vrcp.pop %v8347
        %v8477 = vmul.f32 1.0, %v8476
        %v8478 = vrcp.pop %v8348
        %v8479 = vmul.f32 1.0, %v8478
        %v8480 = vrcp.pop %v8349
        %v8481 = vmul.f32 1.0, %v8480
        %v8482 = vrcp.pop %v8350
        %v8483 = vmul.f32 1.0, %v8482
        %v8484 = vrcp.pop %v8351
        %v8485 = vmul.f32 1.0, %v8484
        %v8486 = vrcp.pop %v8352
        %v8487 = vmul.f32 1.0, %v8486
        %v8488 = vrcp.pop %v8353
        %v8489 = vmul.f32 1.0, %v8488
        %v8490 = vrcp.pop %v8354
        %v8491 = vmul.f32 1.0, %v8490
        %v8492 = vrcp.pop %v8355
        %v8493 = vmul.f32 1.0, %v8492
        %v8494 = vrcp.pop %v8356
        %v8495 = vmul.f32 1.0, %v8494
        %v8496 = vrcp.pop %v8357
        %v8497 = vmul.f32 1.0, %v8496
        %v8498 = vrcp.pop %v8358
        %v8499 = vmul.f32 1.0, %v8498
        %v8500 = vrcp.pop %v8359
        %v8501 = vmul.f32 1.0, %v8500
        %v8502 = vrcp.pop %v8360
        %v8503 = vmul.f32 1.0, %v8502
        %v8504 = vrcp.pop %v8361
        %v8505 = vmul.f32 1.0, %v8504
        %v8506 = vrcp.pop %v8362
        %v8507 = vmul.f32 1.0, %v8506
        %v8508 = vrcp.pop %v8363
        %v8509 = vmul.f32 1.0, %v8508
        %v8510 = vrcp.pop %v8364
        %v8511 = vmul.f32 1.0, %v8510
        %v8512 = vrcp.pop %v8365
        %v8513 = vmul.f32 1.0, %v8512
        %v8514 = vrcp.pop %v8366
        %v8515 = vmul.f32 1.0, %v8514
        %v8516 = vrcp.pop %v8367
        %v8517 = vmul.f32 1.0, %v8516
        %v8518 = vrcp.pop %v8368
        %v8519 = vmul.f32 1.0, %v8518
        %v8520 = vrcp.pop %v8369
        %v8521 = vmul.f32 1.0, %v8520
        %v8522 = vrcp.pop %v8370
        %v8523 = vmul.f32 1.0, %v8522
        %v8524 = vrcp.pop %v8371
        %v8525 = vmul.f32 1.0, %v8524
        %v8526 = vrcp.pop %v8372
        %v8527 = vmul.f32 1.0, %v8526
        %v8528 = vrcp.pop %v8373
        %v8529 = vmul.f32 1.0, %v8528
        %v8530 = vrcp.pop %v8374
        %v8531 = vmul.f32 1.0, %v8530
        %v8532 = vrcp.pop %v8375
        %v8533 = vmul.f32 1.0, %v8532
        %v8534 = vrcp.pop %v8376
        %v8535 = vmul.f32 1.0, %v8534
        %v8536 = vrcp.pop %v8377
        %v8537 = vmul.f32 1.0, %v8536
        %v8538 = vrcp.pop %v8378
        %v8539 = vmul.f32 1.0, %v8538
        %v8540 = vrcp.pop %v8379
        %v8541 = vmul.f32 1.0, %v8540
        %v8542 = vrcp.pop %v8380
        %v8543 = vmul.f32 1.0, %v8542
        %v8544 = vrcp.pop %v8381
        %v8545 = vmul.f32 1.0, %v8544
        %v8546 = vrcp.pop %v8382
        %v8547 = vmul.f32 1.0, %v8546
        %v8548 = vrcp.pop %v8383
        %v8549 = vmul.f32 1.0, %v8548
        %v8550 = vrcp.pop %v8384
        %v8551 = vmul.f32 1.0, %v8550
        %v8552 = vrcp.pop %v8385
        %v8553 = vmul.f32 1.0, %v8552
        %v8554 = vrcp.pop %v8386
        %v8555 = vmul.f32 1.0, %v8554
        %v8556 = vrcp.pop %v8387
        %v8557 = vmul.f32 1.0, %v8556
        %v8558 = vrcp.pop %v8388
        %v8559 = vmul.f32 1.0, %v8558
        %v8560 = vrcp.pop %v8389
        %v8561 = vmul.f32 1.0, %v8560
        %v8562 = vrcp.pop %v8390
        %v8563 = vmul.f32 1.0, %v8562
        %v8564 = vrcp.pop %v8391
        %v8565 = vmul.f32 1.0, %v8564
        %v8566 = vrcp.pop %v8392
        %v8567 = vmul.f32 1.0, %v8566
        %v8568 = vrcp.pop %v8393
        %v8569 = vmul.f32 1.0, %v8568
        %v8570 = vrcp.pop %v8394
        %v8571 = vmul.f32 1.0, %v8570
        %v8572 = vrcp.pop %v8395
        %v8573 = vmul.f32 1.0, %v8572
        %v8574 = vrcp.pop %v8396
        %v8575 = vmul.f32 1.0, %v8574
        %v8576 = vrcp.pop %v8397
        %v8577 = vmul.f32 1.0, %v8576
        %v8578 = vrcp.pop %v8398
        %v8579 = vmul.f32 1.0, %v8578
        %v8580 = vrcp.pop %v8399
        %v8581 = vmul.f32 1.0, %v8580
        %v8582 = vrcp.pop %v8400
        %v8583 = vmul.f32 1.0, %v8582
        %v8584 = vrcp.pop %v8401
        %v8585 = vmul.f32 1.0, %v8584
        %v8586 = vrcp.pop %v8402
        %v8587 = vmul.f32 1.0, %v8586
        %v8588 = vrcp.pop %v8403
        %v8589 = vmul.f32 1.0, %v8588
        %v8590 = vrcp.pop %v8404
        %v8591 = vmul.f32 1.0, %v8590
        %v8592 = vrcp.pop %v8405
        %v8593 = vmul.f32 1.0, %v8592
        %v8594 = vrcp.pop %v8406
        %v8595 = vmul.f32 1.0, %v8594
        %v8596 = vrcp.pop %v8407
        %v8597 = vmul.f32 1.0, %v8596
        %v8598 = vrcp.pop %v8408
        %v8599 = vmul.f32 1.0, %v8598
        %v8600 = vrcp.pop %v8409
        %v8601 = vmul.f32 1.0, %v8600
        %v8602 = vrcp.pop %v8410
        %v8603 = vmul.f32 1.0, %v8602
        %v8604 = vrcp.pop %v8411
        %v8605 = vmul.f32 1.0, %v8604
        %v8606 = vrcp.pop %v8412
        %v8607 = vmul.f32 1.0, %v8606
        %v8608 = vrcp.pop %v8413
        %v8609 = vmul.f32 1.0, %v8608
        %v8610 = vrcp.pop %v8414
        %v8611 = vmul.f32 1.0, %v8610
        %v8612 = vrcp.pop %v8415
        %v8613 = vmul.f32 1.0, %v8612
        %v8614 = vrcp.pop %v8416
        %v8615 = vmul.f32 1.0, %v8614
        %v8616 = vrcp.pop %v8417
        %v8617 = vmul.f32 1.0, %v8616
        %v8618 = vrcp.pop %v8418
        %v8619 = vmul.f32 1.0, %v8618
        %v8620 = vrcp.pop %v8419
        %v8621 = vmul.f32 1.0, %v8620
        %v8622 = vrcp.pop %v8420
        %v8623 = vmul.f32 1.0, %v8622
        %v8624 = vrcp.pop %v8421
        %v8625 = vmul.f32 1.0, %v8624
        %v8626 = vrcp.pop %v8422
        %v8627 = vmul.f32 1.0, %v8626
        %v8628 = vrcp.pop %v8423
        %v8629 = vmul.f32 1.0, %v8628
        %v8630 = vrcp.pop %v8424
        %v8631 = vmul.f32 1.0, %v8630
        %v8632 = vrcp.pop %v8425
        %v8633 = vmul.f32 1.0, %v8632
        %v8634 = vrcp.pop %v8426
        %v8635 = vmul.f32 1.0, %v8634
        %v8636 = vrcp.pop %v8427
        %v8637 = vmul.f32 1.0, %v8636
        %v8638 = vrcp.pop %v8428
        %v8639 = vmul.f32 1.0, %v8638
        %v8640 = vrcp.pop %v8429
        %v8641 = vmul.f32 1.0, %v8640
        %v8642 = vrcp.pop %v8430
        %v8643 = vmul.f32 1.0, %v8642
        %v8644 = vrcp.pop %v8431
        %v8645 = vmul.f32 1.0, %v8644
        %v8646 = vrcp.pop %v8432
        %v8647 = vmul.f32 1.0, %v8646
        %v8648 = vrcp.pop %v8433
        %v8649 = vmul.f32 1.0, %v8648
        %v8650 = vrcp.pop %v8434
        %v8651 = vmul.f32 1.0, %v8650
        %v8652 = vrcp.pop %v8435
        %v8653 = vmul.f32 1.0, %v8652
        %v8654 = vrcp.pop %v8436
        %v8655 = vmul.f32 1.0, %v8654
        %v8656 = vrcp.pop %v8437
        %v8657 = vmul.f32 1.0, %v8656
        %v8658 = vrcp.pop %v8438
        %v8659 = vmul.f32 1.0, %v8658
        %v8660 = vrcp.pop %v8439
        %v8661 = vmul.f32 1.0, %v8660
        %v8662 = vrcp.pop %v8440
        %v8663 = vmul.f32 1.0, %v8662
        %v8664 = vrcp.pop %v8441
        %v8665 = vmul.f32 1.0, %v8664
        %v8666 = vrcp.pop %v8442
        %v8667 = vmul.f32 1.0, %v8666
        %v8668 = vrcp.pop %v8443
        %v8669 = vmul.f32 1.0, %v8668
        %v8670 = vrcp.pop %v8444
        %v8671 = vmul.f32 1.0, %v8670
        %v8672 = vrcp.pop %v8445
        %v8673 = vmul.f32 1.0, %v8672
        %v8674 = vrcp.pop %v8446
        %v8675 = vmul.f32 1.0, %v8674
        %v8676 = vrcp.pop %v8447
        %v8677 = vmul.f32 1.0, %v8676
        %v8678 = vrcp.pop %v8448
        %v8679 = vmul.f32 1.0, %v8678
        %v8680 = vrcp.pop %v8449
        %v8681 = vmul.f32 1.0, %v8680
        %v8682 = vrcp.pop %v8450
        %v8683 = vmul.f32 1.0, %v8682
        %v8684 = vrcp.pop %v8451
        %v8685 = vmul.f32 1.0, %v8684
        %v8686 = vrcp.pop %v8452
        %v8687 = vmul.f32 1.0, %v8686
        %v8688 = vrcp.pop %v8453
        %v8689 = vmul.f32 1.0, %v8688
        %v8690 = vrcp.pop %v8454
        %v8691 = vmul.f32 1.0, %v8690
        %v8692 = vrcp.pop %v8455
        %v8693 = vmul.f32 1.0, %v8692
        %v8694 = vrcp.pop %v8456
        %v8695 = vmul.f32 1.0, %v8694
        %v8696 = vrcp.pop %v8457
        %v8697 = vmul.f32 1.0, %v8696
        %v8698 = vrcp.pop %v8458
        %v8699 = vmul.f32 1.0, %v8698
        %v8700 = vrcp.pop %v8459
        %v8701 = vmul.f32 1.0, %v8700
        %v8702 = vrcp.pop %v8460
        %v8703 = vmul.f32 1.0, %v8702
        %v8704 = vrcp.pop %v8461
        %v8705 = vmul.f32 1.0, %v8704
        %v8706 = vrcp.pop %v8462
        %v8707 = vmul.f32 1.0, %v8706
        %v8708 = vrcp.pop %v8463
        %v8709 = vmul.f32 1.0, %v8708
        %v8710 = vrcp.pop %v8464
        %v8711 = vmul.f32 1.0, %v8710
        %v8712 = vrcp.pop %v8465
        %v8713 = vmul.f32 1.0, %v8712
        %v8714 = vrcp.pop %v8466
        %v8715 = vmul.f32 1.0, %v8714
        %v8716 = vrcp.pop %v8467
        %v8717 = vmul.f32 1.0, %v8716
        %v8718 = vrcp.pop %v8468
        %v8719 = vmul.f32 1.0, %v8718
        %v8720 = vrcp.pop %v8469
        %v8721 = vmul.f32 1.0, %v8720
        %v8722 = vrcp.pop %v8470
        %v8723 = vmul.f32 1.0, %v8722
        %v8724 = vrcp.pop %v8471
        %v8725 = vmul.f32 1.0, %v8724
        %v8726 = vrcp.pop %v8472
        %v8727 = vmul.f32 1.0, %v8726
        %v8728 = vrcp.pop %v8473
        %v8729 = vmul.f32 1.0, %v8728
        %v8858 = vlaneseq
        %v8859 = vand.u32 %v8858, 127
        %v8860 = vlaneseq
        %v8861 = vshrl.u32 %v8860, 7
        %v8862 = vsub.s32 %v8859, %v8861
        %v8863 = vrot.slane %v8475, %v8862
        %v8864 = vadd.s32 %v8859, 4294967288
        %v8865 = vlaneseq
        %v8866 = vshrl.u32 %v8865, 7
        %v8867 = vsub.s32 %v8864, %v8866
        %v8868 = vrot.slane %v8477, %v8867
        %vm8869 = vcmask 130112
        %v8870 = vsel %vm8869, %v8868, %v8863
        %v8871 = vadd.s32 %v8859, 4294967280
        %v8872 = vlaneseq
        %v8873 = vshrl.u32 %v8872, 7
        %v8874 = vsub.s32 %v8871, %v8873
        %v8875 = vrot.slane %v8479, %v8874
        %vm8876 = vcmask 195712
        %v8877 = vsel %vm8876, %v8875, %v8870
        %v8878 = vadd.s32 %v8859, 4294967272
        %v8879 = vlaneseq
        %v8880 = vshrl.u32 %v8879, 7
        %v8881 = vsub.s32 %v8878, %v8880
        %v8882 = vrot.slane %v8481, %v8881
        %vm8883 = vcmask 261312
        %v8884 = vsel %vm8883, %v8882, %v8877
        %v8885 = vadd.s32 %v8859, 4294967264
        %v8886 = vlaneseq
        %v8887 = vshrl.u32 %v8886, 7
        %v8888 = vsub.s32 %v8885, %v8887
        %v8889 = vrot.slane %v8483, %v8888
        %vm8890 = vcmask 326912
        %v8891 = vsel %vm8890, %v8889, %v8884
        %v8892 = vadd.s32 %v8859, 4294967256
        %v8893 = vlaneseq
        %v8894 = vshrl.u32 %v8893, 7
        %v8895 = vsub.s32 %v8892, %v8894
        %v8896 = vrot.slane %v8485, %v8895
        %vm8897 = vcmask 392512
        %v8898 = vsel %vm8897, %v8896, %v8891
        %v8899 = vadd.s32 %v8859, 4294967248
        %v8900 = vlaneseq
        %v8901 = vshrl.u32 %v8900, 7
        %v8902 = vsub.s32 %v8899, %v8901
        %v8903 = vrot.slane %v8487, %v8902
        %vm8904 = vcmask 458112
        %v8905 = vsel %vm8904, %v8903, %v8898
        %v8906 = vadd.s32 %v8859, 4294967240
        %v8907 = vlaneseq
        %v8908 = vshrl.u32 %v8907, 7
        %v8909 = vsub.s32 %v8906, %v8908
        %v8910 = vrot.slane %v8489, %v8909
        %vm8911 = vcmask 523712
        %v8912 = vsel %vm8911, %v8910, %v8905
        %v8913 = vadd.s32 %v8859, 4294967232
        %v8914 = vlaneseq
        %v8915 = vshrl.u32 %v8914, 7
        %v8916 = vsub.s32 %v8913, %v8915
        %v8917 = vrot.slane %v8491, %v8916
        %vm8918 = vcmask 589312
        %v8919 = vsel %vm8918, %v8917, %v8912
        %v8920 = vadd.s32 %v8859, 4294967224
        %v8921 = vlaneseq
        %v8922 = vshrl.u32 %v8921, 7
        %v8923 = vsub.s32 %v8920, %v8922
        %v8924 = vrot.slane %v8493, %v8923
        %vm8925 = vcmask 654912
        %v8926 = vsel %vm8925, %v8924, %v8919
        %v8927 = vadd.s32 %v8859, 4294967216
        %v8928 = vlaneseq
        %v8929 = vshrl.u32 %v8928, 7
        %v8930 = vsub.s32 %v8927, %v8929
        %v8931 = vrot.slane %v8495, %v8930
        %vm8932 = vcmask 720512
        %v8933 = vsel %vm8932, %v8931, %v8926
        %v8934 = vadd.s32 %v8859, 4294967208
        %v8935 = vlaneseq
        %v8936 = vshrl.u32 %v8935, 7
        %v8937 = vsub.s32 %v8934, %v8936
        %v8938 = vrot.slane %v8497, %v8937
        %vm8939 = vcmask 786112
        %v8940 = vsel %vm8939, %v8938, %v8933
        %v8941 = vadd.s32 %v8859, 4294967200
        %v8942 = vlaneseq
        %v8943 = vshrl.u32 %v8942, 7
        %v8944 = vsub.s32 %v8941, %v8943
        %v8945 = vrot.slane %v8499, %v8944
        %vm8946 = vcmask 851712
        %v8947 = vsel %vm8946, %v8945, %v8940
        %v8948 = vadd.s32 %v8859, 4294967192
        %v8949 = vlaneseq
        %v8950 = vshrl.u32 %v8949, 7
        %v8951 = vsub.s32 %v8948, %v8950
        %v8952 = vrot.slane %v8501, %v8951
        %vm8953 = vcmask 917312
        %v8954 = vsel %vm8953, %v8952, %v8947
        %v8955 = vadd.s32 %v8859, 4294967184
        %v8956 = vlaneseq
        %v8957 = vshrl.u32 %v8956, 7
        %v8958 = vsub.s32 %v8955, %v8957
        %v8959 = vrot.slane %v8503, %v8958
        %vm8960 = vcmask 982912
        %v8961 = vsel %vm8960, %v8959, %v8954
        %v8962 = vadd.s32 %v8859, 4294967176
        %v8963 = vlaneseq
        %v8964 = vshrl.u32 %v8963, 7
        %v8965 = vsub.s32 %v8962, %v8964
        %v8966 = vrot.slane %v8505, %v8965
        %vm8967 = vcmask 1048512
        %v8968 = vsel %vm8967, %v8966, %v8961
        %v8969 = vlaneseq
        %v8970 = vshrl.u32 %v8969, 7
        %v8971 = vsub.s32 %v8859, %v8970
        %v8972 = vrot.slane %v8507, %v8971
        %v8973 = vlaneseq
        %v8974 = vshrl.u32 %v8973, 7
        %v8975 = vsub.s32 %v8864, %v8974
        %v8976 = vrot.slane %v8509, %v8975
        %v8977 = vsel %vm8869, %v8976, %v8972
        %v8978 = vlaneseq
        %v8979 = vshrl.u32 %v8978, 7
        %v8980 = vsub.s32 %v8871, %v8979
        %v8981 = vrot.slane %v8511, %v8980
        %v8982 = vsel %vm8876, %v8981, %v8977
        %v8983 = vlaneseq
        %v8984 = vshrl.u32 %v8983, 7
        %v8985 = vsub.s32 %v8878, %v8984
        %v8986 = vrot.slane %v8513, %v8985
        %v8987 = vsel %vm8883, %v8986, %v8982
        %v8988 = vlaneseq
        %v8989 = vshrl.u32 %v8988, 7
        %v8990 = vsub.s32 %v8885, %v8989
        %v8991 = vrot.slane %v8515, %v8990
        %v8992 = vsel %vm8890, %v8991, %v8987
        %v8993 = vlaneseq
        %v8994 = vshrl.u32 %v8993, 7
        %v8995 = vsub.s32 %v8892, %v8994
        %v8996 = vrot.slane %v8517, %v8995
        %v8997 = vsel %vm8897, %v8996, %v8992
        %v8998 = vlaneseq
        %v8999 = vshrl.u32 %v8998, 7
        %v9000 = vsub.s32 %v8899, %v8999
        %v9001 = vrot.slane %v8519, %v9000
        %v9002 = vsel %vm8904, %v9001, %v8997
        %v9003 = vlaneseq
        %v9004 = vshrl.u32 %v9003, 7
        %v9005 = vsub.s32 %v8906, %v9004
        %v9006 = vrot.slane %v8521, %v9005
        %v9007 = vsel %vm8911, %v9006, %v9002
        %v9008 = vlaneseq
        %v9009 = vshrl.u32 %v9008, 7
        %v9010 = vsub.s32 %v8913, %v9009
        %v9011 = vrot.slane %v8523, %v9010
        %v9012 = vsel %vm8918, %v9011, %v9007
        %v9013 = vlaneseq
        %v9014 = vshrl.u32 %v9013, 7
        %v9015 = vsub.s32 %v8920, %v9014
        %v9016 = vrot.slane %v8525, %v9015
        %v9017 = vsel %vm8925, %v9016, %v9012
        %v9018 = vlaneseq
        %v9019 = vshrl.u32 %v9018, 7
        %v9020 = vsub.s32 %v8927, %v9019
        %v9021 = vrot.slane %v8527, %v9020
        %v9022 = vsel %vm8932, %v9021, %v9017
        %v9023 = vlaneseq
        %v9024 = vshrl.u32 %v9023, 7
        %v9025 = vsub.s32 %v8934, %v9024
        %v9026 = vrot.slane %v8529, %v9025
        %v9027 = vsel %vm8939, %v9026, %v9022
        %v9028 = vlaneseq
        %v9029 = vshrl.u32 %v9028, 7
        %v9030 = vsub.s32 %v8941, %v9029
        %v9031 = vrot.slane %v8531, %v9030
        %v9032 = vsel %vm8946, %v9031, %v9027
        %v9033 = vlaneseq
        %v9034 = vshrl.u32 %v9033, 7
        %v9035 = vsub.s32 %v8948, %v9034
        %v9036 = vrot.slane %v8533, %v9035
        %v9037 = vsel %vm8953, %v9036, %v9032
        %v9038 = vlaneseq
        %v9039 = vshrl.u32 %v9038, 7
        %v9040 = vsub.s32 %v8955, %v9039
        %v9041 = vrot.slane %v8535, %v9040
        %v9042 = vsel %vm8960, %v9041, %v9037
        %v9043 = vlaneseq
        %v9044 = vshrl.u32 %v9043, 7
        %v9045 = vsub.s32 %v8962, %v9044
        %v9046 = vrot.slane %v8537, %v9045
        %v9047 = vsel %vm8967, %v9046, %v9042
        %v9048 = vlaneseq
        %v9049 = vshrl.u32 %v9048, 7
        %v9050 = vsub.s32 %v8859, %v9049
        %v9051 = vrot.slane %v8539, %v9050
        %v9052 = vlaneseq
        %v9053 = vshrl.u32 %v9052, 7
        %v9054 = vsub.s32 %v8864, %v9053
        %v9055 = vrot.slane %v8541, %v9054
        %v9056 = vsel %vm8869, %v9055, %v9051
        %v9057 = vlaneseq
        %v9058 = vshrl.u32 %v9057, 7
        %v9059 = vsub.s32 %v8871, %v9058
        %v9060 = vrot.slane %v8543, %v9059
        %v9061 = vsel %vm8876, %v9060, %v9056
        %v9062 = vlaneseq
        %v9063 = vshrl.u32 %v9062, 7
        %v9064 = vsub.s32 %v8878, %v9063
        %v9065 = vrot.slane %v8545, %v9064
        %v9066 = vsel %vm8883, %v9065, %v9061
        %v9067 = vlaneseq
        %v9068 = vshrl.u32 %v9067, 7
        %v9069 = vsub.s32 %v8885, %v9068
        %v9070 = vrot.slane %v8547, %v9069
        %v9071 = vsel %vm8890, %v9070, %v9066
        %v9072 = vlaneseq
        %v9073 = vshrl.u32 %v9072, 7
        %v9074 = vsub.s32 %v8892, %v9073
        %v9075 = vrot.slane %v8549, %v9074
        %v9076 = vsel %vm8897, %v9075, %v9071
        %v9077 = vlaneseq
        %v9078 = vshrl.u32 %v9077, 7
        %v9079 = vsub.s32 %v8899, %v9078
        %v9080 = vrot.slane %v8551, %v9079
        %v9081 = vsel %vm8904, %v9080, %v9076
        %v9082 = vlaneseq
        %v9083 = vshrl.u32 %v9082, 7
        %v9084 = vsub.s32 %v8906, %v9083
        %v9085 = vrot.slane %v8553, %v9084
        %v9086 = vsel %vm8911, %v9085, %v9081
        %v9087 = vlaneseq
        %v9088 = vshrl.u32 %v9087, 7
        %v9089 = vsub.s32 %v8913, %v9088
        %v9090 = vrot.slane %v8555, %v9089
        %v9091 = vsel %vm8918, %v9090, %v9086
        %v9092 = vlaneseq
        %v9093 = vshrl.u32 %v9092, 7
        %v9094 = vsub.s32 %v8920, %v9093
        %v9095 = vrot.slane %v8557, %v9094
        %v9096 = vsel %vm8925, %v9095, %v9091
        %v9097 = vlaneseq
        %v9098 = vshrl.u32 %v9097, 7
        %v9099 = vsub.s32 %v8927, %v9098
        %v9100 = vrot.slane %v8559, %v9099
        %v9101 = vsel %vm8932, %v9100, %v9096
        %v9102 = vlaneseq
        %v9103 = vshrl.u32 %v9102, 7
        %v9104 = vsub.s32 %v8934, %v9103
        %v9105 = vrot.slane %v8561, %v9104
        %v9106 = vsel %vm8939, %v9105, %v9101
        %v9107 = vlaneseq
        %v9108 = vshrl.u32 %v9107, 7
        %v9109 = vsub.s32 %v8941, %v9108
        %v9110 = vrot.slane %v8563, %v9109
        %v9111 = vsel %vm8946, %v9110, %v9106
        %v9112 = vlaneseq
        %v9113 = vshrl.u32 %v9112, 7
        %v9114 = vsub.s32 %v8948, %v9113
        %v9115 = vrot.slane %v8565, %v9114
        %v9116 = vsel %vm8953, %v9115, %v9111
        %v9117 = vlaneseq
        %v9118 = vshrl.u32 %v9117, 7
        %v9119 = vsub.s32 %v8955, %v9118
        %v9120 = vrot.slane %v8567, %v9119
        %v9121 = vsel %vm8960, %v9120, %v9116
        %v9122 = vlaneseq
        %v9123 = vshrl.u32 %v9122, 7
        %v9124 = vsub.s32 %v8962, %v9123
        %v9125 = vrot.slane %v8569, %v9124
        %v9126 = vsel %vm8967, %v9125, %v9121
        %v9127 = vlaneseq
        %v9128 = vshrl.u32 %v9127, 7
        %v9129 = vsub.s32 %v8859, %v9128
        %v9130 = vrot.slane %v8571, %v9129
        %v9131 = vlaneseq
        %v9132 = vshrl.u32 %v9131, 7
        %v9133 = vsub.s32 %v8864, %v9132
        %v9134 = vrot.slane %v8573, %v9133
        %v9135 = vsel %vm8869, %v9134, %v9130
        %v9136 = vlaneseq
        %v9137 = vshrl.u32 %v9136, 7
        %v9138 = vsub.s32 %v8871, %v9137
        %v9139 = vrot.slane %v8575, %v9138
        %v9140 = vsel %vm8876, %v9139, %v9135
        %v9141 = vlaneseq
        %v9142 = vshrl.u32 %v9141, 7
        %v9143 = vsub.s32 %v8878, %v9142
        %v9144 = vrot.slane %v8577, %v9143
        %v9145 = vsel %vm8883, %v9144, %v9140
        %v9146 = vlaneseq
        %v9147 = vshrl.u32 %v9146, 7
        %v9148 = vsub.s32 %v8885, %v9147
        %v9149 = vrot.slane %v8579, %v9148
        %v9150 = vsel %vm8890, %v9149, %v9145
        %v9151 = vlaneseq
        %v9152 = vshrl.u32 %v9151, 7
        %v9153 = vsub.s32 %v8892, %v9152
        %v9154 = vrot.slane %v8581, %v9153
        %v9155 = vsel %vm8897, %v9154, %v9150
        %v9156 = vlaneseq
        %v9157 = vshrl.u32 %v9156, 7
        %v9158 = vsub.s32 %v8899, %v9157
        %v9159 = vrot.slane %v8583, %v9158
        %v9160 = vsel %vm8904, %v9159, %v9155
        %v9161 = vlaneseq
        %v9162 = vshrl.u32 %v9161, 7
        %v9163 = vsub.s32 %v8906, %v9162
        %v9164 = vrot.slane %v8585, %v9163
        %v9165 = vsel %vm8911, %v9164, %v9160
        %v9166 = vlaneseq
        %v9167 = vshrl.u32 %v9166, 7
        %v9168 = vsub.s32 %v8913, %v9167
        %v9169 = vrot.slane %v8587, %v9168
        %v9170 = vsel %vm8918, %v9169, %v9165
        %v9171 = vlaneseq
        %v9172 = vshrl.u32 %v9171, 7
        %v9173 = vsub.s32 %v8920, %v9172
        %v9174 = vrot.slane %v8589, %v9173
        %v9175 = vsel %vm8925, %v9174, %v9170
        %v9176 = vlaneseq
        %v9177 = vshrl.u32 %v9176, 7
        %v9178 = vsub.s32 %v8927, %v9177
        %v9179 = vrot.slane %v8591, %v9178
        %v9180 = vsel %vm8932, %v9179, %v9175
        %v9181 = vlaneseq
        %v9182 = vshrl.u32 %v9181, 7
        %v9183 = vsub.s32 %v8934, %v9182
        %v9184 = vrot.slane %v8593, %v9183
        %v9185 = vsel %vm8939, %v9184, %v9180
        %v9186 = vlaneseq
        %v9187 = vshrl.u32 %v9186, 7
        %v9188 = vsub.s32 %v8941, %v9187
        %v9189 = vrot.slane %v8595, %v9188
        %v9190 = vsel %vm8946, %v9189, %v9185
        %v9191 = vlaneseq
        %v9192 = vshrl.u32 %v9191, 7
        %v9193 = vsub.s32 %v8948, %v9192
        %v9194 = vrot.slane %v8597, %v9193
        %v9195 = vsel %vm8953, %v9194, %v9190
        %v9196 = vlaneseq
        %v9197 = vshrl.u32 %v9196, 7
        %v9198 = vsub.s32 %v8955, %v9197
        %v9199 = vrot.slane %v8599, %v9198
        %v9200 = vsel %vm8960, %v9199, %v9195
        %v9201 = vlaneseq
        %v9202 = vshrl.u32 %v9201, 7
        %v9203 = vsub.s32 %v8962, %v9202
        %v9204 = vrot.slane %v8601, %v9203
        %v9205 = vsel %vm8967, %v9204, %v9200
        %v9206 = vlaneseq
        %v9207 = vshrl.u32 %v9206, 7
        %v9208 = vsub.s32 %v8859, %v9207
        %v9209 = vrot.slane %v8603, %v9208
        %v9210 = vlaneseq
        %v9211 = vshrl.u32 %v9210, 7
        %v9212 = vsub.s32 %v8864, %v9211
        %v9213 = vrot.slane %v8605, %v9212
        %v9214 = vsel %vm8869, %v9213, %v9209
        %v9215 = vlaneseq
        %v9216 = vshrl.u32 %v9215, 7
        %v9217 = vsub.s32 %v8871, %v9216
        %v9218 = vrot.slane %v8607, %v9217
        %v9219 = vsel %vm8876, %v9218, %v9214
        %v9220 = vlaneseq
        %v9221 = vshrl.u32 %v9220, 7
        %v9222 = vsub.s32 %v8878, %v9221
        %v9223 = vrot.slane %v8609, %v9222
        %v9224 = vsel %vm8883, %v9223, %v9219
        %v9225 = vlaneseq
        %v9226 = vshrl.u32 %v9225, 7
        %v9227 = vsub.s32 %v8885, %v9226
        %v9228 = vrot.slane %v8611, %v9227
        %v9229 = vsel %vm8890, %v9228, %v9224
        %v9230 = vlaneseq
        %v9231 = vshrl.u32 %v9230, 7
        %v9232 = vsub.s32 %v8892, %v9231
        %v9233 = vrot.slane %v8613, %v9232
        %v9234 = vsel %vm8897, %v9233, %v9229
        %v9235 = vlaneseq
        %v9236 = vshrl.u32 %v9235, 7
        %v9237 = vsub.s32 %v8899, %v9236
        %v9238 = vrot.slane %v8615, %v9237
        %v9239 = vsel %vm8904, %v9238, %v9234
        %v9240 = vlaneseq
        %v9241 = vshrl.u32 %v9240, 7
        %v9242 = vsub.s32 %v8906, %v9241
        %v9243 = vrot.slane %v8617, %v9242
        %v9244 = vsel %vm8911, %v9243, %v9239
        %v9245 = vlaneseq
        %v9246 = vshrl.u32 %v9245, 7
        %v9247 = vsub.s32 %v8913, %v9246
        %v9248 = vrot.slane %v8619, %v9247
        %v9249 = vsel %vm8918, %v9248, %v9244
        %v9250 = vlaneseq
        %v9251 = vshrl.u32 %v9250, 7
        %v9252 = vsub.s32 %v8920, %v9251
        %v9253 = vrot.slane %v8621, %v9252
        %v9254 = vsel %vm8925, %v9253, %v9249
        %v9255 = vlaneseq
        %v9256 = vshrl.u32 %v9255, 7
        %v9257 = vsub.s32 %v8927, %v9256
        %v9258 = vrot.slane %v8623, %v9257
        %v9259 = vsel %vm8932, %v9258, %v9254
        %v9260 = vlaneseq
        %v9261 = vshrl.u32 %v9260, 7
        %v9262 = vsub.s32 %v8934, %v9261
        %v9263 = vrot.slane %v8625, %v9262
        %v9264 = vsel %vm8939, %v9263, %v9259
        %v9265 = vlaneseq
        %v9266 = vshrl.u32 %v9265, 7
        %v9267 = vsub.s32 %v8941, %v9266
        %v9268 = vrot.slane %v8627, %v9267
        %v9269 = vsel %vm8946, %v9268, %v9264
        %v9270 = vlaneseq
        %v9271 = vshrl.u32 %v9270, 7
        %v9272 = vsub.s32 %v8948, %v9271
        %v9273 = vrot.slane %v8629, %v9272
        %v9274 = vsel %vm8953, %v9273, %v9269
        %v9275 = vlaneseq
        %v9276 = vshrl.u32 %v9275, 7
        %v9277 = vsub.s32 %v8955, %v9276
        %v9278 = vrot.slane %v8631, %v9277
        %v9279 = vsel %vm8960, %v9278, %v9274
        %v9280 = vlaneseq
        %v9281 = vshrl.u32 %v9280, 7
        %v9282 = vsub.s32 %v8962, %v9281
        %v9283 = vrot.slane %v8633, %v9282
        %v9284 = vsel %vm8967, %v9283, %v9279
        %v9285 = vlaneseq
        %v9286 = vshrl.u32 %v9285, 7
        %v9287 = vsub.s32 %v8859, %v9286
        %v9288 = vrot.slane %v8635, %v9287
        %v9289 = vlaneseq
        %v9290 = vshrl.u32 %v9289, 7
        %v9291 = vsub.s32 %v8864, %v9290
        %v9292 = vrot.slane %v8637, %v9291
        %v9293 = vsel %vm8869, %v9292, %v9288
        %v9294 = vlaneseq
        %v9295 = vshrl.u32 %v9294, 7
        %v9296 = vsub.s32 %v8871, %v9295
        %v9297 = vrot.slane %v8639, %v9296
        %v9298 = vsel %vm8876, %v9297, %v9293
        %v9299 = vlaneseq
        %v9300 = vshrl.u32 %v9299, 7
        %v9301 = vsub.s32 %v8878, %v9300
        %v9302 = vrot.slane %v8641, %v9301
        %v9303 = vsel %vm8883, %v9302, %v9298
        %v9304 = vlaneseq
        %v9305 = vshrl.u32 %v9304, 7
        %v9306 = vsub.s32 %v8885, %v9305
        %v9307 = vrot.slane %v8643, %v9306
        %v9308 = vsel %vm8890, %v9307, %v9303
        %v9309 = vlaneseq
        %v9310 = vshrl.u32 %v9309, 7
        %v9311 = vsub.s32 %v8892, %v9310
        %v9312 = vrot.slane %v8645, %v9311
        %v9313 = vsel %vm8897, %v9312, %v9308
        %v9314 = vlaneseq
        %v9315 = vshrl.u32 %v9314, 7
        %v9316 = vsub.s32 %v8899, %v9315
        %v9317 = vrot.slane %v8647, %v9316
        %v9318 = vsel %vm8904, %v9317, %v9313
        %v9319 = vlaneseq
        %v9320 = vshrl.u32 %v9319, 7
        %v9321 = vsub.s32 %v8906, %v9320
        %v9322 = vrot.slane %v8649, %v9321
        %v9323 = vsel %vm8911, %v9322, %v9318
        %v9324 = vlaneseq
        %v9325 = vshrl.u32 %v9324, 7
        %v9326 = vsub.s32 %v8913, %v9325
        %v9327 = vrot.slane %v8651, %v9326
        %v9328 = vsel %vm8918, %v9327, %v9323
        %v9329 = vlaneseq
        %v9330 = vshrl.u32 %v9329, 7
        %v9331 = vsub.s32 %v8920, %v9330
        %v9332 = vrot.slane %v8653, %v9331
        %v9333 = vsel %vm8925, %v9332, %v9328
        %v9334 = vlaneseq
        %v9335 = vshrl.u32 %v9334, 7
        %v9336 = vsub.s32 %v8927, %v9335
        %v9337 = vrot.slane %v8655, %v9336
        %v9338 = vsel %vm8932, %v9337, %v9333
        %v9339 = vlaneseq
        %v9340 = vshrl.u32 %v9339, 7
        %v9341 = vsub.s32 %v8934, %v9340
        %v9342 = vrot.slane %v8657, %v9341
        %v9343 = vsel %vm8939, %v9342, %v9338
        %v9344 = vlaneseq
        %v9345 = vshrl.u32 %v9344, 7
        %v9346 = vsub.s32 %v8941, %v9345
        %v9347 = vrot.slane %v8659, %v9346
        %v9348 = vsel %vm8946, %v9347, %v9343
        %v9349 = vlaneseq
        %v9350 = vshrl.u32 %v9349, 7
        %v9351 = vsub.s32 %v8948, %v9350
        %v9352 = vrot.slane %v8661, %v9351
        %v9353 = vsel %vm8953, %v9352, %v9348
        %v9354 = vlaneseq
        %v9355 = vshrl.u32 %v9354, 7
        %v9356 = vsub.s32 %v8955, %v9355
        %v9357 = vrot.slane %v8663, %v9356
        %v9358 = vsel %vm8960, %v9357, %v9353
        %v9359 = vlaneseq
        %v9360 = vshrl.u32 %v9359, 7
        %v9361 = vsub.s32 %v8962, %v9360
        %v9362 = vrot.slane %v8665, %v9361
        %v9363 = vsel %vm8967, %v9362, %v9358
        %v9364 = vlaneseq
        %v9365 = vshrl.u32 %v9364, 7
        %v9366 = vsub.s32 %v8859, %v9365
        %v9367 = vrot.slane %v8667, %v9366
        %v9368 = vlaneseq
        %v9369 = vshrl.u32 %v9368, 7
        %v9370 = vsub.s32 %v8864, %v9369
        %v9371 = vrot.slane %v8669, %v9370
        %v9372 = vsel %vm8869, %v9371, %v9367
        %v9373 = vlaneseq
        %v9374 = vshrl.u32 %v9373, 7
        %v9375 = vsub.s32 %v8871, %v9374
        %v9376 = vrot.slane %v8671, %v9375
        %v9377 = vsel %vm8876, %v9376, %v9372
        %v9378 = vlaneseq
        %v9379 = vshrl.u32 %v9378, 7
        %v9380 = vsub.s32 %v8878, %v9379
        %v9381 = vrot.slane %v8673, %v9380
        %v9382 = vsel %vm8883, %v9381, %v9377
        %v9383 = vlaneseq
        %v9384 = vshrl.u32 %v9383, 7
        %v9385 = vsub.s32 %v8885, %v9384
        %v9386 = vrot.slane %v8675, %v9385
        %v9387 = vsel %vm8890, %v9386, %v9382
        %v9388 = vlaneseq
        %v9389 = vshrl.u32 %v9388, 7
        %v9390 = vsub.s32 %v8892, %v9389
        %v9391 = vrot.slane %v8677, %v9390
        %v9392 = vsel %vm8897, %v9391, %v9387
        %v9393 = vlaneseq
        %v9394 = vshrl.u32 %v9393, 7
        %v9395 = vsub.s32 %v8899, %v9394
        %v9396 = vrot.slane %v8679, %v9395
        %v9397 = vsel %vm8904, %v9396, %v9392
        %v9398 = vlaneseq
        %v9399 = vshrl.u32 %v9398, 7
        %v9400 = vsub.s32 %v8906, %v9399
        %v9401 = vrot.slane %v8681, %v9400
        %v9402 = vsel %vm8911, %v9401, %v9397
        %v9403 = vlaneseq
        %v9404 = vshrl.u32 %v9403, 7
        %v9405 = vsub.s32 %v8913, %v9404
        %v9406 = vrot.slane %v8683, %v9405
        %v9407 = vsel %vm8918, %v9406, %v9402
        %v9408 = vlaneseq
        %v9409 = vshrl.u32 %v9408, 7
        %v9410 = vsub.s32 %v8920, %v9409
        %v9411 = vrot.slane %v8685, %v9410
        %v9412 = vsel %vm8925, %v9411, %v9407
        %v9413 = vlaneseq
        %v9414 = vshrl.u32 %v9413, 7
        %v9415 = vsub.s32 %v8927, %v9414
        %v9416 = vrot.slane %v8687, %v9415
        %v9417 = vsel %vm8932, %v9416, %v9412
        %v9418 = vlaneseq
        %v9419 = vshrl.u32 %v9418, 7
        %v9420 = vsub.s32 %v8934, %v9419
        %v9421 = vrot.slane %v8689, %v9420
        %v9422 = vsel %vm8939, %v9421, %v9417
        %v9423 = vlaneseq
        %v9424 = vshrl.u32 %v9423, 7
        %v9425 = vsub.s32 %v8941, %v9424
        %v9426 = vrot.slane %v8691, %v9425
        %v9427 = vsel %vm8946, %v9426, %v9422
        %v9428 = vlaneseq
        %v9429 = vshrl.u32 %v9428, 7
        %v9430 = vsub.s32 %v8948, %v9429
        %v9431 = vrot.slane %v8693, %v9430
        %v9432 = vsel %vm8953, %v9431, %v9427
        %v9433 = vlaneseq
        %v9434 = vshrl.u32 %v9433, 7
        %v9435 = vsub.s32 %v8955, %v9434
        %v9436 = vrot.slane %v8695, %v9435
        %v9437 = vsel %vm8960, %v9436, %v9432
        %v9438 = vlaneseq
        %v9439 = vshrl.u32 %v9438, 7
        %v9440 = vsub.s32 %v8962, %v9439
        %v9441 = vrot.slane %v8697, %v9440
        %v9442 = vsel %vm8967, %v9441, %v9437
        %v9443 = vlaneseq
        %v9444 = vshrl.u32 %v9443, 7
        %v9445 = vsub.s32 %v8859, %v9444
        %v9446 = vrot.slane %v8699, %v9445
        %v9447 = vlaneseq
        %v9448 = vshrl.u32 %v9447, 7
        %v9449 = vsub.s32 %v8864, %v9448
        %v9450 = vrot.slane %v8701, %v9449
        %v9451 = vsel %vm8869, %v9450, %v9446
        %v9452 = vlaneseq
        %v9453 = vshrl.u32 %v9452, 7
        %v9454 = vsub.s32 %v8871, %v9453
        %v9455 = vrot.slane %v8703, %v9454
        %v9456 = vsel %vm8876, %v9455, %v9451
        %v9457 = vlaneseq
        %v9458 = vshrl.u32 %v9457, 7
        %v9459 = vsub.s32 %v8878, %v9458
        %v9460 = vrot.slane %v8705, %v9459
        %v9461 = vsel %vm8883, %v9460, %v9456
        %v9462 = vlaneseq
        %v9463 = vshrl.u32 %v9462, 7
        %v9464 = vsub.s32 %v8885, %v9463
        %v9465 = vrot.slane %v8707, %v9464
        %v9466 = vsel %vm8890, %v9465, %v9461
        %v9467 = vlaneseq
        %v9468 = vshrl.u32 %v9467, 7
        %v9469 = vsub.s32 %v8892, %v9468
        %v9470 = vrot.slane %v8709, %v9469
        %v9471 = vsel %vm8897, %v9470, %v9466
        %v9472 = vlaneseq
        %v9473 = vshrl.u32 %v9472, 7
        %v9474 = vsub.s32 %v8899, %v9473
        %v9475 = vrot.slane %v8711, %v9474
        %v9476 = vsel %vm8904, %v9475, %v9471
        %v9477 = vlaneseq
        %v9478 = vshrl.u32 %v9477, 7
        %v9479 = vsub.s32 %v8906, %v9478
        %v9480 = vrot.slane %v8713, %v9479
        %v9481 = vsel %vm8911, %v9480, %v9476
        %v9482 = vlaneseq
        %v9483 = vshrl.u32 %v9482, 7
        %v9484 = vsub.s32 %v8913, %v9483
        %v9485 = vrot.slane %v8715, %v9484
        %v9486 = vsel %vm8918, %v9485, %v9481
        %v9487 = vlaneseq
        %v9488 = vshrl.u32 %v9487, 7
        %v9489 = vsub.s32 %v8920, %v9488
        %v9490 = vrot.slane %v8717, %v9489
        %v9491 = vsel %vm8925, %v9490, %v9486
        %v9492 = vlaneseq
        %v9493 = vshrl.u32 %v9492, 7
        %v9494 = vsub.s32 %v8927, %v9493
        %v9495 = vrot.slane %v8719, %v9494
        %v9496 = vsel %vm8932, %v9495, %v9491
        %v9497 = vlaneseq
        %v9498 = vshrl.u32 %v9497, 7
        %v9499 = vsub.s32 %v8934, %v9498
        %v9500 = vrot.slane %v8721, %v9499
        %v9501 = vsel %vm8939, %v9500, %v9496
        %v9502 = vlaneseq
        %v9503 = vshrl.u32 %v9502, 7
        %v9504 = vsub.s32 %v8941, %v9503
        %v9505 = vrot.slane %v8723, %v9504
        %v9506 = vsel %vm8946, %v9505, %v9501
        %v9507 = vlaneseq
        %v9508 = vshrl.u32 %v9507, 7
        %v9509 = vsub.s32 %v8948, %v9508
        %v9510 = vrot.slane %v8725, %v9509
        %v9511 = vsel %vm8953, %v9510, %v9506
        %v9512 = vlaneseq
        %v9513 = vshrl.u32 %v9512, 7
        %v9514 = vsub.s32 %v8955, %v9513
        %v9515 = vrot.slane %v8727, %v9514
        %v9516 = vsel %vm8960, %v9515, %v9511
        %v9517 = vlaneseq
        %v9518 = vshrl.u32 %v9517, 7
        %v9519 = vsub.s32 %v8962, %v9518
        %v9520 = vrot.slane %v8729, %v9519
        %v9521 = vsel %vm8967, %v9520, %v9516
        %vm9522 = vcmask 1041409
        %v9523 = vsel %vm9522, %v9047, %v8968
        %vm9524 = vcmask 1042434
        %v9525 = vsel %vm9524, %v9126, %v9523
        %vm9526 = vcmask 1043459
        %v9527 = vsel %vm9526, %v9205, %v9525
        %vm9528 = vcmask 1044484
        %v9529 = vsel %vm9528, %v9284, %v9527
        %vm9530 = vcmask 1045509
        %v9531 = vsel %vm9530, %v9363, %v9529
        %vm9532 = vcmask 1046534
        %v9533 = vsel %vm9532, %v9442, %v9531
        %vm9534 = vcmask 1047559
        %v9535 = vsel %vm9534, %v9521, %v9533
        %9537 = vst [vmem:[%s319] sm:$0xff] %v9535
        %s9538 = smul.u32 %s38, 128
        %s9539 = smul.u32 %s37, 8
        %v9540 = vlaneseq
        %v9541 = vshrl.u32 %v9540, 7
        %v9542 = vstv %s9539
        %v9543 = vadd.s32 %v9541, %v9542
        %v9544 = vstv %s9538
        %v9545 = vadd.s32 %v8859, %v9544
        %vm9546 = vcmp.eq.s32.totalorder %v9543, %v9545
        %v9547 = vsel %vm9546, 1.0, %v9535
        %v9548 = vadd.f32 %v9547, 1e-06
        %s9549 = sshra.s32 %s9538, 7
        %s9550 = sand.u32 %s9538, 127
        %s9551 = scalar_lea.vmem %s312, %s9549 [#allocation5]
        %9552 = vst [vmem:[%s9551] sm:$0xff] %v9548
        %vm9553 = vcmp.lt.s32.totalorder %v9545, 8
        %v9554 = vsel %vm9553, %v9548, 0.0
        %v9555 = vld [vmem:[#allocation2] sm:$0xff]
        %9556 = vadd.xlane.f32.xlu0 %v9554
        %v9557 = vpop.xlane.xlu0 %9556
        %v9558 = vadd.f32 %v9555, %v9557
        %vm9559 = vcmask 7168
        %9560 = vst.msk [vmem:[#allocation2] sm:$0xff] %vm9559, %v9558
        // Predicated region
        $region45: #{tpu_custom_call.1} parent=39 // pred_check
          %p9561 = pneg %p339
        $region46: #{tpu_custom_call.1} parent=39 // pred_check_branch
          %9563 = sbr.rel (%p9561) target = $region48
        $region47: #{tpu_custom_call.1} parent=39 // pred_region
          %v9564 = vld [vmem:[#allocation2] sm:$0xff]
          %v9565 = vrcp.pop %v9564
          %v9566 = vmul.f32 1.0, %v9565
          %v9567 = vld [vmem:[%s312] sm:$0xff]
          %9569 = vset.pattern.permute.xlu0 0
          %9570 = vperm.xlu0 %9569, %v9566
          %v9571 = vpop.permute.xlu0 %9570
          %v9573 = vmul.f32 %v9567, %v9571
          %9574 = vst [vmem:[%s312] sm:$0xff] %v9573
        $region48: #{tpu_custom_call.1} parent=39 // pred_fallthru
          _
        %s9575 = sand.u32 %s179, 1
        %s9576 = scalar_lea.sflag [#allocation6], %s9575
        %s9577 = sand.u32 %s179, 1
        %s9578 = smul.addr %s9577, 8
        %s9579 = scalar_lea.vmem [#allocation5], %s9578
        %s9580 = sand.u32 %s209, 1
        %s9581 = scalar_lea.sflag [#allocation8], %s9580
        %s9582 = sand.u32 %s209, 1
        %s9583 = smul.addr %s9582, 8
        %s9584 = scalar_lea.vmem [#allocation7], %s9583
        // Predicated region
        $region49: #{tpu_custom_call.1} parent=39 // pred_check
          %p9585 = pneg %p189
        $region50: #{tpu_custom_call.1} parent=39 // pred_check_branch
          %9587 = sbr.rel (%p9585) target = $region52
        $region51: #{tpu_custom_call.1} parent=39 // pred_region
          %s9589 = ssub.s32 128, 128
          %9590 = vsyncadd %s9576, %s9589
          %s9591 = sadd.s32 %s37, %s36
          %s9592 = smul.addr %s9591, 128
          %s9593 = scalar_lea.hbm %s6, %s9592
          %s9595 = sshll.u32 %s9579, 4
          %s9596 = int_to_ptr.vmem [resolvable:$true] %s9595
          %9598 = dma.vmem_to_hbm [thread:$0]  %s9596, 128, %s9593, %s9576
        $region52: #{tpu_custom_call.1} parent=39 // pred_fallthru
          _
        // Predicated region
        $region53: #{tpu_custom_call.1} parent=39 // pred_check
          %p9599 = pneg %p219
        $region54: #{tpu_custom_call.1} parent=39 // pred_check_branch
          %9601 = sbr.rel (%p9599) target = $region56
        $region55: #{tpu_custom_call.1} parent=39 // pred_region
          %s9603 = ssub.s32 128, 128
          %9604 = vsyncadd %s9581, %s9603
          %s9605 = sadd.s32 %s38, %s37
          %s9606 = sadd.s32 %s9605, %s36
          %s9607 = smul.addr %s9606, 128
          %s9608 = scalar_lea.hbm %s7, %s9607
          %s9610 = sshll.u32 %s9584, 4
          %s9611 = int_to_ptr.vmem [resolvable:$true] %s9610
          %9613 = dma.vmem_to_hbm [thread:$0]  %s9611, 128, %s9608, %s9581
        $region56: #{tpu_custom_call.1} parent=39 // pred_fallthru
          _
      $region40: #{tpu_custom_call.1} parent=5 // pred_fallthru
        _
      %p9614 = scmp.le.s32.totalorder 2, %s26
      // Predicated region
      $region57: #{tpu_custom_call.1} parent=5 // pred_check
        %p9615 = pneg %p9614
      $region58: #{tpu_custom_call.1} parent=5 // pred_check_branch
        %9617 = sbr.rel (%p9615) target = $region60
      $region59: #{tpu_custom_call.1} parent=5 // pred_region
        %s9618 = ssub.s32 %s26, 2
        // Predicated region
        $region61: #{tpu_custom_call.1} parent=59 // pred_check
          %p9619 = pneg %p195
        $region62: #{tpu_custom_call.1} parent=59 // pred_check_branch
          %9621 = sbr.rel (%p9619) target = $region64
        $region63: #{tpu_custom_call.1} parent=59 // pred_region
          %s9622 = sand.u32 %s180, 1
          %s9623 = scalar_lea.sflag [#allocation6], %s9622
          %s9624 = sand.u32 %s180, 1
          %s9625 = smul.addr %s9624, 8
          %s9626 = scalar_lea.vmem [#allocation5], %s9625
          %9627 = dma.done %s9623, 128
        $region64: #{tpu_custom_call.1} parent=59 // pred_fallthru
          _
        // Predicated region
        $region65: #{tpu_custom_call.1} parent=59 // pred_check
          %p9628 = pneg %p225
        $region66: #{tpu_custom_call.1} parent=59 // pred_check_branch
          %9630 = sbr.rel (%p9628) target = $region68
        $region67: #{tpu_custom_call.1} parent=59 // pred_region
          %s9631 = sand.u32 %s210, 1
          %s9632 = scalar_lea.sflag [#allocation8], %s9631
          %s9633 = sand.u32 %s210, 1
          %s9634 = smul.addr %s9633, 8
          %s9635 = scalar_lea.vmem [#allocation7], %s9634
          %9636 = dma.done %s9632, 128
        $region68: #{tpu_custom_call.1} parent=59 // pred_fallthru
          _
      $region60: #{tpu_custom_call.1} parent=5 // pred_fallthru
        _
    $region6: #{tpu_custom_call.1} parent=1 // loop_footer
      %s30 = sadd.s32 1, %s26
    $region7: #{tpu_custom_call.1} parent=1 // loop_footer_branch
      %25 = sbr.rel target = $region3
    $region8: #{tpu_custom_call.1} parent=1 // loop_exit
      _
    %9637 = vsyncpa [#allocation6], 1
    %s9638 = scalar_lea.sflag [#allocation6], 1
    %9639 = vsyncpa %s9638, 1
    %9640 = vsyncpa [#allocation8], 1
    %s9641 = scalar_lea.sflag [#allocation8], 1
    %9642 = vsyncpa %s9641, 1

</llo_original>
